<compile_context>
chip_gen: v6e
topology: v6e:2x2x1
jax: 0.10.0
libtpu: 0.0.40
codegen_flags: <defaults>
</compile_context>

<pallas_src>
import math
import functools

import jax
import jax.numpy as jnp
from jax.experimental import pallas as pl
from jax.experimental.pallas import tpu as pltpu


VMEM_LIMIT_BYTES = 32 * 1024 * 1024  # explicit scoped-VMEM budget (safe on v5e/v6e/v7x)


def _compiler_params():
    return pltpu.CompilerParams(
        dimension_semantics=("parallel",),
        vmem_limit_bytes=VMEM_LIMIT_BYTES,
    )


def _const_spec(shape):
    """Full-array block that stays resident across the batch grid."""
    zeros = (0,) * len(shape)
    return pl.BlockSpec(shape, lambda b, _z=zeros: _z)


# --------------------------- in-kernel helpers ------------------------------

def _dense(x_f32, w_bf16, b_f32):
    """bf16 matmul with f32 accumulate + f32 bias."""
    return (jnp.dot(x_f32.astype(jnp.bfloat16), w_bf16,
                    preferred_element_type=jnp.float32) + b_f32)


def _ffn(x, w1, b1, w2, b2):
    h = jnp.maximum(_dense(x, w1, b1), 0.0)
    return _dense(h, w2, b2)


def _layer_norm(x, gamma, beta, eps=1e-5):
    mean = jnp.mean(x, axis=-1, keepdims=True)
    var = jnp.maximum(jnp.mean(x * x, axis=-1, keepdims=True) - mean * mean, 0.0)
    return (x - mean) * jax.lax.rsqrt(var + eps) * gamma + beta


def _multi_head_attention(q, k, v, num_heads, d_head, causal):
    # q: (Sq, H*Dh), k/v: (Sk, H*Dh); 1/sqrt(Dh) already folded into q's weights.
    outs = []
    for h in range(num_heads):
        lo = h * d_head
        qh = q[:, lo:lo + d_head]
        kh = k[:, lo:lo + d_head]
        vh = v[:, lo:lo + d_head]
        s = jax.lax.dot_general(qh, kh, (((1,), (1,)), ((), ())),
                                preferred_element_type=jnp.float32)  # (Sq, Sk)
        if causal:
            qi = jax.lax.broadcasted_iota(jnp.int32, s.shape, 0)
            ki = jax.lax.broadcasted_iota(jnp.int32, s.shape, 1)
            s = jnp.where(ki > qi, -jnp.inf, s)
        m = jnp.max(s, axis=-1, keepdims=True)
        e = jnp.exp(s - m)
        p = e / jnp.sum(e, axis=-1, keepdims=True)
        outs.append(jnp.dot(p, vh, preferred_element_type=jnp.float32))
    return jnp.concatenate(outs, axis=-1)  # (Sq, H*Dh)


# ------------------------------ Pallas kernels ------------------------------

def encoder_layer_kernel(x_ref, wqkv_ref, bqkv_ref, wo_ref, bo_ref,
                         ln1_g_ref, ln1_b_ref,
                         ff1_w_ref, ff1_b_ref, ff2_w_ref, ff2_b_ref,
                         ln2_g_ref, ln2_b_ref, o_ref,
                         *, num_heads, d_head, d_internal):
    x = x_ref[0]                                                   # (S, d_model) f32
    qkv = _dense(x, wqkv_ref[...], bqkv_ref[...])                  # (S, 3*d_internal)
    q = qkv[:, :d_internal]
    k = qkv[:, d_internal:2 * d_internal]
    v = qkv[:, 2 * d_internal:]
    att = _multi_head_attention(q, k, v, num_heads, d_head, causal=False)
    h1 = _layer_norm(_dense(att, wo_ref[...], bo_ref[...]) + x,
                     ln1_g_ref[...], ln1_b_ref[...])
    ff = _ffn(h1, ff1_w_ref[...], ff1_b_ref[...], ff2_w_ref[...], ff2_b_ref[...])
    o_ref[0] = _layer_norm(ff + h1, ln2_g_ref[...], ln2_b_ref[...])


def decoder_layer_kernel(enc_ref, y_ref,
                         dd_wqkv_ref, dd_bqkv_ref, dd_wo_ref, dd_bo_ref,
                         dd_ln1_g_ref, dd_ln1_b_ref,
                         dd_ff1_w_ref, dd_ff1_b_ref, dd_ff2_w_ref, dd_ff2_b_ref,
                         dd_ln2_g_ref, dd_ln2_b_ref,
                         ed_wq_ref, ed_bq_ref, ed_wkv_ref, ed_bkv_ref,
                         ed_wo_ref, ed_bo_ref,
                         ed_ln1_g_ref, ed_ln1_b_ref,
                         ed_ff1_w_ref, ed_ff1_b_ref, ed_ff2_w_ref, ed_ff2_b_ref,
                         ed_ln2_g_ref, ed_ln2_b_ref,
                         o_ref, *, num_heads, d_head, d_internal):
    enc = enc_ref[0]                                               # (Sk, d_model)
    y = y_ref[0]                                                   # (Sq, d_model)

    # Masked decoder self-attention -> output proj + residual + LN.
    qkv = _dense(y, dd_wqkv_ref[...], dd_bqkv_ref[...])
    q = qkv[:, :d_internal]
    k = qkv[:, d_internal:2 * d_internal]
    v = qkv[:, 2 * d_internal:]
    att = _multi_head_attention(q, k, v, num_heads, d_head, causal=True)
    dec = _layer_norm(_dense(att, dd_wo_ref[...], dd_bo_ref[...]) + y,
                      dd_ln1_g_ref[...], dd_ln1_b_ref[...])
    ff = _ffn(dec, dd_ff1_w_ref[...], dd_ff1_b_ref[...],
              dd_ff2_w_ref[...], dd_ff2_b_ref[...])
    dec = _layer_norm(dec + ff, dd_ln2_g_ref[...], dd_ln2_b_ref[...])

    # Encoder-decoder cross attention -> output proj + residual + LN, FFN + LN.
    q = _dense(dec, ed_wq_ref[...], ed_bq_ref[...])
    kv = _dense(enc, ed_wkv_ref[...], ed_bkv_ref[...])
    k = kv[:, :d_internal]
    v = kv[:, d_internal:]
    att = _multi_head_attention(q, k, v, num_heads, d_head, causal=False)
    h = _layer_norm(_dense(att, ed_wo_ref[...], ed_bo_ref[...]) + dec,
                    ed_ln1_g_ref[...], ed_ln1_b_ref[...])
    ff = _ffn(h, ed_ff1_w_ref[...], ed_ff1_b_ref[...],
              ed_ff2_w_ref[...], ed_ff2_b_ref[...])
    o_ref[0] = _layer_norm(ff + h, ed_ln2_g_ref[...], ed_ln2_b_ref[...])


def vocab_nll_kernel(y_ref, tgt_ref, w_ref, b_ref, tot_ref, cnt_ref):
    # Fused: vocab projection + log-softmax + target gather + masked reduction.
    # TODO(synk): for production vocab sizes, tile the vocab dim with an online
    #             log-sum-exp accumulator instead of a full (T, V) tile.
    y = y_ref[0]                                                   # (T, d_model) f32
    logits = (jnp.dot(y.astype(jnp.bfloat16), w_ref[...],
                      preferred_element_type=jnp.float32) + b_ref[...])  # (T, V)
    m = jnp.max(logits, axis=-1, keepdims=True)
    lse = m + jnp.log(jnp.sum(jnp.exp(logits - m), axis=-1, keepdims=True))
    logp = logits - lse
    tgt = tgt_ref[0]                                               # (T, 1) int32
    vocab_ids = jax.lax.broadcasted_iota(jnp.int32, logits.shape, 1)
    onehot = (vocab_ids == tgt).astype(jnp.float32)
    tgt_logp = jnp.sum(logp * onehot, axis=-1, keepdims=True)      # (T, 1)
    valid = jnp.logical_and(tgt != 0, tgt != 1)
    tgt_logp = tgt_logp * valid.astype(jnp.float32)
    tot_ref[0] = jnp.sum(tgt_logp, axis=0, keepdims=True)          # (1, 1)
    cnt_ref[0] = jnp.sum(valid.astype(jnp.float32),
                         axis=0, keepdims=True).astype(jnp.int32)  # (1, 1)


# ------------------------------ Pallas wrappers -----------------------------

def encoder_layer(weights, x, num_heads):
    B, S, D = x.shape
    d_internal = weights[0].shape[1] // 3
    d_head = d_internal // num_heads
    kernel = functools.partial(encoder_layer_kernel, num_heads=num_heads,
                               d_head=d_head, d_internal=d_internal)
    act_spec = pl.BlockSpec((1, S, D), lambda b: (b, 0, 0))
    in_specs = [act_spec] + [_const_spec(w.shape) for w in weights]
    return pl.pallas_call(
        kernel,
        out_shape=jax.ShapeDtypeStruct((B, S, D), jnp.float32),
        grid=(B,),
        in_specs=in_specs,
        out_specs=act_spec,
        compiler_params=_compiler_params(),
    )(x, *weights)


def decoder_layer(weights, enc_out, y, num_heads):
    B, Sq, D = y.shape
    Sk = enc_out.shape[1]
    d_internal = weights[0].shape[1] // 3
    d_head = d_internal // num_heads
    kernel = functools.partial(decoder_layer_kernel, num_heads=num_heads,
                               d_head=d_head, d_internal=d_internal)
    enc_spec = pl.BlockSpec((1, Sk, D), lambda b: (b, 0, 0))
    y_spec = pl.BlockSpec((1, Sq, D), lambda b: (b, 0, 0))
    in_specs = [enc_spec, y_spec] + [_const_spec(w.shape) for w in weights]
    return pl.pallas_call(
        kernel,
        out_shape=jax.ShapeDtypeStruct((B, Sq, D), jnp.float32),
        grid=(B,),
        in_specs=in_specs,
        out_specs=y_spec,
        compiler_params=_compiler_params(),
    )(enc_out, y, *weights)


def vocab_projection_nll(y, tgt_idx, out_w, out_b):
    B, T, D = y.shape
    tgt3 = tgt_idx.astype(jnp.int32).reshape(B, T, 1)
    y_spec = pl.BlockSpec((1, T, D), lambda b: (b, 0, 0))
    tgt_spec = pl.BlockSpec((1, T, 1), lambda b: (b, 0, 0))
    scalar_spec = pl.BlockSpec((1, 1, 1), lambda b: (b, 0, 0))
    tot, cnt = pl.pallas_call(
        vocab_nll_kernel,
        out_shape=(jax.ShapeDtypeStruct((B, 1, 1), jnp.float32),
                   jax.ShapeDtypeStruct((B, 1, 1), jnp.int32)),
        grid=(B,),
        in_specs=[y_spec, tgt_spec, _const_spec(out_w.shape), _const_spec(out_b.shape)],
        out_specs=(scalar_spec, scalar_spec),
        compiler_params=_compiler_params(),
    )(y, tgt3, out_w, out_b)
    return tot[:, 0, 0], cnt[:, 0, 0]


# ------------------------------ Model assembly ------------------------------

def transformer_nmt_mh_forward(prep, src_idx, tgt_idx, num_heads):
    d_model = prep["src_emb"].shape[1]
    x = prep["src_emb"][src_idx] * math.sqrt(d_model)
    x = x + prep["src_pe"][: src_idx.shape[1]][None, :, :]
    for w in prep["enc_layers"]:
        x = encoder_layer(w, x, num_heads)
    y = prep["tgt_emb"][tgt_idx] * math.sqrt(d_model)
    y = y + prep["tgt_pe"][: tgt_idx.shape[1]][None, :, :]
    for w in prep["dec_layers"]:
        y = decoder_layer(w, x, y, num_heads)
    return vocab_projection_nll(y, tgt_idx, prep["out_w"], prep["out_b"])


# --------------------------- Parameter preparation --------------------------

def _prep_dense(w, b):
    return w.astype(jnp.bfloat16), b.reshape(1, -1).astype(jnp.float32)


def _prep_vec(v):
    return v.reshape(1, -1).astype(jnp.float32)


def _fuse_qkv(q_w, q_b, k_w, k_b, v_w, v_b, d_head):
    scale = 1.0 / math.sqrt(d_head)   # fold attention scale into Q projection
    w = jnp.concatenate([q_w * scale, k_w, v_w], axis=1).astype(jnp.bfloat16)
    b = jnp.concatenate([q_b * scale, k_b, v_b]).reshape(1, -1).astype(jnp.float32)
    return w, b


def _prepare_encoder_layer(p, d_head):
    wqkv, bqkv = _fuse_qkv(p["q_w"], p["q_b"], p["k_w"], p["k_b"],
                           p["v_w"], p["v_b"], d_head)
    wo, bo = _prep_dense(p["o_w"], p["o_b"])
    w1, b1 = _prep_dense(p["ff1_w"], p["ff1_b"])
    w2, b2 = _prep_dense(p["ff2_w"], p["ff2_b"])
    return (wqkv, bqkv, wo, bo,
            _prep_vec(p["ln1_g"]), _prep_vec(p["ln1_b"]),
            w1, b1, w2, b2,
            _prep_vec(p["ln2_g"]), _prep_vec(p["ln2_b"]))


def _prepare_decoder_layer(p, d_head):
    dd_wqkv, dd_bqkv = _fuse_qkv(p["dd_q_w"], p["dd_q_b"], p["dd_k_w"], p["dd_k_b"],
                                 p["dd_v_w"], p["dd_v_b"], d_head)
    dd_wo, dd_bo = _prep_dense(p["dd_o_w"], p["dd_o_b"])
    dd_w1, dd_b1 = _prep_dense(p["dd_ff1_w"], p["dd_ff1_b"])
    dd_w2, dd_b2 = _prep_dense(p["dd_ff2_w"], p["dd_ff2_b"])
    scale = 1.0 / math.sqrt(d_head)
    ed_wq = (p["ed_q_w"] * scale).astype(jnp.bfloat16)
    ed_bq = (p["ed_q_b"] * scale).reshape(1, -1).astype(jnp.float32)
    ed_wkv = jnp.concatenate([p["ed_k_w"], p["ed_v_w"]], axis=1).astype(jnp.bfloat16)
    ed_bkv = jnp.concatenate([p["ed_k_b"], p["ed_v_b"]]).reshape(1, -1).astype(jnp.float32)
    ed_wo, ed_bo = _prep_dense(p["ed_o_w"], p["ed_o_b"])
    ed_w1, ed_b1 = _prep_dense(p["ed_ff1_w"], p["ed_ff1_b"])
    ed_w2, ed_b2 = _prep_dense(p["ed_ff2_w"], p["ed_ff2_b"])
    return (dd_wqkv, dd_bqkv, dd_wo, dd_bo,
            _prep_vec(p["dd_ln1_g"]), _prep_vec(p["dd_ln1_b"]),
            dd_w1, dd_b1, dd_w2, dd_b2,
            _prep_vec(p["dd_ln2_g"]), _prep_vec(p["dd_ln2_b"]),
            ed_wq, ed_bq, ed_wkv, ed_bkv, ed_wo, ed_bo,
            _prep_vec(p["ed_ln1_g"]), _prep_vec(p["ed_ln1_b"]),
            ed_w1, ed_b1, ed_w2, ed_b2,
            _prep_vec(p["ed_ln2_g"]), _prep_vec(p["ed_ln2_b"]))


def prepare_params(params, num_heads):
    d_internal = params["enc_layers"][0]["q_w"].shape[1]
    d_head = d_internal // num_heads
    out_w, out_b = _prep_dense(params["out_w"], params["out_b"])
    return {
        "src_emb": params["src_emb"],
        "tgt_emb": params["tgt_emb"],
        "src_pe": params["src_pe"],
        "tgt_pe": params["tgt_pe"],
        "out_w": out_w,
        "out_b": out_b,
        "enc_layers": [_prepare_encoder_layer(p, d_head) for p in params["enc_layers"]],
        "dec_layers": [_prepare_decoder_layer(p, d_head) for p in params["dec_layers"]],
    }


# ------------------------------ Parameter init ------------------------------

def _init_linear(key, din, dout):
    kw, kb = jax.random.split(key)
    bound = 1.0 / math.sqrt(din)
    w = jax.random.uniform(kw, (din, dout), jnp.float32, -bound, bound)
    b = jax.random.uniform(kb, (dout,), jnp.float32, -bound, bound)
    return w, b


def _init_enc_layer(key, d_model, d_internal):
    keys = jax.random.split(key, 6)
    p = {}
    p["q_w"], p["q_b"] = _init_linear(keys[0], d_model, d_internal)
    p["k_w"], p["k_b"] = _init_linear(keys[1], d_model, d_internal)
    p["v_w"], p["v_b"] = _init_linear(keys[2], d_model, d_internal)
    p["o_w"], p["o_b"] = _init_linear(keys[3], d_internal, d_model)
    p["ff1_w"], p["ff1_b"] = _init_linear(keys[4], d_model, 2 * d_model)
    p["ff2_w"], p["ff2_b"] = _init_linear(keys[5], 2 * d_model, d_model)
    p["ln1_g"] = jnp.ones((d_model,), jnp.float32)
    p["ln1_b"] = jnp.zeros((d_model,), jnp.float32)
    p["ln2_g"] = jnp.ones((d_model,), jnp.float32)
    p["ln2_b"] = jnp.zeros((d_model,), jnp.float32)
    return p


def _init_dec_layer(key, d_model, d_internal):
    keys = jax.random.split(key, 12)
    p = {}
    p["dd_q_w"], p["dd_q_b"] = _init_linear(keys[0], d_model, d_internal)
    p["dd_k_w"], p["dd_k_b"] = _init_linear(keys[1], d_model, d_internal)
    p["dd_v_w"], p["dd_v_b"] = _init_linear(keys[2], d_model, d_internal)
    p["dd_o_w"], p["dd_o_b"] = _init_linear(keys[3], d_internal, d_model)
    p["dd_ff1_w"], p["dd_ff1_b"] = _init_linear(keys[4], d_model, 2 * d_model)
    p["dd_ff2_w"], p["dd_ff2_b"] = _init_linear(keys[5], 2 * d_model, d_model)
    p["ed_q_w"], p["ed_q_b"] = _init_linear(keys[6], d_model, d_internal)
    p["ed_k_w"], p["ed_k_b"] = _init_linear(keys[7], d_model, d_internal)
    p["ed_v_w"], p["ed_v_b"] = _init_linear(keys[8], d_model, d_internal)
    p["ed_o_w"], p["ed_o_b"] = _init_linear(keys[9], d_internal, d_model)
    p["ed_ff1_w"], p["ed_ff1_b"] = _init_linear(keys[10], d_model, 2 * d_model)
    p["ed_ff2_w"], p["ed_ff2_b"] = _init_linear(keys[11], 2 * d_model, d_model)
    for name in ("dd_ln1", "dd_ln2", "ed_ln1", "ed_ln2"):
        p[name + "_g"] = jnp.ones((d_model,), jnp.float32)
        p[name + "_b"] = jnp.zeros((d_model,), jnp.float32)
    return p


def _positional_encoding(d_model, num_positions):
    position = jnp.arange(num_positions, dtype=jnp.float32)[:, None]
    div_term = jnp.exp(jnp.arange(0, d_model, 2, dtype=jnp.float32)
                       * (-math.log(10000.0) / d_model))
    pe = jnp.zeros((num_positions, d_model), jnp.float32)
    pe = pe.at[:, 0::2].set(jnp.sin(position * div_term))
    pe = pe.at[:, 1::2].set(jnp.cos(position * div_term))
    return pe


def init_params(key, src_vocab, tgt_vocab, num_src_pos, num_tgt_pos,
                d_model, d_internal, num_layers):
    keys = jax.random.split(key, 4 + 2 * num_layers)
    params = {
        "src_emb": jax.random.normal(keys[0], (src_vocab, d_model), jnp.float32),
        "tgt_emb": jax.random.normal(keys[1], (tgt_vocab, d_model), jnp.float32),
        "src_pe": _positional_encoding(d_model, num_src_pos),
        "tgt_pe": _positional_encoding(d_model, num_tgt_pos),
    }
    params["out_w"], params["out_b"] = _init_linear(keys[2], d_model, tgt_vocab)
    params["enc_layers"] = [_init_enc_layer(keys[4 + i], d_model, d_internal)
                            for i in range(num_layers)]
    params["dec_layers"] = [_init_dec_layer(keys[4 + num_layers + i], d_model, d_internal)
                            for i in range(num_layers)]
    return params


# ----------------------------------- Main ------------------------------------

if __name__ == "__main__":
    src_vocab_size, tgt_vocab_size = 48, 64
    num_src_positions, num_tgt_positions = 16, 16
    d_model, d_internal = 32, 32
    num_layers, num_heads = 2, 4
    batch, src_len, tgt_len = 2, 8, 8

    key = jax.random.PRNGKey(0)
    k_params, k_src, k_tgt = jax.random.split(key, 3)

    params = init_params(k_params, src_vocab_size, tgt_vocab_size,
                         num_src_positions, num_tgt_positions,
                         d_model, d_internal, num_layers)
    prep = prepare_params(params, num_heads)

    src_indices = jax.random.randint(k_src, (batch, src_len), 0, src_vocab_size, jnp.int32)
    tgt_indices = jax.random.randint(k_tgt, (batch, tgt_len), 0, tgt_vocab_size, jnp.int32)
    # Include some 0/1 tokens so the valid-mask path is exercised.
    tgt_indices = tgt_indices.at[:, 0].set(1).at[:, -1].set(0)

    fwd = jax.jit(functools.partial(transformer_nmt_mh_forward, num_heads=num_heads))
    tot_log_probs, num_to_predict = fwd(prep, src_indices, tgt_indices)
    jax.block_until_ready((tot_log_probs, num_to_predict))

    assert tot_log_probs.shape == (batch,)
    assert num_to_predict.shape == (batch,)
    print("KERNEL_OK")
</pallas_src>

<mosaic_0001>
module attributes {stable_mosaic.version = 11 : i64} {
  func.func @decoder_layer_kernel(%arg0: i32, %arg1: memref<1x8x32xf32, #tpu.memory_space<vmem>>, %arg2: memref<1x8x32xf32, #tpu.memory_space<vmem>>, %arg3: memref<32x96xbf16, #tpu.memory_space<vmem>>, %arg4: memref<1x96xf32, #tpu.memory_space<vmem>>, %arg5: memref<32x32xbf16, #tpu.memory_space<vmem>>, %arg6: memref<1x32xf32, #tpu.memory_space<vmem>>, %arg7: memref<1x32xf32, #tpu.memory_space<vmem>>, %arg8: memref<1x32xf32, #tpu.memory_space<vmem>>, %arg9: memref<32x64xbf16, #tpu.memory_space<vmem>>, %arg10: memref<1x64xf32, #tpu.memory_space<vmem>>, %arg11: memref<64x32xbf16, #tpu.memory_space<vmem>>, %arg12: memref<1x32xf32, #tpu.memory_space<vmem>>, %arg13: memref<1x32xf32, #tpu.memory_space<vmem>>, %arg14: memref<1x32xf32, #tpu.memory_space<vmem>>, %arg15: memref<32x32xbf16, #tpu.memory_space<vmem>>, %arg16: memref<1x32xf32, #tpu.memory_space<vmem>>, %arg17: memref<32x64xbf16, #tpu.memory_space<vmem>>, %arg18: memref<1x64xf32, #tpu.memory_space<vmem>>, %arg19: memref<32x32xbf16, #tpu.memory_space<vmem>>, %arg20: memref<1x32xf32, #tpu.memory_space<vmem>>, %arg21: memref<1x32xf32, #tpu.memory_space<vmem>>, %arg22: memref<1x32xf32, #tpu.memory_space<vmem>>, %arg23: memref<32x64xbf16, #tpu.memory_space<vmem>>, %arg24: memref<1x64xf32, #tpu.memory_space<vmem>>, %arg25: memref<64x32xbf16, #tpu.memory_space<vmem>>, %arg26: memref<1x32xf32, #tpu.memory_space<vmem>>, %arg27: memref<1x32xf32, #tpu.memory_space<vmem>>, %arg28: memref<1x32xf32, #tpu.memory_space<vmem>>, %arg29: memref<1x8x32xf32, #tpu.memory_space<vmem>>) attributes {dimension_semantics = [#tpu.dimension_semantics<parallel>], iteration_bounds = array<i64: 2>, scalar_prefetch = 0 : i64, scratch_operands = 0 : i64, tpu.core_type = #tpu.core_type<tc>, window_params = [{transform_indices = @transform_0, window_bounds = array<i64: 1, 8, 32>}, {transform_indices = @transform_1, window_bounds = array<i64: 1, 8, 32>}, {pipeline_mode = #tpu.pipeline_mode<synchronous>, transform_indices = @transform_2, window_bounds = array<i64: 32, 96>}, {pipeline_mode = #tpu.pipeline_mode<synchronous>, transform_indices = @transform_3, window_bounds = array<i64: 1, 96>}, {pipeline_mode = #tpu.pipeline_mode<synchronous>, transform_indices = @transform_4, window_bounds = array<i64: 32, 32>}, {pipeline_mode = #tpu.pipeline_mode<synchronous>, transform_indices = @transform_5, window_bounds = array<i64: 1, 32>}, {pipeline_mode = #tpu.pipeline_mode<synchronous>, transform_indices = @transform_6, window_bounds = array<i64: 1, 32>}, {pipeline_mode = #tpu.pipeline_mode<synchronous>, transform_indices = @transform_7, window_bounds = array<i64: 1, 32>}, {pipeline_mode = #tpu.pipeline_mode<synchronous>, transform_indices = @transform_8, window_bounds = array<i64: 32, 64>}, {pipeline_mode = #tpu.pipeline_mode<synchronous>, transform_indices = @transform_9, window_bounds = array<i64: 1, 64>}, {pipeline_mode = #tpu.pipeline_mode<synchronous>, transform_indices = @transform_10, window_bounds = array<i64: 64, 32>}, {pipeline_mode = #tpu.pipeline_mode<synchronous>, transform_indices = @transform_11, window_bounds = array<i64: 1, 32>}, {pipeline_mode = #tpu.pipeline_mode<synchronous>, transform_indices = @transform_12, window_bounds = array<i64: 1, 32>}, {pipeline_mode = #tpu.pipeline_mode<synchronous>, transform_indices = @transform_13, window_bounds = array<i64: 1, 32>}, {pipeline_mode = #tpu.pipeline_mode<synchronous>, transform_indices = @transform_14, window_bounds = array<i64: 32, 32>}, {pipeline_mode = #tpu.pipeline_mode<synchronous>, transform_indices = @transform_15, window_bounds = array<i64: 1, 32>}, {pipeline_mode = #tpu.pipeline_mode<synchronous>, transform_indices = @transform_16, window_bounds = array<i64: 32, 64>}, {pipeline_mode = #tpu.pipeline_mode<synchronous>, transform_indices = @transform_17, window_bounds = array<i64: 1, 64>}, {pipeline_mode = #tpu.pipeline_mode<synchronous>, transform_indices = @transform_18, window_bounds = array<i64: 32, 32>}, {pipeline_mode = #tpu.pipeline_mode<synchronous>, transform_indices = @transform_19, window_bounds = array<i64: 1, 32>}, {pipeline_mode = #tpu.pipeline_mode<synchronous>, transform_indices = @transform_20, window_bounds = array<i64: 1, 32>}, {pipeline_mode = #tpu.pipeline_mode<synchronous>, transform_indices = @transform_21, window_bounds = array<i64: 1, 32>}, {pipeline_mode = #tpu.pipeline_mode<synchronous>, transform_indices = @transform_22, window_bounds = array<i64: 32, 64>}, {pipeline_mode = #tpu.pipeline_mode<synchronous>, transform_indices = @transform_23, window_bounds = array<i64: 1, 64>}, {pipeline_mode = #tpu.pipeline_mode<synchronous>, transform_indices = @transform_24, window_bounds = array<i64: 64, 32>}, {pipeline_mode = #tpu.pipeline_mode<synchronous>, transform_indices = @transform_25, window_bounds = array<i64: 1, 32>}, {pipeline_mode = #tpu.pipeline_mode<synchronous>, transform_indices = @transform_26, window_bounds = array<i64: 1, 32>}, {pipeline_mode = #tpu.pipeline_mode<synchronous>, transform_indices = @transform_27, window_bounds = array<i64: 1, 32>}, {transform_indices = @transform_28, window_bounds = array<i64: 1, 8, 32>}]} {
    %c0 = arith.constant 0 : index
    %c0_0 = arith.constant 0 : index
    %c0_1 = arith.constant 0 : index
    %0 = vector.load %arg1[%c0, %c0_0, %c0_1] : memref<1x8x32xf32, #tpu.memory_space<vmem>>, vector<1x8x32xf32>
    %1 = vector.shape_cast %0 : vector<1x8x32xf32> to vector<8x32xf32>
    %c0_2 = arith.constant 0 : index
    %c0_3 = arith.constant 0 : index
    %c0_4 = arith.constant 0 : index
    %2 = vector.load %arg2[%c0_2, %c0_3, %c0_4] : memref<1x8x32xf32, #tpu.memory_space<vmem>>, vector<1x8x32xf32>
    %3 = vector.shape_cast %2 : vector<1x8x32xf32> to vector<8x32xf32>
    %c0_5 = arith.constant 0 : index
    %c0_6 = arith.constant 0 : index
    %4 = vector.load %arg3[%c0_5, %c0_6] : memref<32x96xbf16, #tpu.memory_space<vmem>>, vector<32x96xbf16>
    %c0_7 = arith.constant 0 : index
    %c0_8 = arith.constant 0 : index
    %5 = vector.load %arg4[%c0_7, %c0_8] : memref<1x96xf32, #tpu.memory_space<vmem>>, vector<1x96xf32>
    %6 = arith.truncf %3 : vector<8x32xf32> to vector<8x32xbf16>
    %cst = arith.constant dense<0.000000e+00> : vector<8x96xf32>
    %7 = tpu.matmul %6, %4, %cst {dimension_numbers = #tpu.dot_dimension_numbers<[1], [0], [0], [1], [0, 0, 1, 1], [], []>} : vector<8x32xbf16>, vector<32x96xbf16>, vector<8x96xf32> -> vector<8x96xf32>
    %8 = vector.broadcast %5 : vector<1x96xf32> to vector<8x96xf32>
    %9 = arith.addf %7, %8 : vector<8x96xf32>
    %10 = vector.extract_strided_slice %9 {offsets = [0, 0], sizes = [8, 32], strides = [1, 1]} : vector<8x96xf32> to vector<8x32xf32>
    %11 = vector.extract_strided_slice %9 {offsets = [0, 32], sizes = [8, 32], strides = [1, 1]} : vector<8x96xf32> to vector<8x32xf32>
    %12 = vector.extract_strided_slice %9 {offsets = [0, 64], sizes = [8, 32], strides = [1, 1]} : vector<8x96xf32> to vector<8x32xf32>
    %13 = vector.extract_strided_slice %10 {offsets = [0, 0], sizes = [8, 8], strides = [1, 1]} : vector<8x32xf32> to vector<8x8xf32>
    %14 = vector.extract_strided_slice %11 {offsets = [0, 0], sizes = [8, 8], strides = [1, 1]} : vector<8x32xf32> to vector<8x8xf32>
    %15 = vector.extract_strided_slice %12 {offsets = [0, 0], sizes = [8, 8], strides = [1, 1]} : vector<8x32xf32> to vector<8x8xf32>
    %cst_9 = arith.constant dense<0.000000e+00> : vector<8x8xf32>
    %16 = tpu.matmul %13, %14, %cst_9 {dimension_numbers = #tpu.dot_dimension_numbers<[1], [1], [0], [0], [0, 0, 1, 0], [], []>} : vector<8x8xf32>, vector<8x8xf32>, vector<8x8xf32> -> vector<8x8xf32>
    %17 = tpu.iota {dimensions = array<i32: 0>} : vector<8x8xi32>
    %18 = tpu.iota {dimensions = array<i32: 1>} : vector<8x8xi32>
    %19 = arith.cmpi sgt, %18, %17 : vector<8x8xi32>
    %cst_10 = arith.constant 0xFF800000 : f32
    %20 = vector.broadcast %cst_10 : f32 to vector<8x8xf32>
    %21 = arith.select %19, %20, %16 : vector<8x8xi1>, vector<8x8xf32>
    %cst_11 = arith.constant dense<0xFF800000> : vector<8xf32>
    %22 = vector.multi_reduction <maximumf>, %21, %cst_11 [1] : vector<8x8xf32> to vector<8xf32>
    %23 = vector.shape_cast %22 : vector<8xf32> to vector<8x1xf32>
    %24 = vector.broadcast %23 : vector<8x1xf32> to vector<8x8xf32>
    %25 = arith.subf %21, %24 : vector<8x8xf32>
    %26 = math.exp %25 : vector<8x8xf32>
    %cst_12 = arith.constant dense<0.000000e+00> : vector<8xf32>
    %27 = vector.multi_reduction <add>, %26, %cst_12 [1] : vector<8x8xf32> to vector<8xf32>
    %28 = vector.shape_cast %27 : vector<8xf32> to vector<8x1xf32>
    %29 = vector.broadcast %28 : vector<8x1xf32> to vector<8x8xf32>
    %30 = arith.divf %26, %29 : vector<8x8xf32>
    %cst_13 = arith.constant dense<0.000000e+00> : vector<8x8xf32>
    %31 = tpu.matmul %30, %15, %cst_13 {dimension_numbers = #tpu.dot_dimension_numbers<[1], [0], [0], [1], [0, 0, 1, 1], [], []>} : vector<8x8xf32>, vector<8x8xf32>, vector<8x8xf32> -> vector<8x8xf32>
    %32 = vector.extract_strided_slice %10 {offsets = [0, 8], sizes = [8, 8], strides = [1, 1]} : vector<8x32xf32> to vector<8x8xf32>
    %33 = vector.extract_strided_slice %11 {offsets = [0, 8], sizes = [8, 8], strides = [1, 1]} : vector<8x32xf32> to vector<8x8xf32>
    %34 = vector.extract_strided_slice %12 {offsets = [0, 8], sizes = [8, 8], strides = [1, 1]} : vector<8x32xf32> to vector<8x8xf32>
    %cst_14 = arith.constant dense<0.000000e+00> : vector<8x8xf32>
    %35 = tpu.matmul %32, %33, %cst_14 {dimension_numbers = #tpu.dot_dimension_numbers<[1], [1], [0], [0], [0, 0, 1, 0], [], []>} : vector<8x8xf32>, vector<8x8xf32>, vector<8x8xf32> -> vector<8x8xf32>
    %36 = tpu.iota {dimensions = array<i32: 0>} : vector<8x8xi32>
    %37 = tpu.iota {dimensions = array<i32: 1>} : vector<8x8xi32>
    %38 = arith.cmpi sgt, %37, %36 : vector<8x8xi32>
    %cst_15 = arith.constant 0xFF800000 : f32
    %39 = vector.broadcast %cst_15 : f32 to vector<8x8xf32>
    %40 = arith.select %38, %39, %35 : vector<8x8xi1>, vector<8x8xf32>
    %cst_16 = arith.constant dense<0xFF800000> : vector<8xf32>
    %41 = vector.multi_reduction <maximumf>, %40, %cst_16 [1] : vector<8x8xf32> to vector<8xf32>
    %42 = vector.shape_cast %41 : vector<8xf32> to vector<8x1xf32>
    %43 = vector.broadcast %42 : vector<8x1xf32> to vector<8x8xf32>
    %44 = arith.subf %40, %43 : vector<8x8xf32>
    %45 = math.exp %44 : vector<8x8xf32>
    %cst_17 = arith.constant dense<0.000000e+00> : vector<8xf32>
    %46 = vector.multi_reduction <add>, %45, %cst_17 [1] : vector<8x8xf32> to vector<8xf32>
    %47 = vector.shape_cast %46 : vector<8xf32> to vector<8x1xf32>
    %48 = vector.broadcast %47 : vector<8x1xf32> to vector<8x8xf32>
    %49 = arith.divf %45, %48 : vector<8x8xf32>
    %cst_18 = arith.constant dense<0.000000e+00> : vector<8x8xf32>
    %50 = tpu.matmul %49, %34, %cst_18 {dimension_numbers = #tpu.dot_dimension_numbers<[1], [0], [0], [1], [0, 0, 1, 1], [], []>} : vector<8x8xf32>, vector<8x8xf32>, vector<8x8xf32> -> vector<8x8xf32>
    %51 = vector.extract_strided_slice %10 {offsets = [0, 16], sizes = [8, 8], strides = [1, 1]} : vector<8x32xf32> to vector<8x8xf32>
    %52 = vector.extract_strided_slice %11 {offsets = [0, 16], sizes = [8, 8], strides = [1, 1]} : vector<8x32xf32> to vector<8x8xf32>
    %53 = vector.extract_strided_slice %12 {offsets = [0, 16], sizes = [8, 8], strides = [1, 1]} : vector<8x32xf32> to vector<8x8xf32>
    %cst_19 = arith.constant dense<0.000000e+00> : vector<8x8xf32>
    %54 = tpu.matmul %51, %52, %cst_19 {dimension_numbers = #tpu.dot_dimension_numbers<[1], [1], [0], [0], [0, 0, 1, 0], [], []>} : vector<8x8xf32>, vector<8x8xf32>, vector<8x8xf32> -> vector<8x8xf32>
    %55 = tpu.iota {dimensions = array<i32: 0>} : vector<8x8xi32>
    %56 = tpu.iota {dimensions = array<i32: 1>} : vector<8x8xi32>
    %57 = arith.cmpi sgt, %56, %55 : vector<8x8xi32>
    %cst_20 = arith.constant 0xFF800000 : f32
    %58 = vector.broadcast %cst_20 : f32 to vector<8x8xf32>
    %59 = arith.select %57, %58, %54 : vector<8x8xi1>, vector<8x8xf32>
    %cst_21 = arith.constant dense<0xFF800000> : vector<8xf32>
    %60 = vector.multi_reduction <maximumf>, %59, %cst_21 [1] : vector<8x8xf32> to vector<8xf32>
    %61 = vector.shape_cast %60 : vector<8xf32> to vector<8x1xf32>
    %62 = vector.broadcast %61 : vector<8x1xf32> to vector<8x8xf32>
    %63 = arith.subf %59, %62 : vector<8x8xf32>
    %64 = math.exp %63 : vector<8x8xf32>
    %cst_22 = arith.constant dense<0.000000e+00> : vector<8xf32>
    %65 = vector.multi_reduction <add>, %64, %cst_22 [1] : vector<8x8xf32> to vector<8xf32>
    %66 = vector.shape_cast %65 : vector<8xf32> to vector<8x1xf32>
    %67 = vector.broadcast %66 : vector<8x1xf32> to vector<8x8xf32>
    %68 = arith.divf %64, %67 : vector<8x8xf32>
    %cst_23 = arith.constant dense<0.000000e+00> : vector<8x8xf32>
    %69 = tpu.matmul %68, %53, %cst_23 {dimension_numbers = #tpu.dot_dimension_numbers<[1], [0], [0], [1], [0, 0, 1, 1], [], []>} : vector<8x8xf32>, vector<8x8xf32>, vector<8x8xf32> -> vector<8x8xf32>
    %70 = vector.extract_strided_slice %10 {offsets = [0, 24], sizes = [8, 8], strides = [1, 1]} : vector<8x32xf32> to vector<8x8xf32>
    %71 = vector.extract_strided_slice %11 {offsets = [0, 24], sizes = [8, 8], strides = [1, 1]} : vector<8x32xf32> to vector<8x8xf32>
    %72 = vector.extract_strided_slice %12 {offsets = [0, 24], sizes = [8, 8], strides = [1, 1]} : vector<8x32xf32> to vector<8x8xf32>
    %cst_24 = arith.constant dense<0.000000e+00> : vector<8x8xf32>
    %73 = tpu.matmul %70, %71, %cst_24 {dimension_numbers = #tpu.dot_dimension_numbers<[1], [1], [0], [0], [0, 0, 1, 0], [], []>} : vector<8x8xf32>, vector<8x8xf32>, vector<8x8xf32> -> vector<8x8xf32>
    %74 = tpu.iota {dimensions = array<i32: 0>} : vector<8x8xi32>
    %75 = tpu.iota {dimensions = array<i32: 1>} : vector<8x8xi32>
    %76 = arith.cmpi sgt, %75, %74 : vector<8x8xi32>
    %cst_25 = arith.constant 0xFF800000 : f32
    %77 = vector.broadcast %cst_25 : f32 to vector<8x8xf32>
    %78 = arith.select %76, %77, %73 : vector<8x8xi1>, vector<8x8xf32>
    %cst_26 = arith.constant dense<0xFF800000> : vector<8xf32>
    %79 = vector.multi_reduction <maximumf>, %78, %cst_26 [1] : vector<8x8xf32> to vector<8xf32>
    %80 = vector.shape_cast %79 : vector<8xf32> to vector<8x1xf32>
    %81 = vector.broadcast %80 : vector<8x1xf32> to vector<8x8xf32>
    %82 = arith.subf %78, %81 : vector<8x8xf32>
    %83 = math.exp %82 : vector<8x8xf32>
    %cst_27 = arith.constant dense<0.000000e+00> : vector<8xf32>
    %84 = vector.multi_reduction <add>, %83, %cst_27 [1] : vector<8x8xf32> to vector<8xf32>
    %85 = vector.shape_cast %84 : vector<8xf32> to vector<8x1xf32>
    %86 = vector.broadcast %85 : vector<8x1xf32> to vector<8x8xf32>
    %87 = arith.divf %83, %86 : vector<8x8xf32>
    %cst_28 = arith.constant dense<0.000000e+00> : vector<8x8xf32>
    %88 = tpu.matmul %87, %72, %cst_28 {dimension_numbers = #tpu.dot_dimension_numbers<[1], [0], [0], [1], [0, 0, 1, 1], [], []>} : vector<8x8xf32>, vector<8x8xf32>, vector<8x8xf32> -> vector<8x8xf32>
    %89 = tpu.concatenate %31, %50, %69, %88 in 1 : vector<8x8xf32>, vector<8x8xf32>, vector<8x8xf32>, vector<8x8xf32> -> vector<8x32xf32>
    %c0_29 = arith.constant 0 : index
    %c0_30 = arith.constant 0 : index
    %90 = vector.load %arg5[%c0_29, %c0_30] : memref<32x32xbf16, #tpu.memory_space<vmem>>, vector<32x32xbf16>
    %c0_31 = arith.constant 0 : index
    %c0_32 = arith.constant 0 : index
    %91 = vector.load %arg6[%c0_31, %c0_32] : memref<1x32xf32, #tpu.memory_space<vmem>>, vector<1x32xf32>
    %92 = arith.truncf %89 : vector<8x32xf32> to vector<8x32xbf16>
    %cst_33 = arith.constant dense<0.000000e+00> : vector<8x32xf32>
    %93 = tpu.matmul %92, %90, %cst_33 {dimension_numbers = #tpu.dot_dimension_numbers<[1], [0], [0], [1], [0, 0, 1, 1], [], []>} : vector<8x32xbf16>, vector<32x32xbf16>, vector<8x32xf32> -> vector<8x32xf32>
    %94 = vector.broadcast %91 : vector<1x32xf32> to vector<8x32xf32>
    %95 = arith.addf %93, %94 : vector<8x32xf32>
    %96 = arith.addf %95, %3 : vector<8x32xf32>
    %c0_34 = arith.constant 0 : index
    %c0_35 = arith.constant 0 : index
    %97 = vector.load %arg7[%c0_34, %c0_35] : memref<1x32xf32, #tpu.memory_space<vmem>>, vector<1x32xf32>
    %c0_36 = arith.constant 0 : index
    %c0_37 = arith.constant 0 : index
    %98 = vector.load %arg8[%c0_36, %c0_37] : memref<1x32xf32, #tpu.memory_space<vmem>>, vector<1x32xf32>
    %cst_38 = arith.constant dense<0.000000e+00> : vector<8xf32>
    %99 = vector.multi_reduction <add>, %96, %cst_38 [1] : vector<8x32xf32> to vector<8xf32>
    %100 = vector.shape_cast %99 : vector<8xf32> to vector<8x1xf32>
    %cst_39 = arith.constant 3.200000e+01 : f32
    %101 = vector.broadcast %cst_39 : f32 to vector<8x1xf32>
    %102 = arith.divf %100, %101 : vector<8x1xf32>
    %103 = arith.mulf %96, %96 : vector<8x32xf32>
    %cst_40 = arith.constant dense<0.000000e+00> : vector<8xf32>
    %104 = vector.multi_reduction <add>, %103, %cst_40 [1] : vector<8x32xf32> to vector<8xf32>
    %105 = vector.shape_cast %104 : vector<8xf32> to vector<8x1xf32>
    %cst_41 = arith.constant 3.200000e+01 : f32
    %106 = vector.broadcast %cst_41 : f32 to vector<8x1xf32>
    %107 = arith.divf %105, %106 : vector<8x1xf32>
    %108 = arith.mulf %102, %102 : vector<8x1xf32>
    %109 = arith.subf %107, %108 : vector<8x1xf32>
    %cst_42 = arith.constant 0.000000e+00 : f32
    %110 = vector.broadcast %cst_42 : f32 to vector<8x1xf32>
    %111 = arith.maximumf %109, %110 : vector<8x1xf32>
    %112 = vector.broadcast %102 : vector<8x1xf32> to vector<8x32xf32>
    %113 = arith.subf %96, %112 : vector<8x32xf32>
    %cst_43 = arith.constant 9.99999974E-6 : f32
    %114 = vector.broadcast %cst_43 : f32 to vector<8x1xf32>
    %115 = arith.addf %111, %114 : vector<8x1xf32>
    %116 = math.rsqrt %115 : vector<8x1xf32>
    %117 = vector.broadcast %116 : vector<8x1xf32> to vector<8x32xf32>
    %118 = arith.mulf %113, %117 : vector<8x32xf32>
    %119 = vector.broadcast %97 : vector<1x32xf32> to vector<8x32xf32>
    %120 = arith.mulf %118, %119 : vector<8x32xf32>
    %121 = vector.broadcast %98 : vector<1x32xf32> to vector<8x32xf32>
    %122 = arith.addf %120, %121 : vector<8x32xf32>
    %c0_44 = arith.constant 0 : index
    %c0_45 = arith.constant 0 : index
    %123 = vector.load %arg9[%c0_44, %c0_45] : memref<32x64xbf16, #tpu.memory_space<vmem>>, vector<32x64xbf16>
    %c0_46 = arith.constant 0 : index
    %c0_47 = arith.constant 0 : index
    %124 = vector.load %arg10[%c0_46, %c0_47] : memref<1x64xf32, #tpu.memory_space<vmem>>, vector<1x64xf32>
    %c0_48 = arith.constant 0 : index
    %c0_49 = arith.constant 0 : index
    %125 = vector.load %arg11[%c0_48, %c0_49] : memref<64x32xbf16, #tpu.memory_space<vmem>>, vector<64x32xbf16>
    %c0_50 = arith.constant 0 : index
    %c0_51 = arith.constant 0 : index
    %126 = vector.load %arg12[%c0_50, %c0_51] : memref<1x32xf32, #tpu.memory_space<vmem>>, vector<1x32xf32>
    %127 = arith.truncf %122 : vector<8x32xf32> to vector<8x32xbf16>
    %cst_52 = arith.constant dense<0.000000e+00> : vector<8x64xf32>
    %128 = tpu.matmul %127, %123, %cst_52 {dimension_numbers = #tpu.dot_dimension_numbers<[1], [0], [0], [1], [0, 0, 1, 1], [], []>} : vector<8x32xbf16>, vector<32x64xbf16>, vector<8x64xf32> -> vector<8x64xf32>
    %129 = vector.broadcast %124 : vector<1x64xf32> to vector<8x64xf32>
    %130 = arith.addf %128, %129 : vector<8x64xf32>
    %cst_53 = arith.constant 0.000000e+00 : f32
    %131 = vector.broadcast %cst_53 : f32 to vector<8x64xf32>
    %132 = arith.maximumf %130, %131 : vector<8x64xf32>
    %133 = arith.truncf %132 : vector<8x64xf32> to vector<8x64xbf16>
    %cst_54 = arith.constant dense<0.000000e+00> : vector<8x32xf32>
    %134 = tpu.matmul %133, %125, %cst_54 {dimension_numbers = #tpu.dot_dimension_numbers<[1], [0], [0], [1], [0, 0, 1, 1], [], []>} : vector<8x64xbf16>, vector<64x32xbf16>, vector<8x32xf32> -> vector<8x32xf32>
    %135 = vector.broadcast %126 : vector<1x32xf32> to vector<8x32xf32>
    %136 = arith.addf %134, %135 : vector<8x32xf32>
    %137 = arith.addf %122, %136 : vector<8x32xf32>
    %c0_55 = arith.constant 0 : index
    %c0_56 = arith.constant 0 : index
    %138 = vector.load %arg13[%c0_55, %c0_56] : memref<1x32xf32, #tpu.memory_space<vmem>>, vector<1x32xf32>
    %c0_57 = arith.constant 0 : index
    %c0_58 = arith.constant 0 : index
    %139 = vector.load %arg14[%c0_57, %c0_58] : memref<1x32xf32, #tpu.memory_space<vmem>>, vector<1x32xf32>
    %cst_59 = arith.constant dense<0.000000e+00> : vector<8xf32>
    %140 = vector.multi_reduction <add>, %137, %cst_59 [1] : vector<8x32xf32> to vector<8xf32>
    %141 = vector.shape_cast %140 : vector<8xf32> to vector<8x1xf32>
    %cst_60 = arith.constant 3.200000e+01 : f32
    %142 = vector.broadcast %cst_60 : f32 to vector<8x1xf32>
    %143 = arith.divf %141, %142 : vector<8x1xf32>
    %144 = arith.mulf %137, %137 : vector<8x32xf32>
    %cst_61 = arith.constant dense<0.000000e+00> : vector<8xf32>
    %145 = vector.multi_reduction <add>, %144, %cst_61 [1] : vector<8x32xf32> to vector<8xf32>
    %146 = vector.shape_cast %145 : vector<8xf32> to vector<8x1xf32>
    %cst_62 = arith.constant 3.200000e+01 : f32
    %147 = vector.broadcast %cst_62 : f32 to vector<8x1xf32>
    %148 = arith.divf %146, %147 : vector<8x1xf32>
    %149 = arith.mulf %143, %143 : vector<8x1xf32>
    %150 = arith.subf %148, %149 : vector<8x1xf32>
    %cst_63 = arith.constant 0.000000e+00 : f32
    %151 = vector.broadcast %cst_63 : f32 to vector<8x1xf32>
    %152 = arith.maximumf %150, %151 : vector<8x1xf32>
    %153 = vector.broadcast %143 : vector<8x1xf32> to vector<8x32xf32>
    %154 = arith.subf %137, %153 : vector<8x32xf32>
    %cst_64 = arith.constant 9.99999974E-6 : f32
    %155 = vector.broadcast %cst_64 : f32 to vector<8x1xf32>
    %156 = arith.addf %152, %155 : vector<8x1xf32>
    %157 = math.rsqrt %156 : vector<8x1xf32>
    %158 = vector.broadcast %157 : vector<8x1xf32> to vector<8x32xf32>
    %159 = arith.mulf %154, %158 : vector<8x32xf32>
    %160 = vector.broadcast %138 : vector<1x32xf32> to vector<8x32xf32>
    %161 = arith.mulf %159, %160 : vector<8x32xf32>
    %162 = vector.broadcast %139 : vector<1x32xf32> to vector<8x32xf32>
    %163 = arith.addf %161, %162 : vector<8x32xf32>
    %c0_65 = arith.constant 0 : index
    %c0_66 = arith.constant 0 : index
    %164 = vector.load %arg15[%c0_65, %c0_66] : memref<32x32xbf16, #tpu.memory_space<vmem>>, vector<32x32xbf16>
    %c0_67 = arith.constant 0 : index
    %c0_68 = arith.constant 0 : index
    %165 = vector.load %arg16[%c0_67, %c0_68] : memref<1x32xf32, #tpu.memory_space<vmem>>, vector<1x32xf32>
    %166 = arith.truncf %163 : vector<8x32xf32> to vector<8x32xbf16>
    %cst_69 = arith.constant dense<0.000000e+00> : vector<8x32xf32>
    %167 = tpu.matmul %166, %164, %cst_69 {dimension_numbers = #tpu.dot_dimension_numbers<[1], [0], [0], [1], [0, 0, 1, 1], [], []>} : vector<8x32xbf16>, vector<32x32xbf16>, vector<8x32xf32> -> vector<8x32xf32>
    %168 = vector.broadcast %165 : vector<1x32xf32> to vector<8x32xf32>
    %169 = arith.addf %167, %168 : vector<8x32xf32>
    %c0_70 = arith.constant 0 : index
    %c0_71 = arith.constant 0 : index
    %170 = vector.load %arg17[%c0_70, %c0_71] : memref<32x64xbf16, #tpu.memory_space<vmem>>, vector<32x64xbf16>
    %c0_72 = arith.constant 0 : index
    %c0_73 = arith.constant 0 : index
    %171 = vector.load %arg18[%c0_72, %c0_73] : memref<1x64xf32, #tpu.memory_space<vmem>>, vector<1x64xf32>
    %172 = arith.truncf %1 : vector<8x32xf32> to vector<8x32xbf16>
    %cst_74 = arith.constant dense<0.000000e+00> : vector<8x64xf32>
    %173 = tpu.matmul %172, %170, %cst_74 {dimension_numbers = #tpu.dot_dimension_numbers<[1], [0], [0], [1], [0, 0, 1, 1], [], []>} : vector<8x32xbf16>, vector<32x64xbf16>, vector<8x64xf32> -> vector<8x64xf32>
    %174 = vector.broadcast %171 : vector<1x64xf32> to vector<8x64xf32>
    %175 = arith.addf %173, %174 : vector<8x64xf32>
    %176 = vector.extract_strided_slice %175 {offsets = [0, 0], sizes = [8, 32], strides = [1, 1]} : vector<8x64xf32> to vector<8x32xf32>
    %177 = vector.extract_strided_slice %175 {offsets = [0, 32], sizes = [8, 32], strides = [1, 1]} : vector<8x64xf32> to vector<8x32xf32>
    %178 = vector.extract_strided_slice %169 {offsets = [0, 0], sizes = [8, 8], strides = [1, 1]} : vector<8x32xf32> to vector<8x8xf32>
    %179 = vector.extract_strided_slice %176 {offsets = [0, 0], sizes = [8, 8], strides = [1, 1]} : vector<8x32xf32> to vector<8x8xf32>
    %180 = vector.extract_strided_slice %177 {offsets = [0, 0], sizes = [8, 8], strides = [1, 1]} : vector<8x32xf32> to vector<8x8xf32>
    %cst_75 = arith.constant dense<0.000000e+00> : vector<8x8xf32>
    %181 = tpu.matmul %178, %179, %cst_75 {dimension_numbers = #tpu.dot_dimension_numbers<[1], [1], [0], [0], [0, 0, 1, 0], [], []>} : vector<8x8xf32>, vector<8x8xf32>, vector<8x8xf32> -> vector<8x8xf32>
    %cst_76 = arith.constant dense<0xFF800000> : vector<8xf32>
    %182 = vector.multi_reduction <maximumf>, %181, %cst_76 [1] : vector<8x8xf32> to vector<8xf32>
    %183 = vector.shape_cast %182 : vector<8xf32> to vector<8x1xf32>
    %184 = vector.broadcast %183 : vector<8x1xf32> to vector<8x8xf32>
    %185 = arith.subf %181, %184 : vector<8x8xf32>
    %186 = math.exp %185 : vector<8x8xf32>
    %cst_77 = arith.constant dense<0.000000e+00> : vector<8xf32>
    %187 = vector.multi_reduction <add>, %186, %cst_77 [1] : vector<8x8xf32> to vector<8xf32>
    %188 = vector.shape_cast %187 : vector<8xf32> to vector<8x1xf32>
    %189 = vector.broadcast %188 : vector<8x1xf32> to vector<8x8xf32>
    %190 = arith.divf %186, %189 : vector<8x8xf32>
    %cst_78 = arith.constant dense<0.000000e+00> : vector<8x8xf32>
    %191 = tpu.matmul %190, %180, %cst_78 {dimension_numbers = #tpu.dot_dimension_numbers<[1], [0], [0], [1], [0, 0, 1, 1], [], []>} : vector<8x8xf32>, vector<8x8xf32>, vector<8x8xf32> -> vector<8x8xf32>
    %192 = vector.extract_strided_slice %169 {offsets = [0, 8], sizes = [8, 8], strides = [1, 1]} : vector<8x32xf32> to vector<8x8xf32>
    %193 = vector.extract_strided_slice %176 {offsets = [0, 8], sizes = [8, 8], strides = [1, 1]} : vector<8x32xf32> to vector<8x8xf32>
    %194 = vector.extract_strided_slice %177 {offsets = [0, 8], sizes = [8, 8], strides = [1, 1]} : vector<8x32xf32> to vector<8x8xf32>
    %cst_79 = arith.constant dense<0.000000e+00> : vector<8x8xf32>
    %195 = tpu.matmul %192, %193, %cst_79 {dimension_numbers = #tpu.dot_dimension_numbers<[1], [1], [0], [0], [0, 0, 1, 0], [], []>} : vector<8x8xf32>, vector<8x8xf32>, vector<8x8xf32> -> vector<8x8xf32>
    %cst_80 = arith.constant dense<0xFF800000> : vector<8xf32>
    %196 = vector.multi_reduction <maximumf>, %195, %cst_80 [1] : vector<8x8xf32> to vector<8xf32>
    %197 = vector.shape_cast %196 : vector<8xf32> to vector<8x1xf32>
    %198 = vector.broadcast %197 : vector<8x1xf32> to vector<8x8xf32>
    %199 = arith.subf %195, %198 : vector<8x8xf32>
    %200 = math.exp %199 : vector<8x8xf32>
    %cst_81 = arith.constant dense<0.000000e+00> : vector<8xf32>
    %201 = vector.multi_reduction <add>, %200, %cst_81 [1] : vector<8x8xf32> to vector<8xf32>
    %202 = vector.shape_cast %201 : vector<8xf32> to vector<8x1xf32>
    %203 = vector.broadcast %202 : vector<8x1xf32> to vector<8x8xf32>
    %204 = arith.divf %200, %203 : vector<8x8xf32>
    %cst_82 = arith.constant dense<0.000000e+00> : vector<8x8xf32>
    %205 = tpu.matmul %204, %194, %cst_82 {dimension_numbers = #tpu.dot_dimension_numbers<[1], [0], [0], [1], [0, 0, 1, 1], [], []>} : vector<8x8xf32>, vector<8x8xf32>, vector<8x8xf32> -> vector<8x8xf32>
    %206 = vector.extract_strided_slice %169 {offsets = [0, 16], sizes = [8, 8], strides = [1, 1]} : vector<8x32xf32> to vector<8x8xf32>
    %207 = vector.extract_strided_slice %176 {offsets = [0, 16], sizes = [8, 8], strides = [1, 1]} : vector<8x32xf32> to vector<8x8xf32>
    %208 = vector.extract_strided_slice %177 {offsets = [0, 16], sizes = [8, 8], strides = [1, 1]} : vector<8x32xf32> to vector<8x8xf32>
    %cst_83 = arith.constant dense<0.000000e+00> : vector<8x8xf32>
    %209 = tpu.matmul %206, %207, %cst_83 {dimension_numbers = #tpu.dot_dimension_numbers<[1], [1], [0], [0], [0, 0, 1, 0], [], []>} : vector<8x8xf32>, vector<8x8xf32>, vector<8x8xf32> -> vector<8x8xf32>
    %cst_84 = arith.constant dense<0xFF800000> : vector<8xf32>
    %210 = vector.multi_reduction <maximumf>, %209, %cst_84 [1] : vector<8x8xf32> to vector<8xf32>
    %211 = vector.shape_cast %210 : vector<8xf32> to vector<8x1xf32>
    %212 = vector.broadcast %211 : vector<8x1xf32> to vector<8x8xf32>
    %213 = arith.subf %209, %212 : vector<8x8xf32>
    %214 = math.exp %213 : vector<8x8xf32>
    %cst_85 = arith.constant dense<0.000000e+00> : vector<8xf32>
    %215 = vector.multi_reduction <add>, %214, %cst_85 [1] : vector<8x8xf32> to vector<8xf32>
    %216 = vector.shape_cast %215 : vector<8xf32> to vector<8x1xf32>
    %217 = vector.broadcast %216 : vector<8x1xf32> to vector<8x8xf32>
    %218 = arith.divf %214, %217 : vector<8x8xf32>
    %cst_86 = arith.constant dense<0.000000e+00> : vector<8x8xf32>
    %219 = tpu.matmul %218, %208, %cst_86 {dimension_numbers = #tpu.dot_dimension_numbers<[1], [0], [0], [1], [0, 0, 1, 1], [], []>} : vector<8x8xf32>, vector<8x8xf32>, vector<8x8xf32> -> vector<8x8xf32>
    %220 = vector.extract_strided_slice %169 {offsets = [0, 24], sizes = [8, 8], strides = [1, 1]} : vector<8x32xf32> to vector<8x8xf32>
    %221 = vector.extract_strided_slice %176 {offsets = [0, 24], sizes = [8, 8], strides = [1, 1]} : vector<8x32xf32> to vector<8x8xf32>
    %222 = vector.extract_strided_slice %177 {offsets = [0, 24], sizes = [8, 8], strides = [1, 1]} : vector<8x32xf32> to vector<8x8xf32>
    %cst_87 = arith.constant dense<0.000000e+00> : vector<8x8xf32>
    %223 = tpu.matmul %220, %221, %cst_87 {dimension_numbers = #tpu.dot_dimension_numbers<[1], [1], [0], [0], [0, 0, 1, 0], [], []>} : vector<8x8xf32>, vector<8x8xf32>, vector<8x8xf32> -> vector<8x8xf32>
    %cst_88 = arith.constant dense<0xFF800000> : vector<8xf32>
    %224 = vector.multi_reduction <maximumf>, %223, %cst_88 [1] : vector<8x8xf32> to vector<8xf32>
    %225 = vector.shape_cast %224 : vector<8xf32> to vector<8x1xf32>
    %226 = vector.broadcast %225 : vector<8x1xf32> to vector<8x8xf32>
    %227 = arith.subf %223, %226 : vector<8x8xf32>
    %228 = math.exp %227 : vector<8x8xf32>
    %cst_89 = arith.constant dense<0.000000e+00> : vector<8xf32>
    %229 = vector.multi_reduction <add>, %228, %cst_89 [1] : vector<8x8xf32> to vector<8xf32>
    %230 = vector.shape_cast %229 : vector<8xf32> to vector<8x1xf32>
    %231 = vector.broadcast %230 : vector<8x1xf32> to vector<8x8xf32>
    %232 = arith.divf %228, %231 : vector<8x8xf32>
    %cst_90 = arith.constant dense<0.000000e+00> : vector<8x8xf32>
    %233 = tpu.matmul %232, %222, %cst_90 {dimension_numbers = #tpu.dot_dimension_numbers<[1], [0], [0], [1], [0, 0, 1, 1], [], []>} : vector<8x8xf32>, vector<8x8xf32>, vector<8x8xf32> -> vector<8x8xf32>
    %234 = tpu.concatenate %191, %205, %219, %233 in 1 : vector<8x8xf32>, vector<8x8xf32>, vector<8x8xf32>, vector<8x8xf32> -> vector<8x32xf32>
    %c0_91 = arith.constant 0 : index
    %c0_92 = arith.constant 0 : index
    %235 = vector.load %arg19[%c0_91, %c0_92] : memref<32x32xbf16, #tpu.memory_space<vmem>>, vector<32x32xbf16>
    %c0_93 = arith.constant 0 : index
    %c0_94 = arith.constant 0 : index
    %236 = vector.load %arg20[%c0_93, %c0_94] : memref<1x32xf32, #tpu.memory_space<vmem>>, vector<1x32xf32>
    %237 = arith.truncf %234 : vector<8x32xf32> to vector<8x32xbf16>
    %cst_95 = arith.constant dense<0.000000e+00> : vector<8x32xf32>
    %238 = tpu.matmul %237, %235, %cst_95 {dimension_numbers = #tpu.dot_dimension_numbers<[1], [0], [0], [1], [0, 0, 1, 1], [], []>} : vector<8x32xbf16>, vector<32x32xbf16>, vector<8x32xf32> -> vector<8x32xf32>
    %239 = vector.broadcast %236 : vector<1x32xf32> to vector<8x32xf32>
    %240 = arith.addf %238, %239 : vector<8x32xf32>
    %241 = arith.addf %240, %163 : vector<8x32xf32>
    %c0_96 = arith.constant 0 : index
    %c0_97 = arith.constant 0 : index
    %242 = vector.load %arg21[%c0_96, %c0_97] : memref<1x32xf32, #tpu.memory_space<vmem>>, vector<1x32xf32>
    %c0_98 = arith.constant 0 : index
    %c0_99 = arith.constant 0 : index
    %243 = vector.load %arg22[%c0_98, %c0_99] : memref<1x32xf32, #tpu.memory_space<vmem>>, vector<1x32xf32>
    %cst_100 = arith.constant dense<0.000000e+00> : vector<8xf32>
    %244 = vector.multi_reduction <add>, %241, %cst_100 [1] : vector<8x32xf32> to vector<8xf32>
    %245 = vector.shape_cast %244 : vector<8xf32> to vector<8x1xf32>
    %cst_101 = arith.constant 3.200000e+01 : f32
    %246 = vector.broadcast %cst_101 : f32 to vector<8x1xf32>
    %247 = arith.divf %245, %246 : vector<8x1xf32>
    %248 = arith.mulf %241, %241 : vector<8x32xf32>
    %cst_102 = arith.constant dense<0.000000e+00> : vector<8xf32>
    %249 = vector.multi_reduction <add>, %248, %cst_102 [1] : vector<8x32xf32> to vector<8xf32>
    %250 = vector.shape_cast %249 : vector<8xf32> to vector<8x1xf32>
    %cst_103 = arith.constant 3.200000e+01 : f32
    %251 = vector.broadcast %cst_103 : f32 to vector<8x1xf32>
    %252 = arith.divf %250, %251 : vector<8x1xf32>
    %253 = arith.mulf %247, %247 : vector<8x1xf32>
    %254 = arith.subf %252, %253 : vector<8x1xf32>
    %cst_104 = arith.constant 0.000000e+00 : f32
    %255 = vector.broadcast %cst_104 : f32 to vector<8x1xf32>
    %256 = arith.maximumf %254, %255 : vector<8x1xf32>
    %257 = vector.broadcast %247 : vector<8x1xf32> to vector<8x32xf32>
    %258 = arith.subf %241, %257 : vector<8x32xf32>
    %cst_105 = arith.constant 9.99999974E-6 : f32
    %259 = vector.broadcast %cst_105 : f32 to vector<8x1xf32>
    %260 = arith.addf %256, %259 : vector<8x1xf32>
    %261 = math.rsqrt %260 : vector<8x1xf32>
    %262 = vector.broadcast %261 : vector<8x1xf32> to vector<8x32xf32>
    %263 = arith.mulf %258, %262 : vector<8x32xf32>
    %264 = vector.broadcast %242 : vector<1x32xf32> to vector<8x32xf32>
    %265 = arith.mulf %263, %264 : vector<8x32xf32>
    %266 = vector.broadcast %243 : vector<1x32xf32> to vector<8x32xf32>
    %267 = arith.addf %265, %266 : vector<8x32xf32>
    %c0_106 = arith.constant 0 : index
    %c0_107 = arith.constant 0 : index
    %268 = vector.load %arg23[%c0_106, %c0_107] : memref<32x64xbf16, #tpu.memory_space<vmem>>, vector<32x64xbf16>
    %c0_108 = arith.constant 0 : index
    %c0_109 = arith.constant 0 : index
    %269 = vector.load %arg24[%c0_108, %c0_109] : memref<1x64xf32, #tpu.memory_space<vmem>>, vector<1x64xf32>
    %c0_110 = arith.constant 0 : index
    %c0_111 = arith.constant 0 : index
    %270 = vector.load %arg25[%c0_110, %c0_111] : memref<64x32xbf16, #tpu.memory_space<vmem>>, vector<64x32xbf16>
    %c0_112 = arith.constant 0 : index
    %c0_113 = arith.constant 0 : index
    %271 = vector.load %arg26[%c0_112, %c0_113] : memref<1x32xf32, #tpu.memory_space<vmem>>, vector<1x32xf32>
    %272 = arith.truncf %267 : vector<8x32xf32> to vector<8x32xbf16>
    %cst_114 = arith.constant dense<0.000000e+00> : vector<8x64xf32>
    %273 = tpu.matmul %272, %268, %cst_114 {dimension_numbers = #tpu.dot_dimension_numbers<[1], [0], [0], [1], [0, 0, 1, 1], [], []>} : vector<8x32xbf16>, vector<32x64xbf16>, vector<8x64xf32> -> vector<8x64xf32>
    %274 = vector.broadcast %269 : vector<1x64xf32> to vector<8x64xf32>
    %275 = arith.addf %273, %274 : vector<8x64xf32>
    %cst_115 = arith.constant 0.000000e+00 : f32
    %276 = vector.broadcast %cst_115 : f32 to vector<8x64xf32>
    %277 = arith.maximumf %275, %276 : vector<8x64xf32>
    %278 = arith.truncf %277 : vector<8x64xf32> to vector<8x64xbf16>
    %cst_116 = arith.constant dense<0.000000e+00> : vector<8x32xf32>
    %279 = tpu.matmul %278, %270, %cst_116 {dimension_numbers = #tpu.dot_dimension_numbers<[1], [0], [0], [1], [0, 0, 1, 1], [], []>} : vector<8x64xbf16>, vector<64x32xbf16>, vector<8x32xf32> -> vector<8x32xf32>
    %280 = vector.broadcast %271 : vector<1x32xf32> to vector<8x32xf32>
    %281 = arith.addf %279, %280 : vector<8x32xf32>
    %282 = arith.addf %281, %267 : vector<8x32xf32>
    %c0_117 = arith.constant 0 : index
    %c0_118 = arith.constant 0 : index
    %283 = vector.load %arg27[%c0_117, %c0_118] : memref<1x32xf32, #tpu.memory_space<vmem>>, vector<1x32xf32>
    %c0_119 = arith.constant 0 : index
    %c0_120 = arith.constant 0 : index
    %284 = vector.load %arg28[%c0_119, %c0_120] : memref<1x32xf32, #tpu.memory_space<vmem>>, vector<1x32xf32>
    %cst_121 = arith.constant dense<0.000000e+00> : vector<8xf32>
    %285 = vector.multi_reduction <add>, %282, %cst_121 [1] : vector<8x32xf32> to vector<8xf32>
    %286 = vector.shape_cast %285 : vector<8xf32> to vector<8x1xf32>
    %cst_122 = arith.constant 3.200000e+01 : f32
    %287 = vector.broadcast %cst_122 : f32 to vector<8x1xf32>
    %288 = arith.divf %286, %287 : vector<8x1xf32>
    %289 = arith.mulf %282, %282 : vector<8x32xf32>
    %cst_123 = arith.constant dense<0.000000e+00> : vector<8xf32>
    %290 = vector.multi_reduction <add>, %289, %cst_123 [1] : vector<8x32xf32> to vector<8xf32>
    %291 = vector.shape_cast %290 : vector<8xf32> to vector<8x1xf32>
    %cst_124 = arith.constant 3.200000e+01 : f32
    %292 = vector.broadcast %cst_124 : f32 to vector<8x1xf32>
    %293 = arith.divf %291, %292 : vector<8x1xf32>
    %294 = arith.mulf %288, %288 : vector<8x1xf32>
    %295 = arith.subf %293, %294 : vector<8x1xf32>
    %cst_125 = arith.constant 0.000000e+00 : f32
    %296 = vector.broadcast %cst_125 : f32 to vector<8x1xf32>
    %297 = arith.maximumf %295, %296 : vector<8x1xf32>
    %298 = vector.broadcast %288 : vector<8x1xf32> to vector<8x32xf32>
    %299 = arith.subf %282, %298 : vector<8x32xf32>
    %cst_126 = arith.constant 9.99999974E-6 : f32
    %300 = vector.broadcast %cst_126 : f32 to vector<8x1xf32>
    %301 = arith.addf %297, %300 : vector<8x1xf32>
    %302 = math.rsqrt %301 : vector<8x1xf32>
    %303 = vector.broadcast %302 : vector<8x1xf32> to vector<8x32xf32>
    %304 = arith.mulf %299, %303 : vector<8x32xf32>
    %305 = vector.broadcast %283 : vector<1x32xf32> to vector<8x32xf32>
    %306 = arith.mulf %304, %305 : vector<8x32xf32>
    %307 = vector.broadcast %284 : vector<1x32xf32> to vector<8x32xf32>
    %308 = arith.addf %306, %307 : vector<8x32xf32>
    %c0_127 = arith.constant 0 : index
    %c0_128 = arith.constant 0 : index
    %c0_129 = arith.constant 0 : index
    %309 = vector.load %arg29[%c0_127, %c0_128, %c0_129] : memref<1x8x32xf32, #tpu.memory_space<vmem>>, vector<1x8x32xf32>
    %310 = vector.shape_cast %309 : vector<1x8x32xf32> to vector<8x32xf32>
    %311 = vector.shape_cast %308 : vector<8x32xf32> to vector<1x8x32xf32>
    tpu.vector_store %arg29[%c0_127, %c0_128, %c0_129], %311 {strides = array<i32>} : memref<1x8x32xf32, #tpu.memory_space<vmem>>, vector<1x8x32xf32>,
    return
  }
  func.func @transform_0(%arg0: i32) -> (i32, i32, i32) {
    %c0_i32 = arith.constant 0 : i32
    %c0_i32_0 = arith.constant 0 : i32
    %c0_i32_1 = arith.constant 0 : i32
    return %arg0, %c0_i32, %c0_i32_0 : i32, i32, i32
  }
  func.func @transform_1(%arg0: i32) -> (i32, i32, i32) {
    %c0_i32 = arith.constant 0 : i32
    %c0_i32_0 = arith.constant 0 : i32
    %c0_i32_1 = arith.constant 0 : i32
    return %arg0, %c0_i32, %c0_i32_0 : i32, i32, i32
  }
  func.func @transform_2(%arg0: i32) -> (i32, i32) {
    %c0_i32 = arith.constant 0 : i32
    %c0_i32_0 = arith.constant 0 : i32
    %c0_i32_1 = arith.constant 0 : i32
    return %c0_i32, %c0_i32_0 : i32, i32
  }
  func.func @transform_3(%arg0: i32) -> (i32, i32) {
    %c0_i32 = arith.constant 0 : i32
    %c0_i32_0 = arith.constant 0 : i32
    %c0_i32_1 = arith.constant 0 : i32
    return %c0_i32, %c0_i32_0 : i32, i32
  }
  func.func @transform_4(%arg0: i32) -> (i32, i32) {
    %c0_i32 = arith.constant 0 : i32
    %c0_i32_0 = arith.constant 0 : i32
    %c0_i32_1 = arith.constant 0 : i32
    return %c0_i32, %c0_i32_0 : i32, i32
  }
  func.func @transform_5(%arg0: i32) -> (i32, i32) {
    %c0_i32 = arith.constant 0 : i32
    %c0_i32_0 = arith.constant 0 : i32
    %c0_i32_1 = arith.constant 0 : i32
    return %c0_i32, %c0_i32_0 : i32, i32
  }
  func.func @transform_6(%arg0: i32) -> (i32, i32) {
    %c0_i32 = arith.constant 0 : i32
    %c0_i32_0 = arith.constant 0 : i32
    %c0_i32_1 = arith.constant 0 : i32
    return %c0_i32, %c0_i32_0 : i32, i32
  }
  func.func @transform_7(%arg0: i32) -> (i32, i32) {
    %c0_i32 = arith.constant 0 : i32
    %c0_i32_0 = arith.constant 0 : i32
    %c0_i32_1 = arith.constant 0 : i32
    return %c0_i32, %c0_i32_0 : i32, i32
  }
  func.func @transform_8(%arg0: i32) -> (i32, i32) {
    %c0_i32 = arith.constant 0 : i32
    %c0_i32_0 = arith.constant 0 : i32
    %c0_i32_1 = arith.constant 0 : i32
    return %c0_i32, %c0_i32_0 : i32, i32
  }
  func.func @transform_9(%arg0: i32) -> (i32, i32) {
    %c0_i32 = arith.constant 0 : i32
    %c0_i32_0 = arith.constant 0 : i32
    %c0_i32_1 = arith.constant 0 : i32
    return %c0_i32, %c0_i32_0 : i32, i32
  }
  func.func @transform_10(%arg0: i32) -> (i32, i32) {
    %c0_i32 = arith.constant 0 : i32
    %c0_i32_0 = arith.constant 0 : i32
    %c0_i32_1 = arith.constant 0 : i32
    return %c0_i32, %c0_i32_0 : i32, i32
  }
  func.func @transform_11(%arg0: i32) -> (i32, i32) {
    %c0_i32 = arith.constant 0 : i32
    %c0_i32_0 = arith.constant 0 : i32
    %c0_i32_1 = arith.constant 0 : i32
    return %c0_i32, %c0_i32_0 : i32, i32
  }
  func.func @transform_12(%arg0: i32) -> (i32, i32) {
    %c0_i32 = arith.constant 0 : i32
    %c0_i32_0 = arith.constant 0 : i32
    %c0_i32_1 = arith.constant 0 : i32
    return %c0_i32, %c0_i32_0 : i32, i32
  }
  func.func @transform_13(%arg0: i32) -> (i32, i32) {
    %c0_i32 = arith.constant 0 : i32
    %c0_i32_0 = arith.constant 0 : i32
    %c0_i32_1 = arith.constant 0 : i32
    return %c0_i32, %c0_i32_0 : i32, i32
  }
  func.func @transform_14(%arg0: i32) -> (i32, i32) {
    %c0_i32 = arith.constant 0 : i32
    %c0_i32_0 = arith.constant 0 : i32
    %c0_i32_1 = arith.constant 0 : i32
    return %c0_i32, %c0_i32_0 : i32, i32
  }
  func.func @transform_15(%arg0: i32) -> (i32, i32) {
    %c0_i32 = arith.constant 0 : i32
    %c0_i32_0 = arith.constant 0 : i32
    %c0_i32_1 = arith.constant 0 : i32
    return %c0_i32, %c0_i32_0 : i32, i32
  }
  func.func @transform_16(%arg0: i32) -> (i32, i32) {
    %c0_i32 = arith.constant 0 : i32
    %c0_i32_0 = arith.constant 0 : i32
    %c0_i32_1 = arith.constant 0 : i32
    return %c0_i32, %c0_i32_0 : i32, i32
  }
  func.func @transform_17(%arg0: i32) -> (i32, i32) {
    %c0_i32 = arith.constant 0 : i32
    %c0_i32_0 = arith.constant 0 : i32
    %c0_i32_1 = arith.constant 0 : i32
    return %c0_i32, %c0_i32_0 : i32, i32
  }
  func.func @transform_18(%arg0: i32) -> (i32, i32) {
    %c0_i32 = arith.constant 0 : i32
    %c0_i32_0 = arith.constant 0 : i32
    %c0_i32_1 = arith.constant 0 : i32
    return %c0_i32, %c0_i32_0 : i32, i32
  }
  func.func @transform_19(%arg0: i32) -> (i32, i32) {
    %c0_i32 = arith.constant 0 : i32
    %c0_i32_0 = arith.constant 0 : i32
    %c0_i32_1 = arith.constant 0 : i32
    return %c0_i32, %c0_i32_0 : i32, i32
  }
  func.func @transform_20(%arg0: i32) -> (i32, i32) {
    %c0_i32 = arith.constant 0 : i32
    %c0_i32_0 = arith.constant 0 : i32
    %c0_i32_1 = arith.constant 0 : i32
    return %c0_i32, %c0_i32_0 : i32, i32
  }
  func.func @transform_21(%arg0: i32) -> (i32, i32) {
    %c0_i32 = arith.constant 0 : i32
    %c0_i32_0 = arith.constant 0 : i32
    %c0_i32_1 = arith.constant 0 : i32
    return %c0_i32, %c0_i32_0 : i32, i32
  }
  func.func @transform_22(%arg0: i32) -> (i32, i32) {
    %c0_i32 = arith.constant 0 : i32
    %c0_i32_0 = arith.constant 0 : i32
    %c0_i32_1 = arith.constant 0 : i32
    return %c0_i32, %c0_i32_0 : i32, i32
  }
  func.func @transform_23(%arg0: i32) -> (i32, i32) {
    %c0_i32 = arith.constant 0 : i32
    %c0_i32_0 = arith.constant 0 : i32
    %c0_i32_1 = arith.constant 0 : i32
    return %c0_i32, %c0_i32_0 : i32, i32
  }
  func.func @transform_24(%arg0: i32) -> (i32, i32) {
    %c0_i32 = arith.constant 0 : i32
    %c0_i32_0 = arith.constant 0 : i32
    %c0_i32_1 = arith.constant 0 : i32
    return %c0_i32, %c0_i32_0 : i32, i32
  }
  func.func @transform_25(%arg0: i32) -> (i32, i32) {
    %c0_i32 = arith.constant 0 : i32
    %c0_i32_0 = arith.constant 0 : i32
    %c0_i32_1 = arith.constant 0 : i32
    return %c0_i32, %c0_i32_0 : i32, i32
  }
  func.func @transform_26(%arg0: i32) -> (i32, i32) {
    %c0_i32 = arith.constant 0 : i32
    %c0_i32_0 = arith.constant 0 : i32
    %c0_i32_1 = arith.constant 0 : i32
    return %c0_i32, %c0_i32_0 : i32, i32
  }
  func.func @transform_27(%arg0: i32) -> (i32, i32) {
    %c0_i32 = arith.constant 0 : i32
    %c0_i32_0 = arith.constant 0 : i32
    %c0_i32_1 = arith.constant 0 : i32
    return %c0_i32, %c0_i32_0 : i32, i32
  }
  func.func @transform_28(%arg0: i32) -> (i32, i32, i32) {
    %c0_i32 = arith.constant 0 : i32
    %c0_i32_0 = arith.constant 0 : i32
    %c0_i32_1 = arith.constant 0 : i32
    return %arg0, %c0_i32, %c0_i32_0 : i32, i32, i32
  }
}

module attributes {stable_mosaic.version = 11 : i64} {
  func.func @encoder_layer_kernel(%arg0: i32, %arg1: memref<1x8x32xf32, #tpu.memory_space<vmem>>, %arg2: memref<32x96xbf16, #tpu.memory_space<vmem>>, %arg3: memref<1x96xf32, #tpu.memory_space<vmem>>, %arg4: memref<32x32xbf16, #tpu.memory_space<vmem>>, %arg5: memref<1x32xf32, #tpu.memory_space<vmem>>, %arg6: memref<1x32xf32, #tpu.memory_space<vmem>>, %arg7: memref<1x32xf32, #tpu.memory_space<vmem>>, %arg8: memref<32x64xbf16, #tpu.memory_space<vmem>>, %arg9: memref<1x64xf32, #tpu.memory_space<vmem>>, %arg10: memref<64x32xbf16, #tpu.memory_space<vmem>>, %arg11: memref<1x32xf32, #tpu.memory_space<vmem>>, %arg12: memref<1x32xf32, #tpu.memory_space<vmem>>, %arg13: memref<1x32xf32, #tpu.memory_space<vmem>>, %arg14: memref<1x8x32xf32, #tpu.memory_space<vmem>>) attributes {dimension_semantics = [#tpu.dimension_semantics<parallel>], iteration_bounds = array<i64: 2>, scalar_prefetch = 0 : i64, scratch_operands = 0 : i64, tpu.core_type = #tpu.core_type<tc>, window_params = [{transform_indices = @transform_0, window_bounds = array<i64: 1, 8, 32>}, {pipeline_mode = #tpu.pipeline_mode<synchronous>, transform_indices = @transform_1, window_bounds = array<i64: 32, 96>}, {pipeline_mode = #tpu.pipeline_mode<synchronous>, transform_indices = @transform_2, window_bounds = array<i64: 1, 96>}, {pipeline_mode = #tpu.pipeline_mode<synchronous>, transform_indices = @transform_3, window_bounds = array<i64: 32, 32>}, {pipeline_mode = #tpu.pipeline_mode<synchronous>, transform_indices = @transform_4, window_bounds = array<i64: 1, 32>}, {pipeline_mode = #tpu.pipeline_mode<synchronous>, transform_indices = @transform_5, window_bounds = array<i64: 1, 32>}, {pipeline_mode = #tpu.pipeline_mode<synchronous>, transform_indices = @transform_6, window_bounds = array<i64: 1, 32>}, {pipeline_mode = #tpu.pipeline_mode<synchronous>, transform_indices = @transform_7, window_bounds = array<i64: 32, 64>}, {pipeline_mode = #tpu.pipeline_mode<synchronous>, transform_indices = @transform_8, window_bounds = array<i64: 1, 64>}, {pipeline_mode = #tpu.pipeline_mode<synchronous>, transform_indices = @transform_9, window_bounds = array<i64: 64, 32>}, {pipeline_mode = #tpu.pipeline_mode<synchronous>, transform_indices = @transform_10, window_bounds = array<i64: 1, 32>}, {pipeline_mode = #tpu.pipeline_mode<synchronous>, transform_indices = @transform_11, window_bounds = array<i64: 1, 32>}, {pipeline_mode = #tpu.pipeline_mode<synchronous>, transform_indices = @transform_12, window_bounds = array<i64: 1, 32>}, {transform_indices = @transform_13, window_bounds = array<i64: 1, 8, 32>}]} {
    %c0 = arith.constant 0 : index
    %c0_0 = arith.constant 0 : index
    %c0_1 = arith.constant 0 : index
    %0 = vector.load %arg1[%c0, %c0_0, %c0_1] : memref<1x8x32xf32, #tpu.memory_space<vmem>>, vector<1x8x32xf32>
    %1 = vector.shape_cast %0 : vector<1x8x32xf32> to vector<8x32xf32>
    %c0_2 = arith.constant 0 : index
    %c0_3 = arith.constant 0 : index
    %2 = vector.load %arg2[%c0_2, %c0_3] : memref<32x96xbf16, #tpu.memory_space<vmem>>, vector<32x96xbf16>
    %c0_4 = arith.constant 0 : index
    %c0_5 = arith.constant 0 : index
    %3 = vector.load %arg3[%c0_4, %c0_5] : memref<1x96xf32, #tpu.memory_space<vmem>>, vector<1x96xf32>
    %4 = arith.truncf %1 : vector<8x32xf32> to vector<8x32xbf16>
    %cst = arith.constant dense<0.000000e+00> : vector<8x96xf32>
    %5 = tpu.matmul %4, %2, %cst {dimension_numbers = #tpu.dot_dimension_numbers<[1], [0], [0], [1], [0, 0, 1, 1], [], []>} : vector<8x32xbf16>, vector<32x96xbf16>, vector<8x96xf32> -> vector<8x96xf32>
    %6 = vector.broadcast %3 : vector<1x96xf32> to vector<8x96xf32>
    %7 = arith.addf %5, %6 : vector<8x96xf32>
    %8 = vector.extract_strided_slice %7 {offsets = [0, 0], sizes = [8, 32], strides = [1, 1]} : vector<8x96xf32> to vector<8x32xf32>
    %9 = vector.extract_strided_slice %7 {offsets = [0, 32], sizes = [8, 32], strides = [1, 1]} : vector<8x96xf32> to vector<8x32xf32>
    %10 = vector.extract_strided_slice %7 {offsets = [0, 64], sizes = [8, 32], strides = [1, 1]} : vector<8x96xf32> to vector<8x32xf32>
    %11 = vector.extract_strided_slice %8 {offsets = [0, 0], sizes = [8, 8], strides = [1, 1]} : vector<8x32xf32> to vector<8x8xf32>
    %12 = vector.extract_strided_slice %9 {offsets = [0, 0], sizes = [8, 8], strides = [1, 1]} : vector<8x32xf32> to vector<8x8xf32>
    %13 = vector.extract_strided_slice %10 {offsets = [0, 0], sizes = [8, 8], strides = [1, 1]} : vector<8x32xf32> to vector<8x8xf32>
    %cst_6 = arith.constant dense<0.000000e+00> : vector<8x8xf32>
    %14 = tpu.matmul %11, %12, %cst_6 {dimension_numbers = #tpu.dot_dimension_numbers<[1], [1], [0], [0], [0, 0, 1, 0], [], []>} : vector<8x8xf32>, vector<8x8xf32>, vector<8x8xf32> -> vector<8x8xf32>
    %cst_7 = arith.constant dense<0xFF800000> : vector<8xf32>
    %15 = vector.multi_reduction <maximumf>, %14, %cst_7 [1] : vector<8x8xf32> to vector<8xf32>
    %16 = vector.shape_cast %15 : vector<8xf32> to vector<8x1xf32>
    %17 = vector.broadcast %16 : vector<8x1xf32> to vector<8x8xf32>
    %18 = arith.subf %14, %17 : vector<8x8xf32>
    %19 = math.exp %18 : vector<8x8xf32>
    %cst_8 = arith.constant dense<0.000000e+00> : vector<8xf32>
    %20 = vector.multi_reduction <add>, %19, %cst_8 [1] : vector<8x8xf32> to vector<8xf32>
    %21 = vector.shape_cast %20 : vector<8xf32> to vector<8x1xf32>
    %22 = vector.broadcast %21 : vector<8x1xf32> to vector<8x8xf32>
    %23 = arith.divf %19, %22 : vector<8x8xf32>
    %cst_9 = arith.constant dense<0.000000e+00> : vector<8x8xf32>
    %24 = tpu.matmul %23, %13, %cst_9 {dimension_numbers = #tpu.dot_dimension_numbers<[1], [0], [0], [1], [0, 0, 1, 1], [], []>} : vector<8x8xf32>, vector<8x8xf32>, vector<8x8xf32> -> vector<8x8xf32>
    %25 = vector.extract_strided_slice %8 {offsets = [0, 8], sizes = [8, 8], strides = [1, 1]} : vector<8x32xf32> to vector<8x8xf32>
    %26 = vector.extract_strided_slice %9 {offsets = [0, 8], sizes = [8, 8], strides = [1, 1]} : vector<8x32xf32> to vector<8x8xf32>
    %27 = vector.extract_strided_slice %10 {offsets = [0, 8], sizes = [8, 8], strides = [1, 1]} : vector<8x32xf32> to vector<8x8xf32>
    %cst_10 = arith.constant dense<0.000000e+00> : vector<8x8xf32>
    %28 = tpu.matmul %25, %26, %cst_10 {dimension_numbers = #tpu.dot_dimension_numbers<[1], [1], [0], [0], [0, 0, 1, 0], [], []>} : vector<8x8xf32>, vector<8x8xf32>, vector<8x8xf32> -> vector<8x8xf32>
    %cst_11 = arith.constant dense<0xFF800000> : vector<8xf32>
    %29 = vector.multi_reduction <maximumf>, %28, %cst_11 [1] : vector<8x8xf32> to vector<8xf32>
    %30 = vector.shape_cast %29 : vector<8xf32> to vector<8x1xf32>
    %31 = vector.broadcast %30 : vector<8x1xf32> to vector<8x8xf32>
    %32 = arith.subf %28, %31 : vector<8x8xf32>
    %33 = math.exp %32 : vector<8x8xf32>
    %cst_12 = arith.constant dense<0.000000e+00> : vector<8xf32>
    %34 = vector.multi_reduction <add>, %33, %cst_12 [1] : vector<8x8xf32> to vector<8xf32>
    %35 = vector.shape_cast %34 : vector<8xf32> to vector<8x1xf32>
    %36 = vector.broadcast %35 : vector<8x1xf32> to vector<8x8xf32>
    %37 = arith.divf %33, %36 : vector<8x8xf32>
    %cst_13 = arith.constant dense<0.000000e+00> : vector<8x8xf32>
    %38 = tpu.matmul %37, %27, %cst_13 {dimension_numbers = #tpu.dot_dimension_numbers<[1], [0], [0], [1], [0, 0, 1, 1], [], []>} : vector<8x8xf32>, vector<8x8xf32>, vector<8x8xf32> -> vector<8x8xf32>
    %39 = vector.extract_strided_slice %8 {offsets = [0, 16], sizes = [8, 8], strides = [1, 1]} : vector<8x32xf32> to vector<8x8xf32>
    %40 = vector.extract_strided_slice %9 {offsets = [0, 16], sizes = [8, 8], strides = [1, 1]} : vector<8x32xf32> to vector<8x8xf32>
    %41 = vector.extract_strided_slice %10 {offsets = [0, 16], sizes = [8, 8], strides = [1, 1]} : vector<8x32xf32> to vector<8x8xf32>
    %cst_14 = arith.constant dense<0.000000e+00> : vector<8x8xf32>
    %42 = tpu.matmul %39, %40, %cst_14 {dimension_numbers = #tpu.dot_dimension_numbers<[1], [1], [0], [0], [0, 0, 1, 0], [], []>} : vector<8x8xf32>, vector<8x8xf32>, vector<8x8xf32> -> vector<8x8xf32>
    %cst_15 = arith.constant dense<0xFF800000> : vector<8xf32>
    %43 = vector.multi_reduction <maximumf>, %42, %cst_15 [1] : vector<8x8xf32> to vector<8xf32>
    %44 = vector.shape_cast %43 : vector<8xf32> to vector<8x1xf32>
    %45 = vector.broadcast %44 : vector<8x1xf32> to vector<8x8xf32>
    %46 = arith.subf %42, %45 : vector<8x8xf32>
    %47 = math.exp %46 : vector<8x8xf32>
    %cst_16 = arith.constant dense<0.000000e+00> : vector<8xf32>
    %48 = vector.multi_reduction <add>, %47, %cst_16 [1] : vector<8x8xf32> to vector<8xf32>
    %49 = vector.shape_cast %48 : vector<8xf32> to vector<8x1xf32>
    %50 = vector.broadcast %49 : vector<8x1xf32> to vector<8x8xf32>
    %51 = arith.divf %47, %50 : vector<8x8xf32>
    %cst_17 = arith.constant dense<0.000000e+00> : vector<8x8xf32>
    %52 = tpu.matmul %51, %41, %cst_17 {dimension_numbers = #tpu.dot_dimension_numbers<[1], [0], [0], [1], [0, 0, 1, 1], [], []>} : vector<8x8xf32>, vector<8x8xf32>, vector<8x8xf32> -> vector<8x8xf32>
    %53 = vector.extract_strided_slice %8 {offsets = [0, 24], sizes = [8, 8], strides = [1, 1]} : vector<8x32xf32> to vector<8x8xf32>
    %54 = vector.extract_strided_slice %9 {offsets = [0, 24], sizes = [8, 8], strides = [1, 1]} : vector<8x32xf32> to vector<8x8xf32>
    %55 = vector.extract_strided_slice %10 {offsets = [0, 24], sizes = [8, 8], strides = [1, 1]} : vector<8x32xf32> to vector<8x8xf32>
    %cst_18 = arith.constant dense<0.000000e+00> : vector<8x8xf32>
    %56 = tpu.matmul %53, %54, %cst_18 {dimension_numbers = #tpu.dot_dimension_numbers<[1], [1], [0], [0], [0, 0, 1, 0], [], []>} : vector<8x8xf32>, vector<8x8xf32>, vector<8x8xf32> -> vector<8x8xf32>
    %cst_19 = arith.constant dense<0xFF800000> : vector<8xf32>
    %57 = vector.multi_reduction <maximumf>, %56, %cst_19 [1] : vector<8x8xf32> to vector<8xf32>
    %58 = vector.shape_cast %57 : vector<8xf32> to vector<8x1xf32>
    %59 = vector.broadcast %58 : vector<8x1xf32> to vector<8x8xf32>
    %60 = arith.subf %56, %59 : vector<8x8xf32>
    %61 = math.exp %60 : vector<8x8xf32>
    %cst_20 = arith.constant dense<0.000000e+00> : vector<8xf32>
    %62 = vector.multi_reduction <add>, %61, %cst_20 [1] : vector<8x8xf32> to vector<8xf32>
    %63 = vector.shape_cast %62 : vector<8xf32> to vector<8x1xf32>
    %64 = vector.broadcast %63 : vector<8x1xf32> to vector<8x8xf32>
    %65 = arith.divf %61, %64 : vector<8x8xf32>
    %cst_21 = arith.constant dense<0.000000e+00> : vector<8x8xf32>
    %66 = tpu.matmul %65, %55, %cst_21 {dimension_numbers = #tpu.dot_dimension_numbers<[1], [0], [0], [1], [0, 0, 1, 1], [], []>} : vector<8x8xf32>, vector<8x8xf32>, vector<8x8xf32> -> vector<8x8xf32>
    %67 = tpu.concatenate %24, %38, %52, %66 in 1 : vector<8x8xf32>, vector<8x8xf32>, vector<8x8xf32>, vector<8x8xf32> -> vector<8x32xf32>
    %c0_22 = arith.constant 0 : index
    %c0_23 = arith.constant 0 : index
    %68 = vector.load %arg4[%c0_22, %c0_23] : memref<32x32xbf16, #tpu.memory_space<vmem>>, vector<32x32xbf16>
    %c0_24 = arith.constant 0 : index
    %c0_25 = arith.constant 0 : index
    %69 = vector.load %arg5[%c0_24, %c0_25] : memref<1x32xf32, #tpu.memory_space<vmem>>, vector<1x32xf32>
    %70 = arith.truncf %67 : vector<8x32xf32> to vector<8x32xbf16>
    %cst_26 = arith.constant dense<0.000000e+00> : vector<8x32xf32>
    %71 = tpu.matmul %70, %68, %cst_26 {dimension_numbers = #tpu.dot_dimension_numbers<[1], [0], [0], [1], [0, 0, 1, 1], [], []>} : vector<8x32xbf16>, vector<32x32xbf16>, vector<8x32xf32> -> vector<8x32xf32>
    %72 = vector.broadcast %69 : vector<1x32xf32> to vector<8x32xf32>
    %73 = arith.addf %71, %72 : vector<8x32xf32>
    %74 = arith.addf %73, %1 : vector<8x32xf32>
    %c0_27 = arith.constant 0 : index
    %c0_28 = arith.constant 0 : index
    %75 = vector.load %arg6[%c0_27, %c0_28] : memref<1x32xf32, #tpu.memory_space<vmem>>, vector<1x32xf32>
    %c0_29 = arith.constant 0 : index
    %c0_30 = arith.constant 0 : index
    %76 = vector.load %arg7[%c0_29, %c0_30] : memref<1x32xf32, #tpu.memory_space<vmem>>, vector<1x32xf32>
    %cst_31 = arith.constant dense<0.000000e+00> : vector<8xf32>
    %77 = vector.multi_reduction <add>, %74, %cst_31 [1] : vector<8x32xf32> to vector<8xf32>
    %78 = vector.shape_cast %77 : vector<8xf32> to vector<8x1xf32>
    %cst_32 = arith.constant 3.200000e+01 : f32
    %79 = vector.broadcast %cst_32 : f32 to vector<8x1xf32>
    %80 = arith.divf %78, %79 : vector<8x1xf32>
    %81 = arith.mulf %74, %74 : vector<8x32xf32>
    %cst_33 = arith.constant dense<0.000000e+00> : vector<8xf32>
    %82 = vector.multi_reduction <add>, %81, %cst_33 [1] : vector<8x32xf32> to vector<8xf32>
    %83 = vector.shape_cast %82 : vector<8xf32> to vector<8x1xf32>
    %cst_34 = arith.constant 3.200000e+01 : f32
    %84 = vector.broadcast %cst_34 : f32 to vector<8x1xf32>
    %85 = arith.divf %83, %84 : vector<8x1xf32>
    %86 = arith.mulf %80, %80 : vector<8x1xf32>
    %87 = arith.subf %85, %86 : vector<8x1xf32>
    %cst_35 = arith.constant 0.000000e+00 : f32
    %88 = vector.broadcast %cst_35 : f32 to vector<8x1xf32>
    %89 = arith.maximumf %87, %88 : vector<8x1xf32>
    %90 = vector.broadcast %80 : vector<8x1xf32> to vector<8x32xf32>
    %91 = arith.subf %74, %90 : vector<8x32xf32>
    %cst_36 = arith.constant 9.99999974E-6 : f32
    %92 = vector.broadcast %cst_36 : f32 to vector<8x1xf32>
    %93 = arith.addf %89, %92 : vector<8x1xf32>
    %94 = math.rsqrt %93 : vector<8x1xf32>
    %95 = vector.broadcast %94 : vector<8x1xf32> to vector<8x32xf32>
    %96 = arith.mulf %91, %95 : vector<8x32xf32>
    %97 = vector.broadcast %75 : vector<1x32xf32> to vector<8x32xf32>
    %98 = arith.mulf %96, %97 : vector<8x32xf32>
    %99 = vector.broadcast %76 : vector<1x32xf32> to vector<8x32xf32>
    %100 = arith.addf %98, %99 : vector<8x32xf32>
    %c0_37 = arith.constant 0 : index
    %c0_38 = arith.constant 0 : index
    %101 = vector.load %arg8[%c0_37, %c0_38] : memref<32x64xbf16, #tpu.memory_space<vmem>>, vector<32x64xbf16>
    %c0_39 = arith.constant 0 : index
    %c0_40 = arith.constant 0 : index
    %102 = vector.load %arg9[%c0_39, %c0_40] : memref<1x64xf32, #tpu.memory_space<vmem>>, vector<1x64xf32>
    %c0_41 = arith.constant 0 : index
    %c0_42 = arith.constant 0 : index
    %103 = vector.load %arg10[%c0_41, %c0_42] : memref<64x32xbf16, #tpu.memory_space<vmem>>, vector<64x32xbf16>
    %c0_43 = arith.constant 0 : index
    %c0_44 = arith.constant 0 : index
    %104 = vector.load %arg11[%c0_43, %c0_44] : memref<1x32xf32, #tpu.memory_space<vmem>>, vector<1x32xf32>
    %105 = arith.truncf %100 : vector<8x32xf32> to vector<8x32xbf16>
    %cst_45 = arith.constant dense<0.000000e+00> : vector<8x64xf32>
    %106 = tpu.matmul %105, %101, %cst_45 {dimension_numbers = #tpu.dot_dimension_numbers<[1], [0], [0], [1], [0, 0, 1, 1], [], []>} : vector<8x32xbf16>, vector<32x64xbf16>, vector<8x64xf32> -> vector<8x64xf32>
    %107 = vector.broadcast %102 : vector<1x64xf32> to vector<8x64xf32>
    %108 = arith.addf %106, %107 : vector<8x64xf32>
    %cst_46 = arith.constant 0.000000e+00 : f32
    %109 = vector.broadcast %cst_46 : f32 to vector<8x64xf32>
    %110 = arith.maximumf %108, %109 : vector<8x64xf32>
    %111 = arith.truncf %110 : vector<8x64xf32> to vector<8x64xbf16>
    %cst_47 = arith.constant dense<0.000000e+00> : vector<8x32xf32>
    %112 = tpu.matmul %111, %103, %cst_47 {dimension_numbers = #tpu.dot_dimension_numbers<[1], [0], [0], [1], [0, 0, 1, 1], [], []>} : vector<8x64xbf16>, vector<64x32xbf16>, vector<8x32xf32> -> vector<8x32xf32>
    %113 = vector.broadcast %104 : vector<1x32xf32> to vector<8x32xf32>
    %114 = arith.addf %112, %113 : vector<8x32xf32>
    %115 = arith.addf %114, %100 : vector<8x32xf32>
    %c0_48 = arith.constant 0 : index
    %c0_49 = arith.constant 0 : index
    %116 = vector.load %arg12[%c0_48, %c0_49] : memref<1x32xf32, #tpu.memory_space<vmem>>, vector<1x32xf32>
    %c0_50 = arith.constant 0 : index
    %c0_51 = arith.constant 0 : index
    %117 = vector.load %arg13[%c0_50, %c0_51] : memref<1x32xf32, #tpu.memory_space<vmem>>, vector<1x32xf32>
    %cst_52 = arith.constant dense<0.000000e+00> : vector<8xf32>
    %118 = vector.multi_reduction <add>, %115, %cst_52 [1] : vector<8x32xf32> to vector<8xf32>
    %119 = vector.shape_cast %118 : vector<8xf32> to vector<8x1xf32>
    %cst_53 = arith.constant 3.200000e+01 : f32
    %120 = vector.broadcast %cst_53 : f32 to vector<8x1xf32>
    %121 = arith.divf %119, %120 : vector<8x1xf32>
    %122 = arith.mulf %115, %115 : vector<8x32xf32>
    %cst_54 = arith.constant dense<0.000000e+00> : vector<8xf32>
    %123 = vector.multi_reduction <add>, %122, %cst_54 [1] : vector<8x32xf32> to vector<8xf32>
    %124 = vector.shape_cast %123 : vector<8xf32> to vector<8x1xf32>
    %cst_55 = arith.constant 3.200000e+01 : f32
    %125 = vector.broadcast %cst_55 : f32 to vector<8x1xf32>
    %126 = arith.divf %124, %125 : vector<8x1xf32>
    %127 = arith.mulf %121, %121 : vector<8x1xf32>
    %128 = arith.subf %126, %127 : vector<8x1xf32>
    %cst_56 = arith.constant 0.000000e+00 : f32
    %129 = vector.broadcast %cst_56 : f32 to vector<8x1xf32>
    %130 = arith.maximumf %128, %129 : vector<8x1xf32>
    %131 = vector.broadcast %121 : vector<8x1xf32> to vector<8x32xf32>
    %132 = arith.subf %115, %131 : vector<8x32xf32>
    %cst_57 = arith.constant 9.99999974E-6 : f32
    %133 = vector.broadcast %cst_57 : f32 to vector<8x1xf32>
    %134 = arith.addf %130, %133 : vector<8x1xf32>
    %135 = math.rsqrt %134 : vector<8x1xf32>
    %136 = vector.broadcast %135 : vector<8x1xf32> to vector<8x32xf32>
    %137 = arith.mulf %132, %136 : vector<8x32xf32>
    %138 = vector.broadcast %116 : vector<1x32xf32> to vector<8x32xf32>
    %139 = arith.mulf %137, %138 : vector<8x32xf32>
    %140 = vector.broadcast %117 : vector<1x32xf32> to vector<8x32xf32>
    %141 = arith.addf %139, %140 : vector<8x32xf32>
    %c0_58 = arith.constant 0 : index
    %c0_59 = arith.constant 0 : index
    %c0_60 = arith.constant 0 : index
    %142 = vector.load %arg14[%c0_58, %c0_59, %c0_60] : memref<1x8x32xf32, #tpu.memory_space<vmem>>, vector<1x8x32xf32>
    %143 = vector.shape_cast %142 : vector<1x8x32xf32> to vector<8x32xf32>
    %144 = vector.shape_cast %141 : vector<8x32xf32> to vector<1x8x32xf32>
    tpu.vector_store %arg14[%c0_58, %c0_59, %c0_60], %144 {strides = array<i32>} : memref<1x8x32xf32, #tpu.memory_space<vmem>>, vector<1x8x32xf32>,
    return
  }
  func.func @transform_0(%arg0: i32) -> (i32, i32, i32) {
    %c0_i32 = arith.constant 0 : i32
    %c0_i32_0 = arith.constant 0 : i32
    %c0_i32_1 = arith.constant 0 : i32
    return %arg0, %c0_i32, %c0_i32_0 : i32, i32, i32
  }
  func.func @transform_1(%arg0: i32) -> (i32, i32) {
    %c0_i32 = arith.constant 0 : i32
    %c0_i32_0 = arith.constant 0 : i32
    %c0_i32_1 = arith.constant 0 : i32
    return %c0_i32, %c0_i32_0 : i32, i32
  }
  func.func @transform_2(%arg0: i32) -> (i32, i32) {
    %c0_i32 = arith.constant 0 : i32
    %c0_i32_0 = arith.constant 0 : i32
    %c0_i32_1 = arith.constant 0 : i32
    return %c0_i32, %c0_i32_0 : i32, i32
  }
  func.func @transform_3(%arg0: i32) -> (i32, i32) {
    %c0_i32 = arith.constant 0 : i32
    %c0_i32_0 = arith.constant 0 : i32
    %c0_i32_1 = arith.constant 0 : i32
    return %c0_i32, %c0_i32_0 : i32, i32
  }
  func.func @transform_4(%arg0: i32) -> (i32, i32) {
    %c0_i32 = arith.constant 0 : i32
    %c0_i32_0 = arith.constant 0 : i32
    %c0_i32_1 = arith.constant 0 : i32
    return %c0_i32, %c0_i32_0 : i32, i32
  }
  func.func @transform_5(%arg0: i32) -> (i32, i32) {
    %c0_i32 = arith.constant 0 : i32
    %c0_i32_0 = arith.constant 0 : i32
    %c0_i32_1 = arith.constant 0 : i32
    return %c0_i32, %c0_i32_0 : i32, i32
  }
  func.func @transform_6(%arg0: i32) -> (i32, i32) {
    %c0_i32 = arith.constant 0 : i32
    %c0_i32_0 = arith.constant 0 : i32
    %c0_i32_1 = arith.constant 0 : i32
    return %c0_i32, %c0_i32_0 : i32, i32
  }
  func.func @transform_7(%arg0: i32) -> (i32, i32) {
    %c0_i32 = arith.constant 0 : i32
    %c0_i32_0 = arith.constant 0 : i32
    %c0_i32_1 = arith.constant 0 : i32
    return %c0_i32, %c0_i32_0 : i32, i32
  }
  func.func @transform_8(%arg0: i32) -> (i32, i32) {
    %c0_i32 = arith.constant 0 : i32
    %c0_i32_0 = arith.constant 0 : i32
    %c0_i32_1 = arith.constant 0 : i32
    return %c0_i32, %c0_i32_0 : i32, i32
  }
  func.func @transform_9(%arg0: i32) -> (i32, i32) {
    %c0_i32 = arith.constant 0 : i32
    %c0_i32_0 = arith.constant 0 : i32
    %c0_i32_1 = arith.constant 0 : i32
    return %c0_i32, %c0_i32_0 : i32, i32
  }
  func.func @transform_10(%arg0: i32) -> (i32, i32) {
    %c0_i32 = arith.constant 0 : i32
    %c0_i32_0 = arith.constant 0 : i32
    %c0_i32_1 = arith.constant 0 : i32
    return %c0_i32, %c0_i32_0 : i32, i32
  }
  func.func @transform_11(%arg0: i32) -> (i32, i32) {
    %c0_i32 = arith.constant 0 : i32
    %c0_i32_0 = arith.constant 0 : i32
    %c0_i32_1 = arith.constant 0 : i32
    return %c0_i32, %c0_i32_0 : i32, i32
  }
  func.func @transform_12(%arg0: i32) -> (i32, i32) {
    %c0_i32 = arith.constant 0 : i32
    %c0_i32_0 = arith.constant 0 : i32
    %c0_i32_1 = arith.constant 0 : i32
    return %c0_i32, %c0_i32_0 : i32, i32
  }
  func.func @transform_13(%arg0: i32) -> (i32, i32, i32) {
    %c0_i32 = arith.constant 0 : i32
    %c0_i32_0 = arith.constant 0 : i32
    %c0_i32_1 = arith.constant 0 : i32
    return %arg0, %c0_i32, %c0_i32_0 : i32, i32, i32
  }
}

module attributes {stable_mosaic.version = 11 : i64} {
  func.func @decoder_layer_kernel(%arg0: i32, %arg1: memref<1x8x32xf32, #tpu.memory_space<vmem>>, %arg2: memref<1x8x32xf32, #tpu.memory_space<vmem>>, %arg3: memref<32x96xbf16, #tpu.memory_space<vmem>>, %arg4: memref<1x96xf32, #tpu.memory_space<vmem>>, %arg5: memref<32x32xbf16, #tpu.memory_space<vmem>>, %arg6: memref<1x32xf32, #tpu.memory_space<vmem>>, %arg7: memref<1x32xf32, #tpu.memory_space<vmem>>, %arg8: memref<1x32xf32, #tpu.memory_space<vmem>>, %arg9: memref<32x64xbf16, #tpu.memory_space<vmem>>, %arg10: memref<1x64xf32, #tpu.memory_space<vmem>>, %arg11: memref<64x32xbf16, #tpu.memory_space<vmem>>, %arg12: memref<1x32xf32, #tpu.memory_space<vmem>>, %arg13: memref<1x32xf32, #tpu.memory_space<vmem>>, %arg14: memref<1x32xf32, #tpu.memory_space<vmem>>, %arg15: memref<32x32xbf16, #tpu.memory_space<vmem>>, %arg16: memref<1x32xf32, #tpu.memory_space<vmem>>, %arg17: memref<32x64xbf16, #tpu.memory_space<vmem>>, %arg18: memref<1x64xf32, #tpu.memory_space<vmem>>, %arg19: memref<32x32xbf16, #tpu.memory_space<vmem>>, %arg20: memref<1x32xf32, #tpu.memory_space<vmem>>, %arg21: memref<1x32xf32, #tpu.memory_space<vmem>>, %arg22: memref<1x32xf32, #tpu.memory_space<vmem>>, %arg23: memref<32x64xbf16, #tpu.memory_space<vmem>>, %arg24: memref<1x64xf32, #tpu.memory_space<vmem>>, %arg25: memref<64x32xbf16, #tpu.memory_space<vmem>>, %arg26: memref<1x32xf32, #tpu.memory_space<vmem>>, %arg27: memref<1x32xf32, #tpu.memory_space<vmem>>, %arg28: memref<1x32xf32, #tpu.memory_space<vmem>>, %arg29: memref<1x8x32xf32, #tpu.memory_space<vmem>>) attributes {dimension_semantics = [#tpu.dimension_semantics<parallel>], iteration_bounds = array<i64: 2>, scalar_prefetch = 0 : i64, scratch_operands = 0 : i64, tpu.core_type = #tpu.core_type<tc>, window_params = [{transform_indices = @transform_0, window_bounds = array<i64: 1, 8, 32>}, {transform_indices = @transform_1, window_bounds = array<i64: 1, 8, 32>}, {pipeline_mode = #tpu.pipeline_mode<synchronous>, transform_indices = @transform_2, window_bounds = array<i64: 32, 96>}, {pipeline_mode = #tpu.pipeline_mode<synchronous>, transform_indices = @transform_3, window_bounds = array<i64: 1, 96>}, {pipeline_mode = #tpu.pipeline_mode<synchronous>, transform_indices = @transform_4, window_bounds = array<i64: 32, 32>}, {pipeline_mode = #tpu.pipeline_mode<synchronous>, transform_indices = @transform_5, window_bounds = array<i64: 1, 32>}, {pipeline_mode = #tpu.pipeline_mode<synchronous>, transform_indices = @transform_6, window_bounds = array<i64: 1, 32>}, {pipeline_mode = #tpu.pipeline_mode<synchronous>, transform_indices = @transform_7, window_bounds = array<i64: 1, 32>}, {pipeline_mode = #tpu.pipeline_mode<synchronous>, transform_indices = @transform_8, window_bounds = array<i64: 32, 64>}, {pipeline_mode = #tpu.pipeline_mode<synchronous>, transform_indices = @transform_9, window_bounds = array<i64: 1, 64>}, {pipeline_mode = #tpu.pipeline_mode<synchronous>, transform_indices = @transform_10, window_bounds = array<i64: 64, 32>}, {pipeline_mode = #tpu.pipeline_mode<synchronous>, transform_indices = @transform_11, window_bounds = array<i64: 1, 32>}, {pipeline_mode = #tpu.pipeline_mode<synchronous>, transform_indices = @transform_12, window_bounds = array<i64: 1, 32>}, {pipeline_mode = #tpu.pipeline_mode<synchronous>, transform_indices = @transform_13, window_bounds = array<i64: 1, 32>}, {pipeline_mode = #tpu.pipeline_mode<synchronous>, transform_indices = @transform_14, window_bounds = array<i64: 32, 32>}, {pipeline_mode = #tpu.pipeline_mode<synchronous>, transform_indices = @transform_15, window_bounds = array<i64: 1, 32>}, {pipeline_mode = #tpu.pipeline_mode<synchronous>, transform_indices = @transform_16, window_bounds = array<i64: 32, 64>}, {pipeline_mode = #tpu.pipeline_mode<synchronous>, transform_indices = @transform_17, window_bounds = array<i64: 1, 64>}, {pipeline_mode = #tpu.pipeline_mode<synchronous>, transform_indices = @transform_18, window_bounds = array<i64: 32, 32>}, {pipeline_mode = #tpu.pipeline_mode<synchronous>, transform_indices = @transform_19, window_bounds = array<i64: 1, 32>}, {pipeline_mode = #tpu.pipeline_mode<synchronous>, transform_indices = @transform_20, window_bounds = array<i64: 1, 32>}, {pipeline_mode = #tpu.pipeline_mode<synchronous>, transform_indices = @transform_21, window_bounds = array<i64: 1, 32>}, {pipeline_mode = #tpu.pipeline_mode<synchronous>, transform_indices = @transform_22, window_bounds = array<i64: 32, 64>}, {pipeline_mode = #tpu.pipeline_mode<synchronous>, transform_indices = @transform_23, window_bounds = array<i64: 1, 64>}, {pipeline_mode = #tpu.pipeline_mode<synchronous>, transform_indices = @transform_24, window_bounds = array<i64: 64, 32>}, {pipeline_mode = #tpu.pipeline_mode<synchronous>, transform_indices = @transform_25, window_bounds = array<i64: 1, 32>}, {pipeline_mode = #tpu.pipeline_mode<synchronous>, transform_indices = @transform_26, window_bounds = array<i64: 1, 32>}, {pipeline_mode = #tpu.pipeline_mode<synchronous>, transform_indices = @transform_27, window_bounds = array<i64: 1, 32>}, {transform_indices = @transform_28, window_bounds = array<i64: 1, 8, 32>}]} {
    %c0 = arith.constant 0 : index
    %c0_0 = arith.constant 0 : index
    %c0_1 = arith.constant 0 : index
    %0 = vector.load %arg1[%c0, %c0_0, %c0_1] : memref<1x8x32xf32, #tpu.memory_space<vmem>>, vector<1x8x32xf32>
    %1 = vector.shape_cast %0 : vector<1x8x32xf32> to vector<8x32xf32>
    %c0_2 = arith.constant 0 : index
    %c0_3 = arith.constant 0 : index
    %c0_4 = arith.constant 0 : index
    %2 = vector.load %arg2[%c0_2, %c0_3, %c0_4] : memref<1x8x32xf32, #tpu.memory_space<vmem>>, vector<1x8x32xf32>
    %3 = vector.shape_cast %2 : vector<1x8x32xf32> to vector<8x32xf32>
    %c0_5 = arith.constant 0 : index
    %c0_6 = arith.constant 0 : index
    %4 = vector.load %arg3[%c0_5, %c0_6] : memref<32x96xbf16, #tpu.memory_space<vmem>>, vector<32x96xbf16>
    %c0_7 = arith.constant 0 : index
    %c0_8 = arith.constant 0 : index
    %5 = vector.load %arg4[%c0_7, %c0_8] : memref<1x96xf32, #tpu.memory_space<vmem>>, vector<1x96xf32>
    %6 = arith.truncf %3 : vector<8x32xf32> to vector<8x32xbf16>
    %cst = arith.constant dense<0.000000e+00> : vector<8x96xf32>
    %7 = tpu.matmul %6, %4, %cst {dimension_numbers = #tpu.dot_dimension_numbers<[1], [0], [0], [1], [0, 0, 1, 1], [], []>} : vector<8x32xbf16>, vector<32x96xbf16>, vector<8x96xf32> -> vector<8x96xf32>
    %8 = vector.broadcast %5 : vector<1x96xf32> to vector<8x96xf32>
    %9 = arith.addf %7, %8 : vector<8x96xf32>
    %10 = vector.extract_strided_slice %9 {offsets = [0, 0], sizes = [8, 32], strides = [1, 1]} : vector<8x96xf32> to vector<8x32xf32>
    %11 = vector.extract_strided_slice %9 {offsets = [0, 32], sizes = [8, 32], strides = [1, 1]} : vector<8x96xf32> to vector<8x32xf32>
    %12 = vector.extract_strided_slice %9 {offsets = [0, 64], sizes = [8, 32], strides = [1, 1]} : vector<8x96xf32> to vector<8x32xf32>
    %13 = vector.extract_strided_slice %10 {offsets = [0, 0], sizes = [8, 8], strides = [1, 1]} : vector<8x32xf32> to vector<8x8xf32>
    %14 = vector.extract_strided_slice %11 {offsets = [0, 0], sizes = [8, 8], strides = [1, 1]} : vector<8x32xf32> to vector<8x8xf32>
    %15 = vector.extract_strided_slice %12 {offsets = [0, 0], sizes = [8, 8], strides = [1, 1]} : vector<8x32xf32> to vector<8x8xf32>
    %cst_9 = arith.constant dense<0.000000e+00> : vector<8x8xf32>
    %16 = tpu.matmul %13, %14, %cst_9 {dimension_numbers = #tpu.dot_dimension_numbers<[1], [1], [0], [0], [0, 0, 1, 0], [], []>} : vector<8x8xf32>, vector<8x8xf32>, vector<8x8xf32> -> vector<8x8xf32>
    %17 = tpu.iota {dimensions = array<i32: 0>} : vector<8x8xi32>
    %18 = tpu.iota {dimensions = array<i32: 1>} : vector<8x8xi32>
    %19 = arith.cmpi sgt, %18, %17 : vector<8x8xi32>
    %cst_10 = arith.constant 0xFF800000 : f32
    %20 = vector.broadcast %cst_10 : f32 to vector<8x8xf32>
    %21 = arith.select %19, %20, %16 : vector<8x8xi1>, vector<8x8xf32>
    %cst_11 = arith.constant dense<0xFF800000> : vector<8xf32>
    %22 = vector.multi_reduction <maximumf>, %21, %cst_11 [1] : vector<8x8xf32> to vector<8xf32>
    %23 = vector.shape_cast %22 : vector<8xf32> to vector<8x1xf32>
    %24 = vector.broadcast %23 : vector<8x1xf32> to vector<8x8xf32>
    %25 = arith.subf %21, %24 : vector<8x8xf32>
    %26 = math.exp %25 : vector<8x8xf32>
    %cst_12 = arith.constant dense<0.000000e+00> : vector<8xf32>
    %27 = vector.multi_reduction <add>, %26, %cst_12 [1] : vector<8x8xf32> to vector<8xf32>
    %28 = vector.shape_cast %27 : vector<8xf32> to vector<8x1xf32>
    %29 = vector.broadcast %28 : vector<8x1xf32> to vector<8x8xf32>
    %30 = arith.divf %26, %29 : vector<8x8xf32>
    %cst_13 = arith.constant dense<0.000000e+00> : vector<8x8xf32>
    %31 = tpu.matmul %30, %15, %cst_13 {dimension_numbers = #tpu.dot_dimension_numbers<[1], [0], [0], [1], [0, 0, 1, 1], [], []>} : vector<8x8xf32>, vector<8x8xf32>, vector<8x8xf32> -> vector<8x8xf32>
    %32 = vector.extract_strided_slice %10 {offsets = [0, 8], sizes = [8, 8], strides = [1, 1]} : vector<8x32xf32> to vector<8x8xf32>
    %33 = vector.extract_strided_slice %11 {offsets = [0, 8], sizes = [8, 8], strides = [1, 1]} : vector<8x32xf32> to vector<8x8xf32>
    %34 = vector.extract_strided_slice %12 {offsets = [0, 8], sizes = [8, 8], strides = [1, 1]} : vector<8x32xf32> to vector<8x8xf32>
    %cst_14 = arith.constant dense<0.000000e+00> : vector<8x8xf32>
    %35 = tpu.matmul %32, %33, %cst_14 {dimension_numbers = #tpu.dot_dimension_numbers<[1], [1], [0], [0], [0, 0, 1, 0], [], []>} : vector<8x8xf32>, vector<8x8xf32>, vector<8x8xf32> -> vector<8x8xf32>
    %36 = tpu.iota {dimensions = array<i32: 0>} : vector<8x8xi32>
    %37 = tpu.iota {dimensions = array<i32: 1>} : vector<8x8xi32>
    %38 = arith.cmpi sgt, %37, %36 : vector<8x8xi32>
    %cst_15 = arith.constant 0xFF800000 : f32
    %39 = vector.broadcast %cst_15 : f32 to vector<8x8xf32>
    %40 = arith.select %38, %39, %35 : vector<8x8xi1>, vector<8x8xf32>
    %cst_16 = arith.constant dense<0xFF800000> : vector<8xf32>
    %41 = vector.multi_reduction <maximumf>, %40, %cst_16 [1] : vector<8x8xf32> to vector<8xf32>
    %42 = vector.shape_cast %41 : vector<8xf32> to vector<8x1xf32>
    %43 = vector.broadcast %42 : vector<8x1xf32> to vector<8x8xf32>
    %44 = arith.subf %40, %43 : vector<8x8xf32>
    %45 = math.exp %44 : vector<8x8xf32>
    %cst_17 = arith.constant dense<0.000000e+00> : vector<8xf32>
    %46 = vector.multi_reduction <add>, %45, %cst_17 [1] : vector<8x8xf32> to vector<8xf32>
    %47 = vector.shape_cast %46 : vector<8xf32> to vector<8x1xf32>
    %48 = vector.broadcast %47 : vector<8x1xf32> to vector<8x8xf32>
    %49 = arith.divf %45, %48 : vector<8x8xf32>
    %cst_18 = arith.constant dense<0.000000e+00> : vector<8x8xf32>
    %50 = tpu.matmul %49, %34, %cst_18 {dimension_numbers = #tpu.dot_dimension_numbers<[1], [0], [0], [1], [0, 0, 1, 1], [], []>} : vector<8x8xf32>, vector<8x8xf32>, vector<8x8xf32> -> vector<8x8xf32>
    %51 = vector.extract_strided_slice %10 {offsets = [0, 16], sizes = [8, 8], strides = [1, 1]} : vector<8x32xf32> to vector<8x8xf32>
    %52 = vector.extract_strided_slice %11 {offsets = [0, 16], sizes = [8, 8], strides = [1, 1]} : vector<8x32xf32> to vector<8x8xf32>
    %53 = vector.extract_strided_slice %12 {offsets = [0, 16], sizes = [8, 8], strides = [1, 1]} : vector<8x32xf32> to vector<8x8xf32>
    %cst_19 = arith.constant dense<0.000000e+00> : vector<8x8xf32>
    %54 = tpu.matmul %51, %52, %cst_19 {dimension_numbers = #tpu.dot_dimension_numbers<[1], [1], [0], [0], [0, 0, 1, 0], [], []>} : vector<8x8xf32>, vector<8x8xf32>, vector<8x8xf32> -> vector<8x8xf32>
    %55 = tpu.iota {dimensions = array<i32: 0>} : vector<8x8xi32>
    %56 = tpu.iota {dimensions = array<i32: 1>} : vector<8x8xi32>
    %57 = arith.cmpi sgt, %56, %55 : vector<8x8xi32>
    %cst_20 = arith.constant 0xFF800000 : f32
    %58 = vector.broadcast %cst_20 : f32 to vector<8x8xf32>
    %59 = arith.select %57, %58, %54 : vector<8x8xi1>, vector<8x8xf32>
    %cst_21 = arith.constant dense<0xFF800000> : vector<8xf32>
    %60 = vector.multi_reduction <maximumf>, %59, %cst_21 [1] : vector<8x8xf32> to vector<8xf32>
    %61 = vector.shape_cast %60 : vector<8xf32> to vector<8x1xf32>
    %62 = vector.broadcast %61 : vector<8x1xf32> to vector<8x8xf32>
    %63 = arith.subf %59, %62 : vector<8x8xf32>
    %64 = math.exp %63 : vector<8x8xf32>
    %cst_22 = arith.constant dense<0.000000e+00> : vector<8xf32>
    %65 = vector.multi_reduction <add>, %64, %cst_22 [1] : vector<8x8xf32> to vector<8xf32>
    %66 = vector.shape_cast %65 : vector<8xf32> to vector<8x1xf32>
    %67 = vector.broadcast %66 : vector<8x1xf32> to vector<8x8xf32>
    %68 = arith.divf %64, %67 : vector<8x8xf32>
    %cst_23 = arith.constant dense<0.000000e+00> : vector<8x8xf32>
    %69 = tpu.matmul %68, %53, %cst_23 {dimension_numbers = #tpu.dot_dimension_numbers<[1], [0], [0], [1], [0, 0, 1, 1], [], []>} : vector<8x8xf32>, vector<8x8xf32>, vector<8x8xf32> -> vector<8x8xf32>
    %70 = vector.extract_strided_slice %10 {offsets = [0, 24], sizes = [8, 8], strides = [1, 1]} : vector<8x32xf32> to vector<8x8xf32>
    %71 = vector.extract_strided_slice %11 {offsets = [0, 24], sizes = [8, 8], strides = [1, 1]} : vector<8x32xf32> to vector<8x8xf32>
    %72 = vector.extract_strided_slice %12 {offsets = [0, 24], sizes = [8, 8], strides = [1, 1]} : vector<8x32xf32> to vector<8x8xf32>
    %cst_24 = arith.constant dense<0.000000e+00> : vector<8x8xf32>
    %73 = tpu.matmul %70, %71, %cst_24 {dimension_numbers = #tpu.dot_dimension_numbers<[1], [1], [0], [0], [0, 0, 1, 0], [], []>} : vector<8x8xf32>, vector<8x8xf32>, vector<8x8xf32> -> vector<8x8xf32>
    %74 = tpu.iota {dimensions = array<i32: 0>} : vector<8x8xi32>
    %75 = tpu.iota {dimensions = array<i32: 1>} : vector<8x8xi32>
    %76 = arith.cmpi sgt, %75, %74 : vector<8x8xi32>
    %cst_25 = arith.constant 0xFF800000 : f32
    %77 = vector.broadcast %cst_25 : f32 to vector<8x8xf32>
    %78 = arith.select %76, %77, %73 : vector<8x8xi1>, vector<8x8xf32>
    %cst_26 = arith.constant dense<0xFF800000> : vector<8xf32>
    %79 = vector.multi_reduction <maximumf>, %78, %cst_26 [1] : vector<8x8xf32> to vector<8xf32>
    %80 = vector.shape_cast %79 : vector<8xf32> to vector<8x1xf32>
    %81 = vector.broadcast %80 : vector<8x1xf32> to vector<8x8xf32>
    %82 = arith.subf %78, %81 : vector<8x8xf32>
    %83 = math.exp %82 : vector<8x8xf32>
    %cst_27 = arith.constant dense<0.000000e+00> : vector<8xf32>
    %84 = vector.multi_reduction <add>, %83, %cst_27 [1] : vector<8x8xf32> to vector<8xf32>
    %85 = vector.shape_cast %84 : vector<8xf32> to vector<8x1xf32>
    %86 = vector.broadcast %85 : vector<8x1xf32> to vector<8x8xf32>
    %87 = arith.divf %83, %86 : vector<8x8xf32>
    %cst_28 = arith.constant dense<0.000000e+00> : vector<8x8xf32>
    %88 = tpu.matmul %87, %72, %cst_28 {dimension_numbers = #tpu.dot_dimension_numbers<[1], [0], [0], [1], [0, 0, 1, 1], [], []>} : vector<8x8xf32>, vector<8x8xf32>, vector<8x8xf32> -> vector<8x8xf32>
    %89 = tpu.concatenate %31, %50, %69, %88 in 1 : vector<8x8xf32>, vector<8x8xf32>, vector<8x8xf32>, vector<8x8xf32> -> vector<8x32xf32>
    %c0_29 = arith.constant 0 : index
    %c0_30 = arith.constant 0 : index
    %90 = vector.load %arg5[%c0_29, %c0_30] : memref<32x32xbf16, #tpu.memory_space<vmem>>, vector<32x32xbf16>
    %c0_31 = arith.constant 0 : index
    %c0_32 = arith.constant 0 : index
    %91 = vector.load %arg6[%c0_31, %c0_32] : memref<1x32xf32, #tpu.memory_space<vmem>>, vector<1x32xf32>
    %92 = arith.truncf %89 : vector<8x32xf32> to vector<8x32xbf16>
    %cst_33 = arith.constant dense<0.000000e+00> : vector<8x32xf32>
    %93 = tpu.matmul %92, %90, %cst_33 {dimension_numbers = #tpu.dot_dimension_numbers<[1], [0], [0], [1], [0, 0, 1, 1], [], []>} : vector<8x32xbf16>, vector<32x32xbf16>, vector<8x32xf32> -> vector<8x32xf32>
    %94 = vector.broadcast %91 : vector<1x32xf32> to vector<8x32xf32>
    %95 = arith.addf %93, %94 : vector<8x32xf32>
    %96 = arith.addf %95, %3 : vector<8x32xf32>
    %c0_34 = arith.constant 0 : index
    %c0_35 = arith.constant 0 : index
    %97 = vector.load %arg7[%c0_34, %c0_35] : memref<1x32xf32, #tpu.memory_space<vmem>>, vector<1x32xf32>
    %c0_36 = arith.constant 0 : index
    %c0_37 = arith.constant 0 : index
    %98 = vector.load %arg8[%c0_36, %c0_37] : memref<1x32xf32, #tpu.memory_space<vmem>>, vector<1x32xf32>
    %cst_38 = arith.constant dense<0.000000e+00> : vector<8xf32>
    %99 = vector.multi_reduction <add>, %96, %cst_38 [1] : vector<8x32xf32> to vector<8xf32>
    %100 = vector.shape_cast %99 : vector<8xf32> to vector<8x1xf32>
    %cst_39 = arith.constant 3.200000e+01 : f32
    %101 = vector.broadcast %cst_39 : f32 to vector<8x1xf32>
    %102 = arith.divf %100, %101 : vector<8x1xf32>
    %103 = arith.mulf %96, %96 : vector<8x32xf32>
    %cst_40 = arith.constant dense<0.000000e+00> : vector<8xf32>
    %104 = vector.multi_reduction <add>, %103, %cst_40 [1] : vector<8x32xf32> to vector<8xf32>
    %105 = vector.shape_cast %104 : vector<8xf32> to vector<8x1xf32>
    %cst_41 = arith.constant 3.200000e+01 : f32
    %106 = vector.broadcast %cst_41 : f32 to vector<8x1xf32>
    %107 = arith.divf %105, %106 : vector<8x1xf32>
    %108 = arith.mulf %102, %102 : vector<8x1xf32>
    %109 = arith.subf %107, %108 : vector<8x1xf32>
    %cst_42 = arith.constant 0.000000e+00 : f32
    %110 = vector.broadcast %cst_42 : f32 to vector<8x1xf32>
    %111 = arith.maximumf %109, %110 : vector<8x1xf32>
    %112 = vector.broadcast %102 : vector<8x1xf32> to vector<8x32xf32>
    %113 = arith.subf %96, %112 : vector<8x32xf32>
    %cst_43 = arith.constant 9.99999974E-6 : f32
    %114 = vector.broadcast %cst_43 : f32 to vector<8x1xf32>
    %115 = arith.addf %111, %114 : vector<8x1xf32>
    %116 = math.rsqrt %115 : vector<8x1xf32>
    %117 = vector.broadcast %116 : vector<8x1xf32> to vector<8x32xf32>
    %118 = arith.mulf %113, %117 : vector<8x32xf32>
    %119 = vector.broadcast %97 : vector<1x32xf32> to vector<8x32xf32>
    %120 = arith.mulf %118, %119 : vector<8x32xf32>
    %121 = vector.broadcast %98 : vector<1x32xf32> to vector<8x32xf32>
    %122 = arith.addf %120, %121 : vector<8x32xf32>
    %c0_44 = arith.constant 0 : index
    %c0_45 = arith.constant 0 : index
    %123 = vector.load %arg9[%c0_44, %c0_45] : memref<32x64xbf16, #tpu.memory_space<vmem>>, vector<32x64xbf16>
    %c0_46 = arith.constant 0 : index
    %c0_47 = arith.constant 0 : index
    %124 = vector.load %arg10[%c0_46, %c0_47] : memref<1x64xf32, #tpu.memory_space<vmem>>, vector<1x64xf32>
    %c0_48 = arith.constant 0 : index
    %c0_49 = arith.constant 0 : index
    %125 = vector.load %arg11[%c0_48, %c0_49] : memref<64x32xbf16, #tpu.memory_space<vmem>>, vector<64x32xbf16>
    %c0_50 = arith.constant 0 : index
    %c0_51 = arith.constant 0 : index
    %126 = vector.load %arg12[%c0_50, %c0_51] : memref<1x32xf32, #tpu.memory_space<vmem>>, vector<1x32xf32>
    %127 = arith.truncf %122 : vector<8x32xf32> to vector<8x32xbf16>
    %cst_52 = arith.constant dense<0.000000e+00> : vector<8x64xf32>
    %128 = tpu.matmul %127, %123, %cst_52 {dimension_numbers = #tpu.dot_dimension_numbers<[1], [0], [0], [1], [0, 0, 1, 1], [], []>} : vector<8x32xbf16>, vector<32x64xbf16>, vector<8x64xf32> -> vector<8x64xf32>
    %129 = vector.broadcast %124 : vector<1x64xf32> to vector<8x64xf32>
    %130 = arith.addf %128, %129 : vector<8x64xf32>
    %cst_53 = arith.constant 0.000000e+00 : f32
    %131 = vector.broadcast %cst_53 : f32 to vector<8x64xf32>
    %132 = arith.maximumf %130, %131 : vector<8x64xf32>
    %133 = arith.truncf %132 : vector<8x64xf32> to vector<8x64xbf16>
    %cst_54 = arith.constant dense<0.000000e+00> : vector<8x32xf32>
    %134 = tpu.matmul %133, %125, %cst_54 {dimension_numbers = #tpu.dot_dimension_numbers<[1], [0], [0], [1], [0, 0, 1, 1], [], []>} : vector<8x64xbf16>, vector<64x32xbf16>, vector<8x32xf32> -> vector<8x32xf32>
    %135 = vector.broadcast %126 : vector<1x32xf32> to vector<8x32xf32>
    %136 = arith.addf %134, %135 : vector<8x32xf32>
    %137 = arith.addf %122, %136 : vector<8x32xf32>
    %c0_55 = arith.constant 0 : index
    %c0_56 = arith.constant 0 : index
    %138 = vector.load %arg13[%c0_55, %c0_56] : memref<1x32xf32, #tpu.memory_space<vmem>>, vector<1x32xf32>
    %c0_57 = arith.constant 0 : index
    %c0_58 = arith.constant 0 : index
    %139 = vector.load %arg14[%c0_57, %c0_58] : memref<1x32xf32, #tpu.memory_space<vmem>>, vector<1x32xf32>
    %cst_59 = arith.constant dense<0.000000e+00> : vector<8xf32>
    %140 = vector.multi_reduction <add>, %137, %cst_59 [1] : vector<8x32xf32> to vector<8xf32>
    %141 = vector.shape_cast %140 : vector<8xf32> to vector<8x1xf32>
    %cst_60 = arith.constant 3.200000e+01 : f32
    %142 = vector.broadcast %cst_60 : f32 to vector<8x1xf32>
    %143 = arith.divf %141, %142 : vector<8x1xf32>
    %144 = arith.mulf %137, %137 : vector<8x32xf32>
    %cst_61 = arith.constant dense<0.000000e+00> : vector<8xf32>
    %145 = vector.multi_reduction <add>, %144, %cst_61 [1] : vector<8x32xf32> to vector<8xf32>
    %146 = vector.shape_cast %145 : vector<8xf32> to vector<8x1xf32>
    %cst_62 = arith.constant 3.200000e+01 : f32
    %147 = vector.broadcast %cst_62 : f32 to vector<8x1xf32>
    %148 = arith.divf %146, %147 : vector<8x1xf32>
    %149 = arith.mulf %143, %143 : vector<8x1xf32>
    %150 = arith.subf %148, %149 : vector<8x1xf32>
    %cst_63 = arith.constant 0.000000e+00 : f32
    %151 = vector.broadcast %cst_63 : f32 to vector<8x1xf32>
    %152 = arith.maximumf %150, %151 : vector<8x1xf32>
    %153 = vector.broadcast %143 : vector<8x1xf32> to vector<8x32xf32>
    %154 = arith.subf %137, %153 : vector<8x32xf32>
    %cst_64 = arith.constant 9.99999974E-6 : f32
    %155 = vector.broadcast %cst_64 : f32 to vector<8x1xf32>
    %156 = arith.addf %152, %155 : vector<8x1xf32>
    %157 = math.rsqrt %156 : vector<8x1xf32>
    %158 = vector.broadcast %157 : vector<8x1xf32> to vector<8x32xf32>
    %159 = arith.mulf %154, %158 : vector<8x32xf32>
    %160 = vector.broadcast %138 : vector<1x32xf32> to vector<8x32xf32>
    %161 = arith.mulf %159, %160 : vector<8x32xf32>
    %162 = vector.broadcast %139 : vector<1x32xf32> to vector<8x32xf32>
    %163 = arith.addf %161, %162 : vector<8x32xf32>
    %c0_65 = arith.constant 0 : index
    %c0_66 = arith.constant 0 : index
    %164 = vector.load %arg15[%c0_65, %c0_66] : memref<32x32xbf16, #tpu.memory_space<vmem>>, vector<32x32xbf16>
    %c0_67 = arith.constant 0 : index
    %c0_68 = arith.constant 0 : index
    %165 = vector.load %arg16[%c0_67, %c0_68] : memref<1x32xf32, #tpu.memory_space<vmem>>, vector<1x32xf32>
    %166 = arith.truncf %163 : vector<8x32xf32> to vector<8x32xbf16>
    %cst_69 = arith.constant dense<0.000000e+00> : vector<8x32xf32>
    %167 = tpu.matmul %166, %164, %cst_69 {dimension_numbers = #tpu.dot_dimension_numbers<[1], [0], [0], [1], [0, 0, 1, 1], [], []>} : vector<8x32xbf16>, vector<32x32xbf16>, vector<8x32xf32> -> vector<8x32xf32>
    %168 = vector.broadcast %165 : vector<1x32xf32> to vector<8x32xf32>
    %169 = arith.addf %167, %168 : vector<8x32xf32>
    %c0_70 = arith.constant 0 : index
    %c0_71 = arith.constant 0 : index
    %170 = vector.load %arg17[%c0_70, %c0_71] : memref<32x64xbf16, #tpu.memory_space<vmem>>, vector<32x64xbf16>
    %c0_72 = arith.constant 0 : index
    %c0_73 = arith.constant 0 : index
    %171 = vector.load %arg18[%c0_72, %c0_73] : memref<1x64xf32, #tpu.memory_space<vmem>>, vector<1x64xf32>
    %172 = arith.truncf %1 : vector<8x32xf32> to vector<8x32xbf16>
    %cst_74 = arith.constant dense<0.000000e+00> : vector<8x64xf32>
    %173 = tpu.matmul %172, %170, %cst_74 {dimension_numbers = #tpu.dot_dimension_numbers<[1], [0], [0], [1], [0, 0, 1, 1], [], []>} : vector<8x32xbf16>, vector<32x64xbf16>, vector<8x64xf32> -> vector<8x64xf32>
    %174 = vector.broadcast %171 : vector<1x64xf32> to vector<8x64xf32>
    %175 = arith.addf %173, %174 : vector<8x64xf32>
    %176 = vector.extract_strided_slice %175 {offsets = [0, 0], sizes = [8, 32], strides = [1, 1]} : vector<8x64xf32> to vector<8x32xf32>
    %177 = vector.extract_strided_slice %175 {offsets = [0, 32], sizes = [8, 32], strides = [1, 1]} : vector<8x64xf32> to vector<8x32xf32>
    %178 = vector.extract_strided_slice %169 {offsets = [0, 0], sizes = [8, 8], strides = [1, 1]} : vector<8x32xf32> to vector<8x8xf32>
    %179 = vector.extract_strided_slice %176 {offsets = [0, 0], sizes = [8, 8], strides = [1, 1]} : vector<8x32xf32> to vector<8x8xf32>
    %180 = vector.extract_strided_slice %177 {offsets = [0, 0], sizes = [8, 8], strides = [1, 1]} : vector<8x32xf32> to vector<8x8xf32>
    %cst_75 = arith.constant dense<0.000000e+00> : vector<8x8xf32>
    %181 = tpu.matmul %178, %179, %cst_75 {dimension_numbers = #tpu.dot_dimension_numbers<[1], [1], [0], [0], [0, 0, 1, 0], [], []>} : vector<8x8xf32>, vector<8x8xf32>, vector<8x8xf32> -> vector<8x8xf32>
    %cst_76 = arith.constant dense<0xFF800000> : vector<8xf32>
    %182 = vector.multi_reduction <maximumf>, %181, %cst_76 [1] : vector<8x8xf32> to vector<8xf32>
    %183 = vector.shape_cast %182 : vector<8xf32> to vector<8x1xf32>
    %184 = vector.broadcast %183 : vector<8x1xf32> to vector<8x8xf32>
    %185 = arith.subf %181, %184 : vector<8x8xf32>
    %186 = math.exp %185 : vector<8x8xf32>
    %cst_77 = arith.constant dense<0.000000e+00> : vector<8xf32>
    %187 = vector.multi_reduction <add>, %186, %cst_77 [1] : vector<8x8xf32> to vector<8xf32>
    %188 = vector.shape_cast %187 : vector<8xf32> to vector<8x1xf32>
    %189 = vector.broadcast %188 : vector<8x1xf32> to vector<8x8xf32>
    %190 = arith.divf %186, %189 : vector<8x8xf32>
    %cst_78 = arith.constant dense<0.000000e+00> : vector<8x8xf32>
    %191 = tpu.matmul %190, %180, %cst_78 {dimension_numbers = #tpu.dot_dimension_numbers<[1], [0], [0], [1], [0, 0, 1, 1], [], []>} : vector<8x8xf32>, vector<8x8xf32>, vector<8x8xf32> -> vector<8x8xf32>
    %192 = vector.extract_strided_slice %169 {offsets = [0, 8], sizes = [8, 8], strides = [1, 1]} : vector<8x32xf32> to vector<8x8xf32>
    %193 = vector.extract_strided_slice %176 {offsets = [0, 8], sizes = [8, 8], strides = [1, 1]} : vector<8x32xf32> to vector<8x8xf32>
    %194 = vector.extract_strided_slice %177 {offsets = [0, 8], sizes = [8, 8], strides = [1, 1]} : vector<8x32xf32> to vector<8x8xf32>
    %cst_79 = arith.constant dense<0.000000e+00> : vector<8x8xf32>
    %195 = tpu.matmul %192, %193, %cst_79 {dimension_numbers = #tpu.dot_dimension_numbers<[1], [1], [0], [0], [0, 0, 1, 0], [], []>} : vector<8x8xf32>, vector<8x8xf32>, vector<8x8xf32> -> vector<8x8xf32>
    %cst_80 = arith.constant dense<0xFF800000> : vector<8xf32>
    %196 = vector.multi_reduction <maximumf>, %195, %cst_80 [1] : vector<8x8xf32> to vector<8xf32>
    %197 = vector.shape_cast %196 : vector<8xf32> to vector<8x1xf32>
    %198 = vector.broadcast %197 : vector<8x1xf32> to vector<8x8xf32>
    %199 = arith.subf %195, %198 : vector<8x8xf32>
    %200 = math.exp %199 : vector<8x8xf32>
    %cst_81 = arith.constant dense<0.000000e+00> : vector<8xf32>
    %201 = vector.multi_reduction <add>, %200, %cst_81 [1] : vector<8x8xf32> to vector<8xf32>
    %202 = vector.shape_cast %201 : vector<8xf32> to vector<8x1xf32>
    %203 = vector.broadcast %202 : vector<8x1xf32> to vector<8x8xf32>
    %204 = arith.divf %200, %203 : vector<8x8xf32>
    %cst_82 = arith.constant dense<0.000000e+00> : vector<8x8xf32>
    %205 = tpu.matmul %204, %194, %cst_82 {dimension_numbers = #tpu.dot_dimension_numbers<[1], [0], [0], [1], [0, 0, 1, 1], [], []>} : vector<8x8xf32>, vector<8x8xf32>, vector<8x8xf32> -> vector<8x8xf32>
    %206 = vector.extract_strided_slice %169 {offsets = [0, 16], sizes = [8, 8], strides = [1, 1]} : vector<8x32xf32> to vector<8x8xf32>
    %207 = vector.extract_strided_slice %176 {offsets = [0, 16], sizes = [8, 8], strides = [1, 1]} : vector<8x32xf32> to vector<8x8xf32>
    %208 = vector.extract_strided_slice %177 {offsets = [0, 16], sizes = [8, 8], strides = [1, 1]} : vector<8x32xf32> to vector<8x8xf32>
    %cst_83 = arith.constant dense<0.000000e+00> : vector<8x8xf32>
    %209 = tpu.matmul %206, %207, %cst_83 {dimension_numbers = #tpu.dot_dimension_numbers<[1], [1], [0], [0], [0, 0, 1, 0], [], []>} : vector<8x8xf32>, vector<8x8xf32>, vector<8x8xf32> -> vector<8x8xf32>
    %cst_84 = arith.constant dense<0xFF800000> : vector<8xf32>
    %210 = vector.multi_reduction <maximumf>, %209, %cst_84 [1] : vector<8x8xf32> to vector<8xf32>
    %211 = vector.shape_cast %210 : vector<8xf32> to vector<8x1xf32>
    %212 = vector.broadcast %211 : vector<8x1xf32> to vector<8x8xf32>
    %213 = arith.subf %209, %212 : vector<8x8xf32>
    %214 = math.exp %213 : vector<8x8xf32>
    %cst_85 = arith.constant dense<0.000000e+00> : vector<8xf32>
    %215 = vector.multi_reduction <add>, %214, %cst_85 [1] : vector<8x8xf32> to vector<8xf32>
    %216 = vector.shape_cast %215 : vector<8xf32> to vector<8x1xf32>
    %217 = vector.broadcast %216 : vector<8x1xf32> to vector<8x8xf32>
    %218 = arith.divf %214, %217 : vector<8x8xf32>
    %cst_86 = arith.constant dense<0.000000e+00> : vector<8x8xf32>
    %219 = tpu.matmul %218, %208, %cst_86 {dimension_numbers = #tpu.dot_dimension_numbers<[1], [0], [0], [1], [0, 0, 1, 1], [], []>} : vector<8x8xf32>, vector<8x8xf32>, vector<8x8xf32> -> vector<8x8xf32>
    %220 = vector.extract_strided_slice %169 {offsets = [0, 24], sizes = [8, 8], strides = [1, 1]} : vector<8x32xf32> to vector<8x8xf32>
    %221 = vector.extract_strided_slice %176 {offsets = [0, 24], sizes = [8, 8], strides = [1, 1]} : vector<8x32xf32> to vector<8x8xf32>
    %222 = vector.extract_strided_slice %177 {offsets = [0, 24], sizes = [8, 8], strides = [1, 1]} : vector<8x32xf32> to vector<8x8xf32>
    %cst_87 = arith.constant dense<0.000000e+00> : vector<8x8xf32>
    %223 = tpu.matmul %220, %221, %cst_87 {dimension_numbers = #tpu.dot_dimension_numbers<[1], [1], [0], [0], [0, 0, 1, 0], [], []>} : vector<8x8xf32>, vector<8x8xf32>, vector<8x8xf32> -> vector<8x8xf32>
    %cst_88 = arith.constant dense<0xFF800000> : vector<8xf32>
    %224 = vector.multi_reduction <maximumf>, %223, %cst_88 [1] : vector<8x8xf32> to vector<8xf32>
    %225 = vector.shape_cast %224 : vector<8xf32> to vector<8x1xf32>
    %226 = vector.broadcast %225 : vector<8x1xf32> to vector<8x8xf32>
    %227 = arith.subf %223, %226 : vector<8x8xf32>
    %228 = math.exp %227 : vector<8x8xf32>
    %cst_89 = arith.constant dense<0.000000e+00> : vector<8xf32>
    %229 = vector.multi_reduction <add>, %228, %cst_89 [1] : vector<8x8xf32> to vector<8xf32>
    %230 = vector.shape_cast %229 : vector<8xf32> to vector<8x1xf32>
    %231 = vector.broadcast %230 : vector<8x1xf32> to vector<8x8xf32>
    %232 = arith.divf %228, %231 : vector<8x8xf32>
    %cst_90 = arith.constant dense<0.000000e+00> : vector<8x8xf32>
    %233 = tpu.matmul %232, %222, %cst_90 {dimension_numbers = #tpu.dot_dimension_numbers<[1], [0], [0], [1], [0, 0, 1, 1], [], []>} : vector<8x8xf32>, vector<8x8xf32>, vector<8x8xf32> -> vector<8x8xf32>
    %234 = tpu.concatenate %191, %205, %219, %233 in 1 : vector<8x8xf32>, vector<8x8xf32>, vector<8x8xf32>, vector<8x8xf32> -> vector<8x32xf32>
    %c0_91 = arith.constant 0 : index
    %c0_92 = arith.constant 0 : index
    %235 = vector.load %arg19[%c0_91, %c0_92] : memref<32x32xbf16, #tpu.memory_space<vmem>>, vector<32x32xbf16>
    %c0_93 = arith.constant 0 : index
    %c0_94 = arith.constant 0 : index
    %236 = vector.load %arg20[%c0_93, %c0_94] : memref<1x32xf32, #tpu.memory_space<vmem>>, vector<1x32xf32>
    %237 = arith.truncf %234 : vector<8x32xf32> to vector<8x32xbf16>
    %cst_95 = arith.constant dense<0.000000e+00> : vector<8x32xf32>
    %238 = tpu.matmul %237, %235, %cst_95 {dimension_numbers = #tpu.dot_dimension_numbers<[1], [0], [0], [1], [0, 0, 1, 1], [], []>} : vector<8x32xbf16>, vector<32x32xbf16>, vector<8x32xf32> -> vector<8x32xf32>
    %239 = vector.broadcast %236 : vector<1x32xf32> to vector<8x32xf32>
    %240 = arith.addf %238, %239 : vector<8x32xf32>
    %241 = arith.addf %240, %163 : vector<8x32xf32>
    %c0_96 = arith.constant 0 : index
    %c0_97 = arith.constant 0 : index
    %242 = vector.load %arg21[%c0_96, %c0_97] : memref<1x32xf32, #tpu.memory_space<vmem>>, vector<1x32xf32>
    %c0_98 = arith.constant 0 : index
    %c0_99 = arith.constant 0 : index
    %243 = vector.load %arg22[%c0_98, %c0_99] : memref<1x32xf32, #tpu.memory_space<vmem>>, vector<1x32xf32>
    %cst_100 = arith.constant dense<0.000000e+00> : vector<8xf32>
    %244 = vector.multi_reduction <add>, %241, %cst_100 [1] : vector<8x32xf32> to vector<8xf32>
    %245 = vector.shape_cast %244 : vector<8xf32> to vector<8x1xf32>
    %cst_101 = arith.constant 3.200000e+01 : f32
    %246 = vector.broadcast %cst_101 : f32 to vector<8x1xf32>
    %247 = arith.divf %245, %246 : vector<8x1xf32>
    %248 = arith.mulf %241, %241 : vector<8x32xf32>
    %cst_102 = arith.constant dense<0.000000e+00> : vector<8xf32>
    %249 = vector.multi_reduction <add>, %248, %cst_102 [1] : vector<8x32xf32> to vector<8xf32>
    %250 = vector.shape_cast %249 : vector<8xf32> to vector<8x1xf32>
    %cst_103 = arith.constant 3.200000e+01 : f32
    %251 = vector.broadcast %cst_103 : f32 to vector<8x1xf32>
    %252 = arith.divf %250, %251 : vector<8x1xf32>
    %253 = arith.mulf %247, %247 : vector<8x1xf32>
    %254 = arith.subf %252, %253 : vector<8x1xf32>
    %cst_104 = arith.constant 0.000000e+00 : f32
    %255 = vector.broadcast %cst_104 : f32 to vector<8x1xf32>
    %256 = arith.maximumf %254, %255 : vector<8x1xf32>
    %257 = vector.broadcast %247 : vector<8x1xf32> to vector<8x32xf32>
    %258 = arith.subf %241, %257 : vector<8x32xf32>
    %cst_105 = arith.constant 9.99999974E-6 : f32
    %259 = vector.broadcast %cst_105 : f32 to vector<8x1xf32>
    %260 = arith.addf %256, %259 : vector<8x1xf32>
    %261 = math.rsqrt %260 : vector<8x1xf32>
    %262 = vector.broadcast %261 : vector<8x1xf32> to vector<8x32xf32>
    %263 = arith.mulf %258, %262 : vector<8x32xf32>
    %264 = vector.broadcast %242 : vector<1x32xf32> to vector<8x32xf32>
    %265 = arith.mulf %263, %264 : vector<8x32xf32>
    %266 = vector.broadcast %243 : vector<1x32xf32> to vector<8x32xf32>
    %267 = arith.addf %265, %266 : vector<8x32xf32>
    %c0_106 = arith.constant 0 : index
    %c0_107 = arith.constant 0 : index
    %268 = vector.load %arg23[%c0_106, %c0_107] : memref<32x64xbf16, #tpu.memory_space<vmem>>, vector<32x64xbf16>
    %c0_108 = arith.constant 0 : index
    %c0_109 = arith.constant 0 : index
    %269 = vector.load %arg24[%c0_108, %c0_109] : memref<1x64xf32, #tpu.memory_space<vmem>>, vector<1x64xf32>
    %c0_110 = arith.constant 0 : index
    %c0_111 = arith.constant 0 : index
    %270 = vector.load %arg25[%c0_110, %c0_111] : memref<64x32xbf16, #tpu.memory_space<vmem>>, vector<64x32xbf16>
    %c0_112 = arith.constant 0 : index
    %c0_113 = arith.constant 0 : index
    %271 = vector.load %arg26[%c0_112, %c0_113] : memref<1x32xf32, #tpu.memory_space<vmem>>, vector<1x32xf32>
    %272 = arith.truncf %267 : vector<8x32xf32> to vector<8x32xbf16>
    %cst_114 = arith.constant dense<0.000000e+00> : vector<8x64xf32>
    %273 = tpu.matmul %272, %268, %cst_114 {dimension_numbers = #tpu.dot_dimension_numbers<[1], [0], [0], [1], [0, 0, 1, 1], [], []>} : vector<8x32xbf16>, vector<32x64xbf16>, vector<8x64xf32> -> vector<8x64xf32>
    %274 = vector.broadcast %269 : vector<1x64xf32> to vector<8x64xf32>
    %275 = arith.addf %273, %274 : vector<8x64xf32>
    %cst_115 = arith.constant 0.000000e+00 : f32
    %276 = vector.broadcast %cst_115 : f32 to vector<8x64xf32>
    %277 = arith.maximumf %275, %276 : vector<8x64xf32>
    %278 = arith.truncf %277 : vector<8x64xf32> to vector<8x64xbf16>
    %cst_116 = arith.constant dense<0.000000e+00> : vector<8x32xf32>
    %279 = tpu.matmul %278, %270, %cst_116 {dimension_numbers = #tpu.dot_dimension_numbers<[1], [0], [0], [1], [0, 0, 1, 1], [], []>} : vector<8x64xbf16>, vector<64x32xbf16>, vector<8x32xf32> -> vector<8x32xf32>
    %280 = vector.broadcast %271 : vector<1x32xf32> to vector<8x32xf32>
    %281 = arith.addf %279, %280 : vector<8x32xf32>
    %282 = arith.addf %281, %267 : vector<8x32xf32>
    %c0_117 = arith.constant 0 : index
    %c0_118 = arith.constant 0 : index
    %283 = vector.load %arg27[%c0_117, %c0_118] : memref<1x32xf32, #tpu.memory_space<vmem>>, vector<1x32xf32>
    %c0_119 = arith.constant 0 : index
    %c0_120 = arith.constant 0 : index
    %284 = vector.load %arg28[%c0_119, %c0_120] : memref<1x32xf32, #tpu.memory_space<vmem>>, vector<1x32xf32>
    %cst_121 = arith.constant dense<0.000000e+00> : vector<8xf32>
    %285 = vector.multi_reduction <add>, %282, %cst_121 [1] : vector<8x32xf32> to vector<8xf32>
    %286 = vector.shape_cast %285 : vector<8xf32> to vector<8x1xf32>
    %cst_122 = arith.constant 3.200000e+01 : f32
    %287 = vector.broadcast %cst_122 : f32 to vector<8x1xf32>
    %288 = arith.divf %286, %287 : vector<8x1xf32>
    %289 = arith.mulf %282, %282 : vector<8x32xf32>
    %cst_123 = arith.constant dense<0.000000e+00> : vector<8xf32>
    %290 = vector.multi_reduction <add>, %289, %cst_123 [1] : vector<8x32xf32> to vector<8xf32>
    %291 = vector.shape_cast %290 : vector<8xf32> to vector<8x1xf32>
    %cst_124 = arith.constant 3.200000e+01 : f32
    %292 = vector.broadcast %cst_124 : f32 to vector<8x1xf32>
    %293 = arith.divf %291, %292 : vector<8x1xf32>
    %294 = arith.mulf %288, %288 : vector<8x1xf32>
    %295 = arith.subf %293, %294 : vector<8x1xf32>
    %cst_125 = arith.constant 0.000000e+00 : f32
    %296 = vector.broadcast %cst_125 : f32 to vector<8x1xf32>
    %297 = arith.maximumf %295, %296 : vector<8x1xf32>
    %298 = vector.broadcast %288 : vector<8x1xf32> to vector<8x32xf32>
    %299 = arith.subf %282, %298 : vector<8x32xf32>
    %cst_126 = arith.constant 9.99999974E-6 : f32
    %300 = vector.broadcast %cst_126 : f32 to vector<8x1xf32>
    %301 = arith.addf %297, %300 : vector<8x1xf32>
    %302 = math.rsqrt %301 : vector<8x1xf32>
    %303 = vector.broadcast %302 : vector<8x1xf32> to vector<8x32xf32>
    %304 = arith.mulf %299, %303 : vector<8x32xf32>
    %305 = vector.broadcast %283 : vector<1x32xf32> to vector<8x32xf32>
    %306 = arith.mulf %304, %305 : vector<8x32xf32>
    %307 = vector.broadcast %284 : vector<1x32xf32> to vector<8x32xf32>
    %308 = arith.addf %306, %307 : vector<8x32xf32>
    %c0_127 = arith.constant 0 : index
    %c0_128 = arith.constant 0 : index
    %c0_129 = arith.constant 0 : index
    %309 = vector.load %arg29[%c0_127, %c0_128, %c0_129] : memref<1x8x32xf32, #tpu.memory_space<vmem>>, vector<1x8x32xf32>
    %310 = vector.shape_cast %309 : vector<1x8x32xf32> to vector<8x32xf32>
    %311 = vector.shape_cast %308 : vector<8x32xf32> to vector<1x8x32xf32>
    tpu.vector_store %arg29[%c0_127, %c0_128, %c0_129], %311 {strides = array<i32>} : memref<1x8x32xf32, #tpu.memory_space<vmem>>, vector<1x8x32xf32>,
    return
  }
  func.func @transform_0(%arg0: i32) -> (i32, i32, i32) {
    %c0_i32 = arith.constant 0 : i32
    %c0_i32_0 = arith.constant 0 : i32
    %c0_i32_1 = arith.constant 0 : i32
    return %arg0, %c0_i32, %c0_i32_0 : i32, i32, i32
  }
  func.func @transform_1(%arg0: i32) -> (i32, i32, i32) {
    %c0_i32 = arith.constant 0 : i32
    %c0_i32_0 = arith.constant 0 : i32
    %c0_i32_1 = arith.constant 0 : i32
    return %arg0, %c0_i32, %c0_i32_0 : i32, i32, i32
  }
  func.func @transform_2(%arg0: i32) -> (i32, i32) {
    %c0_i32 = arith.constant 0 : i32
    %c0_i32_0 = arith.constant 0 : i32
    %c0_i32_1 = arith.constant 0 : i32
    return %c0_i32, %c0_i32_0 : i32, i32
  }
  func.func @transform_3(%arg0: i32) -> (i32, i32) {
    %c0_i32 = arith.constant 0 : i32
    %c0_i32_0 = arith.constant 0 : i32
    %c0_i32_1 = arith.constant 0 : i32
    return %c0_i32, %c0_i32_0 : i32, i32
  }
  func.func @transform_4(%arg0: i32) -> (i32, i32) {
    %c0_i32 = arith.constant 0 : i32
    %c0_i32_0 = arith.constant 0 : i32
    %c0_i32_1 = arith.constant 0 : i32
    return %c0_i32, %c0_i32_0 : i32, i32
  }
  func.func @transform_5(%arg0: i32) -> (i32, i32) {
    %c0_i32 = arith.constant 0 : i32
    %c0_i32_0 = arith.constant 0 : i32
    %c0_i32_1 = arith.constant 0 : i32
    return %c0_i32, %c0_i32_0 : i32, i32
  }
  func.func @transform_6(%arg0: i32) -> (i32, i32) {
    %c0_i32 = arith.constant 0 : i32
    %c0_i32_0 = arith.constant 0 : i32
    %c0_i32_1 = arith.constant 0 : i32
    return %c0_i32, %c0_i32_0 : i32, i32
  }
  func.func @transform_7(%arg0: i32) -> (i32, i32) {
    %c0_i32 = arith.constant 0 : i32
    %c0_i32_0 = arith.constant 0 : i32
    %c0_i32_1 = arith.constant 0 : i32
    return %c0_i32, %c0_i32_0 : i32, i32
  }
  func.func @transform_8(%arg0: i32) -> (i32, i32) {
    %c0_i32 = arith.constant 0 : i32
    %c0_i32_0 = arith.constant 0 : i32
    %c0_i32_1 = arith.constant 0 : i32
    return %c0_i32, %c0_i32_0 : i32, i32
  }
  func.func @transform_9(%arg0: i32) -> (i32, i32) {
    %c0_i32 = arith.constant 0 : i32
    %c0_i32_0 = arith.constant 0 : i32
    %c0_i32_1 = arith.constant 0 : i32
    return %c0_i32, %c0_i32_0 : i32, i32
  }
  func.func @transform_10(%arg0: i32) -> (i32, i32) {
    %c0_i32 = arith.constant 0 : i32
    %c0_i32_0 = arith.constant 0 : i32
    %c0_i32_1 = arith.constant 0 : i32
    return %c0_i32, %c0_i32_0 : i32, i32
  }
  func.func @transform_11(%arg0: i32) -> (i32, i32) {
    %c0_i32 = arith.constant 0 : i32
    %c0_i32_0 = arith.constant 0 : i32
    %c0_i32_1 = arith.constant 0 : i32
    return %c0_i32, %c0_i32_0 : i32, i32
  }
  func.func @transform_12(%arg0: i32) -> (i32, i32) {
    %c0_i32 = arith.constant 0 : i32
    %c0_i32_0 = arith.constant 0 : i32
    %c0_i32_1 = arith.constant 0 : i32
    return %c0_i32, %c0_i32_0 : i32, i32
  }
  func.func @transform_13(%arg0: i32) -> (i32, i32) {
    %c0_i32 = arith.constant 0 : i32
    %c0_i32_0 = arith.constant 0 : i32
    %c0_i32_1 = arith.constant 0 : i32
    return %c0_i32, %c0_i32_0 : i32, i32
  }
  func.func @transform_14(%arg0: i32) -> (i32, i32) {
    %c0_i32 = arith.constant 0 : i32
    %c0_i32_0 = arith.constant 0 : i32
    %c0_i32_1 = arith.constant 0 : i32
    return %c0_i32, %c0_i32_0 : i32, i32
  }
  func.func @transform_15(%arg0: i32) -> (i32, i32) {
    %c0_i32 = arith.constant 0 : i32
    %c0_i32_0 = arith.constant 0 : i32
    %c0_i32_1 = arith.constant 0 : i32
    return %c0_i32, %c0_i32_0 : i32, i32
  }
  func.func @transform_16(%arg0: i32) -> (i32, i32) {
    %c0_i32 = arith.constant 0 : i32
    %c0_i32_0 = arith.constant 0 : i32
    %c0_i32_1 = arith.constant 0 : i32
    return %c0_i32, %c0_i32_0 : i32, i32
  }
  func.func @transform_17(%arg0: i32) -> (i32, i32) {
    %c0_i32 = arith.constant 0 : i32
    %c0_i32_0 = arith.constant 0 : i32
    %c0_i32_1 = arith.constant 0 : i32
    return %c0_i32, %c0_i32_0 : i32, i32
  }
  func.func @transform_18(%arg0: i32) -> (i32, i32) {
    %c0_i32 = arith.constant 0 : i32
    %c0_i32_0 = arith.constant 0 : i32
    %c0_i32_1 = arith.constant 0 : i32
    return %c0_i32, %c0_i32_0 : i32, i32
  }
  func.func @transform_19(%arg0: i32) -> (i32, i32) {
    %c0_i32 = arith.constant 0 : i32
    %c0_i32_0 = arith.constant 0 : i32
    %c0_i32_1 = arith.constant 0 : i32
    return %c0_i32, %c0_i32_0 : i32, i32
  }
  func.func @transform_20(%arg0: i32) -> (i32, i32) {
    %c0_i32 = arith.constant 0 : i32
    %c0_i32_0 = arith.constant 0 : i32
    %c0_i32_1 = arith.constant 0 : i32
    return %c0_i32, %c0_i32_0 : i32, i32
  }
  func.func @transform_21(%arg0: i32) -> (i32, i32) {
    %c0_i32 = arith.constant 0 : i32
    %c0_i32_0 = arith.constant 0 : i32
    %c0_i32_1 = arith.constant 0 : i32
    return %c0_i32, %c0_i32_0 : i32, i32
  }
  func.func @transform_22(%arg0: i32) -> (i32, i32) {
    %c0_i32 = arith.constant 0 : i32
    %c0_i32_0 = arith.constant 0 : i32
    %c0_i32_1 = arith.constant 0 : i32
    return %c0_i32, %c0_i32_0 : i32, i32
  }
  func.func @transform_23(%arg0: i32) -> (i32, i32) {
    %c0_i32 = arith.constant 0 : i32
    %c0_i32_0 = arith.constant 0 : i32
    %c0_i32_1 = arith.constant 0 : i32
    return %c0_i32, %c0_i32_0 : i32, i32
  }
  func.func @transform_24(%arg0: i32) -> (i32, i32) {
    %c0_i32 = arith.constant 0 : i32
    %c0_i32_0 = arith.constant 0 : i32
    %c0_i32_1 = arith.constant 0 : i32
    return %c0_i32, %c0_i32_0 : i32, i32
  }
  func.func @transform_25(%arg0: i32) -> (i32, i32) {
    %c0_i32 = arith.constant 0 : i32
    %c0_i32_0 = arith.constant 0 : i32
    %c0_i32_1 = arith.constant 0 : i32
    return %c0_i32, %c0_i32_0 : i32, i32
  }
  func.func @transform_26(%arg0: i32) -> (i32, i32) {
    %c0_i32 = arith.constant 0 : i32
    %c0_i32_0 = arith.constant 0 : i32
    %c0_i32_1 = arith.constant 0 : i32
    return %c0_i32, %c0_i32_0 : i32, i32
  }
  func.func @transform_27(%arg0: i32) -> (i32, i32) {
    %c0_i32 = arith.constant 0 : i32
    %c0_i32_0 = arith.constant 0 : i32
    %c0_i32_1 = arith.constant 0 : i32
    return %c0_i32, %c0_i32_0 : i32, i32
  }
  func.func @transform_28(%arg0: i32) -> (i32, i32, i32) {
    %c0_i32 = arith.constant 0 : i32
    %c0_i32_0 = arith.constant 0 : i32
    %c0_i32_1 = arith.constant 0 : i32
    return %arg0, %c0_i32, %c0_i32_0 : i32, i32, i32
  }
}

module attributes {stable_mosaic.version = 11 : i64} {
  func.func @vocab_nll_kernel(%arg0: i32, %arg1: memref<1x8x32xf32, #tpu.memory_space<vmem>>, %arg2: memref<1x8x1xi32, #tpu.memory_space<vmem>>, %arg3: memref<32x64xbf16, #tpu.memory_space<vmem>>, %arg4: memref<1x64xf32, #tpu.memory_space<vmem>>, %arg5: memref<1x1x1xf32, #tpu.memory_space<vmem>>, %arg6: memref<1x1x1xi32, #tpu.memory_space<vmem>>) attributes {dimension_semantics = [#tpu.dimension_semantics<parallel>], iteration_bounds = array<i64: 2>, scalar_prefetch = 0 : i64, scratch_operands = 0 : i64, tpu.core_type = #tpu.core_type<tc>, window_params = [{transform_indices = @transform_0, window_bounds = array<i64: 1, 8, 32>}, {transform_indices = @transform_1, window_bounds = array<i64: 1, 8, 1>}, {pipeline_mode = #tpu.pipeline_mode<synchronous>, transform_indices = @transform_2, window_bounds = array<i64: 32, 64>}, {pipeline_mode = #tpu.pipeline_mode<synchronous>, transform_indices = @transform_3, window_bounds = array<i64: 1, 64>}, {transform_indices = @transform_4, window_bounds = array<i64: 1, 1, 1>}, {transform_indices = @transform_5, window_bounds = array<i64: 1, 1, 1>}]} {
    %c0 = arith.constant 0 : index
    %c0_0 = arith.constant 0 : index
    %c0_1 = arith.constant 0 : index
    %0 = vector.load %arg1[%c0, %c0_0, %c0_1] : memref<1x8x32xf32, #tpu.memory_space<vmem>>, vector<1x8x32xf32>
    %1 = vector.shape_cast %0 : vector<1x8x32xf32> to vector<8x32xf32>
    %2 = arith.truncf %1 : vector<8x32xf32> to vector<8x32xbf16>
    %c0_2 = arith.constant 0 : index
    %c0_3 = arith.constant 0 : index
    %3 = vector.load %arg3[%c0_2, %c0_3] : memref<32x64xbf16, #tpu.memory_space<vmem>>, vector<32x64xbf16>
    %cst = arith.constant dense<0.000000e+00> : vector<8x64xf32>
    %4 = tpu.matmul %2, %3, %cst {dimension_numbers = #tpu.dot_dimension_numbers<[1], [0], [0], [1], [0, 0, 1, 1], [], []>} : vector<8x32xbf16>, vector<32x64xbf16>, vector<8x64xf32> -> vector<8x64xf32>
    %c0_4 = arith.constant 0 : index
    %c0_5 = arith.constant 0 : index
    %5 = vector.load %arg4[%c0_4, %c0_5] : memref<1x64xf32, #tpu.memory_space<vmem>>, vector<1x64xf32>
    %6 = vector.broadcast %5 : vector<1x64xf32> to vector<8x64xf32>
    %7 = arith.addf %4, %6 : vector<8x64xf32>
    %cst_6 = arith.constant dense<0xFF800000> : vector<8xf32>
    %8 = vector.multi_reduction <maximumf>, %7, %cst_6 [1] : vector<8x64xf32> to vector<8xf32>
    %9 = vector.shape_cast %8 : vector<8xf32> to vector<8x1xf32>
    %10 = vector.broadcast %9 : vector<8x1xf32> to vector<8x64xf32>
    %11 = arith.subf %7, %10 : vector<8x64xf32>
    %12 = math.exp %11 : vector<8x64xf32>
    %cst_7 = arith.constant dense<0.000000e+00> : vector<8xf32>
    %13 = vector.multi_reduction <add>, %12, %cst_7 [1] : vector<8x64xf32> to vector<8xf32>
    %14 = vector.shape_cast %13 : vector<8xf32> to vector<8x1xf32>
    %15 = math.log %14 : vector<8x1xf32>
    %16 = arith.addf %9, %15 : vector<8x1xf32>
    %17 = vector.broadcast %16 : vector<8x1xf32> to vector<8x64xf32>
    %18 = arith.subf %7, %17 : vector<8x64xf32>
    %c0_8 = arith.constant 0 : index
    %c0_9 = arith.constant 0 : index
    %c0_10 = arith.constant 0 : index
    %19 = vector.load %arg2[%c0_8, %c0_9, %c0_10] : memref<1x8x1xi32, #tpu.memory_space<vmem>>, vector<1x8x1xi32>
    %20 = vector.shape_cast %19 : vector<1x8x1xi32> to vector<8x1xi32>
    %21 = tpu.iota {dimensions = array<i32: 1>} : vector<8x64xi32>
    %22 = vector.broadcast %20 : vector<8x1xi32> to vector<8x64xi32>
    %23 = arith.cmpi eq, %21, %22 : vector<8x64xi32>
    %24 = arith.extui %23 : vector<8x64xi1> to vector<8x64xi32>
    %25 = arith.sitofp %24 : vector<8x64xi32> to vector<8x64xf32>
    %26 = arith.mulf %18, %25 : vector<8x64xf32>
    %cst_11 = arith.constant dense<0.000000e+00> : vector<8xf32>
    %27 = vector.multi_reduction <add>, %26, %cst_11 [1] : vector<8x64xf32> to vector<8xf32>
    %28 = vector.shape_cast %27 : vector<8xf32> to vector<8x1xf32>
    %c0_i32 = arith.constant 0 : i32
    %29 = vector.broadcast %c0_i32 : i32 to vector<8x1xi32>
    %30 = arith.cmpi ne, %20, %29 : vector<8x1xi32>
    %c1_i32 = arith.constant 1 : i32
    %31 = vector.broadcast %c1_i32 : i32 to vector<8x1xi32>
    %32 = arith.cmpi ne, %20, %31 : vector<8x1xi32>
    %33 = arith.andi %30, %32 : vector<8x1xi1>
    %34 = arith.extui %33 : vector<8x1xi1> to vector<8x1xi32>
    %35 = arith.sitofp %34 : vector<8x1xi32> to vector<8x1xf32>
    %36 = arith.mulf %28, %35 : vector<8x1xf32>
    %cst_12 = arith.constant dense<0.000000e+00> : vector<1xf32>
    %37 = vector.multi_reduction <add>, %36, %cst_12 [0] : vector<8x1xf32> to vector<1xf32>
    %38 = vector.shape_cast %37 : vector<1xf32> to vector<1x1xf32>
    %c0_13 = arith.constant 0 : index
    %c0_14 = arith.constant 0 : index
    %c0_15 = arith.constant 0 : index
    %39 = vector.load %arg5[%c0_13, %c0_14, %c0_15] : memref<1x1x1xf32, #tpu.memory_space<vmem>>, vector<1x1x1xf32>
    %40 = vector.shape_cast %39 : vector<1x1x1xf32> to vector<1x1xf32>
    %41 = vector.shape_cast %38 : vector<1x1xf32> to vector<1x1x1xf32>
    tpu.vector_store %arg5[%c0_13, %c0_14, %c0_15], %41 {strides = array<i32>} : memref<1x1x1xf32, #tpu.memory_space<vmem>>, vector<1x1x1xf32>,
    %42 = arith.extui %33 : vector<8x1xi1> to vector<8x1xi32>
    %43 = arith.sitofp %42 : vector<8x1xi32> to vector<8x1xf32>
    %cst_16 = arith.constant dense<0.000000e+00> : vector<1xf32>
    %44 = vector.multi_reduction <add>, %43, %cst_16 [0] : vector<8x1xf32> to vector<1xf32>
    %45 = vector.shape_cast %44 : vector<1xf32> to vector<1x1xf32>
    %46 = arith.fptosi %45 : vector<1x1xf32> to vector<1x1xi32>
    %c0_17 = arith.constant 0 : index
    %c0_18 = arith.constant 0 : index
    %c0_19 = arith.constant 0 : index
    %47 = vector.load %arg6[%c0_17, %c0_18, %c0_19] : memref<1x1x1xi32, #tpu.memory_space<vmem>>, vector<1x1x1xi32>
    %48 = vector.shape_cast %47 : vector<1x1x1xi32> to vector<1x1xi32>
    %49 = vector.shape_cast %46 : vector<1x1xi32> to vector<1x1x1xi32>
    tpu.vector_store %arg6[%c0_17, %c0_18, %c0_19], %49 {strides = array<i32>} : memref<1x1x1xi32, #tpu.memory_space<vmem>>, vector<1x1x1xi32>,
    return
  }
  func.func @transform_0(%arg0: i32) -> (i32, i32, i32) {
    %c0_i32 = arith.constant 0 : i32
    %c0_i32_0 = arith.constant 0 : i32
    %c0_i32_1 = arith.constant 0 : i32
    return %arg0, %c0_i32, %c0_i32_0 : i32, i32, i32
  }
  func.func @transform_1(%arg0: i32) -> (i32, i32, i32) {
    %c0_i32 = arith.constant 0 : i32
    %c0_i32_0 = arith.constant 0 : i32
    %c0_i32_1 = arith.constant 0 : i32
    return %arg0, %c0_i32, %c0_i32_0 : i32, i32, i32
  }
  func.func @transform_2(%arg0: i32) -> (i32, i32) {
    %c0_i32 = arith.constant 0 : i32
    %c0_i32_0 = arith.constant 0 : i32
    %c0_i32_1 = arith.constant 0 : i32
    return %c0_i32, %c0_i32_0 : i32, i32
  }
  func.func @transform_3(%arg0: i32) -> (i32, i32) {
    %c0_i32 = arith.constant 0 : i32
    %c0_i32_0 = arith.constant 0 : i32
    %c0_i32_1 = arith.constant 0 : i32
    return %c0_i32, %c0_i32_0 : i32, i32
  }
  func.func @transform_4(%arg0: i32) -> (i32, i32, i32) {
    %c0_i32 = arith.constant 0 : i32
    %c0_i32_0 = arith.constant 0 : i32
    %c0_i32_1 = arith.constant 0 : i32
    return %arg0, %c0_i32, %c0_i32_0 : i32, i32, i32
  }
  func.func @transform_5(%arg0: i32) -> (i32, i32, i32) {
    %c0_i32 = arith.constant 0 : i32
    %c0_i32_0 = arith.constant 0 : i32
    %c0_i32_1 = arith.constant 0 : i32
    return %arg0, %c0_i32, %c0_i32_0 : i32, i32, i32
  }
}

</mosaic_0001>

<llo_original>
// kernel: transformer_nmt_mh_forward.9
$region0: #{transformer_nmt_mh_forward.9}
  #allocation0 [shape = 'u32[]', space=smem, size = 0x4, offset = 0x4, fixed_abs, tag = 'smem constant byte address 0x4 - core index']
  #allocation1 [shape = 'u32[144,128]{1,0:T(1,128)}', space=vmem, size = 0x12000, scoped, tag = 'internal scratch']
  %s0 = inlined_call_operand.vmem [shape: f32[2,8,32], index: 0, kind: input, shape index: {}]
  %s1 = inlined_call_operand.vmem [shape: s32[2,8,1], index: 1, kind: input, shape index: {}]
  %s2 = inlined_call_operand.vmem [shape: bf16[32,64], index: 2, kind: input, shape index: {}]
  %s3 = inlined_call_operand.vmem [shape: f32[1,64], index: 3, kind: input, shape index: {}]
  %s4 = inlined_call_operand.vmem [shape: f32[2,1,1], index: 4, kind: output, shape index: {0}]
  %s5 = inlined_call_operand.vmem [shape: s32[2,1,1], index: 5, kind: output, shape index: {1}]
  %6 = xla_tuple %s4, %s5
  %s7 = sld [smem:[#allocation0]]
  $region57: #{transformer_nmt_mh_forward.9} parent=0
    _
  %s9 = ssub.s32 1, %s7
  %s10 = scalar_select 0, %s9, %s7
  loop: start=0, step=1, limit=4
  $region2: #{transformer_nmt_mh_forward.9} parent=0 // loop_pre_header
    _
  $region3: #{transformer_nmt_mh_forward.9} parent=0 // loop_header
    %s12 = sphi 0, %s16
    %p13 = scmp.ge.s32.totalorder %s12, 4
    %s22 = sphi 0, %s24
    %s25 = sphi 0, %s22
    %s26 = sphi 0, %s25
    %s42 = sphi 0, %s26
    %s48 = sphi 0, %s50
    %s51 = sphi 0, %s48
    %s52 = sphi 0, %s51
    %s68 = sphi 0, %s52
    %s72 = sphi 0, %s72
    %s74 = sphi 0, %s72
    %s75 = sphi 0, %s74
    %s89 = sphi 0, %s75
    %s93 = sphi 0, %s93
    %s95 = sphi 0, %s93
    %s96 = sphi 0, %s95
    %s110 = sphi 0, %s96
    %s116 = sphi 0, %s118
    %s119 = sphi 0, %s116
    %s120 = sphi 0, %s119
    %s136 = sphi 0, %s120
    %s142 = sphi 0, %s144
    %s145 = sphi 0, %s142
    %s146 = sphi 0, %s145
    %s162 = sphi 0, %s146
  $region4: #{transformer_nmt_mh_forward.9} parent=0 // loop_header_branch
    %15 = sbr.rel (%p13) target = $region8
  $region5: #{transformer_nmt_mh_forward.9} parent=0 // loop_body
    %s17 = ssub.s32 %s12, 1
    %s18 = ssub.s32 %s12, 2
    %s19 = sadd.s32 %s12, 1
    %s20 = ssub.s32 %s12, %s19
    %p21 = scmp.eq.s32.totalorder %s20, 0
    %s23 = sadd.s32 %s22, 1
    %s24 = scalar_select %p21, %s22, %s23
    %p27 = pneg %p21
    %p28 = scmp.eq.s32.totalorder %s12, 1
    %p29 = por %p27, %p28
    %p30 = scmp.ne.s32.totalorder %s22, %s25
    %p31 = scmp.eq.s32.totalorder %s12, 0
    %p32 = por %p30, %p31
    %p33 = scmp.ne.s32.totalorder %s22, %s25
    %p34 = scmp.eq.s32.totalorder %s17, 1
    %p35 = por %p33, %p34
    %p36 = scmp.ne.s32.totalorder %s25, %s26
    %p37 = scmp.eq.s32.totalorder %s17, 0
    %p38 = por %p36, %p37
    %p39 = scmp.ne.s32.totalorder %s25, %s26
    %p40 = scmp.eq.s32.totalorder %s18, 1
    %p41 = por %p39, %p40
    %p43 = scmp.ne.s32.totalorder %s26, %s42
    %p44 = scmp.eq.s32.totalorder %s18, 0
    %p45 = por %p43, %p44
    %s46 = ssub.s32 %s12, %s19
    %p47 = scmp.eq.s32.totalorder %s46, 0
    %s49 = sadd.s32 %s48, 1
    %s50 = scalar_select %p47, %s48, %s49
    %p53 = pneg %p47
    %p54 = scmp.eq.s32.totalorder %s12, 1
    %p55 = por %p53, %p54
    %p56 = scmp.ne.s32.totalorder %s48, %s51
    %p57 = scmp.eq.s32.totalorder %s12, 0
    %p58 = por %p56, %p57
    %p59 = scmp.ne.s32.totalorder %s48, %s51
    %p60 = scmp.eq.s32.totalorder %s17, 1
    %p61 = por %p59, %p60
    %p62 = scmp.ne.s32.totalorder %s51, %s52
    %p63 = scmp.eq.s32.totalorder %s17, 0
    %p64 = por %p62, %p63
    %p65 = scmp.ne.s32.totalorder %s51, %s52
    %p66 = scmp.eq.s32.totalorder %s18, 1
    %p67 = por %p65, %p66
    %p69 = scmp.ne.s32.totalorder %s52, %s68
    %p70 = scmp.eq.s32.totalorder %s18, 0
    %p71 = por %p69, %p70
    %s73 = sadd.s32 %s72, 1
    %p76 = scmp.eq.s32.totalorder %s12, 1
    %p77 = scmp.ne.s32.totalorder %s72, %s74
    %p78 = scmp.eq.s32.totalorder %s12, 0
    %p79 = por %p77, %p78
    %p80 = scmp.ne.s32.totalorder %s72, %s74
    %p81 = scmp.eq.s32.totalorder %s17, 1
    %p82 = por %p80, %p81
    %p83 = scmp.ne.s32.totalorder %s74, %s75
    %p84 = scmp.eq.s32.totalorder %s17, 0
    %p85 = por %p83, %p84
    %p86 = scmp.ne.s32.totalorder %s74, %s75
    %p87 = scmp.eq.s32.totalorder %s18, 1
    %p88 = por %p86, %p87
    %p90 = scmp.ne.s32.totalorder %s75, %s89
    %p91 = scmp.eq.s32.totalorder %s18, 0
    %p92 = por %p90, %p91
    %s94 = sadd.s32 %s93, 1
    %p97 = scmp.eq.s32.totalorder %s12, 1
    %p98 = scmp.ne.s32.totalorder %s93, %s95
    %p99 = scmp.eq.s32.totalorder %s12, 0
    %p100 = por %p98, %p99
    %p101 = scmp.ne.s32.totalorder %s93, %s95
    %p102 = scmp.eq.s32.totalorder %s17, 1
    %p103 = por %p101, %p102
    %p104 = scmp.ne.s32.totalorder %s95, %s96
    %p105 = scmp.eq.s32.totalorder %s17, 0
    %p106 = por %p104, %p105
    %p107 = scmp.ne.s32.totalorder %s95, %s96
    %p108 = scmp.eq.s32.totalorder %s18, 1
    %p109 = por %p107, %p108
    %p111 = scmp.ne.s32.totalorder %s96, %s110
    %p112 = scmp.eq.s32.totalorder %s18, 0
    %p113 = por %p111, %p112
    %s114 = ssub.s32 %s12, %s19
    %p115 = scmp.eq.s32.totalorder %s114, 0
    %s117 = sadd.s32 %s116, 1
    %s118 = scalar_select %p115, %s116, %s117
    %p121 = pneg %p115
    %p122 = scmp.eq.s32.totalorder %s12, 1
    %p123 = por %p121, %p122
    %p124 = scmp.ne.s32.totalorder %s116, %s119
    %p125 = scmp.eq.s32.totalorder %s12, 0
    %p126 = por %p124, %p125
    %p127 = scmp.ne.s32.totalorder %s116, %s119
    %p128 = scmp.eq.s32.totalorder %s17, 1
    %p129 = por %p127, %p128
    %p130 = scmp.ne.s32.totalorder %s119, %s120
    %p131 = scmp.eq.s32.totalorder %s17, 0
    %p132 = por %p130, %p131
    %p133 = scmp.ne.s32.totalorder %s119, %s120
    %p134 = scmp.eq.s32.totalorder %s18, 1
    %p135 = por %p133, %p134
    %p137 = scmp.ne.s32.totalorder %s120, %s136
    %p138 = scmp.eq.s32.totalorder %s18, 0
    %p139 = por %p137, %p138
    %s140 = ssub.s32 %s12, %s19
    %p141 = scmp.eq.s32.totalorder %s140, 0
    %s143 = sadd.s32 %s142, 1
    %s144 = scalar_select %p141, %s142, %s143
    %p147 = pneg %p141
    %p148 = scmp.eq.s32.totalorder %s12, 1
    %p149 = por %p147, %p148
    %p150 = scmp.ne.s32.totalorder %s142, %s145
    %p151 = scmp.eq.s32.totalorder %s12, 0
    %p152 = por %p150, %p151
    %p153 = scmp.ne.s32.totalorder %s142, %s145
    %p154 = scmp.eq.s32.totalorder %s17, 1
    %p155 = por %p153, %p154
    %p156 = scmp.ne.s32.totalorder %s145, %s146
    %p157 = scmp.eq.s32.totalorder %s17, 0
    %p158 = por %p156, %p157
    %p159 = scmp.ne.s32.totalorder %s145, %s146
    %p160 = scmp.eq.s32.totalorder %s18, 1
    %p161 = por %p159, %p160
    %p163 = scmp.ne.s32.totalorder %s146, %s162
    %p164 = scmp.eq.s32.totalorder %s18, 0
    %p165 = por %p163, %p164
    %p166 = scmp.le.s32.totalorder 1, %s12
    %p167 = scmp.lt.s32.totalorder %s12, 3
    %p168 = pnand %p166, %p167
    %p169 = pneg %p168
    // Predicated region
    $region9: #{transformer_nmt_mh_forward.9} parent=5 // pred_check
      _
    $region10: #{transformer_nmt_mh_forward.9} parent=5 // pred_check_branch
      %171 = sbr.rel (%p168) target = $region12
    $region11: #{transformer_nmt_mh_forward.9} parent=5 // pred_region
      %s172 = ssub.s32 %s12, 1
      // Predicated region
      $region13: #{transformer_nmt_mh_forward.9} parent=11 // pred_check
        %p173 = pneg %p85
      $region14: #{transformer_nmt_mh_forward.9} parent=11 // pred_check_branch
        %175 = sbr.rel (%p173) target = $region16
      $region15: #{transformer_nmt_mh_forward.9} parent=11 // pred_region
        _
      $region16: #{transformer_nmt_mh_forward.9} parent=11 // pred_fallthru
        _
      // Predicated region
      $region17: #{transformer_nmt_mh_forward.9} parent=11 // pred_check
        %p176 = pneg %p106
      $region18: #{transformer_nmt_mh_forward.9} parent=11 // pred_check_branch
        %178 = sbr.rel (%p176) target = $region20
      $region19: #{transformer_nmt_mh_forward.9} parent=11 // pred_region
        _
      $region20: #{transformer_nmt_mh_forward.9} parent=11 // pred_fallthru
        _
    $region12: #{transformer_nmt_mh_forward.9} parent=5 // pred_fallthru
      _
    %p179 = scmp.lt.s32.totalorder %s12, 2
    // Predicated region
    $region21: #{transformer_nmt_mh_forward.9} parent=5 // pred_check
      %p180 = pneg %p179
    $region22: #{transformer_nmt_mh_forward.9} parent=5 // pred_check_branch
      %182 = sbr.rel (%p180) target = $region24
    $region23: #{transformer_nmt_mh_forward.9} parent=5 // pred_region
      // Predicated region
      $region25: #{transformer_nmt_mh_forward.9} parent=23 // pred_check
        %p183 = pneg %p32
      $region26: #{transformer_nmt_mh_forward.9} parent=23 // pred_check_branch
        %185 = sbr.rel (%p183) target = $region28
      $region27: #{transformer_nmt_mh_forward.9} parent=23 // pred_region
        %p186 = scmp.lt.s32.totalorder %s12, 1
        %s187 = scalar_select %p186, %s12, 1
        %s188 = smul.addr %s187, 8
        %s189 = scalar_lea.vmem %s0, %s188
      $region28: #{transformer_nmt_mh_forward.9} parent=23 // pred_fallthru
        _
      // Predicated region
      $region29: #{transformer_nmt_mh_forward.9} parent=23 // pred_check
        %p190 = pneg %p58
      $region30: #{transformer_nmt_mh_forward.9} parent=23 // pred_check_branch
        %192 = sbr.rel (%p190) target = $region32
      $region31: #{transformer_nmt_mh_forward.9} parent=23 // pred_region
        %p193 = scmp.lt.s32.totalorder %s12, 1
        %s194 = scalar_select %p193, %s12, 1
        %s195 = smul.addr %s194, 8
        %s196 = scalar_lea.vmem %s1, %s195
      $region32: #{transformer_nmt_mh_forward.9} parent=23 // pred_fallthru
        _
    $region24: #{transformer_nmt_mh_forward.9} parent=5 // pred_fallthru
      _
    %p197 = scmp.le.s32.totalorder 1, %s12
    %p198 = scmp.lt.s32.totalorder %s12, 3
    %p199 = pnand %p197, %p198
    %p200 = pneg %p199
    // Predicated region
    $region33: #{transformer_nmt_mh_forward.9} parent=5 // pred_check
      _
    $region34: #{transformer_nmt_mh_forward.9} parent=5 // pred_check_branch
      %202 = sbr.rel (%p199) target = $region36
    $region35: #{transformer_nmt_mh_forward.9} parent=5 // pred_region
      %s203 = ssub.s32 %s12, 1
      %p204 = scmp.lt.s32.totalorder %s17, 1
      %s205 = scalar_select %p204, %s17, 1
      %s206 = smul.addr %s205, 8
      %s207 = scalar_lea.vmem %s0, %s206
      %p208 = pneg %p38
      %p209 = pneg %p35
      %p210 = scmp.lt.s32.totalorder %s17, 1
      %s211 = scalar_select %p210, %s17, 1
      %s212 = smul.addr %s211, 8
      %s213 = scalar_lea.vmem %s1, %s212
      %p214 = pneg %p64
      %p215 = pneg %p61
      %p216 = pneg %p85
      %p217 = pneg %p82
      %p218 = pneg %p106
      %p219 = pneg %p103
      %p220 = pneg %p132
      %p221 = pneg %p129
      %p222 = scmp.lt.s32.totalorder %s17, 1
      %s223 = scalar_select %p222, %s17, 1
      %s224 = scalar_lea.vmem %s4, %s223
      %p225 = pneg %p158
      %p226 = pneg %p155
      %p227 = scmp.lt.s32.totalorder %s17, 1
      %s228 = scalar_select %p227, %s17, 1
      %s229 = scalar_lea.vmem %s5, %s228
      %p230 = scmp.lt.s32.totalorder %s17, 1
      %s231 = scalar_select %p230, %s17, 1
      %s232 = smul.addr %s231, 8
      %s233 = scalar_lea.vmem %s0, %s232
      %p234 = scmp.lt.s32.totalorder %s17, 1
      %s235 = scalar_select %p234, %s17, 1
      %s236 = smul.addr %s235, 8
      %s237 = scalar_lea.vmem %s1, %s236
      %p238 = scmp.lt.s32.totalorder %s17, 1
      %s239 = scalar_select %p238, %s17, 1
      %s240 = scalar_lea.vmem %s4, %s239
      %p241 = scmp.lt.s32.totalorder %s17, 1
      %s242 = scalar_select %p241, %s17, 1
      %s243 = scalar_lea.vmem %s5, %s242
      %v245 = vld [vmem:[%s233] sm:$0xff]
      %v246 = vpack.c.bf16 %v245, %v245
      %v247 = vld [vmem:[%s2] sm:$0xf]
      %v248 = vld [vmem:[%s2 + $0x4] sm:$0xf]
      %v249 = vld [vmem:[%s2 + $0x8] sm:$0xf]
      %v250 = vld [vmem:[%s2 + $0xc] sm:$0xf]
      %v251 = vld [vmem:[%s3] sm:$0x1]
      %v253 = vlaneseq
      %v254 = vshrl.u32 %v253, 7
      %v255 = vsub.s32 0, %v254
      %v256 = vrot.slane %v251, %v255
      %v262 = vunpack.c.l.b16 %v247
      %v263 = vunpack.c.l.b16 %v248
      %v264 = vunpack.c.l.b16 %v249
      %v265 = vunpack.c.l.b16 %v250
      %v266 = vpack.c.b16 %v263, %v262
      %v267 = vpack.c.b16 %v265, %v264
      %vm270 = vcmask 261120
      %v272 = vsel %vm270, %v246, 0
      %274 = vmatprep.subr.bf16.mxu0 0
      %275 = vmatpush1.bf16.msra.mxu0 0
      %276 = vmatprep.subr.bf16.mxu0 0
      %277 = vmatpush1.bf16.msra.mxu0 0
      %278 = vmatprep.subr.bf16.mxu0 0
      %279 = vmatpush1.bf16.msra.mxu0 0
      %280 = vmatprep.subr.bf16.mxu0 0
      %281 = vmatpush1.bf16.msra.mxu0 0
      %282 = vmatprep.subr.bf16.mxu0 0
      %283 = vmatpush1.bf16.msra.mxu0 0
      %284 = vmatprep.subr.bf16.mxu0 0
      %285 = vmatpush1.bf16.msra.mxu0 0
      %286 = vmatprep.subr.bf16.mxu0 0
      %287 = vmatpush1.bf16.msra.mxu0 %v267
      %288 = vmatprep.subr.bf16.mxu0 0
      %289 = vmatpush1.bf16.msra.mxu0 %v266
      %290 = vmatprep.subr.bf16.mxu0 0
      %291 = vmatpush2.bf16.msra.mxu0 0
      %292 = vmatprep.subr.bf16.mxu0 0
      %293 = vmatpush2.bf16.msra.mxu0 0
      %294 = vmatprep.subr.bf16.mxu0 0
      %295 = vmatpush2.bf16.msra.mxu0 0
      %296 = vmatprep.subr.bf16.mxu0 0
      %297 = vmatpush2.bf16.msra.mxu0 0
      %298 = vmatprep.subr.bf16.mxu0 0
      %299 = vmatpush2.bf16.msra.mxu0 0
      %300 = vmatprep.subr.bf16.mxu0 0
      %301 = vmatpush2.bf16.msra.mxu0 0
      %302 = vmatprep.subr.bf16.mxu0 0
      %303 = vmatpush2.bf16.msra.mxu0 0
      %304 = vmatprep.subr.bf16.mxu0 0
      %305 = vmatpush2.bf16.msra.mxu0 0
      %306 = vmatprep.mubr.bf16.mxu0 0
      %307 = vmatmul.mubr.bf16.gmra.mxu0 %v272
      %v308 = vpop.f32.mrf.mxu0
      %v309 = vadd.f32 %v256, %v308
      %v310 = vpop.f32.mrf.mxu0
      %v311 = vpop.f32.mrf.mxu0
      %v312 = vpop.f32.mrf.mxu0
      %313 = vdwg.mxu0
      %vm314 = vcmask 523264
      %v315 = vsel %vm314, %v309, -inf
      %316 = vmax.xlane.f32.xlu0 %v315
      %v317 = vpop.xlane.xlu0 %316
      %v318 = vsub.f32 %v309, %v317
      %v319 = vmul.f32 %v318, 1.442695
      %v320 = vpow.pop %v319
      %v321 = vsel %vm314, %v320, 0.0
      %322 = vadd.xlane.f32.xlu0 %v321
      %v323 = vpop.xlane.xlu0 %322
      %v324 = vlog2.pop %v323
      %v325 = vmul.f32 %v324, 0.6931472
      %v326 = vadd.f32 %v317, %v325
      %v327 = vsub.f32 %v309, %v326
      %v328 = vld [vmem:[%s237] sm:$0xff]
      %v329 = vlaneseq
      %v330 = vand.u32 %v329, 127
      %331 = vset.pattern.permute.xlu0 0
      %332 = vperm.xlu0 %331, %v328
      %v333 = vpop.permute.xlu0 %332
      %vm334 = vcmp.eq.s32.totalorder %v330, %v333
      %v335 = vsel %vm334, 1, 0
      %v336 = vcvt.s32.f32 %v335
      %v337 = vmul.f32 %v327, %v336
      %v338 = vsel %vm314, %v337, 0.0
      %339 = vadd.xlane.f32.xlu0 %v338
      %v340 = vpop.xlane.xlu0 %339
      %vm341 = vcmp.ne.s32.totalorder %v328, 0
      %vm342 = vcmp.ne.s32.totalorder %v328, 1
      %vm343 = vmand %vm341, %vm342
      %v344 = vsel %vm343, 1, 0
      %v345 = vcvt.s32.f32 %v344
      %v346 = vmul.f32 %v340, %v345
      %vm347 = vcmask 7168
      %v348 = vsel %vm347, %v346, 0.0
      %v349 = vrot.slane %v348, 4
      %v350 = vadd.f32 %v348, %v349
      %v351 = vrot.slane %v350, 2
      %v352 = vadd.f32 %v350, %v351
      %v353 = vrot.slane %v352, 1
      %v354 = vadd.f32 %v352, %v353
      %vm355 = vcmask 0
      %356 = vst.msk [vmem:[%s240] sm:$0x1] %vm355, %v354
      %v357 = vsel %vm347, %v345, 0.0
      %v358 = vrot.slane %v357, 4
      %v359 = vadd.f32 %v357, %v358
      %v360 = vrot.slane %v359, 2
      %v361 = vadd.f32 %v359, %v360
      %v362 = vrot.slane %v361, 1
      %v363 = vadd.f32 %v361, %v362
      %v364 = vcvt.f32.s32.to.zero.pseudo %v363
      %365 = vst.msk [vmem:[%s243] sm:$0x1] %vm355, %v364
      %p366 = scmp.lt.s32.totalorder %s17, 1
      %s367 = scalar_select %p366, %s17, 1
      %s368 = scalar_lea.vmem %s4, %s367
      %p369 = scmp.lt.s32.totalorder %s17, 1
      %s370 = scalar_select %p369, %s17, 1
      %s371 = scalar_lea.vmem %s5, %s370
      // Predicated region
      $region37: #{transformer_nmt_mh_forward.9} parent=35 // pred_check
        %p372 = pneg %p129
      $region38: #{transformer_nmt_mh_forward.9} parent=35 // pred_check_branch
        %374 = sbr.rel (%p372) target = $region40
      $region39: #{transformer_nmt_mh_forward.9} parent=35 // pred_region
        _
      $region40: #{transformer_nmt_mh_forward.9} parent=35 // pred_fallthru
        _
      // Predicated region
      $region41: #{transformer_nmt_mh_forward.9} parent=35 // pred_check
        %p375 = pneg %p155
      $region42: #{transformer_nmt_mh_forward.9} parent=35 // pred_check_branch
        %377 = sbr.rel (%p375) target = $region44
      $region43: #{transformer_nmt_mh_forward.9} parent=35 // pred_region
        _
      $region44: #{transformer_nmt_mh_forward.9} parent=35 // pred_fallthru
        _
    $region36: #{transformer_nmt_mh_forward.9} parent=5 // pred_fallthru
      _
    %p378 = scmp.le.s32.totalorder 2, %s12
    // Predicated region
    $region45: #{transformer_nmt_mh_forward.9} parent=5 // pred_check
      %p379 = pneg %p378
    $region46: #{transformer_nmt_mh_forward.9} parent=5 // pred_check_branch
      %381 = sbr.rel (%p379) target = $region48
    $region47: #{transformer_nmt_mh_forward.9} parent=5 // pred_region
      %s382 = ssub.s32 %s12, 2
      // Predicated region
      $region49: #{transformer_nmt_mh_forward.9} parent=47 // pred_check
        %p383 = pneg %p135
      $region50: #{transformer_nmt_mh_forward.9} parent=47 // pred_check_branch
        %385 = sbr.rel (%p383) target = $region52
      $region51: #{transformer_nmt_mh_forward.9} parent=47 // pred_region
        %p386 = scmp.lt.s32.totalorder %s18, 1
        %s387 = scalar_select %p386, %s18, 1
        %s388 = scalar_lea.vmem %s4, %s387
      $region52: #{transformer_nmt_mh_forward.9} parent=47 // pred_fallthru
        _
      // Predicated region
      $region53: #{transformer_nmt_mh_forward.9} parent=47 // pred_check
        %p389 = pneg %p161
      $region54: #{transformer_nmt_mh_forward.9} parent=47 // pred_check_branch
        %391 = sbr.rel (%p389) target = $region56
      $region55: #{transformer_nmt_mh_forward.9} parent=47 // pred_region
        %p392 = scmp.lt.s32.totalorder %s18, 1
        %s393 = scalar_select %p392, %s18, 1
        %s394 = scalar_lea.vmem %s5, %s393
      $region56: #{transformer_nmt_mh_forward.9} parent=47 // pred_fallthru
        _
    $region48: #{transformer_nmt_mh_forward.9} parent=5 // pred_fallthru
      _
  $region6: #{transformer_nmt_mh_forward.9} parent=0 // loop_footer
    %s16 = sadd.s32 1, %s12
  $region7: #{transformer_nmt_mh_forward.9} parent=0 // loop_footer_branch
    %11 = sbr.rel target = $region3
  $region8: #{transformer_nmt_mh_forward.9} parent=0 // loop_exit
    _

// kernel: transformer_nmt_mh_forward.5
$region0: #{transformer_nmt_mh_forward.5}
  #allocation0 [shape = 'u32[]', space=smem, size = 0x4, offset = 0x4, fixed_abs, tag = 'smem constant byte address 0x4 - core index']
  #allocation1 [shape = 'u32[144,128]{1,0:T(1,128)}', space=vmem, size = 0x12000, scoped, tag = 'internal scratch']
  %s0 = inlined_call_operand.vmem [shape: f32[2,8,32], index: 0, kind: input, shape index: {}]
  %s1 = inlined_call_operand.vmem [shape: bf16[32,96], index: 1, kind: input, shape index: {}]
  %s2 = inlined_call_operand.vmem [shape: f32[1,96], index: 2, kind: input, shape index: {}]
  %s3 = inlined_call_operand.vmem [shape: bf16[32,32], index: 3, kind: input, shape index: {}]
  %s4 = inlined_call_operand.vmem [shape: f32[1,32], index: 4, kind: input, shape index: {}]
  %s5 = inlined_call_operand.vmem [shape: f32[1,32], index: 5, kind: input, shape index: {}]
  %s6 = inlined_call_operand.vmem [shape: f32[1,32], index: 6, kind: input, shape index: {}]
  %s7 = inlined_call_operand.vmem [shape: bf16[32,64], index: 7, kind: input, shape index: {}]
  %s8 = inlined_call_operand.vmem [shape: f32[1,64], index: 8, kind: input, shape index: {}]
  %s9 = inlined_call_operand.vmem [shape: bf16[64,32], index: 9, kind: input, shape index: {}]
  %s10 = inlined_call_operand.vmem [shape: f32[1,32], index: 10, kind: input, shape index: {}]
  %s11 = inlined_call_operand.vmem [shape: f32[1,32], index: 11, kind: input, shape index: {}]
  %s12 = inlined_call_operand.vmem [shape: f32[1,32], index: 12, kind: input, shape index: {}]
  %s13 = inlined_call_operand.vmem [shape: f32[2,8,32], index: 13, kind: output, shape index: {}]
  %s14 = sld [smem:[#allocation0]]
  $region85: #{transformer_nmt_mh_forward.5} parent=0
    _
  %s16 = ssub.s32 1, %s14
  %s17 = scalar_select 0, %s16, %s14
  loop: start=0, step=1, limit=4
  $region2: #{transformer_nmt_mh_forward.5} parent=0 // loop_pre_header
    _
  $region3: #{transformer_nmt_mh_forward.5} parent=0 // loop_header
    %s19 = sphi 0, %s23
    %p20 = scmp.ge.s32.totalorder %s19, 4
    %s29 = sphi 0, %s31
    %s32 = sphi 0, %s29
    %s33 = sphi 0, %s32
    %s49 = sphi 0, %s33
    %s53 = sphi 0, %s53
    %s55 = sphi 0, %s53
    %s56 = sphi 0, %s55
    %s70 = sphi 0, %s56
    %s74 = sphi 0, %s74
    %s76 = sphi 0, %s74
    %s77 = sphi 0, %s76
    %s91 = sphi 0, %s77
    %s95 = sphi 0, %s95
    %s97 = sphi 0, %s95
    %s98 = sphi 0, %s97
    %s112 = sphi 0, %s98
    %s116 = sphi 0, %s116
    %s118 = sphi 0, %s116
    %s119 = sphi 0, %s118
    %s133 = sphi 0, %s119
    %s137 = sphi 0, %s137
    %s139 = sphi 0, %s137
    %s140 = sphi 0, %s139
    %s154 = sphi 0, %s140
    %s158 = sphi 0, %s158
    %s160 = sphi 0, %s158
    %s161 = sphi 0, %s160
    %s175 = sphi 0, %s161
    %s179 = sphi 0, %s179
    %s181 = sphi 0, %s179
    %s182 = sphi 0, %s181
    %s196 = sphi 0, %s182
    %s200 = sphi 0, %s200
    %s202 = sphi 0, %s200
    %s203 = sphi 0, %s202
    %s217 = sphi 0, %s203
    %s221 = sphi 0, %s221
    %s223 = sphi 0, %s221
    %s224 = sphi 0, %s223
    %s238 = sphi 0, %s224
    %s242 = sphi 0, %s242
    %s244 = sphi 0, %s242
    %s245 = sphi 0, %s244
    %s259 = sphi 0, %s245
    %s263 = sphi 0, %s263
    %s265 = sphi 0, %s263
    %s266 = sphi 0, %s265
    %s280 = sphi 0, %s266
    %s284 = sphi 0, %s284
    %s286 = sphi 0, %s284
    %s287 = sphi 0, %s286
    %s301 = sphi 0, %s287
    %s307 = sphi 0, %s309
    %s310 = sphi 0, %s307
    %s311 = sphi 0, %s310
    %s327 = sphi 0, %s311
  $region4: #{transformer_nmt_mh_forward.5} parent=0 // loop_header_branch
    %22 = sbr.rel (%p20) target = $region8
  $region5: #{transformer_nmt_mh_forward.5} parent=0 // loop_body
    %s24 = ssub.s32 %s19, 1
    %s25 = ssub.s32 %s19, 2
    %s26 = sadd.s32 %s19, 1
    %s27 = ssub.s32 %s19, %s26
    %p28 = scmp.eq.s32.totalorder %s27, 0
    %s30 = sadd.s32 %s29, 1
    %s31 = scalar_select %p28, %s29, %s30
    %p34 = pneg %p28
    %p35 = scmp.eq.s32.totalorder %s19, 1
    %p36 = por %p34, %p35
    %p37 = scmp.ne.s32.totalorder %s29, %s32
    %p38 = scmp.eq.s32.totalorder %s19, 0
    %p39 = por %p37, %p38
    %p40 = scmp.ne.s32.totalorder %s29, %s32
    %p41 = scmp.eq.s32.totalorder %s24, 1
    %p42 = por %p40, %p41
    %p43 = scmp.ne.s32.totalorder %s32, %s33
    %p44 = scmp.eq.s32.totalorder %s24, 0
    %p45 = por %p43, %p44
    %p46 = scmp.ne.s32.totalorder %s32, %s33
    %p47 = scmp.eq.s32.totalorder %s25, 1
    %p48 = por %p46, %p47
    %p50 = scmp.ne.s32.totalorder %s33, %s49
    %p51 = scmp.eq.s32.totalorder %s25, 0
    %p52 = por %p50, %p51
    %s54 = sadd.s32 %s53, 1
    %p57 = scmp.eq.s32.totalorder %s19, 1
    %p58 = scmp.ne.s32.totalorder %s53, %s55
    %p59 = scmp.eq.s32.totalorder %s19, 0
    %p60 = por %p58, %p59
    %p61 = scmp.ne.s32.totalorder %s53, %s55
    %p62 = scmp.eq.s32.totalorder %s24, 1
    %p63 = por %p61, %p62
    %p64 = scmp.ne.s32.totalorder %s55, %s56
    %p65 = scmp.eq.s32.totalorder %s24, 0
    %p66 = por %p64, %p65
    %p67 = scmp.ne.s32.totalorder %s55, %s56
    %p68 = scmp.eq.s32.totalorder %s25, 1
    %p69 = por %p67, %p68
    %p71 = scmp.ne.s32.totalorder %s56, %s70
    %p72 = scmp.eq.s32.totalorder %s25, 0
    %p73 = por %p71, %p72
    %s75 = sadd.s32 %s74, 1
    %p78 = scmp.eq.s32.totalorder %s19, 1
    %p79 = scmp.ne.s32.totalorder %s74, %s76
    %p80 = scmp.eq.s32.totalorder %s19, 0
    %p81 = por %p79, %p80
    %p82 = scmp.ne.s32.totalorder %s74, %s76
    %p83 = scmp.eq.s32.totalorder %s24, 1
    %p84 = por %p82, %p83
    %p85 = scmp.ne.s32.totalorder %s76, %s77
    %p86 = scmp.eq.s32.totalorder %s24, 0
    %p87 = por %p85, %p86
    %p88 = scmp.ne.s32.totalorder %s76, %s77
    %p89 = scmp.eq.s32.totalorder %s25, 1
    %p90 = por %p88, %p89
    %p92 = scmp.ne.s32.totalorder %s77, %s91
    %p93 = scmp.eq.s32.totalorder %s25, 0
    %p94 = por %p92, %p93
    %s96 = sadd.s32 %s95, 1
    %p99 = scmp.eq.s32.totalorder %s19, 1
    %p100 = scmp.ne.s32.totalorder %s95, %s97
    %p101 = scmp.eq.s32.totalorder %s19, 0
    %p102 = por %p100, %p101
    %p103 = scmp.ne.s32.totalorder %s95, %s97
    %p104 = scmp.eq.s32.totalorder %s24, 1
    %p105 = por %p103, %p104
    %p106 = scmp.ne.s32.totalorder %s97, %s98
    %p107 = scmp.eq.s32.totalorder %s24, 0
    %p108 = por %p106, %p107
    %p109 = scmp.ne.s32.totalorder %s97, %s98
    %p110 = scmp.eq.s32.totalorder %s25, 1
    %p111 = por %p109, %p110
    %p113 = scmp.ne.s32.totalorder %s98, %s112
    %p114 = scmp.eq.s32.totalorder %s25, 0
    %p115 = por %p113, %p114
    %s117 = sadd.s32 %s116, 1
    %p120 = scmp.eq.s32.totalorder %s19, 1
    %p121 = scmp.ne.s32.totalorder %s116, %s118
    %p122 = scmp.eq.s32.totalorder %s19, 0
    %p123 = por %p121, %p122
    %p124 = scmp.ne.s32.totalorder %s116, %s118
    %p125 = scmp.eq.s32.totalorder %s24, 1
    %p126 = por %p124, %p125
    %p127 = scmp.ne.s32.totalorder %s118, %s119
    %p128 = scmp.eq.s32.totalorder %s24, 0
    %p129 = por %p127, %p128
    %p130 = scmp.ne.s32.totalorder %s118, %s119
    %p131 = scmp.eq.s32.totalorder %s25, 1
    %p132 = por %p130, %p131
    %p134 = scmp.ne.s32.totalorder %s119, %s133
    %p135 = scmp.eq.s32.totalorder %s25, 0
    %p136 = por %p134, %p135
    %s138 = sadd.s32 %s137, 1
    %p141 = scmp.eq.s32.totalorder %s19, 1
    %p142 = scmp.ne.s32.totalorder %s137, %s139
    %p143 = scmp.eq.s32.totalorder %s19, 0
    %p144 = por %p142, %p143
    %p145 = scmp.ne.s32.totalorder %s137, %s139
    %p146 = scmp.eq.s32.totalorder %s24, 1
    %p147 = por %p145, %p146
    %p148 = scmp.ne.s32.totalorder %s139, %s140
    %p149 = scmp.eq.s32.totalorder %s24, 0
    %p150 = por %p148, %p149
    %p151 = scmp.ne.s32.totalorder %s139, %s140
    %p152 = scmp.eq.s32.totalorder %s25, 1
    %p153 = por %p151, %p152
    %p155 = scmp.ne.s32.totalorder %s140, %s154
    %p156 = scmp.eq.s32.totalorder %s25, 0
    %p157 = por %p155, %p156
    %s159 = sadd.s32 %s158, 1
    %p162 = scmp.eq.s32.totalorder %s19, 1
    %p163 = scmp.ne.s32.totalorder %s158, %s160
    %p164 = scmp.eq.s32.totalorder %s19, 0
    %p165 = por %p163, %p164
    %p166 = scmp.ne.s32.totalorder %s158, %s160
    %p167 = scmp.eq.s32.totalorder %s24, 1
    %p168 = por %p166, %p167
    %p169 = scmp.ne.s32.totalorder %s160, %s161
    %p170 = scmp.eq.s32.totalorder %s24, 0
    %p171 = por %p169, %p170
    %p172 = scmp.ne.s32.totalorder %s160, %s161
    %p173 = scmp.eq.s32.totalorder %s25, 1
    %p174 = por %p172, %p173
    %p176 = scmp.ne.s32.totalorder %s161, %s175
    %p177 = scmp.eq.s32.totalorder %s25, 0
    %p178 = por %p176, %p177
    %s180 = sadd.s32 %s179, 1
    %p183 = scmp.eq.s32.totalorder %s19, 1
    %p184 = scmp.ne.s32.totalorder %s179, %s181
    %p185 = scmp.eq.s32.totalorder %s19, 0
    %p186 = por %p184, %p185
    %p187 = scmp.ne.s32.totalorder %s179, %s181
    %p188 = scmp.eq.s32.totalorder %s24, 1
    %p189 = por %p187, %p188
    %p190 = scmp.ne.s32.totalorder %s181, %s182
    %p191 = scmp.eq.s32.totalorder %s24, 0
    %p192 = por %p190, %p191
    %p193 = scmp.ne.s32.totalorder %s181, %s182
    %p194 = scmp.eq.s32.totalorder %s25, 1
    %p195 = por %p193, %p194
    %p197 = scmp.ne.s32.totalorder %s182, %s196
    %p198 = scmp.eq.s32.totalorder %s25, 0
    %p199 = por %p197, %p198
    %s201 = sadd.s32 %s200, 1
    %p204 = scmp.eq.s32.totalorder %s19, 1
    %p205 = scmp.ne.s32.totalorder %s200, %s202
    %p206 = scmp.eq.s32.totalorder %s19, 0
    %p207 = por %p205, %p206
    %p208 = scmp.ne.s32.totalorder %s200, %s202
    %p209 = scmp.eq.s32.totalorder %s24, 1
    %p210 = por %p208, %p209
    %p211 = scmp.ne.s32.totalorder %s202, %s203
    %p212 = scmp.eq.s32.totalorder %s24, 0
    %p213 = por %p211, %p212
    %p214 = scmp.ne.s32.totalorder %s202, %s203
    %p215 = scmp.eq.s32.totalorder %s25, 1
    %p216 = por %p214, %p215
    %p218 = scmp.ne.s32.totalorder %s203, %s217
    %p219 = scmp.eq.s32.totalorder %s25, 0
    %p220 = por %p218, %p219
    %s222 = sadd.s32 %s221, 1
    %p225 = scmp.eq.s32.totalorder %s19, 1
    %p226 = scmp.ne.s32.totalorder %s221, %s223
    %p227 = scmp.eq.s32.totalorder %s19, 0
    %p228 = por %p226, %p227
    %p229 = scmp.ne.s32.totalorder %s221, %s223
    %p230 = scmp.eq.s32.totalorder %s24, 1
    %p231 = por %p229, %p230
    %p232 = scmp.ne.s32.totalorder %s223, %s224
    %p233 = scmp.eq.s32.totalorder %s24, 0
    %p234 = por %p232, %p233
    %p235 = scmp.ne.s32.totalorder %s223, %s224
    %p236 = scmp.eq.s32.totalorder %s25, 1
    %p237 = por %p235, %p236
    %p239 = scmp.ne.s32.totalorder %s224, %s238
    %p240 = scmp.eq.s32.totalorder %s25, 0
    %p241 = por %p239, %p240
    %s243 = sadd.s32 %s242, 1
    %p246 = scmp.eq.s32.totalorder %s19, 1
    %p247 = scmp.ne.s32.totalorder %s242, %s244
    %p248 = scmp.eq.s32.totalorder %s19, 0
    %p249 = por %p247, %p248
    %p250 = scmp.ne.s32.totalorder %s242, %s244
    %p251 = scmp.eq.s32.totalorder %s24, 1
    %p252 = por %p250, %p251
    %p253 = scmp.ne.s32.totalorder %s244, %s245
    %p254 = scmp.eq.s32.totalorder %s24, 0
    %p255 = por %p253, %p254
    %p256 = scmp.ne.s32.totalorder %s244, %s245
    %p257 = scmp.eq.s32.totalorder %s25, 1
    %p258 = por %p256, %p257
    %p260 = scmp.ne.s32.totalorder %s245, %s259
    %p261 = scmp.eq.s32.totalorder %s25, 0
    %p262 = por %p260, %p261
    %s264 = sadd.s32 %s263, 1
    %p267 = scmp.eq.s32.totalorder %s19, 1
    %p268 = scmp.ne.s32.totalorder %s263, %s265
    %p269 = scmp.eq.s32.totalorder %s19, 0
    %p270 = por %p268, %p269
    %p271 = scmp.ne.s32.totalorder %s263, %s265
    %p272 = scmp.eq.s32.totalorder %s24, 1
    %p273 = por %p271, %p272
    %p274 = scmp.ne.s32.totalorder %s265, %s266
    %p275 = scmp.eq.s32.totalorder %s24, 0
    %p276 = por %p274, %p275
    %p277 = scmp.ne.s32.totalorder %s265, %s266
    %p278 = scmp.eq.s32.totalorder %s25, 1
    %p279 = por %p277, %p278
    %p281 = scmp.ne.s32.totalorder %s266, %s280
    %p282 = scmp.eq.s32.totalorder %s25, 0
    %p283 = por %p281, %p282
    %s285 = sadd.s32 %s284, 1
    %p288 = scmp.eq.s32.totalorder %s19, 1
    %p289 = scmp.ne.s32.totalorder %s284, %s286
    %p290 = scmp.eq.s32.totalorder %s19, 0
    %p291 = por %p289, %p290
    %p292 = scmp.ne.s32.totalorder %s284, %s286
    %p293 = scmp.eq.s32.totalorder %s24, 1
    %p294 = por %p292, %p293
    %p295 = scmp.ne.s32.totalorder %s286, %s287
    %p296 = scmp.eq.s32.totalorder %s24, 0
    %p297 = por %p295, %p296
    %p298 = scmp.ne.s32.totalorder %s286, %s287
    %p299 = scmp.eq.s32.totalorder %s25, 1
    %p300 = por %p298, %p299
    %p302 = scmp.ne.s32.totalorder %s287, %s301
    %p303 = scmp.eq.s32.totalorder %s25, 0
    %p304 = por %p302, %p303
    %s305 = ssub.s32 %s19, %s26
    %p306 = scmp.eq.s32.totalorder %s305, 0
    %s308 = sadd.s32 %s307, 1
    %s309 = scalar_select %p306, %s307, %s308
    %p312 = pneg %p306
    %p313 = scmp.eq.s32.totalorder %s19, 1
    %p314 = por %p312, %p313
    %p315 = scmp.ne.s32.totalorder %s307, %s310
    %p316 = scmp.eq.s32.totalorder %s19, 0
    %p317 = por %p315, %p316
    %p318 = scmp.ne.s32.totalorder %s307, %s310
    %p319 = scmp.eq.s32.totalorder %s24, 1
    %p320 = por %p318, %p319
    %p321 = scmp.ne.s32.totalorder %s310, %s311
    %p322 = scmp.eq.s32.totalorder %s24, 0
    %p323 = por %p321, %p322
    %p324 = scmp.ne.s32.totalorder %s310, %s311
    %p325 = scmp.eq.s32.totalorder %s25, 1
    %p326 = por %p324, %p325
    %p328 = scmp.ne.s32.totalorder %s311, %s327
    %p329 = scmp.eq.s32.totalorder %s25, 0
    %p330 = por %p328, %p329
    %p331 = scmp.le.s32.totalorder 1, %s19
    %p332 = scmp.lt.s32.totalorder %s19, 3
    %p333 = pnand %p331, %p332
    %p334 = pneg %p333
    // Predicated region
    $region9: #{transformer_nmt_mh_forward.5} parent=5 // pred_check
      _
    $region10: #{transformer_nmt_mh_forward.5} parent=5 // pred_check_branch
      %336 = sbr.rel (%p333) target = $region12
    $region11: #{transformer_nmt_mh_forward.5} parent=5 // pred_region
      %s337 = ssub.s32 %s19, 1
      // Predicated region
      $region13: #{transformer_nmt_mh_forward.5} parent=11 // pred_check
        %p338 = pneg %p66
      $region14: #{transformer_nmt_mh_forward.5} parent=11 // pred_check_branch
        %340 = sbr.rel (%p338) target = $region16
      $region15: #{transformer_nmt_mh_forward.5} parent=11 // pred_region
        _
      $region16: #{transformer_nmt_mh_forward.5} parent=11 // pred_fallthru
        _
      // Predicated region
      $region17: #{transformer_nmt_mh_forward.5} parent=11 // pred_check
        %p341 = pneg %p87
      $region18: #{transformer_nmt_mh_forward.5} parent=11 // pred_check_branch
        %343 = sbr.rel (%p341) target = $region20
      $region19: #{transformer_nmt_mh_forward.5} parent=11 // pred_region
        _
      $region20: #{transformer_nmt_mh_forward.5} parent=11 // pred_fallthru
        _
      // Predicated region
      $region21: #{transformer_nmt_mh_forward.5} parent=11 // pred_check
        %p344 = pneg %p108
      $region22: #{transformer_nmt_mh_forward.5} parent=11 // pred_check_branch
        %346 = sbr.rel (%p344) target = $region24
      $region23: #{transformer_nmt_mh_forward.5} parent=11 // pred_region
        _
      $region24: #{transformer_nmt_mh_forward.5} parent=11 // pred_fallthru
        _
      // Predicated region
      $region25: #{transformer_nmt_mh_forward.5} parent=11 // pred_check
        %p347 = pneg %p129
      $region26: #{transformer_nmt_mh_forward.5} parent=11 // pred_check_branch
        %349 = sbr.rel (%p347) target = $region28
      $region27: #{transformer_nmt_mh_forward.5} parent=11 // pred_region
        _
      $region28: #{transformer_nmt_mh_forward.5} parent=11 // pred_fallthru
        _
      // Predicated region
      $region29: #{transformer_nmt_mh_forward.5} parent=11 // pred_check
        %p350 = pneg %p150
      $region30: #{transformer_nmt_mh_forward.5} parent=11 // pred_check_branch
        %352 = sbr.rel (%p350) target = $region32
      $region31: #{transformer_nmt_mh_forward.5} parent=11 // pred_region
        _
      $region32: #{transformer_nmt_mh_forward.5} parent=11 // pred_fallthru
        _
      // Predicated region
      $region33: #{transformer_nmt_mh_forward.5} parent=11 // pred_check
        %p353 = pneg %p171
      $region34: #{transformer_nmt_mh_forward.5} parent=11 // pred_check_branch
        %355 = sbr.rel (%p353) target = $region36
      $region35: #{transformer_nmt_mh_forward.5} parent=11 // pred_region
        _
      $region36: #{transformer_nmt_mh_forward.5} parent=11 // pred_fallthru
        _
      // Predicated region
      $region37: #{transformer_nmt_mh_forward.5} parent=11 // pred_check
        %p356 = pneg %p192
      $region38: #{transformer_nmt_mh_forward.5} parent=11 // pred_check_branch
        %358 = sbr.rel (%p356) target = $region40
      $region39: #{transformer_nmt_mh_forward.5} parent=11 // pred_region
        _
      $region40: #{transformer_nmt_mh_forward.5} parent=11 // pred_fallthru
        _
      // Predicated region
      $region41: #{transformer_nmt_mh_forward.5} parent=11 // pred_check
        %p359 = pneg %p213
      $region42: #{transformer_nmt_mh_forward.5} parent=11 // pred_check_branch
        %361 = sbr.rel (%p359) target = $region44
      $region43: #{transformer_nmt_mh_forward.5} parent=11 // pred_region
        _
      $region44: #{transformer_nmt_mh_forward.5} parent=11 // pred_fallthru
        _
      // Predicated region
      $region45: #{transformer_nmt_mh_forward.5} parent=11 // pred_check
        %p362 = pneg %p234
      $region46: #{transformer_nmt_mh_forward.5} parent=11 // pred_check_branch
        %364 = sbr.rel (%p362) target = $region48
      $region47: #{transformer_nmt_mh_forward.5} parent=11 // pred_region
        _
      $region48: #{transformer_nmt_mh_forward.5} parent=11 // pred_fallthru
        _
      // Predicated region
      $region49: #{transformer_nmt_mh_forward.5} parent=11 // pred_check
        %p365 = pneg %p255
      $region50: #{transformer_nmt_mh_forward.5} parent=11 // pred_check_branch
        %367 = sbr.rel (%p365) target = $region52
      $region51: #{transformer_nmt_mh_forward.5} parent=11 // pred_region
        _
      $region52: #{transformer_nmt_mh_forward.5} parent=11 // pred_fallthru
        _
      // Predicated region
      $region53: #{transformer_nmt_mh_forward.5} parent=11 // pred_check
        %p368 = pneg %p276
      $region54: #{transformer_nmt_mh_forward.5} parent=11 // pred_check_branch
        %370 = sbr.rel (%p368) target = $region56
      $region55: #{transformer_nmt_mh_forward.5} parent=11 // pred_region
        _
      $region56: #{transformer_nmt_mh_forward.5} parent=11 // pred_fallthru
        _
      // Predicated region
      $region57: #{transformer_nmt_mh_forward.5} parent=11 // pred_check
        %p371 = pneg %p297
      $region58: #{transformer_nmt_mh_forward.5} parent=11 // pred_check_branch
        %373 = sbr.rel (%p371) target = $region60
      $region59: #{transformer_nmt_mh_forward.5} parent=11 // pred_region
        _
      $region60: #{transformer_nmt_mh_forward.5} parent=11 // pred_fallthru
        _
    $region12: #{transformer_nmt_mh_forward.5} parent=5 // pred_fallthru
      _
    %p374 = scmp.lt.s32.totalorder %s19, 2
    // Predicated region
    $region61: #{transformer_nmt_mh_forward.5} parent=5 // pred_check
      %p375 = pneg %p374
    $region62: #{transformer_nmt_mh_forward.5} parent=5 // pred_check_branch
      %377 = sbr.rel (%p375) target = $region64
    $region63: #{transformer_nmt_mh_forward.5} parent=5 // pred_region
      // Predicated region
      $region65: #{transformer_nmt_mh_forward.5} parent=63 // pred_check
        %p378 = pneg %p39
      $region66: #{transformer_nmt_mh_forward.5} parent=63 // pred_check_branch
        %380 = sbr.rel (%p378) target = $region68
      $region67: #{transformer_nmt_mh_forward.5} parent=63 // pred_region
        %p381 = scmp.lt.s32.totalorder %s19, 1
        %s382 = scalar_select %p381, %s19, 1
        %s383 = smul.addr %s382, 8
        %s384 = scalar_lea.vmem %s0, %s383
      $region68: #{transformer_nmt_mh_forward.5} parent=63 // pred_fallthru
        _
    $region64: #{transformer_nmt_mh_forward.5} parent=5 // pred_fallthru
      _
    %p385 = scmp.le.s32.totalorder 1, %s19
    %p386 = scmp.lt.s32.totalorder %s19, 3
    %p387 = pnand %p385, %p386
    %p388 = pneg %p387
    // Predicated region
    $region69: #{transformer_nmt_mh_forward.5} parent=5 // pred_check
      _
    $region70: #{transformer_nmt_mh_forward.5} parent=5 // pred_check_branch
      %390 = sbr.rel (%p387) target = $region72
    $region71: #{transformer_nmt_mh_forward.5} parent=5 // pred_region
      %s391 = ssub.s32 %s19, 1
      %p392 = scmp.lt.s32.totalorder %s24, 1
      %s393 = scalar_select %p392, %s24, 1
      %s394 = smul.addr %s393, 8
      %s395 = scalar_lea.vmem %s0, %s394
      %p396 = pneg %p45
      %p397 = pneg %p42
      %p398 = pneg %p66
      %p399 = pneg %p63
      %p400 = pneg %p87
      %p401 = pneg %p84
      %p402 = pneg %p108
      %p403 = pneg %p105
      %p404 = pneg %p129
      %p405 = pneg %p126
      %p406 = pneg %p150
      %p407 = pneg %p147
      %p408 = pneg %p171
      %p409 = pneg %p168
      %p410 = pneg %p192
      %p411 = pneg %p189
      %p412 = pneg %p213
      %p413 = pneg %p210
      %p414 = pneg %p234
      %p415 = pneg %p231
      %p416 = pneg %p255
      %p417 = pneg %p252
      %p418 = pneg %p276
      %p419 = pneg %p273
      %p420 = pneg %p297
      %p421 = pneg %p294
      %p422 = pneg %p323
      %p423 = pneg %p320
      %p424 = scmp.lt.s32.totalorder %s24, 1
      %s425 = scalar_select %p424, %s24, 1
      %s426 = smul.addr %s425, 8
      %s427 = scalar_lea.vmem %s13, %s426
      %p428 = scmp.lt.s32.totalorder %s24, 1
      %s429 = scalar_select %p428, %s24, 1
      %s430 = smul.addr %s429, 8
      %s431 = scalar_lea.vmem %s0, %s430
      %p432 = scmp.lt.s32.totalorder %s24, 1
      %s433 = scalar_select %p432, %s24, 1
      %s434 = smul.addr %s433, 8
      %s435 = scalar_lea.vmem %s13, %s434
      %v437 = vld [vmem:[%s431] sm:$0xff]
      %v438 = vld [vmem:[%s1] sm:$0xf]
      %v439 = vld [vmem:[%s1 + $0x4] sm:$0xf]
      %v440 = vld [vmem:[%s1 + $0x8] sm:$0xf]
      %v441 = vld [vmem:[%s1 + $0xc] sm:$0xf]
      %v442 = vld [vmem:[%s2] sm:$0x1]
      %v443 = vpack.c.bf16 %v437, %v437
      %v445 = vlaneseq
      %v446 = vshrl.u32 %v445, 7
      %v447 = vsub.s32 0, %v446
      %v448 = vrot.slane %v442, %v447
      %v454 = vunpack.c.l.b16 %v438
      %v455 = vunpack.c.l.b16 %v439
      %v456 = vunpack.c.l.b16 %v440
      %v457 = vunpack.c.l.b16 %v441
      %v458 = vpack.c.b16 %v455, %v454
      %v459 = vpack.c.b16 %v457, %v456
      %vm462 = vcmask 261120
      %v464 = vsel %vm462, %v443, 0
      %466 = vmatprep.subr.bf16.mxu0 0
      %467 = vmatpush1.bf16.msra.mxu0 0
      %468 = vmatprep.subr.bf16.mxu0 0
      %469 = vmatpush1.bf16.msra.mxu0 0
      %470 = vmatprep.subr.bf16.mxu0 0
      %471 = vmatpush1.bf16.msra.mxu0 0
      %472 = vmatprep.subr.bf16.mxu0 0
      %473 = vmatpush1.bf16.msra.mxu0 0
      %474 = vmatprep.subr.bf16.mxu0 0
      %475 = vmatpush1.bf16.msra.mxu0 0
      %476 = vmatprep.subr.bf16.mxu0 0
      %477 = vmatpush1.bf16.msra.mxu0 0
      %478 = vmatprep.subr.bf16.mxu0 0
      %479 = vmatpush1.bf16.msra.mxu0 %v459
      %480 = vmatprep.subr.bf16.mxu0 0
      %481 = vmatpush1.bf16.msra.mxu0 %v458
      %482 = vmatprep.subr.bf16.mxu0 0
      %483 = vmatpush2.bf16.msra.mxu0 0
      %484 = vmatprep.subr.bf16.mxu0 0
      %485 = vmatpush2.bf16.msra.mxu0 0
      %486 = vmatprep.subr.bf16.mxu0 0
      %487 = vmatpush2.bf16.msra.mxu0 0
      %488 = vmatprep.subr.bf16.mxu0 0
      %489 = vmatpush2.bf16.msra.mxu0 0
      %490 = vmatprep.subr.bf16.mxu0 0
      %491 = vmatpush2.bf16.msra.mxu0 0
      %492 = vmatprep.subr.bf16.mxu0 0
      %493 = vmatpush2.bf16.msra.mxu0 0
      %494 = vmatprep.subr.bf16.mxu0 0
      %495 = vmatpush2.bf16.msra.mxu0 0
      %496 = vmatprep.subr.bf16.mxu0 0
      %497 = vmatpush2.bf16.msra.mxu0 0
      %498 = vmatprep.mubr.bf16.mxu0 0
      %499 = vmatmul.mubr.bf16.gmra.mxu0 %v464
      %v500 = vpop.f32.mrf.mxu0
      %v501 = vadd.f32 %v448, %v500
      %v502 = vpop.f32.mrf.mxu0
      %v503 = vpop.f32.mrf.mxu0
      %v504 = vpop.f32.mrf.mxu0
      %505 = vdwg.mxu0
      %507 = vrot.lane.b32.xlu0 %v501, 96
      %v508 = vpop.permute.xlu0 %507
      %vm509 = vcmask 64512
      %v510 = vsel %vm509, %v501, 0
      %v512 = vsel %vm509, %v508, 0
      %514 = vmatprep.subr.mxu0 0.0
      %515 = vmatpush1.xpose.msra.mxu0 0.0
      %516 = vmatprep.subr.mxu0 0.0
      %517 = vmatpush1.xpose.msra.mxu0 0.0
      %518 = vmatprep.subr.mxu0 0.0
      %519 = vmatpush1.xpose.msra.mxu0 0.0
      %520 = vmatprep.subr.mxu0 0.0
      %521 = vmatpush1.xpose.msra.mxu0 0.0
      %522 = vmatprep.subr.mxu0 0.0
      %523 = vmatpush1.xpose.msra.mxu0 0.0
      %524 = vmatprep.subr.mxu0 0.0
      %525 = vmatpush1.xpose.msra.mxu0 0.0
      %526 = vmatprep.subr.mxu0 0.0
      %527 = vmatpush1.xpose.msra.mxu0 0.0
      %528 = vmatprep.subr.mxu0 0.0
      %529 = vmatpush1.xpose.msra.mxu0 0.0
      %530 = vmatprep.subr.mxu0 0.0
      %531 = vmatpush1.xpose.msra.mxu0 0.0
      %532 = vmatprep.subr.mxu0 0.0
      %533 = vmatpush1.xpose.msra.mxu0 0.0
      %534 = vmatprep.subr.mxu0 0.0
      %535 = vmatpush1.xpose.msra.mxu0 0.0
      %536 = vmatprep.subr.mxu0 0.0
      %537 = vmatpush1.xpose.msra.mxu0 0.0
      %538 = vmatprep.subr.mxu0 0.0
      %539 = vmatpush1.xpose.msra.mxu0 0.0
      %540 = vmatprep.subr.mxu0 0.0
      %541 = vmatpush1.xpose.msra.mxu0 0.0
      %542 = vmatprep.subr.mxu0 0.0
      %543 = vmatpush1.xpose.msra.mxu0 0.0
      %544 = vmatprep.subr.mxu0 0.0
      %545 = vmatpush1.xpose.msra.mxu0 %v512
      %546 = vmatprep.subr.mxu0 0.0
      %547 = vmatpush2.xpose.msra.mxu0 0.0
      %548 = vmatprep.subr.mxu0 0.0
      %549 = vmatpush2.xpose.msra.mxu0 0.0
      %550 = vmatprep.subr.mxu0 0.0
      %551 = vmatpush2.xpose.msra.mxu0 0.0
      %552 = vmatprep.subr.mxu0 0.0
      %553 = vmatpush2.xpose.msra.mxu0 0.0
      %554 = vmatprep.subr.mxu0 0.0
      %555 = vmatpush2.xpose.msra.mxu0 0.0
      %556 = vmatprep.subr.mxu0 0.0
      %557 = vmatpush2.xpose.msra.mxu0 0.0
      %558 = vmatprep.subr.mxu0 0.0
      %559 = vmatpush2.xpose.msra.mxu0 0.0
      %560 = vmatprep.subr.mxu0 0.0
      %561 = vmatpush2.xpose.msra.mxu0 0.0
      %562 = vmatprep.subr.mxu0 0.0
      %563 = vmatpush2.xpose.msra.mxu0 0.0
      %564 = vmatprep.subr.mxu0 0.0
      %565 = vmatpush2.xpose.msra.mxu0 0.0
      %566 = vmatprep.subr.mxu0 0.0
      %567 = vmatpush2.xpose.msra.mxu0 0.0
      %568 = vmatprep.subr.mxu0 0.0
      %569 = vmatpush2.xpose.msra.mxu0 0.0
      %570 = vmatprep.subr.mxu0 0.0
      %571 = vmatpush2.xpose.msra.mxu0 0.0
      %572 = vmatprep.subr.mxu0 0.0
      %573 = vmatpush2.xpose.msra.mxu0 0.0
      %574 = vmatprep.subr.mxu0 0.0
      %575 = vmatpush2.xpose.msra.mxu0 0.0
      %576 = vmatprep.subr.mxu0 0.0
      %577 = vmatpush2.xpose.msra.mxu0 0.0
      %578 = vmatprep.mubr.f32.mxu0 0.0
      %579 = vmatmul.mubr.f32.gmra.mxu0 %v510
      %v580 = vpop.f32.mrf.mxu0
      %v581 = vadd.f32 0.0, %v580
      %v582 = vpop.f32.mrf.mxu0
      %583 = vdwg.mxu0
      %v584 = vsel %vm509, %v581, -inf
      %585 = vmax.xlane.f32.xlu0 %v584
      %v586 = vpop.xlane.xlu0 %585
      %v587 = vsub.f32 %v581, %v586
      %v588 = vmul.f32 %v587, 1.442695
      %v589 = vpow.pop %v588
      %v590 = vsel %vm509, %v589, 0.0
      %591 = vadd.xlane.f32.xlu0 %v590
      %v592 = vpop.xlane.xlu0 %591
      %v593 = vrcp.pop %v592
      %v594 = vmul.f32 %v589, %v593
      %595 = vrot.lane.b32.xlu0 %v501, 64
      %v596 = vpop.permute.xlu0 %595
      %v599 = vsel %vm509, %v594, 0
      %601 = vmatprep.subr.mxu0 0.0
      %602 = vmatpush1.msra.mxu0 0.0
      %603 = vmatprep.subr.mxu0 0.0
      %604 = vmatpush1.msra.mxu0 0.0
      %605 = vmatprep.subr.mxu0 0.0
      %606 = vmatpush1.msra.mxu0 0.0
      %607 = vmatprep.subr.mxu0 0.0
      %608 = vmatpush1.msra.mxu0 0.0
      %609 = vmatprep.subr.mxu0 0.0
      %610 = vmatpush1.msra.mxu0 0.0
      %611 = vmatprep.subr.mxu0 0.0
      %612 = vmatpush1.msra.mxu0 0.0
      %613 = vmatprep.subr.mxu0 0.0
      %614 = vmatpush1.msra.mxu0 0.0
      %615 = vmatprep.subr.mxu0 0.0
      %616 = vmatpush1.msra.mxu0 0.0
      %617 = vmatprep.subr.mxu0 0.0
      %618 = vmatpush1.msra.mxu0 0.0
      %619 = vmatprep.subr.mxu0 0.0
      %620 = vmatpush1.msra.mxu0 0.0
      %621 = vmatprep.subr.mxu0 0.0
      %622 = vmatpush1.msra.mxu0 0.0
      %623 = vmatprep.subr.mxu0 0.0
      %624 = vmatpush1.msra.mxu0 0.0
      %625 = vmatprep.subr.mxu0 0.0
      %626 = vmatpush1.msra.mxu0 0.0
      %627 = vmatprep.subr.mxu0 0.0
      %628 = vmatpush1.msra.mxu0 0.0
      %629 = vmatprep.subr.mxu0 0.0
      %630 = vmatpush1.msra.mxu0 0.0
      %631 = vmatprep.subr.mxu0 0.0
      %632 = vmatpush1.msra.mxu0 %v596
      %633 = vmatprep.subr.mxu0 0.0
      %634 = vmatpush2.msra.mxu0 0.0
      %635 = vmatprep.subr.mxu0 0.0
      %636 = vmatpush2.msra.mxu0 0.0
      %637 = vmatprep.subr.mxu0 0.0
      %638 = vmatpush2.msra.mxu0 0.0
      %639 = vmatprep.subr.mxu0 0.0
      %640 = vmatpush2.msra.mxu0 0.0
      %641 = vmatprep.subr.mxu0 0.0
      %642 = vmatpush2.msra.mxu0 0.0
      %643 = vmatprep.subr.mxu0 0.0
      %644 = vmatpush2.msra.mxu0 0.0
      %645 = vmatprep.subr.mxu0 0.0
      %646 = vmatpush2.msra.mxu0 0.0
      %647 = vmatprep.subr.mxu0 0.0
      %648 = vmatpush2.msra.mxu0 0.0
      %649 = vmatprep.subr.mxu0 0.0
      %650 = vmatpush2.msra.mxu0 0.0
      %651 = vmatprep.subr.mxu0 0.0
      %652 = vmatpush2.msra.mxu0 0.0
      %653 = vmatprep.subr.mxu0 0.0
      %654 = vmatpush2.msra.mxu0 0.0
      %655 = vmatprep.subr.mxu0 0.0
      %656 = vmatpush2.msra.mxu0 0.0
      %657 = vmatprep.subr.mxu0 0.0
      %658 = vmatpush2.msra.mxu0 0.0
      %659 = vmatprep.subr.mxu0 0.0
      %660 = vmatpush2.msra.mxu0 0.0
      %661 = vmatprep.subr.mxu0 0.0
      %662 = vmatpush2.msra.mxu0 0.0
      %663 = vmatprep.subr.mxu0 0.0
      %664 = vmatpush2.msra.mxu0 0.0
      %665 = vmatprep.mubr.f32.mxu0 0.0
      %666 = vmatmul.mubr.f32.gmra.mxu0 %v599
      %v667 = vpop.f32.mrf.mxu0
      %v668 = vadd.f32 0.0, %v667
      %v669 = vpop.f32.mrf.mxu0
      %670 = vdwg.mxu0
      %671 = vrot.lane.b32.xlu0 %v501, 120
      %v672 = vpop.permute.xlu0 %671
      %673 = vrot.lane.b32.xlu0 %v501, 88
      %v674 = vpop.permute.xlu0 %673
      %v675 = vsel %vm509, %v672, 0
      %v677 = vsel %vm509, %v674, 0
      %679 = vmatprep.subr.mxu0 0.0
      %680 = vmatpush1.xpose.msra.mxu0 0.0
      %681 = vmatprep.subr.mxu0 0.0
      %682 = vmatpush1.xpose.msra.mxu0 0.0
      %683 = vmatprep.subr.mxu0 0.0
      %684 = vmatpush1.xpose.msra.mxu0 0.0
      %685 = vmatprep.subr.mxu0 0.0
      %686 = vmatpush1.xpose.msra.mxu0 0.0
      %687 = vmatprep.subr.mxu0 0.0
      %688 = vmatpush1.xpose.msra.mxu0 0.0
      %689 = vmatprep.subr.mxu0 0.0
      %690 = vmatpush1.xpose.msra.mxu0 0.0
      %691 = vmatprep.subr.mxu0 0.0
      %692 = vmatpush1.xpose.msra.mxu0 0.0
      %693 = vmatprep.subr.mxu0 0.0
      %694 = vmatpush1.xpose.msra.mxu0 0.0
      %695 = vmatprep.subr.mxu0 0.0
      %696 = vmatpush1.xpose.msra.mxu0 0.0
      %697 = vmatprep.subr.mxu0 0.0
      %698 = vmatpush1.xpose.msra.mxu0 0.0
      %699 = vmatprep.subr.mxu0 0.0
      %700 = vmatpush1.xpose.msra.mxu0 0.0
      %701 = vmatprep.subr.mxu0 0.0
      %702 = vmatpush1.xpose.msra.mxu0 0.0
      %703 = vmatprep.subr.mxu0 0.0
      %704 = vmatpush1.xpose.msra.mxu0 0.0
      %705 = vmatprep.subr.mxu0 0.0
      %706 = vmatpush1.xpose.msra.mxu0 0.0
      %707 = vmatprep.subr.mxu0 0.0
      %708 = vmatpush1.xpose.msra.mxu0 0.0
      %709 = vmatprep.subr.mxu0 0.0
      %710 = vmatpush1.xpose.msra.mxu0 %v677
      %711 = vmatprep.subr.mxu0 0.0
      %712 = vmatpush2.xpose.msra.mxu0 0.0
      %713 = vmatprep.subr.mxu0 0.0
      %714 = vmatpush2.xpose.msra.mxu0 0.0
      %715 = vmatprep.subr.mxu0 0.0
      %716 = vmatpush2.xpose.msra.mxu0 0.0
      %717 = vmatprep.subr.mxu0 0.0
      %718 = vmatpush2.xpose.msra.mxu0 0.0
      %719 = vmatprep.subr.mxu0 0.0
      %720 = vmatpush2.xpose.msra.mxu0 0.0
      %721 = vmatprep.subr.mxu0 0.0
      %722 = vmatpush2.xpose.msra.mxu0 0.0
      %723 = vmatprep.subr.mxu0 0.0
      %724 = vmatpush2.xpose.msra.mxu0 0.0
      %725 = vmatprep.subr.mxu0 0.0
      %726 = vmatpush2.xpose.msra.mxu0 0.0
      %727 = vmatprep.subr.mxu0 0.0
      %728 = vmatpush2.xpose.msra.mxu0 0.0
      %729 = vmatprep.subr.mxu0 0.0
      %730 = vmatpush2.xpose.msra.mxu0 0.0
      %731 = vmatprep.subr.mxu0 0.0
      %732 = vmatpush2.xpose.msra.mxu0 0.0
      %733 = vmatprep.subr.mxu0 0.0
      %734 = vmatpush2.xpose.msra.mxu0 0.0
      %735 = vmatprep.subr.mxu0 0.0
      %736 = vmatpush2.xpose.msra.mxu0 0.0
      %737 = vmatprep.subr.mxu0 0.0
      %738 = vmatpush2.xpose.msra.mxu0 0.0
      %739 = vmatprep.subr.mxu0 0.0
      %740 = vmatpush2.xpose.msra.mxu0 0.0
      %741 = vmatprep.subr.mxu0 0.0
      %742 = vmatpush2.xpose.msra.mxu0 0.0
      %743 = vmatprep.mubr.f32.mxu0 0.0
      %744 = vmatmul.mubr.f32.gmra.mxu0 %v675
      %v745 = vpop.f32.mrf.mxu0
      %v746 = vadd.f32 0.0, %v745
      %v747 = vpop.f32.mrf.mxu0
      %748 = vdwg.mxu0
      %v749 = vsel %vm509, %v746, -inf
      %750 = vmax.xlane.f32.xlu0 %v749
      %v751 = vpop.xlane.xlu0 %750
      %v752 = vsub.f32 %v746, %v751
      %v753 = vmul.f32 %v752, 1.442695
      %v754 = vpow.pop %v753
      %v755 = vsel %vm509, %v754, 0.0
      %756 = vadd.xlane.f32.xlu0 %v755
      %v757 = vpop.xlane.xlu0 %756
      %v758 = vrcp.pop %v757
      %v759 = vmul.f32 %v754, %v758
      %760 = vrot.lane.b32.xlu0 %v501, 56
      %v761 = vpop.permute.xlu0 %760
      %v764 = vsel %vm509, %v759, 0
      %766 = vmatprep.subr.mxu0 0.0
      %767 = vmatpush1.msra.mxu0 0.0
      %768 = vmatprep.subr.mxu0 0.0
      %769 = vmatpush1.msra.mxu0 0.0
      %770 = vmatprep.subr.mxu0 0.0
      %771 = vmatpush1.msra.mxu0 0.0
      %772 = vmatprep.subr.mxu0 0.0
      %773 = vmatpush1.msra.mxu0 0.0
      %774 = vmatprep.subr.mxu0 0.0
      %775 = vmatpush1.msra.mxu0 0.0
      %776 = vmatprep.subr.mxu0 0.0
      %777 = vmatpush1.msra.mxu0 0.0
      %778 = vmatprep.subr.mxu0 0.0
      %779 = vmatpush1.msra.mxu0 0.0
      %780 = vmatprep.subr.mxu0 0.0
      %781 = vmatpush1.msra.mxu0 0.0
      %782 = vmatprep.subr.mxu0 0.0
      %783 = vmatpush1.msra.mxu0 0.0
      %784 = vmatprep.subr.mxu0 0.0
      %785 = vmatpush1.msra.mxu0 0.0
      %786 = vmatprep.subr.mxu0 0.0
      %787 = vmatpush1.msra.mxu0 0.0
      %788 = vmatprep.subr.mxu0 0.0
      %789 = vmatpush1.msra.mxu0 0.0
      %790 = vmatprep.subr.mxu0 0.0
      %791 = vmatpush1.msra.mxu0 0.0
      %792 = vmatprep.subr.mxu0 0.0
      %793 = vmatpush1.msra.mxu0 0.0
      %794 = vmatprep.subr.mxu0 0.0
      %795 = vmatpush1.msra.mxu0 0.0
      %796 = vmatprep.subr.mxu0 0.0
      %797 = vmatpush1.msra.mxu0 %v761
      %798 = vmatprep.subr.mxu0 0.0
      %799 = vmatpush2.msra.mxu0 0.0
      %800 = vmatprep.subr.mxu0 0.0
      %801 = vmatpush2.msra.mxu0 0.0
      %802 = vmatprep.subr.mxu0 0.0
      %803 = vmatpush2.msra.mxu0 0.0
      %804 = vmatprep.subr.mxu0 0.0
      %805 = vmatpush2.msra.mxu0 0.0
      %806 = vmatprep.subr.mxu0 0.0
      %807 = vmatpush2.msra.mxu0 0.0
      %808 = vmatprep.subr.mxu0 0.0
      %809 = vmatpush2.msra.mxu0 0.0
      %810 = vmatprep.subr.mxu0 0.0
      %811 = vmatpush2.msra.mxu0 0.0
      %812 = vmatprep.subr.mxu0 0.0
      %813 = vmatpush2.msra.mxu0 0.0
      %814 = vmatprep.subr.mxu0 0.0
      %815 = vmatpush2.msra.mxu0 0.0
      %816 = vmatprep.subr.mxu0 0.0
      %817 = vmatpush2.msra.mxu0 0.0
      %818 = vmatprep.subr.mxu0 0.0
      %819 = vmatpush2.msra.mxu0 0.0
      %820 = vmatprep.subr.mxu0 0.0
      %821 = vmatpush2.msra.mxu0 0.0
      %822 = vmatprep.subr.mxu0 0.0
      %823 = vmatpush2.msra.mxu0 0.0
      %824 = vmatprep.subr.mxu0 0.0
      %825 = vmatpush2.msra.mxu0 0.0
      %826 = vmatprep.subr.mxu0 0.0
      %827 = vmatpush2.msra.mxu0 0.0
      %828 = vmatprep.subr.mxu0 0.0
      %829 = vmatpush2.msra.mxu0 0.0
      %830 = vmatprep.mubr.f32.mxu0 0.0
      %831 = vmatmul.mubr.f32.gmra.mxu0 %v764
      %v832 = vpop.f32.mrf.mxu0
      %v833 = vadd.f32 0.0, %v832
      %v834 = vpop.f32.mrf.mxu0
      %835 = vdwg.mxu0
      %836 = vrot.lane.b32.xlu0 %v501, 112
      %v837 = vpop.permute.xlu0 %836
      %838 = vrot.lane.b32.xlu0 %v501, 80
      %v839 = vpop.permute.xlu0 %838
      %v840 = vsel %vm509, %v837, 0
      %v842 = vsel %vm509, %v839, 0
      %844 = vmatprep.subr.mxu0 0.0
      %845 = vmatpush1.xpose.msra.mxu0 0.0
      %846 = vmatprep.subr.mxu0 0.0
      %847 = vmatpush1.xpose.msra.mxu0 0.0
      %848 = vmatprep.subr.mxu0 0.0
      %849 = vmatpush1.xpose.msra.mxu0 0.0
      %850 = vmatprep.subr.mxu0 0.0
      %851 = vmatpush1.xpose.msra.mxu0 0.0
      %852 = vmatprep.subr.mxu0 0.0
      %853 = vmatpush1.xpose.msra.mxu0 0.0
      %854 = vmatprep.subr.mxu0 0.0
      %855 = vmatpush1.xpose.msra.mxu0 0.0
      %856 = vmatprep.subr.mxu0 0.0
      %857 = vmatpush1.xpose.msra.mxu0 0.0
      %858 = vmatprep.subr.mxu0 0.0
      %859 = vmatpush1.xpose.msra.mxu0 0.0
      %860 = vmatprep.subr.mxu0 0.0
      %861 = vmatpush1.xpose.msra.mxu0 0.0
      %862 = vmatprep.subr.mxu0 0.0
      %863 = vmatpush1.xpose.msra.mxu0 0.0
      %864 = vmatprep.subr.mxu0 0.0
      %865 = vmatpush1.xpose.msra.mxu0 0.0
      %866 = vmatprep.subr.mxu0 0.0
      %867 = vmatpush1.xpose.msra.mxu0 0.0
      %868 = vmatprep.subr.mxu0 0.0
      %869 = vmatpush1.xpose.msra.mxu0 0.0
      %870 = vmatprep.subr.mxu0 0.0
      %871 = vmatpush1.xpose.msra.mxu0 0.0
      %872 = vmatprep.subr.mxu0 0.0
      %873 = vmatpush1.xpose.msra.mxu0 0.0
      %874 = vmatprep.subr.mxu0 0.0
      %875 = vmatpush1.xpose.msra.mxu0 %v842
      %876 = vmatprep.subr.mxu0 0.0
      %877 = vmatpush2.xpose.msra.mxu0 0.0
      %878 = vmatprep.subr.mxu0 0.0
      %879 = vmatpush2.xpose.msra.mxu0 0.0
      %880 = vmatprep.subr.mxu0 0.0
      %881 = vmatpush2.xpose.msra.mxu0 0.0
      %882 = vmatprep.subr.mxu0 0.0
      %883 = vmatpush2.xpose.msra.mxu0 0.0
      %884 = vmatprep.subr.mxu0 0.0
      %885 = vmatpush2.xpose.msra.mxu0 0.0
      %886 = vmatprep.subr.mxu0 0.0
      %887 = vmatpush2.xpose.msra.mxu0 0.0
      %888 = vmatprep.subr.mxu0 0.0
      %889 = vmatpush2.xpose.msra.mxu0 0.0
      %890 = vmatprep.subr.mxu0 0.0
      %891 = vmatpush2.xpose.msra.mxu0 0.0
      %892 = vmatprep.subr.mxu0 0.0
      %893 = vmatpush2.xpose.msra.mxu0 0.0
      %894 = vmatprep.subr.mxu0 0.0
      %895 = vmatpush2.xpose.msra.mxu0 0.0
      %896 = vmatprep.subr.mxu0 0.0
      %897 = vmatpush2.xpose.msra.mxu0 0.0
      %898 = vmatprep.subr.mxu0 0.0
      %899 = vmatpush2.xpose.msra.mxu0 0.0
      %900 = vmatprep.subr.mxu0 0.0
      %901 = vmatpush2.xpose.msra.mxu0 0.0
      %902 = vmatprep.subr.mxu0 0.0
      %903 = vmatpush2.xpose.msra.mxu0 0.0
      %904 = vmatprep.subr.mxu0 0.0
      %905 = vmatpush2.xpose.msra.mxu0 0.0
      %906 = vmatprep.subr.mxu0 0.0
      %907 = vmatpush2.xpose.msra.mxu0 0.0
      %908 = vmatprep.mubr.f32.mxu0 0.0
      %909 = vmatmul.mubr.f32.gmra.mxu0 %v840
      %v910 = vpop.f32.mrf.mxu0
      %v911 = vadd.f32 0.0, %v910
      %v912 = vpop.f32.mrf.mxu0
      %913 = vdwg.mxu0
      %v914 = vsel %vm509, %v911, -inf
      %915 = vmax.xlane.f32.xlu0 %v914
      %v916 = vpop.xlane.xlu0 %915
      %v917 = vsub.f32 %v911, %v916
      %v918 = vmul.f32 %v917, 1.442695
      %v919 = vpow.pop %v918
      %v920 = vsel %vm509, %v919, 0.0
      %921 = vadd.xlane.f32.xlu0 %v920
      %v922 = vpop.xlane.xlu0 %921
      %v923 = vrcp.pop %v922
      %v924 = vmul.f32 %v919, %v923
      %925 = vrot.lane.b32.xlu0 %v501, 48
      %v926 = vpop.permute.xlu0 %925
      %v929 = vsel %vm509, %v924, 0
      %931 = vmatprep.subr.mxu0 0.0
      %932 = vmatpush1.msra.mxu0 0.0
      %933 = vmatprep.subr.mxu0 0.0
      %934 = vmatpush1.msra.mxu0 0.0
      %935 = vmatprep.subr.mxu0 0.0
      %936 = vmatpush1.msra.mxu0 0.0
      %937 = vmatprep.subr.mxu0 0.0
      %938 = vmatpush1.msra.mxu0 0.0
      %939 = vmatprep.subr.mxu0 0.0
      %940 = vmatpush1.msra.mxu0 0.0
      %941 = vmatprep.subr.mxu0 0.0
      %942 = vmatpush1.msra.mxu0 0.0
      %943 = vmatprep.subr.mxu0 0.0
      %944 = vmatpush1.msra.mxu0 0.0
      %945 = vmatprep.subr.mxu0 0.0
      %946 = vmatpush1.msra.mxu0 0.0
      %947 = vmatprep.subr.mxu0 0.0
      %948 = vmatpush1.msra.mxu0 0.0
      %949 = vmatprep.subr.mxu0 0.0
      %950 = vmatpush1.msra.mxu0 0.0
      %951 = vmatprep.subr.mxu0 0.0
      %952 = vmatpush1.msra.mxu0 0.0
      %953 = vmatprep.subr.mxu0 0.0
      %954 = vmatpush1.msra.mxu0 0.0
      %955 = vmatprep.subr.mxu0 0.0
      %956 = vmatpush1.msra.mxu0 0.0
      %957 = vmatprep.subr.mxu0 0.0
      %958 = vmatpush1.msra.mxu0 0.0
      %959 = vmatprep.subr.mxu0 0.0
      %960 = vmatpush1.msra.mxu0 0.0
      %961 = vmatprep.subr.mxu0 0.0
      %962 = vmatpush1.msra.mxu0 %v926
      %963 = vmatprep.subr.mxu0 0.0
      %964 = vmatpush2.msra.mxu0 0.0
      %965 = vmatprep.subr.mxu0 0.0
      %966 = vmatpush2.msra.mxu0 0.0
      %967 = vmatprep.subr.mxu0 0.0
      %968 = vmatpush2.msra.mxu0 0.0
      %969 = vmatprep.subr.mxu0 0.0
      %970 = vmatpush2.msra.mxu0 0.0
      %971 = vmatprep.subr.mxu0 0.0
      %972 = vmatpush2.msra.mxu0 0.0
      %973 = vmatprep.subr.mxu0 0.0
      %974 = vmatpush2.msra.mxu0 0.0
      %975 = vmatprep.subr.mxu0 0.0
      %976 = vmatpush2.msra.mxu0 0.0
      %977 = vmatprep.subr.mxu0 0.0
      %978 = vmatpush2.msra.mxu0 0.0
      %979 = vmatprep.subr.mxu0 0.0
      %980 = vmatpush2.msra.mxu0 0.0
      %981 = vmatprep.subr.mxu0 0.0
      %982 = vmatpush2.msra.mxu0 0.0
      %983 = vmatprep.subr.mxu0 0.0
      %984 = vmatpush2.msra.mxu0 0.0
      %985 = vmatprep.subr.mxu0 0.0
      %986 = vmatpush2.msra.mxu0 0.0
      %987 = vmatprep.subr.mxu0 0.0
      %988 = vmatpush2.msra.mxu0 0.0
      %989 = vmatprep.subr.mxu0 0.0
      %990 = vmatpush2.msra.mxu0 0.0
      %991 = vmatprep.subr.mxu0 0.0
      %992 = vmatpush2.msra.mxu0 0.0
      %993 = vmatprep.subr.mxu0 0.0
      %994 = vmatpush2.msra.mxu0 0.0
      %995 = vmatprep.mubr.f32.mxu0 0.0
      %996 = vmatmul.mubr.f32.gmra.mxu0 %v929
      %v997 = vpop.f32.mrf.mxu0
      %v998 = vadd.f32 0.0, %v997
      %v999 = vpop.f32.mrf.mxu0
      %1000 = vdwg.mxu0
      %1001 = vrot.lane.b32.xlu0 %v501, 104
      %v1002 = vpop.permute.xlu0 %1001
      %1003 = vrot.lane.b32.xlu0 %v501, 72
      %v1004 = vpop.permute.xlu0 %1003
      %v1005 = vsel %vm509, %v1002, 0
      %v1007 = vsel %vm509, %v1004, 0
      %1009 = vmatprep.subr.mxu0 0.0
      %1010 = vmatpush1.xpose.msra.mxu0 0.0
      %1011 = vmatprep.subr.mxu0 0.0
      %1012 = vmatpush1.xpose.msra.mxu0 0.0
      %1013 = vmatprep.subr.mxu0 0.0
      %1014 = vmatpush1.xpose.msra.mxu0 0.0
      %1015 = vmatprep.subr.mxu0 0.0
      %1016 = vmatpush1.xpose.msra.mxu0 0.0
      %1017 = vmatprep.subr.mxu0 0.0
      %1018 = vmatpush1.xpose.msra.mxu0 0.0
      %1019 = vmatprep.subr.mxu0 0.0
      %1020 = vmatpush1.xpose.msra.mxu0 0.0
      %1021 = vmatprep.subr.mxu0 0.0
      %1022 = vmatpush1.xpose.msra.mxu0 0.0
      %1023 = vmatprep.subr.mxu0 0.0
      %1024 = vmatpush1.xpose.msra.mxu0 0.0
      %1025 = vmatprep.subr.mxu0 0.0
      %1026 = vmatpush1.xpose.msra.mxu0 0.0
      %1027 = vmatprep.subr.mxu0 0.0
      %1028 = vmatpush1.xpose.msra.mxu0 0.0
      %1029 = vmatprep.subr.mxu0 0.0
      %1030 = vmatpush1.xpose.msra.mxu0 0.0
      %1031 = vmatprep.subr.mxu0 0.0
      %1032 = vmatpush1.xpose.msra.mxu0 0.0
      %1033 = vmatprep.subr.mxu0 0.0
      %1034 = vmatpush1.xpose.msra.mxu0 0.0
      %1035 = vmatprep.subr.mxu0 0.0
      %1036 = vmatpush1.xpose.msra.mxu0 0.0
      %1037 = vmatprep.subr.mxu0 0.0
      %1038 = vmatpush1.xpose.msra.mxu0 0.0
      %1039 = vmatprep.subr.mxu0 0.0
      %1040 = vmatpush1.xpose.msra.mxu0 %v1007
      %1041 = vmatprep.subr.mxu0 0.0
      %1042 = vmatpush2.xpose.msra.mxu0 0.0
      %1043 = vmatprep.subr.mxu0 0.0
      %1044 = vmatpush2.xpose.msra.mxu0 0.0
      %1045 = vmatprep.subr.mxu0 0.0
      %1046 = vmatpush2.xpose.msra.mxu0 0.0
      %1047 = vmatprep.subr.mxu0 0.0
      %1048 = vmatpush2.xpose.msra.mxu0 0.0
      %1049 = vmatprep.subr.mxu0 0.0
      %1050 = vmatpush2.xpose.msra.mxu0 0.0
      %1051 = vmatprep.subr.mxu0 0.0
      %1052 = vmatpush2.xpose.msra.mxu0 0.0
      %1053 = vmatprep.subr.mxu0 0.0
      %1054 = vmatpush2.xpose.msra.mxu0 0.0
      %1055 = vmatprep.subr.mxu0 0.0
      %1056 = vmatpush2.xpose.msra.mxu0 0.0
      %1057 = vmatprep.subr.mxu0 0.0
      %1058 = vmatpush2.xpose.msra.mxu0 0.0
      %1059 = vmatprep.subr.mxu0 0.0
      %1060 = vmatpush2.xpose.msra.mxu0 0.0
      %1061 = vmatprep.subr.mxu0 0.0
      %1062 = vmatpush2.xpose.msra.mxu0 0.0
      %1063 = vmatprep.subr.mxu0 0.0
      %1064 = vmatpush2.xpose.msra.mxu0 0.0
      %1065 = vmatprep.subr.mxu0 0.0
      %1066 = vmatpush2.xpose.msra.mxu0 0.0
      %1067 = vmatprep.subr.mxu0 0.0
      %1068 = vmatpush2.xpose.msra.mxu0 0.0
      %1069 = vmatprep.subr.mxu0 0.0
      %1070 = vmatpush2.xpose.msra.mxu0 0.0
      %1071 = vmatprep.subr.mxu0 0.0
      %1072 = vmatpush2.xpose.msra.mxu0 0.0
      %1073 = vmatprep.mubr.f32.mxu0 0.0
      %1074 = vmatmul.mubr.f32.gmra.mxu0 %v1005
      %v1075 = vpop.f32.mrf.mxu0
      %v1076 = vadd.f32 0.0, %v1075
      %v1077 = vpop.f32.mrf.mxu0
      %1078 = vdwg.mxu0
      %v1079 = vsel %vm509, %v1076, -inf
      %1080 = vmax.xlane.f32.xlu0 %v1079
      %v1081 = vpop.xlane.xlu0 %1080
      %v1082 = vsub.f32 %v1076, %v1081
      %v1083 = vmul.f32 %v1082, 1.442695
      %v1084 = vpow.pop %v1083
      %v1085 = vsel %vm509, %v1084, 0.0
      %1086 = vadd.xlane.f32.xlu0 %v1085
      %v1087 = vpop.xlane.xlu0 %1086
      %v1088 = vrcp.pop %v1087
      %v1089 = vmul.f32 %v1084, %v1088
      %1090 = vrot.lane.b32.xlu0 %v501, 40
      %v1091 = vpop.permute.xlu0 %1090
      %v1094 = vsel %vm509, %v1089, 0
      %1096 = vmatprep.subr.mxu0 0.0
      %1097 = vmatpush1.msra.mxu0 0.0
      %1098 = vmatprep.subr.mxu0 0.0
      %1099 = vmatpush1.msra.mxu0 0.0
      %1100 = vmatprep.subr.mxu0 0.0
      %1101 = vmatpush1.msra.mxu0 0.0
      %1102 = vmatprep.subr.mxu0 0.0
      %1103 = vmatpush1.msra.mxu0 0.0
      %1104 = vmatprep.subr.mxu0 0.0
      %1105 = vmatpush1.msra.mxu0 0.0
      %1106 = vmatprep.subr.mxu0 0.0
      %1107 = vmatpush1.msra.mxu0 0.0
      %1108 = vmatprep.subr.mxu0 0.0
      %1109 = vmatpush1.msra.mxu0 0.0
      %1110 = vmatprep.subr.mxu0 0.0
      %1111 = vmatpush1.msra.mxu0 0.0
      %1112 = vmatprep.subr.mxu0 0.0
      %1113 = vmatpush1.msra.mxu0 0.0
      %1114 = vmatprep.subr.mxu0 0.0
      %1115 = vmatpush1.msra.mxu0 0.0
      %1116 = vmatprep.subr.mxu0 0.0
      %1117 = vmatpush1.msra.mxu0 0.0
      %1118 = vmatprep.subr.mxu0 0.0
      %1119 = vmatpush1.msra.mxu0 0.0
      %1120 = vmatprep.subr.mxu0 0.0
      %1121 = vmatpush1.msra.mxu0 0.0
      %1122 = vmatprep.subr.mxu0 0.0
      %1123 = vmatpush1.msra.mxu0 0.0
      %1124 = vmatprep.subr.mxu0 0.0
      %1125 = vmatpush1.msra.mxu0 0.0
      %1126 = vmatprep.subr.mxu0 0.0
      %1127 = vmatpush1.msra.mxu0 %v1091
      %1128 = vmatprep.subr.mxu0 0.0
      %1129 = vmatpush2.msra.mxu0 0.0
      %1130 = vmatprep.subr.mxu0 0.0
      %1131 = vmatpush2.msra.mxu0 0.0
      %1132 = vmatprep.subr.mxu0 0.0
      %1133 = vmatpush2.msra.mxu0 0.0
      %1134 = vmatprep.subr.mxu0 0.0
      %1135 = vmatpush2.msra.mxu0 0.0
      %1136 = vmatprep.subr.mxu0 0.0
      %1137 = vmatpush2.msra.mxu0 0.0
      %1138 = vmatprep.subr.mxu0 0.0
      %1139 = vmatpush2.msra.mxu0 0.0
      %1140 = vmatprep.subr.mxu0 0.0
      %1141 = vmatpush2.msra.mxu0 0.0
      %1142 = vmatprep.subr.mxu0 0.0
      %1143 = vmatpush2.msra.mxu0 0.0
      %1144 = vmatprep.subr.mxu0 0.0
      %1145 = vmatpush2.msra.mxu0 0.0
      %1146 = vmatprep.subr.mxu0 0.0
      %1147 = vmatpush2.msra.mxu0 0.0
      %1148 = vmatprep.subr.mxu0 0.0
      %1149 = vmatpush2.msra.mxu0 0.0
      %1150 = vmatprep.subr.mxu0 0.0
      %1151 = vmatpush2.msra.mxu0 0.0
      %1152 = vmatprep.subr.mxu0 0.0
      %1153 = vmatpush2.msra.mxu0 0.0
      %1154 = vmatprep.subr.mxu0 0.0
      %1155 = vmatpush2.msra.mxu0 0.0
      %1156 = vmatprep.subr.mxu0 0.0
      %1157 = vmatpush2.msra.mxu0 0.0
      %1158 = vmatprep.subr.mxu0 0.0
      %1159 = vmatpush2.msra.mxu0 0.0
      %1160 = vmatprep.mubr.f32.mxu0 0.0
      %1161 = vmatmul.mubr.f32.gmra.mxu0 %v1094
      %v1162 = vpop.f32.mrf.mxu0
      %v1163 = vadd.f32 0.0, %v1162
      %v1164 = vpop.f32.mrf.mxu0
      %1165 = vdwg.mxu0
      %1167 = vrot.lane.b32.xlu0 %v833, 8
      %v1168 = vpop.permute.xlu0 %1167
      %1171 = vrot.lane.b32.xlu0 %v998, 16
      %v1172 = vpop.permute.xlu0 %1171
      %1175 = vrot.lane.b32.xlu0 %v1163, 24
      %v1176 = vpop.permute.xlu0 %1175
      %v1178 = vsel %vm509, %v668, %v1168
      %vm1179 = vcmask 130048
      %v1180 = vsel %vm1179, %v1178, %v1172
      %vm1181 = vcmask 195584
      %v1182 = vsel %vm1181, %v1180, %v1176
      %v1183 = vld [vmem:[%s3] sm:$0xf]
      %v1184 = vld [vmem:[%s3 + $0x4] sm:$0xf]
      %v1185 = vld [vmem:[%s3 + $0x8] sm:$0xf]
      %v1186 = vld [vmem:[%s3 + $0xc] sm:$0xf]
      %v1187 = vld [vmem:[%s4] sm:$0x1]
      %v1188 = vpack.c.bf16 %v1182, %v1182
      %v1190 = vlaneseq
      %v1191 = vshrl.u32 %v1190, 7
      %v1192 = vsub.s32 0, %v1191
      %v1193 = vrot.slane %v1187, %v1192
      %v1199 = vunpack.c.l.b16 %v1183
      %v1200 = vunpack.c.l.b16 %v1184
      %v1201 = vunpack.c.l.b16 %v1185
      %v1202 = vunpack.c.l.b16 %v1186
      %v1203 = vpack.c.b16 %v1200, %v1199
      %v1204 = vpack.c.b16 %v1202, %v1201
      %v1208 = vsel %vm462, %v1188, 0
      %1210 = vmatprep.subr.bf16.mxu0 0
      %1211 = vmatpush1.bf16.msra.mxu0 0
      %1212 = vmatprep.subr.bf16.mxu0 0
      %1213 = vmatpush1.bf16.msra.mxu0 0
      %1214 = vmatprep.subr.bf16.mxu0 0
      %1215 = vmatpush1.bf16.msra.mxu0 0
      %1216 = vmatprep.subr.bf16.mxu0 0
      %1217 = vmatpush1.bf16.msra.mxu0 0
      %1218 = vmatprep.subr.bf16.mxu0 0
      %1219 = vmatpush1.bf16.msra.mxu0 0
      %1220 = vmatprep.subr.bf16.mxu0 0
      %1221 = vmatpush1.bf16.msra.mxu0 0
      %1222 = vmatprep.subr.bf16.mxu0 0
      %1223 = vmatpush1.bf16.msra.mxu0 %v1204
      %1224 = vmatprep.subr.bf16.mxu0 0
      %1225 = vmatpush1.bf16.msra.mxu0 %v1203
      %1226 = vmatprep.subr.bf16.mxu0 0
      %1227 = vmatpush2.bf16.msra.mxu0 0
      %1228 = vmatprep.subr.bf16.mxu0 0
      %1229 = vmatpush2.bf16.msra.mxu0 0
      %1230 = vmatprep.subr.bf16.mxu0 0
      %1231 = vmatpush2.bf16.msra.mxu0 0
      %1232 = vmatprep.subr.bf16.mxu0 0
      %1233 = vmatpush2.bf16.msra.mxu0 0
      %1234 = vmatprep.subr.bf16.mxu0 0
      %1235 = vmatpush2.bf16.msra.mxu0 0
      %1236 = vmatprep.subr.bf16.mxu0 0
      %1237 = vmatpush2.bf16.msra.mxu0 0
      %1238 = vmatprep.subr.bf16.mxu0 0
      %1239 = vmatpush2.bf16.msra.mxu0 0
      %1240 = vmatprep.subr.bf16.mxu0 0
      %1241 = vmatpush2.bf16.msra.mxu0 0
      %1242 = vmatprep.mubr.bf16.mxu0 0
      %1243 = vmatmul.mubr.bf16.gmra.mxu0 %v1208
      %v1244 = vpop.f32.mrf.mxu0
      %v1245 = vadd.f32 %v1193, %v1244
      %v1246 = vpop.f32.mrf.mxu0
      %v1247 = vpop.f32.mrf.mxu0
      %v1248 = vpop.f32.mrf.mxu0
      %1249 = vdwg.mxu0
      %v1250 = vadd.f32 %v1245, %v437
      %v1251 = vld [vmem:[%s5] sm:$0x1]
      %v1252 = vld [vmem:[%s6] sm:$0x1]
      %v1253 = vsel %vm462, %v1250, 0.0
      %1254 = vadd.xlane.f32.xlu0 %v1253
      %v1255 = vpop.xlane.xlu0 %1254
      %v1256 = vrcp.pop 32.0
      %v1257 = vmul.f32 %v1255, %v1256
      %v1258 = vmul.f32 %v1250, %v1250
      %v1259 = vsel %vm462, %v1258, 0.0
      %1260 = vadd.xlane.f32.xlu0 %v1259
      %v1261 = vpop.xlane.xlu0 %1260
      %v1262 = vmul.f32 %v1261, %v1256
      %v1263 = vmul.f32 %v1257, %v1257
      %v1264 = vsub.f32 %v1262, %v1263
      %v1265 = vmax.f32 %v1264, 0.0
      %v1266 = vsub.f32 %v1250, %v1257
      %v1267 = vadd.f32 %v1265, 1e-05
      %v1268 = vrsqrt.pop %v1267
      %v1269 = vmul.f32 %v1266, %v1268
      %v1271 = vlaneseq
      %v1272 = vshrl.u32 %v1271, 7
      %v1273 = vsub.s32 0, %v1272
      %v1274 = vrot.slane %v1251, %v1273
      %v1276 = vmul.f32 %v1269, %v1274
      %v1278 = vlaneseq
      %v1279 = vshrl.u32 %v1278, 7
      %v1280 = vsub.s32 0, %v1279
      %v1281 = vrot.slane %v1252, %v1280
      %v1283 = vadd.f32 %v1276, %v1281
      %v1284 = vld [vmem:[%s7] sm:$0xf]
      %v1285 = vld [vmem:[%s7 + $0x4] sm:$0xf]
      %v1286 = vld [vmem:[%s7 + $0x8] sm:$0xf]
      %v1287 = vld [vmem:[%s7 + $0xc] sm:$0xf]
      %v1288 = vld [vmem:[%s8] sm:$0x1]
      %v1289 = vld [vmem:[%s9] sm:$0xf]
      %v1290 = vld [vmem:[%s9 + $0x4] sm:$0xf]
      %v1291 = vld [vmem:[%s9 + $0x8] sm:$0xf]
      %v1292 = vld [vmem:[%s9 + $0xc] sm:$0xf]
      %v1293 = vld [vmem:[%s9 + $0x10] sm:$0xf]
      %v1294 = vld [vmem:[%s9 + $0x14] sm:$0xf]
      %v1295 = vld [vmem:[%s9 + $0x18] sm:$0xf]
      %v1296 = vld [vmem:[%s9 + $0x1c] sm:$0xf]
      %v1297 = vld [vmem:[%s10] sm:$0x1]
      %v1298 = vpack.c.bf16 %v1283, %v1283
      %v1300 = vlaneseq
      %v1301 = vshrl.u32 %v1300, 7
      %v1302 = vsub.s32 0, %v1301
      %v1303 = vrot.slane %v1288, %v1302
      %v1309 = vunpack.c.l.b16 %v1284
      %v1310 = vunpack.c.l.b16 %v1285
      %v1311 = vunpack.c.l.b16 %v1286
      %v1312 = vunpack.c.l.b16 %v1287
      %v1313 = vpack.c.b16 %v1310, %v1309
      %v1314 = vpack.c.b16 %v1312, %v1311
      %v1318 = vsel %vm462, %v1298, 0
      %1320 = vmatprep.subr.bf16.mxu0 0
      %1321 = vmatpush1.bf16.msra.mxu0 0
      %1322 = vmatprep.subr.bf16.mxu0 0
      %1323 = vmatpush1.bf16.msra.mxu0 0
      %1324 = vmatprep.subr.bf16.mxu0 0
      %1325 = vmatpush1.bf16.msra.mxu0 0
      %1326 = vmatprep.subr.bf16.mxu0 0
      %1327 = vmatpush1.bf16.msra.mxu0 0
      %1328 = vmatprep.subr.bf16.mxu0 0
      %1329 = vmatpush1.bf16.msra.mxu0 0
      %1330 = vmatprep.subr.bf16.mxu0 0
      %1331 = vmatpush1.bf16.msra.mxu0 0
      %1332 = vmatprep.subr.bf16.mxu0 0
      %1333 = vmatpush1.bf16.msra.mxu0 %v1314
      %1334 = vmatprep.subr.bf16.mxu0 0
      %1335 = vmatpush1.bf16.msra.mxu0 %v1313
      %1336 = vmatprep.subr.bf16.mxu0 0
      %1337 = vmatpush2.bf16.msra.mxu0 0
      %1338 = vmatprep.subr.bf16.mxu0 0
      %1339 = vmatpush2.bf16.msra.mxu0 0
      %1340 = vmatprep.subr.bf16.mxu0 0
      %1341 = vmatpush2.bf16.msra.mxu0 0
      %1342 = vmatprep.subr.bf16.mxu0 0
      %1343 = vmatpush2.bf16.msra.mxu0 0
      %1344 = vmatprep.subr.bf16.mxu0 0
      %1345 = vmatpush2.bf16.msra.mxu0 0
      %1346 = vmatprep.subr.bf16.mxu0 0
      %1347 = vmatpush2.bf16.msra.mxu0 0
      %1348 = vmatprep.subr.bf16.mxu0 0
      %1349 = vmatpush2.bf16.msra.mxu0 0
      %1350 = vmatprep.subr.bf16.mxu0 0
      %1351 = vmatpush2.bf16.msra.mxu0 0
      %1352 = vmatprep.mubr.bf16.mxu0 0
      %1353 = vmatmul.mubr.bf16.gmra.mxu0 %v1318
      %v1354 = vpop.f32.mrf.mxu0
      %v1355 = vadd.f32 %v1303, %v1354
      %v1356 = vpop.f32.mrf.mxu0
      %v1357 = vpop.f32.mrf.mxu0
      %v1358 = vpop.f32.mrf.mxu0
      %1359 = vdwg.mxu0
      %v1360 = vmax.f32 %v1355, 0.0
      %v1361 = vpack.c.bf16 %v1360, %v1360
      %v1363 = vlaneseq
      %v1364 = vshrl.u32 %v1363, 7
      %v1365 = vsub.s32 0, %v1364
      %v1366 = vrot.slane %v1297, %v1365
      %v1376 = vunpack.c.l.b16 %v1289
      %v1377 = vunpack.c.l.b16 %v1290
      %v1378 = vunpack.c.l.b16 %v1291
      %v1379 = vunpack.c.l.b16 %v1292
      %v1380 = vunpack.c.l.b16 %v1293
      %v1381 = vunpack.c.l.b16 %v1294
      %v1382 = vunpack.c.l.b16 %v1295
      %v1383 = vunpack.c.l.b16 %v1296
      %v1384 = vpack.c.b16 %v1377, %v1376
      %v1385 = vpack.c.b16 %v1379, %v1378
      %v1386 = vpack.c.b16 %v1381, %v1380
      %v1387 = vpack.c.b16 %v1383, %v1382
      %vm1392 = vcmask 523264
      %v1394 = vsel %vm1392, %v1361, 0
      %1396 = vmatprep.subr.bf16.mxu0 0
      %1397 = vmatpush1.bf16.msra.mxu0 0
      %1398 = vmatprep.subr.bf16.mxu0 0
      %1399 = vmatpush1.bf16.msra.mxu0 0
      %1400 = vmatprep.subr.bf16.mxu0 0
      %1401 = vmatpush1.bf16.msra.mxu0 0
      %1402 = vmatprep.subr.bf16.mxu0 0
      %1403 = vmatpush1.bf16.msra.mxu0 0
      %1404 = vmatprep.subr.bf16.mxu0 0
      %1405 = vmatpush1.bf16.msra.mxu0 %v1387
      %1406 = vmatprep.subr.bf16.mxu0 0
      %1407 = vmatpush1.bf16.msra.mxu0 %v1386
      %1408 = vmatprep.subr.bf16.mxu0 0
      %1409 = vmatpush1.bf16.msra.mxu0 %v1385
      %1410 = vmatprep.subr.bf16.mxu0 0
      %1411 = vmatpush1.bf16.msra.mxu0 %v1384
      %1412 = vmatprep.subr.bf16.mxu0 0
      %1413 = vmatpush2.bf16.msra.mxu0 0
      %1414 = vmatprep.subr.bf16.mxu0 0
      %1415 = vmatpush2.bf16.msra.mxu0 0
      %1416 = vmatprep.subr.bf16.mxu0 0
      %1417 = vmatpush2.bf16.msra.mxu0 0
      %1418 = vmatprep.subr.bf16.mxu0 0
      %1419 = vmatpush2.bf16.msra.mxu0 0
      %1420 = vmatprep.subr.bf16.mxu0 0
      %1421 = vmatpush2.bf16.msra.mxu0 0
      %1422 = vmatprep.subr.bf16.mxu0 0
      %1423 = vmatpush2.bf16.msra.mxu0 0
      %1424 = vmatprep.subr.bf16.mxu0 0
      %1425 = vmatpush2.bf16.msra.mxu0 0
      %1426 = vmatprep.subr.bf16.mxu0 0
      %1427 = vmatpush2.bf16.msra.mxu0 0
      %1428 = vmatprep.mubr.bf16.mxu0 0
      %1429 = vmatmul.mubr.bf16.gmra.mxu0 %v1394
      %v1430 = vpop.f32.mrf.mxu0
      %v1431 = vadd.f32 %v1366, %v1430
      %v1432 = vpop.f32.mrf.mxu0
      %v1433 = vpop.f32.mrf.mxu0
      %v1434 = vpop.f32.mrf.mxu0
      %1435 = vdwg.mxu0
      %v1436 = vadd.f32 %v1431, %v1283
      %v1437 = vld [vmem:[%s11] sm:$0x1]
      %v1438 = vld [vmem:[%s12] sm:$0x1]
      %v1439 = vsel %vm462, %v1436, 0.0
      %1440 = vadd.xlane.f32.xlu0 %v1439
      %v1441 = vpop.xlane.xlu0 %1440
      %v1442 = vmul.f32 %v1441, %v1256
      %v1443 = vmul.f32 %v1436, %v1436
      %v1444 = vsel %vm462, %v1443, 0.0
      %1445 = vadd.xlane.f32.xlu0 %v1444
      %v1446 = vpop.xlane.xlu0 %1445
      %v1447 = vmul.f32 %v1446, %v1256
      %v1448 = vmul.f32 %v1442, %v1442
      %v1449 = vsub.f32 %v1447, %v1448
      %v1450 = vmax.f32 %v1449, 0.0
      %v1451 = vsub.f32 %v1436, %v1442
      %v1452 = vadd.f32 %v1450, 1e-05
      %v1453 = vrsqrt.pop %v1452
      %v1454 = vmul.f32 %v1451, %v1453
      %v1456 = vlaneseq
      %v1457 = vshrl.u32 %v1456, 7
      %v1458 = vsub.s32 0, %v1457
      %v1459 = vrot.slane %v1437, %v1458
      %v1461 = vmul.f32 %v1454, %v1459
      %v1463 = vlaneseq
      %v1464 = vshrl.u32 %v1463, 7
      %v1465 = vsub.s32 0, %v1464
      %v1466 = vrot.slane %v1438, %v1465
      %v1468 = vadd.f32 %v1461, %v1466
      %1469 = vst.msk [vmem:[%s435] sm:$0xff] %vm462, %v1468
      %p1470 = scmp.lt.s32.totalorder %s24, 1
      %s1471 = scalar_select %p1470, %s24, 1
      %s1472 = smul.addr %s1471, 8
      %s1473 = scalar_lea.vmem %s13, %s1472
      // Predicated region
      $region73: #{transformer_nmt_mh_forward.5} parent=71 // pred_check
        %p1474 = pneg %p320
      $region74: #{transformer_nmt_mh_forward.5} parent=71 // pred_check_branch
        %1476 = sbr.rel (%p1474) target = $region76
      $region75: #{transformer_nmt_mh_forward.5} parent=71 // pred_region
        _
      $region76: #{transformer_nmt_mh_forward.5} parent=71 // pred_fallthru
        _
    $region72: #{transformer_nmt_mh_forward.5} parent=5 // pred_fallthru
      _
    %p1477 = scmp.le.s32.totalorder 2, %s19
    // Predicated region
    $region77: #{transformer_nmt_mh_forward.5} parent=5 // pred_check
      %p1478 = pneg %p1477
    $region78: #{transformer_nmt_mh_forward.5} parent=5 // pred_check_branch
      %1480 = sbr.rel (%p1478) target = $region80
    $region79: #{transformer_nmt_mh_forward.5} parent=5 // pred_region
      %s1481 = ssub.s32 %s19, 2
      // Predicated region
      $region81: #{transformer_nmt_mh_forward.5} parent=79 // pred_check
        %p1482 = pneg %p326
      $region82: #{transformer_nmt_mh_forward.5} parent=79 // pred_check_branch
        %1484 = sbr.rel (%p1482) target = $region84
      $region83: #{transformer_nmt_mh_forward.5} parent=79 // pred_region
        %p1485 = scmp.lt.s32.totalorder %s25, 1
        %s1486 = scalar_select %p1485, %s25, 1
        %s1487 = smul.addr %s1486, 8
        %s1488 = scalar_lea.vmem %s13, %s1487
      $region84: #{transformer_nmt_mh_forward.5} parent=79 // pred_fallthru
        _
    $region80: #{transformer_nmt_mh_forward.5} parent=5 // pred_fallthru
      _
  $region6: #{transformer_nmt_mh_forward.5} parent=0 // loop_footer
    %s23 = sadd.s32 1, %s19
  $region7: #{transformer_nmt_mh_forward.5} parent=0 // loop_footer_branch
    %18 = sbr.rel target = $region3
  $region8: #{transformer_nmt_mh_forward.5} parent=0 // loop_exit
    _

// kernel: transformer_nmt_mh_forward.8
$region0: #{transformer_nmt_mh_forward.8}
  #allocation0 [shape = 'u32[]', space=smem, size = 0x4, offset = 0x4, fixed_abs, tag = 'smem constant byte address 0x4 - core index']
  #allocation1 [shape = 'u32[144,128]{1,0:T(1,128)}', space=vmem, size = 0x12000, scoped, tag = 'internal scratch']
  %s0 = inlined_call_operand.vmem [shape: f32[2,8,32], index: 0, kind: input, shape index: {}]
  %s1 = inlined_call_operand.vmem [shape: f32[2,8,32], index: 1, kind: input, shape index: {}]
  %s2 = inlined_call_operand.vmem [shape: bf16[32,96], index: 2, kind: input, shape index: {}]
  %s3 = inlined_call_operand.vmem [shape: f32[1,96], index: 3, kind: input, shape index: {}]
  %s4 = inlined_call_operand.vmem [shape: bf16[32,32], index: 4, kind: input, shape index: {}]
  %s5 = inlined_call_operand.vmem [shape: f32[1,32], index: 5, kind: input, shape index: {}]
  %s6 = inlined_call_operand.vmem [shape: f32[1,32], index: 6, kind: input, shape index: {}]
  %s7 = inlined_call_operand.vmem [shape: f32[1,32], index: 7, kind: input, shape index: {}]
  %s8 = inlined_call_operand.vmem [shape: bf16[32,64], index: 8, kind: input, shape index: {}]
  %s9 = inlined_call_operand.vmem [shape: f32[1,64], index: 9, kind: input, shape index: {}]
  %s10 = inlined_call_operand.vmem [shape: bf16[64,32], index: 10, kind: input, shape index: {}]
  %s11 = inlined_call_operand.vmem [shape: f32[1,32], index: 11, kind: input, shape index: {}]
  %s12 = inlined_call_operand.hbm [shape: f32[1,32], index: 12, kind: input, shape index: {}]
  %s13 = inlined_call_operand.hbm [shape: f32[1,32], index: 13, kind: input, shape index: {}]
  %s14 = inlined_call_operand.vmem [shape: bf16[32,32], index: 14, kind: input, shape index: {}]
  %s15 = inlined_call_operand.hbm [shape: f32[1,32], index: 15, kind: input, shape index: {}]
  %s16 = inlined_call_operand.vmem [shape: bf16[32,64], index: 16, kind: input, shape index: {}]
  %s17 = inlined_call_operand.hbm [shape: f32[1,64], index: 17, kind: input, shape index: {}]
  %s18 = inlined_call_operand.vmem [shape: bf16[32,32], index: 18, kind: input, shape index: {}]
  %s19 = inlined_call_operand.hbm [shape: f32[1,32], index: 19, kind: input, shape index: {}]
  %s20 = inlined_call_operand.hbm [shape: f32[1,32], index: 20, kind: input, shape index: {}]
  %s21 = inlined_call_operand.hbm [shape: f32[1,32], index: 21, kind: input, shape index: {}]
  %s22 = inlined_call_operand.vmem [shape: bf16[32,64], index: 22, kind: input, shape index: {}]
  %s23 = inlined_call_operand.hbm [shape: f32[1,64], index: 23, kind: input, shape index: {}]
  %s24 = inlined_call_operand.vmem [shape: bf16[64,32], index: 24, kind: input, shape index: {}]
  %s25 = inlined_call_operand.hbm [shape: f32[1,32], index: 25, kind: input, shape index: {}]
  %s26 = inlined_call_operand.hbm [shape: f32[1,32], index: 26, kind: input, shape index: {}]
  %s27 = inlined_call_operand.hbm [shape: f32[1,32], index: 27, kind: input, shape index: {}]
  %s28 = inlined_call_operand.vmem [shape: f32[2,8,32], index: 28, kind: output, shape index: {}]
  %s29 = sld [smem:[#allocation0]]
  $region189: #{transformer_nmt_mh_forward.8} parent=0
    _
  %s31 = ssub.s32 1, %s29
  %s32 = scalar_select 0, %s31, %s29
  $region1: #{transformer_nmt_mh_forward.8} parent=0
    #allocation2 [shape = 'u8[512]{0}', space=vmem, size = 0x400, scoped, tag = 'input window, operand 12, single buffered']
    #allocation3 [shape = 's32[2]{0}', space=sflag, size = 0x8, scoped, tag = 'scoped memory for transformer_nmt_mh_forward.8']
    #allocation4 [shape = 'u8[512]{0}', space=vmem, size = 0x400, scoped, tag = 'input window, operand 13, single buffered']
    #allocation5 [shape = 's32[1]{0}', space=sflag, size = 0x4, scoped, tag = 'scoped memory for transformer_nmt_mh_forward.8']
    #allocation6 [shape = 'u8[512]{0}', space=vmem, size = 0x400, scoped, tag = 'input window, operand 15, single buffered']
    #allocation7 [shape = 'u8[512]{0}', space=vmem, size = 0x400, scoped, tag = 'input window, operand 17, single buffered']
    #allocation8 [shape = 's32[1]{0}', space=sflag, size = 0x4, scoped, tag = 'scoped memory for transformer_nmt_mh_forward.8']
    #allocation9 [shape = 'u8[512]{0}', space=vmem, size = 0x400, scoped, tag = 'input window, operand 19, single buffered']
    #allocation10 [shape = 'u8[512]{0}', space=vmem, size = 0x400, scoped, tag = 'input window, operand 20, single buffered']
    #allocation11 [shape = 's32[1]{0}', space=sflag, size = 0x4, scoped, tag = 'scoped memory for transformer_nmt_mh_forward.8']
    #allocation12 [shape = 'u8[512]{0}', space=vmem, size = 0x400, scoped, tag = 'input window, operand 21, single buffered']
    #allocation13 [shape = 'u8[512]{0}', space=vmem, size = 0x400, scoped, tag = 'input window, operand 23, single buffered']
    #allocation14 [shape = 's32[1]{0}', space=sflag, size = 0x4, scoped, tag = 'scoped memory for transformer_nmt_mh_forward.8']
    #allocation15 [shape = 'u8[512]{0}', space=vmem, size = 0x400, scoped, tag = 'input window, operand 25, single buffered']
    #allocation16 [shape = 'u8[512]{0}', space=vmem, size = 0x400, scoped, tag = 'input window, operand 26, single buffered']
    #allocation17 [shape = 's32[1]{0}', space=sflag, size = 0x4, scoped, tag = 'scoped memory for transformer_nmt_mh_forward.8']
    #allocation18 [shape = 'u8[512]{0}', space=vmem, size = 0x400, scoped, tag = 'input window, operand 27, single buffered']
    %33 = vsyncpa [#allocation3], 0
    %34 = vsyncpa [#allocation5], 0
    %35 = vsyncpa [#allocation8], 0
    %36 = vsyncpa [#allocation11], 0
    %37 = vsyncpa [#allocation14], 0
    %38 = vsyncpa [#allocation17], 0
    loop: start=0, step=1, limit=4
    $region2: #{transformer_nmt_mh_forward.8} parent=1 // loop_pre_header
      _
    $region3: #{transformer_nmt_mh_forward.8} parent=1 // loop_header
      %s40 = sphi 0, %s44
      %p41 = scmp.ge.s32.totalorder %s40, 4
      %s50 = sphi 0, %s52
      %s53 = sphi 0, %s50
      %s54 = sphi 0, %s53
      %s70 = sphi 0, %s54
      %s76 = sphi 0, %s78
      %s79 = sphi 0, %s76
      %s80 = sphi 0, %s79
      %s96 = sphi 0, %s80
      %s100 = sphi 0, %s100
      %s102 = sphi 0, %s100
      %s103 = sphi 0, %s102
      %s117 = sphi 0, %s103
      %s121 = sphi 0, %s121
      %s123 = sphi 0, %s121
      %s124 = sphi 0, %s123
      %s138 = sphi 0, %s124
      %s142 = sphi 0, %s142
      %s144 = sphi 0, %s142
      %s145 = sphi 0, %s144
      %s159 = sphi 0, %s145
      %s163 = sphi 0, %s163
      %s165 = sphi 0, %s163
      %s166 = sphi 0, %s165
      %s180 = sphi 0, %s166
      %s184 = sphi 0, %s184
      %s186 = sphi 0, %s184
      %s187 = sphi 0, %s186
      %s201 = sphi 0, %s187
      %s205 = sphi 0, %s205
      %s207 = sphi 0, %s205
      %s208 = sphi 0, %s207
      %s222 = sphi 0, %s208
      %s226 = sphi 0, %s226
      %s228 = sphi 0, %s226
      %s229 = sphi 0, %s228
      %s243 = sphi 0, %s229
      %s247 = sphi 0, %s247
      %s249 = sphi 0, %s247
      %s250 = sphi 0, %s249
      %s264 = sphi 0, %s250
      %s268 = sphi 0, %s268
      %s270 = sphi 0, %s268
      %s271 = sphi 0, %s270
      %s285 = sphi 0, %s271
      %s289 = sphi 0, %s289
      %s291 = sphi 0, %s289
      %s292 = sphi 0, %s291
      %s306 = sphi 0, %s292
      %s310 = sphi 0, %s310
      %s312 = sphi 0, %s310
      %s313 = sphi 0, %s312
      %s327 = sphi 0, %s313
      %s331 = sphi 0, %s331
      %s333 = sphi 0, %s331
      %s334 = sphi 0, %s333
      %s348 = sphi 0, %s334
      %s352 = sphi 0, %s352
      %s354 = sphi 0, %s352
      %s355 = sphi 0, %s354
      %s369 = sphi 0, %s355
      %s373 = sphi 0, %s373
      %s375 = sphi 0, %s373
      %s376 = sphi 0, %s375
      %s390 = sphi 0, %s376
      %s394 = sphi 0, %s394
      %s396 = sphi 0, %s394
      %s397 = sphi 0, %s396
      %s411 = sphi 0, %s397
      %s415 = sphi 0, %s415
      %s417 = sphi 0, %s415
      %s418 = sphi 0, %s417
      %s432 = sphi 0, %s418
      %s436 = sphi 0, %s436
      %s438 = sphi 0, %s436
      %s439 = sphi 0, %s438
      %s453 = sphi 0, %s439
      %s457 = sphi 0, %s457
      %s459 = sphi 0, %s457
      %s460 = sphi 0, %s459
      %s474 = sphi 0, %s460
      %s478 = sphi 0, %s478
      %s480 = sphi 0, %s478
      %s481 = sphi 0, %s480
      %s495 = sphi 0, %s481
      %s499 = sphi 0, %s499
      %s501 = sphi 0, %s499
      %s502 = sphi 0, %s501
      %s516 = sphi 0, %s502
      %s520 = sphi 0, %s520
      %s522 = sphi 0, %s520
      %s523 = sphi 0, %s522
      %s537 = sphi 0, %s523
      %s541 = sphi 0, %s541
      %s543 = sphi 0, %s541
      %s544 = sphi 0, %s543
      %s558 = sphi 0, %s544
      %s562 = sphi 0, %s562
      %s564 = sphi 0, %s562
      %s565 = sphi 0, %s564
      %s579 = sphi 0, %s565
      %s583 = sphi 0, %s583
      %s585 = sphi 0, %s583
      %s586 = sphi 0, %s585
      %s600 = sphi 0, %s586
      %s604 = sphi 0, %s604
      %s606 = sphi 0, %s604
      %s607 = sphi 0, %s606
      %s621 = sphi 0, %s607
      %s625 = sphi 0, %s625
      %s627 = sphi 0, %s625
      %s628 = sphi 0, %s627
      %s642 = sphi 0, %s628
      %s648 = sphi 0, %s650
      %s651 = sphi 0, %s648
      %s652 = sphi 0, %s651
      %s668 = sphi 0, %s652
    $region4: #{transformer_nmt_mh_forward.8} parent=1 // loop_header_branch
      %43 = sbr.rel (%p41) target = $region8
    $region5: #{transformer_nmt_mh_forward.8} parent=1 // loop_body
      %s45 = ssub.s32 %s40, 1
      %s46 = ssub.s32 %s40, 2
      %s47 = sadd.s32 %s40, 1
      %s48 = ssub.s32 %s40, %s47
      %p49 = scmp.eq.s32.totalorder %s48, 0
      %s51 = sadd.s32 %s50, 1
      %s52 = scalar_select %p49, %s50, %s51
      %p55 = pneg %p49
      %p56 = scmp.eq.s32.totalorder %s40, 1
      %p57 = por %p55, %p56
      %p58 = scmp.ne.s32.totalorder %s50, %s53
      %p59 = scmp.eq.s32.totalorder %s40, 0
      %p60 = por %p58, %p59
      %p61 = scmp.ne.s32.totalorder %s50, %s53
      %p62 = scmp.eq.s32.totalorder %s45, 1
      %p63 = por %p61, %p62
      %p64 = scmp.ne.s32.totalorder %s53, %s54
      %p65 = scmp.eq.s32.totalorder %s45, 0
      %p66 = por %p64, %p65
      %p67 = scmp.ne.s32.totalorder %s53, %s54
      %p68 = scmp.eq.s32.totalorder %s46, 1
      %p69 = por %p67, %p68
      %p71 = scmp.ne.s32.totalorder %s54, %s70
      %p72 = scmp.eq.s32.totalorder %s46, 0
      %p73 = por %p71, %p72
      %s74 = ssub.s32 %s40, %s47
      %p75 = scmp.eq.s32.totalorder %s74, 0
      %s77 = sadd.s32 %s76, 1
      %s78 = scalar_select %p75, %s76, %s77
      %p81 = pneg %p75
      %p82 = scmp.eq.s32.totalorder %s40, 1
      %p83 = por %p81, %p82
      %p84 = scmp.ne.s32.totalorder %s76, %s79
      %p85 = scmp.eq.s32.totalorder %s40, 0
      %p86 = por %p84, %p85
      %p87 = scmp.ne.s32.totalorder %s76, %s79
      %p88 = scmp.eq.s32.totalorder %s45, 1
      %p89 = por %p87, %p88
      %p90 = scmp.ne.s32.totalorder %s79, %s80
      %p91 = scmp.eq.s32.totalorder %s45, 0
      %p92 = por %p90, %p91
      %p93 = scmp.ne.s32.totalorder %s79, %s80
      %p94 = scmp.eq.s32.totalorder %s46, 1
      %p95 = por %p93, %p94
      %p97 = scmp.ne.s32.totalorder %s80, %s96
      %p98 = scmp.eq.s32.totalorder %s46, 0
      %p99 = por %p97, %p98
      %s101 = sadd.s32 %s100, 1
      %p104 = scmp.eq.s32.totalorder %s40, 1
      %p105 = scmp.ne.s32.totalorder %s100, %s102
      %p106 = scmp.eq.s32.totalorder %s40, 0
      %p107 = por %p105, %p106
      %p108 = scmp.ne.s32.totalorder %s100, %s102
      %p109 = scmp.eq.s32.totalorder %s45, 1
      %p110 = por %p108, %p109
      %p111 = scmp.ne.s32.totalorder %s102, %s103
      %p112 = scmp.eq.s32.totalorder %s45, 0
      %p113 = por %p111, %p112
      %p114 = scmp.ne.s32.totalorder %s102, %s103
      %p115 = scmp.eq.s32.totalorder %s46, 1
      %p116 = por %p114, %p115
      %p118 = scmp.ne.s32.totalorder %s103, %s117
      %p119 = scmp.eq.s32.totalorder %s46, 0
      %p120 = por %p118, %p119
      %s122 = sadd.s32 %s121, 1
      %p125 = scmp.eq.s32.totalorder %s40, 1
      %p126 = scmp.ne.s32.totalorder %s121, %s123
      %p127 = scmp.eq.s32.totalorder %s40, 0
      %p128 = por %p126, %p127
      %p129 = scmp.ne.s32.totalorder %s121, %s123
      %p130 = scmp.eq.s32.totalorder %s45, 1
      %p131 = por %p129, %p130
      %p132 = scmp.ne.s32.totalorder %s123, %s124
      %p133 = scmp.eq.s32.totalorder %s45, 0
      %p134 = por %p132, %p133
      %p135 = scmp.ne.s32.totalorder %s123, %s124
      %p136 = scmp.eq.s32.totalorder %s46, 1
      %p137 = por %p135, %p136
      %p139 = scmp.ne.s32.totalorder %s124, %s138
      %p140 = scmp.eq.s32.totalorder %s46, 0
      %p141 = por %p139, %p140
      %s143 = sadd.s32 %s142, 1
      %p146 = scmp.eq.s32.totalorder %s40, 1
      %p147 = scmp.ne.s32.totalorder %s142, %s144
      %p148 = scmp.eq.s32.totalorder %s40, 0
      %p149 = por %p147, %p148
      %p150 = scmp.ne.s32.totalorder %s142, %s144
      %p151 = scmp.eq.s32.totalorder %s45, 1
      %p152 = por %p150, %p151
      %p153 = scmp.ne.s32.totalorder %s144, %s145
      %p154 = scmp.eq.s32.totalorder %s45, 0
      %p155 = por %p153, %p154
      %p156 = scmp.ne.s32.totalorder %s144, %s145
      %p157 = scmp.eq.s32.totalorder %s46, 1
      %p158 = por %p156, %p157
      %p160 = scmp.ne.s32.totalorder %s145, %s159
      %p161 = scmp.eq.s32.totalorder %s46, 0
      %p162 = por %p160, %p161
      %s164 = sadd.s32 %s163, 1
      %p167 = scmp.eq.s32.totalorder %s40, 1
      %p168 = scmp.ne.s32.totalorder %s163, %s165
      %p169 = scmp.eq.s32.totalorder %s40, 0
      %p170 = por %p168, %p169
      %p171 = scmp.ne.s32.totalorder %s163, %s165
      %p172 = scmp.eq.s32.totalorder %s45, 1
      %p173 = por %p171, %p172
      %p174 = scmp.ne.s32.totalorder %s165, %s166
      %p175 = scmp.eq.s32.totalorder %s45, 0
      %p176 = por %p174, %p175
      %p177 = scmp.ne.s32.totalorder %s165, %s166
      %p178 = scmp.eq.s32.totalorder %s46, 1
      %p179 = por %p177, %p178
      %p181 = scmp.ne.s32.totalorder %s166, %s180
      %p182 = scmp.eq.s32.totalorder %s46, 0
      %p183 = por %p181, %p182
      %s185 = sadd.s32 %s184, 1
      %p188 = scmp.eq.s32.totalorder %s40, 1
      %p189 = scmp.ne.s32.totalorder %s184, %s186
      %p190 = scmp.eq.s32.totalorder %s40, 0
      %p191 = por %p189, %p190
      %p192 = scmp.ne.s32.totalorder %s184, %s186
      %p193 = scmp.eq.s32.totalorder %s45, 1
      %p194 = por %p192, %p193
      %p195 = scmp.ne.s32.totalorder %s186, %s187
      %p196 = scmp.eq.s32.totalorder %s45, 0
      %p197 = por %p195, %p196
      %p198 = scmp.ne.s32.totalorder %s186, %s187
      %p199 = scmp.eq.s32.totalorder %s46, 1
      %p200 = por %p198, %p199
      %p202 = scmp.ne.s32.totalorder %s187, %s201
      %p203 = scmp.eq.s32.totalorder %s46, 0
      %p204 = por %p202, %p203
      %s206 = sadd.s32 %s205, 1
      %p209 = scmp.eq.s32.totalorder %s40, 1
      %p210 = scmp.ne.s32.totalorder %s205, %s207
      %p211 = scmp.eq.s32.totalorder %s40, 0
      %p212 = por %p210, %p211
      %p213 = scmp.ne.s32.totalorder %s205, %s207
      %p214 = scmp.eq.s32.totalorder %s45, 1
      %p215 = por %p213, %p214
      %p216 = scmp.ne.s32.totalorder %s207, %s208
      %p217 = scmp.eq.s32.totalorder %s45, 0
      %p218 = por %p216, %p217
      %p219 = scmp.ne.s32.totalorder %s207, %s208
      %p220 = scmp.eq.s32.totalorder %s46, 1
      %p221 = por %p219, %p220
      %p223 = scmp.ne.s32.totalorder %s208, %s222
      %p224 = scmp.eq.s32.totalorder %s46, 0
      %p225 = por %p223, %p224
      %s227 = sadd.s32 %s226, 1
      %p230 = scmp.eq.s32.totalorder %s40, 1
      %p231 = scmp.ne.s32.totalorder %s226, %s228
      %p232 = scmp.eq.s32.totalorder %s40, 0
      %p233 = por %p231, %p232
      %p234 = scmp.ne.s32.totalorder %s226, %s228
      %p235 = scmp.eq.s32.totalorder %s45, 1
      %p236 = por %p234, %p235
      %p237 = scmp.ne.s32.totalorder %s228, %s229
      %p238 = scmp.eq.s32.totalorder %s45, 0
      %p239 = por %p237, %p238
      %p240 = scmp.ne.s32.totalorder %s228, %s229
      %p241 = scmp.eq.s32.totalorder %s46, 1
      %p242 = por %p240, %p241
      %p244 = scmp.ne.s32.totalorder %s229, %s243
      %p245 = scmp.eq.s32.totalorder %s46, 0
      %p246 = por %p244, %p245
      %s248 = sadd.s32 %s247, 1
      %p251 = scmp.eq.s32.totalorder %s40, 1
      %p252 = scmp.ne.s32.totalorder %s247, %s249
      %p253 = scmp.eq.s32.totalorder %s40, 0
      %p254 = por %p252, %p253
      %p255 = scmp.ne.s32.totalorder %s247, %s249
      %p256 = scmp.eq.s32.totalorder %s45, 1
      %p257 = por %p255, %p256
      %p258 = scmp.ne.s32.totalorder %s249, %s250
      %p259 = scmp.eq.s32.totalorder %s45, 0
      %p260 = por %p258, %p259
      %p261 = scmp.ne.s32.totalorder %s249, %s250
      %p262 = scmp.eq.s32.totalorder %s46, 1
      %p263 = por %p261, %p262
      %p265 = scmp.ne.s32.totalorder %s250, %s264
      %p266 = scmp.eq.s32.totalorder %s46, 0
      %p267 = por %p265, %p266
      %s269 = sadd.s32 %s268, 1
      %p272 = scmp.eq.s32.totalorder %s40, 1
      %p273 = scmp.ne.s32.totalorder %s268, %s270
      %p274 = scmp.eq.s32.totalorder %s40, 0
      %p275 = por %p273, %p274
      %p276 = scmp.ne.s32.totalorder %s268, %s270
      %p277 = scmp.eq.s32.totalorder %s45, 1
      %p278 = por %p276, %p277
      %p279 = scmp.ne.s32.totalorder %s270, %s271
      %p280 = scmp.eq.s32.totalorder %s45, 0
      %p281 = por %p279, %p280
      %p282 = scmp.ne.s32.totalorder %s270, %s271
      %p283 = scmp.eq.s32.totalorder %s46, 1
      %p284 = por %p282, %p283
      %p286 = scmp.ne.s32.totalorder %s271, %s285
      %p287 = scmp.eq.s32.totalorder %s46, 0
      %p288 = por %p286, %p287
      %s290 = sadd.s32 %s289, 1
      %p293 = scmp.eq.s32.totalorder %s40, 1
      %p294 = scmp.ne.s32.totalorder %s289, %s291
      %p295 = scmp.eq.s32.totalorder %s40, 0
      %p296 = por %p294, %p295
      %p297 = scmp.ne.s32.totalorder %s289, %s291
      %p298 = scmp.eq.s32.totalorder %s45, 1
      %p299 = por %p297, %p298
      %p300 = scmp.ne.s32.totalorder %s291, %s292
      %p301 = scmp.eq.s32.totalorder %s45, 0
      %p302 = por %p300, %p301
      %p303 = scmp.ne.s32.totalorder %s291, %s292
      %p304 = scmp.eq.s32.totalorder %s46, 1
      %p305 = por %p303, %p304
      %p307 = scmp.ne.s32.totalorder %s292, %s306
      %p308 = scmp.eq.s32.totalorder %s46, 0
      %p309 = por %p307, %p308
      %s311 = sadd.s32 %s310, 1
      %p314 = scmp.eq.s32.totalorder %s40, 1
      %p315 = scmp.ne.s32.totalorder %s310, %s312
      %p316 = scmp.eq.s32.totalorder %s40, 0
      %p317 = por %p315, %p316
      %p318 = scmp.ne.s32.totalorder %s310, %s312
      %p319 = scmp.eq.s32.totalorder %s45, 1
      %p320 = por %p318, %p319
      %p321 = scmp.ne.s32.totalorder %s312, %s313
      %p322 = scmp.eq.s32.totalorder %s45, 0
      %p323 = por %p321, %p322
      %p324 = scmp.ne.s32.totalorder %s312, %s313
      %p325 = scmp.eq.s32.totalorder %s46, 1
      %p326 = por %p324, %p325
      %p328 = scmp.ne.s32.totalorder %s313, %s327
      %p329 = scmp.eq.s32.totalorder %s46, 0
      %p330 = por %p328, %p329
      %s332 = sadd.s32 %s331, 1
      %p335 = scmp.eq.s32.totalorder %s40, 1
      %p336 = scmp.ne.s32.totalorder %s331, %s333
      %p337 = scmp.eq.s32.totalorder %s40, 0
      %p338 = por %p336, %p337
      %p339 = scmp.ne.s32.totalorder %s331, %s333
      %p340 = scmp.eq.s32.totalorder %s45, 1
      %p341 = por %p339, %p340
      %p342 = scmp.ne.s32.totalorder %s333, %s334
      %p343 = scmp.eq.s32.totalorder %s45, 0
      %p344 = por %p342, %p343
      %p345 = scmp.ne.s32.totalorder %s333, %s334
      %p346 = scmp.eq.s32.totalorder %s46, 1
      %p347 = por %p345, %p346
      %p349 = scmp.ne.s32.totalorder %s334, %s348
      %p350 = scmp.eq.s32.totalorder %s46, 0
      %p351 = por %p349, %p350
      %s353 = sadd.s32 %s352, 1
      %p356 = scmp.eq.s32.totalorder %s40, 1
      %p357 = scmp.ne.s32.totalorder %s352, %s354
      %p358 = scmp.eq.s32.totalorder %s40, 0
      %p359 = por %p357, %p358
      %p360 = scmp.ne.s32.totalorder %s352, %s354
      %p361 = scmp.eq.s32.totalorder %s45, 1
      %p362 = por %p360, %p361
      %p363 = scmp.ne.s32.totalorder %s354, %s355
      %p364 = scmp.eq.s32.totalorder %s45, 0
      %p365 = por %p363, %p364
      %p366 = scmp.ne.s32.totalorder %s354, %s355
      %p367 = scmp.eq.s32.totalorder %s46, 1
      %p368 = por %p366, %p367
      %p370 = scmp.ne.s32.totalorder %s355, %s369
      %p371 = scmp.eq.s32.totalorder %s46, 0
      %p372 = por %p370, %p371
      %s374 = sadd.s32 %s373, 1
      %p377 = scmp.eq.s32.totalorder %s40, 1
      %p378 = scmp.ne.s32.totalorder %s373, %s375
      %p379 = scmp.eq.s32.totalorder %s40, 0
      %p380 = por %p378, %p379
      %p381 = scmp.ne.s32.totalorder %s373, %s375
      %p382 = scmp.eq.s32.totalorder %s45, 1
      %p383 = por %p381, %p382
      %p384 = scmp.ne.s32.totalorder %s375, %s376
      %p385 = scmp.eq.s32.totalorder %s45, 0
      %p386 = por %p384, %p385
      %p387 = scmp.ne.s32.totalorder %s375, %s376
      %p388 = scmp.eq.s32.totalorder %s46, 1
      %p389 = por %p387, %p388
      %p391 = scmp.ne.s32.totalorder %s376, %s390
      %p392 = scmp.eq.s32.totalorder %s46, 0
      %p393 = por %p391, %p392
      %s395 = sadd.s32 %s394, 1
      %p398 = scmp.eq.s32.totalorder %s40, 1
      %p399 = scmp.ne.s32.totalorder %s394, %s396
      %p400 = scmp.eq.s32.totalorder %s40, 0
      %p401 = por %p399, %p400
      %p402 = scmp.ne.s32.totalorder %s394, %s396
      %p403 = scmp.eq.s32.totalorder %s45, 1
      %p404 = por %p402, %p403
      %p405 = scmp.ne.s32.totalorder %s396, %s397
      %p406 = scmp.eq.s32.totalorder %s45, 0
      %p407 = por %p405, %p406
      %p408 = scmp.ne.s32.totalorder %s396, %s397
      %p409 = scmp.eq.s32.totalorder %s46, 1
      %p410 = por %p408, %p409
      %p412 = scmp.ne.s32.totalorder %s397, %s411
      %p413 = scmp.eq.s32.totalorder %s46, 0
      %p414 = por %p412, %p413
      %s416 = sadd.s32 %s415, 1
      %p419 = scmp.eq.s32.totalorder %s40, 1
      %p420 = scmp.ne.s32.totalorder %s415, %s417
      %p421 = scmp.eq.s32.totalorder %s40, 0
      %p422 = por %p420, %p421
      %p423 = scmp.ne.s32.totalorder %s415, %s417
      %p424 = scmp.eq.s32.totalorder %s45, 1
      %p425 = por %p423, %p424
      %p426 = scmp.ne.s32.totalorder %s417, %s418
      %p427 = scmp.eq.s32.totalorder %s45, 0
      %p428 = por %p426, %p427
      %p429 = scmp.ne.s32.totalorder %s417, %s418
      %p430 = scmp.eq.s32.totalorder %s46, 1
      %p431 = por %p429, %p430
      %p433 = scmp.ne.s32.totalorder %s418, %s432
      %p434 = scmp.eq.s32.totalorder %s46, 0
      %p435 = por %p433, %p434
      %s437 = sadd.s32 %s436, 1
      %p440 = scmp.eq.s32.totalorder %s40, 1
      %p441 = scmp.ne.s32.totalorder %s436, %s438
      %p442 = scmp.eq.s32.totalorder %s40, 0
      %p443 = por %p441, %p442
      %p444 = scmp.ne.s32.totalorder %s436, %s438
      %p445 = scmp.eq.s32.totalorder %s45, 1
      %p446 = por %p444, %p445
      %p447 = scmp.ne.s32.totalorder %s438, %s439
      %p448 = scmp.eq.s32.totalorder %s45, 0
      %p449 = por %p447, %p448
      %p450 = scmp.ne.s32.totalorder %s438, %s439
      %p451 = scmp.eq.s32.totalorder %s46, 1
      %p452 = por %p450, %p451
      %p454 = scmp.ne.s32.totalorder %s439, %s453
      %p455 = scmp.eq.s32.totalorder %s46, 0
      %p456 = por %p454, %p455
      %s458 = sadd.s32 %s457, 1
      %p461 = scmp.eq.s32.totalorder %s40, 1
      %p462 = scmp.ne.s32.totalorder %s457, %s459
      %p463 = scmp.eq.s32.totalorder %s40, 0
      %p464 = por %p462, %p463
      %p465 = scmp.ne.s32.totalorder %s457, %s459
      %p466 = scmp.eq.s32.totalorder %s45, 1
      %p467 = por %p465, %p466
      %p468 = scmp.ne.s32.totalorder %s459, %s460
      %p469 = scmp.eq.s32.totalorder %s45, 0
      %p470 = por %p468, %p469
      %p471 = scmp.ne.s32.totalorder %s459, %s460
      %p472 = scmp.eq.s32.totalorder %s46, 1
      %p473 = por %p471, %p472
      %p475 = scmp.ne.s32.totalorder %s460, %s474
      %p476 = scmp.eq.s32.totalorder %s46, 0
      %p477 = por %p475, %p476
      %s479 = sadd.s32 %s478, 1
      %p482 = scmp.eq.s32.totalorder %s40, 1
      %p483 = scmp.ne.s32.totalorder %s478, %s480
      %p484 = scmp.eq.s32.totalorder %s40, 0
      %p485 = por %p483, %p484
      %p486 = scmp.ne.s32.totalorder %s478, %s480
      %p487 = scmp.eq.s32.totalorder %s45, 1
      %p488 = por %p486, %p487
      %p489 = scmp.ne.s32.totalorder %s480, %s481
      %p490 = scmp.eq.s32.totalorder %s45, 0
      %p491 = por %p489, %p490
      %p492 = scmp.ne.s32.totalorder %s480, %s481
      %p493 = scmp.eq.s32.totalorder %s46, 1
      %p494 = por %p492, %p493
      %p496 = scmp.ne.s32.totalorder %s481, %s495
      %p497 = scmp.eq.s32.totalorder %s46, 0
      %p498 = por %p496, %p497
      %s500 = sadd.s32 %s499, 1
      %p503 = scmp.eq.s32.totalorder %s40, 1
      %p504 = scmp.ne.s32.totalorder %s499, %s501
      %p505 = scmp.eq.s32.totalorder %s40, 0
      %p506 = por %p504, %p505
      %p507 = scmp.ne.s32.totalorder %s499, %s501
      %p508 = scmp.eq.s32.totalorder %s45, 1
      %p509 = por %p507, %p508
      %p510 = scmp.ne.s32.totalorder %s501, %s502
      %p511 = scmp.eq.s32.totalorder %s45, 0
      %p512 = por %p510, %p511
      %p513 = scmp.ne.s32.totalorder %s501, %s502
      %p514 = scmp.eq.s32.totalorder %s46, 1
      %p515 = por %p513, %p514
      %p517 = scmp.ne.s32.totalorder %s502, %s516
      %p518 = scmp.eq.s32.totalorder %s46, 0
      %p519 = por %p517, %p518
      %s521 = sadd.s32 %s520, 1
      %p524 = scmp.eq.s32.totalorder %s40, 1
      %p525 = scmp.ne.s32.totalorder %s520, %s522
      %p526 = scmp.eq.s32.totalorder %s40, 0
      %p527 = por %p525, %p526
      %p528 = scmp.ne.s32.totalorder %s520, %s522
      %p529 = scmp.eq.s32.totalorder %s45, 1
      %p530 = por %p528, %p529
      %p531 = scmp.ne.s32.totalorder %s522, %s523
      %p532 = scmp.eq.s32.totalorder %s45, 0
      %p533 = por %p531, %p532
      %p534 = scmp.ne.s32.totalorder %s522, %s523
      %p535 = scmp.eq.s32.totalorder %s46, 1
      %p536 = por %p534, %p535
      %p538 = scmp.ne.s32.totalorder %s523, %s537
      %p539 = scmp.eq.s32.totalorder %s46, 0
      %p540 = por %p538, %p539
      %s542 = sadd.s32 %s541, 1
      %p545 = scmp.eq.s32.totalorder %s40, 1
      %p546 = scmp.ne.s32.totalorder %s541, %s543
      %p547 = scmp.eq.s32.totalorder %s40, 0
      %p548 = por %p546, %p547
      %p549 = scmp.ne.s32.totalorder %s541, %s543
      %p550 = scmp.eq.s32.totalorder %s45, 1
      %p551 = por %p549, %p550
      %p552 = scmp.ne.s32.totalorder %s543, %s544
      %p553 = scmp.eq.s32.totalorder %s45, 0
      %p554 = por %p552, %p553
      %p555 = scmp.ne.s32.totalorder %s543, %s544
      %p556 = scmp.eq.s32.totalorder %s46, 1
      %p557 = por %p555, %p556
      %p559 = scmp.ne.s32.totalorder %s544, %s558
      %p560 = scmp.eq.s32.totalorder %s46, 0
      %p561 = por %p559, %p560
      %s563 = sadd.s32 %s562, 1
      %p566 = scmp.eq.s32.totalorder %s40, 1
      %p567 = scmp.ne.s32.totalorder %s562, %s564
      %p568 = scmp.eq.s32.totalorder %s40, 0
      %p569 = por %p567, %p568
      %p570 = scmp.ne.s32.totalorder %s562, %s564
      %p571 = scmp.eq.s32.totalorder %s45, 1
      %p572 = por %p570, %p571
      %p573 = scmp.ne.s32.totalorder %s564, %s565
      %p574 = scmp.eq.s32.totalorder %s45, 0
      %p575 = por %p573, %p574
      %p576 = scmp.ne.s32.totalorder %s564, %s565
      %p577 = scmp.eq.s32.totalorder %s46, 1
      %p578 = por %p576, %p577
      %p580 = scmp.ne.s32.totalorder %s565, %s579
      %p581 = scmp.eq.s32.totalorder %s46, 0
      %p582 = por %p580, %p581
      %s584 = sadd.s32 %s583, 1
      %p587 = scmp.eq.s32.totalorder %s40, 1
      %p588 = scmp.ne.s32.totalorder %s583, %s585
      %p589 = scmp.eq.s32.totalorder %s40, 0
      %p590 = por %p588, %p589
      %p591 = scmp.ne.s32.totalorder %s583, %s585
      %p592 = scmp.eq.s32.totalorder %s45, 1
      %p593 = por %p591, %p592
      %p594 = scmp.ne.s32.totalorder %s585, %s586
      %p595 = scmp.eq.s32.totalorder %s45, 0
      %p596 = por %p594, %p595
      %p597 = scmp.ne.s32.totalorder %s585, %s586
      %p598 = scmp.eq.s32.totalorder %s46, 1
      %p599 = por %p597, %p598
      %p601 = scmp.ne.s32.totalorder %s586, %s600
      %p602 = scmp.eq.s32.totalorder %s46, 0
      %p603 = por %p601, %p602
      %s605 = sadd.s32 %s604, 1
      %p608 = scmp.eq.s32.totalorder %s40, 1
      %p609 = scmp.ne.s32.totalorder %s604, %s606
      %p610 = scmp.eq.s32.totalorder %s40, 0
      %p611 = por %p609, %p610
      %p612 = scmp.ne.s32.totalorder %s604, %s606
      %p613 = scmp.eq.s32.totalorder %s45, 1
      %p614 = por %p612, %p613
      %p615 = scmp.ne.s32.totalorder %s606, %s607
      %p616 = scmp.eq.s32.totalorder %s45, 0
      %p617 = por %p615, %p616
      %p618 = scmp.ne.s32.totalorder %s606, %s607
      %p619 = scmp.eq.s32.totalorder %s46, 1
      %p620 = por %p618, %p619
      %p622 = scmp.ne.s32.totalorder %s607, %s621
      %p623 = scmp.eq.s32.totalorder %s46, 0
      %p624 = por %p622, %p623
      %s626 = sadd.s32 %s625, 1
      %p629 = scmp.eq.s32.totalorder %s40, 1
      %p630 = scmp.ne.s32.totalorder %s625, %s627
      %p631 = scmp.eq.s32.totalorder %s40, 0
      %p632 = por %p630, %p631
      %p633 = scmp.ne.s32.totalorder %s625, %s627
      %p634 = scmp.eq.s32.totalorder %s45, 1
      %p635 = por %p633, %p634
      %p636 = scmp.ne.s32.totalorder %s627, %s628
      %p637 = scmp.eq.s32.totalorder %s45, 0
      %p638 = por %p636, %p637
      %p639 = scmp.ne.s32.totalorder %s627, %s628
      %p640 = scmp.eq.s32.totalorder %s46, 1
      %p641 = por %p639, %p640
      %p643 = scmp.ne.s32.totalorder %s628, %s642
      %p644 = scmp.eq.s32.totalorder %s46, 0
      %p645 = por %p643, %p644
      %s646 = ssub.s32 %s40, %s47
      %p647 = scmp.eq.s32.totalorder %s646, 0
      %s649 = sadd.s32 %s648, 1
      %s650 = scalar_select %p647, %s648, %s649
      %p653 = pneg %p647
      %p654 = scmp.eq.s32.totalorder %s40, 1
      %p655 = por %p653, %p654
      %p656 = scmp.ne.s32.totalorder %s648, %s651
      %p657 = scmp.eq.s32.totalorder %s40, 0
      %p658 = por %p656, %p657
      %p659 = scmp.ne.s32.totalorder %s648, %s651
      %p660 = scmp.eq.s32.totalorder %s45, 1
      %p661 = por %p659, %p660
      %p662 = scmp.ne.s32.totalorder %s651, %s652
      %p663 = scmp.eq.s32.totalorder %s45, 0
      %p664 = por %p662, %p663
      %p665 = scmp.ne.s32.totalorder %s651, %s652
      %p666 = scmp.eq.s32.totalorder %s46, 1
      %p667 = por %p665, %p666
      %p669 = scmp.ne.s32.totalorder %s652, %s668
      %p670 = scmp.eq.s32.totalorder %s46, 0
      %p671 = por %p669, %p670
      %p672 = scmp.le.s32.totalorder 1, %s40
      %p673 = scmp.lt.s32.totalorder %s40, 3
      %p674 = pnand %p672, %p673
      %p675 = pneg %p674
      // Predicated region
      $region9: #{transformer_nmt_mh_forward.8} parent=5 // pred_check
        _
      $region10: #{transformer_nmt_mh_forward.8} parent=5 // pred_check_branch
        %677 = sbr.rel (%p674) target = $region12
      $region11: #{transformer_nmt_mh_forward.8} parent=5 // pred_region
        %s678 = ssub.s32 %s40, 1
        // Predicated region
        $region13: #{transformer_nmt_mh_forward.8} parent=11 // pred_check
          %p679 = pneg %p113
        $region14: #{transformer_nmt_mh_forward.8} parent=11 // pred_check_branch
          %681 = sbr.rel (%p679) target = $region16
        $region15: #{transformer_nmt_mh_forward.8} parent=11 // pred_region
          _
        $region16: #{transformer_nmt_mh_forward.8} parent=11 // pred_fallthru
          _
        // Predicated region
        $region17: #{transformer_nmt_mh_forward.8} parent=11 // pred_check
          %p682 = pneg %p134
        $region18: #{transformer_nmt_mh_forward.8} parent=11 // pred_check_branch
          %684 = sbr.rel (%p682) target = $region20
        $region19: #{transformer_nmt_mh_forward.8} parent=11 // pred_region
          _
        $region20: #{transformer_nmt_mh_forward.8} parent=11 // pred_fallthru
          _
        // Predicated region
        $region21: #{transformer_nmt_mh_forward.8} parent=11 // pred_check
          %p685 = pneg %p155
        $region22: #{transformer_nmt_mh_forward.8} parent=11 // pred_check_branch
          %687 = sbr.rel (%p685) target = $region24
        $region23: #{transformer_nmt_mh_forward.8} parent=11 // pred_region
          _
        $region24: #{transformer_nmt_mh_forward.8} parent=11 // pred_fallthru
          _
        // Predicated region
        $region25: #{transformer_nmt_mh_forward.8} parent=11 // pred_check
          %p688 = pneg %p176
        $region26: #{transformer_nmt_mh_forward.8} parent=11 // pred_check_branch
          %690 = sbr.rel (%p688) target = $region28
        $region27: #{transformer_nmt_mh_forward.8} parent=11 // pred_region
          _
        $region28: #{transformer_nmt_mh_forward.8} parent=11 // pred_fallthru
          _
        // Predicated region
        $region29: #{transformer_nmt_mh_forward.8} parent=11 // pred_check
          %p691 = pneg %p197
        $region30: #{transformer_nmt_mh_forward.8} parent=11 // pred_check_branch
          %693 = sbr.rel (%p691) target = $region32
        $region31: #{transformer_nmt_mh_forward.8} parent=11 // pred_region
          _
        $region32: #{transformer_nmt_mh_forward.8} parent=11 // pred_fallthru
          _
        // Predicated region
        $region33: #{transformer_nmt_mh_forward.8} parent=11 // pred_check
          %p694 = pneg %p218
        $region34: #{transformer_nmt_mh_forward.8} parent=11 // pred_check_branch
          %696 = sbr.rel (%p694) target = $region36
        $region35: #{transformer_nmt_mh_forward.8} parent=11 // pred_region
          _
        $region36: #{transformer_nmt_mh_forward.8} parent=11 // pred_fallthru
          _
        // Predicated region
        $region37: #{transformer_nmt_mh_forward.8} parent=11 // pred_check
          %p697 = pneg %p239
        $region38: #{transformer_nmt_mh_forward.8} parent=11 // pred_check_branch
          %699 = sbr.rel (%p697) target = $region40
        $region39: #{transformer_nmt_mh_forward.8} parent=11 // pred_region
          _
        $region40: #{transformer_nmt_mh_forward.8} parent=11 // pred_fallthru
          _
        // Predicated region
        $region41: #{transformer_nmt_mh_forward.8} parent=11 // pred_check
          %p700 = pneg %p260
        $region42: #{transformer_nmt_mh_forward.8} parent=11 // pred_check_branch
          %702 = sbr.rel (%p700) target = $region44
        $region43: #{transformer_nmt_mh_forward.8} parent=11 // pred_region
          _
        $region44: #{transformer_nmt_mh_forward.8} parent=11 // pred_fallthru
          _
        // Predicated region
        $region45: #{transformer_nmt_mh_forward.8} parent=11 // pred_check
          %p703 = pneg %p281
        $region46: #{transformer_nmt_mh_forward.8} parent=11 // pred_check_branch
          %705 = sbr.rel (%p703) target = $region48
        $region47: #{transformer_nmt_mh_forward.8} parent=11 // pred_region
          _
        $region48: #{transformer_nmt_mh_forward.8} parent=11 // pred_fallthru
          _
        // Predicated region
        $region49: #{transformer_nmt_mh_forward.8} parent=11 // pred_check
          %p706 = pneg %p302
        $region50: #{transformer_nmt_mh_forward.8} parent=11 // pred_check_branch
          %708 = sbr.rel (%p706) target = $region52
        $region51: #{transformer_nmt_mh_forward.8} parent=11 // pred_region
          _
        $region52: #{transformer_nmt_mh_forward.8} parent=11 // pred_fallthru
          _
        // Predicated region
        $region53: #{transformer_nmt_mh_forward.8} parent=11 // pred_check
          %p709 = pneg %p323
        $region54: #{transformer_nmt_mh_forward.8} parent=11 // pred_check_branch
          %711 = sbr.rel (%p709) target = $region56
        $region55: #{transformer_nmt_mh_forward.8} parent=11 // pred_region
          %s713 = ssub.s32 16, 16
          %714 = vsyncadd [#allocation3], %s713
          %s716 = sshll.u32 [#allocation2], 4
          %s717 = int_to_ptr.vmem [resolvable:$true] %s716
          %719 = dma.hbm_to_vmem [thread:$0]  %s12, 16, %s717, [#allocation3]
        $region56: #{transformer_nmt_mh_forward.8} parent=11 // pred_fallthru
          _
        // Predicated region
        $region57: #{transformer_nmt_mh_forward.8} parent=11 // pred_check
          %p720 = pneg %p344
        $region58: #{transformer_nmt_mh_forward.8} parent=11 // pred_check_branch
          %722 = sbr.rel (%p720) target = $region60
        $region59: #{transformer_nmt_mh_forward.8} parent=11 // pred_region
          %s724 = ssub.s32 16, 16
          %725 = vsyncadd [#allocation5], %s724
          %s727 = sshll.u32 [#allocation4], 4
          %s728 = int_to_ptr.vmem [resolvable:$true] %s727
          %730 = dma.hbm_to_vmem [thread:$0]  %s13, 16, %s728, [#allocation5]
        $region60: #{transformer_nmt_mh_forward.8} parent=11 // pred_fallthru
          _
        // Predicated region
        $region61: #{transformer_nmt_mh_forward.8} parent=11 // pred_check
          %p731 = pneg %p365
        $region62: #{transformer_nmt_mh_forward.8} parent=11 // pred_check_branch
          %733 = sbr.rel (%p731) target = $region64
        $region63: #{transformer_nmt_mh_forward.8} parent=11 // pred_region
          _
        $region64: #{transformer_nmt_mh_forward.8} parent=11 // pred_fallthru
          _
        // Predicated region
        $region65: #{transformer_nmt_mh_forward.8} parent=11 // pred_check
          %p734 = pneg %p386
        $region66: #{transformer_nmt_mh_forward.8} parent=11 // pred_check_branch
          %736 = sbr.rel (%p734) target = $region68
        $region67: #{transformer_nmt_mh_forward.8} parent=11 // pred_region
          %s738 = ssub.s32 16, 16
          %739 = vsyncadd [#allocation5], %s738
          %s741 = sshll.u32 [#allocation6], 4
          %s742 = int_to_ptr.vmem [resolvable:$true] %s741
          %744 = dma.hbm_to_vmem [thread:$0]  %s15, 16, %s742, [#allocation5]
        $region68: #{transformer_nmt_mh_forward.8} parent=11 // pred_fallthru
          _
        // Predicated region
        $region69: #{transformer_nmt_mh_forward.8} parent=11 // pred_check
          %p745 = pneg %p407
        $region70: #{transformer_nmt_mh_forward.8} parent=11 // pred_check_branch
          %747 = sbr.rel (%p745) target = $region72
        $region71: #{transformer_nmt_mh_forward.8} parent=11 // pred_region
          _
        $region72: #{transformer_nmt_mh_forward.8} parent=11 // pred_fallthru
          _
        // Predicated region
        $region73: #{transformer_nmt_mh_forward.8} parent=11 // pred_check
          %p748 = pneg %p428
        $region74: #{transformer_nmt_mh_forward.8} parent=11 // pred_check_branch
          %750 = sbr.rel (%p748) target = $region76
        $region75: #{transformer_nmt_mh_forward.8} parent=11 // pred_region
          %s752 = ssub.s32 16, 16
          %753 = vsyncadd [#allocation8], %s752
          %s755 = sshll.u32 [#allocation7], 4
          %s756 = int_to_ptr.vmem [resolvable:$true] %s755
          %758 = dma.hbm_to_vmem [thread:$0]  %s17, 16, %s756, [#allocation8]
        $region76: #{transformer_nmt_mh_forward.8} parent=11 // pred_fallthru
          _
        // Predicated region
        $region77: #{transformer_nmt_mh_forward.8} parent=11 // pred_check
          %p759 = pneg %p449
        $region78: #{transformer_nmt_mh_forward.8} parent=11 // pred_check_branch
          %761 = sbr.rel (%p759) target = $region80
        $region79: #{transformer_nmt_mh_forward.8} parent=11 // pred_region
          _
        $region80: #{transformer_nmt_mh_forward.8} parent=11 // pred_fallthru
          _
        // Predicated region
        $region81: #{transformer_nmt_mh_forward.8} parent=11 // pred_check
          %p762 = pneg %p470
        $region82: #{transformer_nmt_mh_forward.8} parent=11 // pred_check_branch
          %764 = sbr.rel (%p762) target = $region84
        $region83: #{transformer_nmt_mh_forward.8} parent=11 // pred_region
          %s766 = ssub.s32 16, 16
          %767 = vsyncadd [#allocation8], %s766
          %s769 = sshll.u32 [#allocation9], 4
          %s770 = int_to_ptr.vmem [resolvable:$true] %s769
          %772 = dma.hbm_to_vmem [thread:$0]  %s19, 16, %s770, [#allocation8]
        $region84: #{transformer_nmt_mh_forward.8} parent=11 // pred_fallthru
          _
        // Predicated region
        $region85: #{transformer_nmt_mh_forward.8} parent=11 // pred_check
          %p773 = pneg %p491
        $region86: #{transformer_nmt_mh_forward.8} parent=11 // pred_check_branch
          %775 = sbr.rel (%p773) target = $region88
        $region87: #{transformer_nmt_mh_forward.8} parent=11 // pred_region
          %s777 = ssub.s32 16, 16
          %778 = vsyncadd [#allocation11], %s777
          %s780 = sshll.u32 [#allocation10], 4
          %s781 = int_to_ptr.vmem [resolvable:$true] %s780
          %783 = dma.hbm_to_vmem [thread:$0]  %s20, 16, %s781, [#allocation11]
        $region88: #{transformer_nmt_mh_forward.8} parent=11 // pred_fallthru
          _
        // Predicated region
        $region89: #{transformer_nmt_mh_forward.8} parent=11 // pred_check
          %p784 = pneg %p512
        $region90: #{transformer_nmt_mh_forward.8} parent=11 // pred_check_branch
          %786 = sbr.rel (%p784) target = $region92
        $region91: #{transformer_nmt_mh_forward.8} parent=11 // pred_region
          %s788 = ssub.s32 16, 16
          %789 = vsyncadd [#allocation11], %s788
          %s791 = sshll.u32 [#allocation12], 4
          %s792 = int_to_ptr.vmem [resolvable:$true] %s791
          %794 = dma.hbm_to_vmem [thread:$0]  %s21, 16, %s792, [#allocation11]
        $region92: #{transformer_nmt_mh_forward.8} parent=11 // pred_fallthru
          _
        // Predicated region
        $region93: #{transformer_nmt_mh_forward.8} parent=11 // pred_check
          %p795 = pneg %p533
        $region94: #{transformer_nmt_mh_forward.8} parent=11 // pred_check_branch
          %797 = sbr.rel (%p795) target = $region96
        $region95: #{transformer_nmt_mh_forward.8} parent=11 // pred_region
          _
        $region96: #{transformer_nmt_mh_forward.8} parent=11 // pred_fallthru
          _
        // Predicated region
        $region97: #{transformer_nmt_mh_forward.8} parent=11 // pred_check
          %p798 = pneg %p554
        $region98: #{transformer_nmt_mh_forward.8} parent=11 // pred_check_branch
          %800 = sbr.rel (%p798) target = $region100
        $region99: #{transformer_nmt_mh_forward.8} parent=11 // pred_region
          %s802 = ssub.s32 16, 16
          %803 = vsyncadd [#allocation14], %s802
          %s805 = sshll.u32 [#allocation13], 4
          %s806 = int_to_ptr.vmem [resolvable:$true] %s805
          %808 = dma.hbm_to_vmem [thread:$0]  %s23, 16, %s806, [#allocation14]
        $region100: #{transformer_nmt_mh_forward.8} parent=11 // pred_fallthru
          _
        // Predicated region
        $region101: #{transformer_nmt_mh_forward.8} parent=11 // pred_check
          %p809 = pneg %p575
        $region102: #{transformer_nmt_mh_forward.8} parent=11 // pred_check_branch
          %811 = sbr.rel (%p809) target = $region104
        $region103: #{transformer_nmt_mh_forward.8} parent=11 // pred_region
          _
        $region104: #{transformer_nmt_mh_forward.8} parent=11 // pred_fallthru
          _
        // Predicated region
        $region105: #{transformer_nmt_mh_forward.8} parent=11 // pred_check
          %p812 = pneg %p596
        $region106: #{transformer_nmt_mh_forward.8} parent=11 // pred_check_branch
          %814 = sbr.rel (%p812) target = $region108
        $region107: #{transformer_nmt_mh_forward.8} parent=11 // pred_region
          %s816 = ssub.s32 16, 16
          %817 = vsyncadd [#allocation14], %s816
          %s819 = sshll.u32 [#allocation15], 4
          %s820 = int_to_ptr.vmem [resolvable:$true] %s819
          %822 = dma.hbm_to_vmem [thread:$0]  %s25, 16, %s820, [#allocation14]
        $region108: #{transformer_nmt_mh_forward.8} parent=11 // pred_fallthru
          _
        // Predicated region
        $region109: #{transformer_nmt_mh_forward.8} parent=11 // pred_check
          %p823 = pneg %p617
        $region110: #{transformer_nmt_mh_forward.8} parent=11 // pred_check_branch
          %825 = sbr.rel (%p823) target = $region112
        $region111: #{transformer_nmt_mh_forward.8} parent=11 // pred_region
          %s827 = ssub.s32 16, 16
          %828 = vsyncadd [#allocation17], %s827
          %s830 = sshll.u32 [#allocation16], 4
          %s831 = int_to_ptr.vmem [resolvable:$true] %s830
          %833 = dma.hbm_to_vmem [thread:$0]  %s26, 16, %s831, [#allocation17]
        $region112: #{transformer_nmt_mh_forward.8} parent=11 // pred_fallthru
          _
        // Predicated region
        $region113: #{transformer_nmt_mh_forward.8} parent=11 // pred_check
          %p834 = pneg %p638
        $region114: #{transformer_nmt_mh_forward.8} parent=11 // pred_check_branch
          %836 = sbr.rel (%p834) target = $region116
        $region115: #{transformer_nmt_mh_forward.8} parent=11 // pred_region
          %s838 = ssub.s32 16, 16
          %839 = vsyncadd [#allocation17], %s838
          %s841 = sshll.u32 [#allocation18], 4
          %s842 = int_to_ptr.vmem [resolvable:$true] %s841
          %844 = dma.hbm_to_vmem [thread:$0]  %s27, 16, %s842, [#allocation17]
        $region116: #{transformer_nmt_mh_forward.8} parent=11 // pred_fallthru
          _
      $region12: #{transformer_nmt_mh_forward.8} parent=5 // pred_fallthru
        _
      %p845 = scmp.lt.s32.totalorder %s40, 2
      // Predicated region
      $region117: #{transformer_nmt_mh_forward.8} parent=5 // pred_check
        %p846 = pneg %p845
      $region118: #{transformer_nmt_mh_forward.8} parent=5 // pred_check_branch
        %848 = sbr.rel (%p846) target = $region120
      $region119: #{transformer_nmt_mh_forward.8} parent=5 // pred_region
        // Predicated region
        $region121: #{transformer_nmt_mh_forward.8} parent=119 // pred_check
          %p849 = pneg %p60
        $region122: #{transformer_nmt_mh_forward.8} parent=119 // pred_check_branch
          %851 = sbr.rel (%p849) target = $region124
        $region123: #{transformer_nmt_mh_forward.8} parent=119 // pred_region
          %p852 = scmp.lt.s32.totalorder %s40, 1
          %s853 = scalar_select %p852, %s40, 1
          %s854 = smul.addr %s853, 8
          %s855 = scalar_lea.vmem %s0, %s854
        $region124: #{transformer_nmt_mh_forward.8} parent=119 // pred_fallthru
          _
        // Predicated region
        $region125: #{transformer_nmt_mh_forward.8} parent=119 // pred_check
          %p856 = pneg %p86
        $region126: #{transformer_nmt_mh_forward.8} parent=119 // pred_check_branch
          %858 = sbr.rel (%p856) target = $region128
        $region127: #{transformer_nmt_mh_forward.8} parent=119 // pred_region
          %p859 = scmp.lt.s32.totalorder %s40, 1
          %s860 = scalar_select %p859, %s40, 1
          %s861 = smul.addr %s860, 8
          %s862 = scalar_lea.vmem %s1, %s861
        $region128: #{transformer_nmt_mh_forward.8} parent=119 // pred_fallthru
          _
      $region120: #{transformer_nmt_mh_forward.8} parent=5 // pred_fallthru
        _
      %p863 = scmp.le.s32.totalorder 1, %s40
      %p864 = scmp.lt.s32.totalorder %s40, 3
      %p865 = pnand %p863, %p864
      %p866 = pneg %p865
      // Predicated region
      $region129: #{transformer_nmt_mh_forward.8} parent=5 // pred_check
        _
      $region130: #{transformer_nmt_mh_forward.8} parent=5 // pred_check_branch
        %868 = sbr.rel (%p865) target = $region132
      $region131: #{transformer_nmt_mh_forward.8} parent=5 // pred_region
        %s869 = ssub.s32 %s40, 1
        // Predicated region
        $region133: #{transformer_nmt_mh_forward.8} parent=131 // pred_check
          %p870 = pneg %p323
        $region134: #{transformer_nmt_mh_forward.8} parent=131 // pred_check_branch
          %872 = sbr.rel (%p870) target = $region136
        $region135: #{transformer_nmt_mh_forward.8} parent=131 // pred_region
          %873 = dma.done [#allocation3], 16
        $region136: #{transformer_nmt_mh_forward.8} parent=131 // pred_fallthru
          _
        // Predicated region
        $region137: #{transformer_nmt_mh_forward.8} parent=131 // pred_check
          %p874 = pneg %p344
        $region138: #{transformer_nmt_mh_forward.8} parent=131 // pred_check_branch
          %876 = sbr.rel (%p874) target = $region140
        $region139: #{transformer_nmt_mh_forward.8} parent=131 // pred_region
          %877 = dma.done [#allocation5], 16
        $region140: #{transformer_nmt_mh_forward.8} parent=131 // pred_fallthru
          _
        // Predicated region
        $region141: #{transformer_nmt_mh_forward.8} parent=131 // pred_check
          %p878 = pneg %p386
        $region142: #{transformer_nmt_mh_forward.8} parent=131 // pred_check_branch
          %880 = sbr.rel (%p878) target = $region144
        $region143: #{transformer_nmt_mh_forward.8} parent=131 // pred_region
          %881 = dma.done [#allocation5], 16
        $region144: #{transformer_nmt_mh_forward.8} parent=131 // pred_fallthru
          _
        // Predicated region
        $region145: #{transformer_nmt_mh_forward.8} parent=131 // pred_check
          %p882 = pneg %p428
        $region146: #{transformer_nmt_mh_forward.8} parent=131 // pred_check_branch
          %884 = sbr.rel (%p882) target = $region148
        $region147: #{transformer_nmt_mh_forward.8} parent=131 // pred_region
          %885 = dma.done [#allocation8], 16
        $region148: #{transformer_nmt_mh_forward.8} parent=131 // pred_fallthru
          _
        // Predicated region
        $region149: #{transformer_nmt_mh_forward.8} parent=131 // pred_check
          %p886 = pneg %p470
        $region150: #{transformer_nmt_mh_forward.8} parent=131 // pred_check_branch
          %888 = sbr.rel (%p886) target = $region152
        $region151: #{transformer_nmt_mh_forward.8} parent=131 // pred_region
          %889 = dma.done [#allocation8], 16
        $region152: #{transformer_nmt_mh_forward.8} parent=131 // pred_fallthru
          _
        // Predicated region
        $region153: #{transformer_nmt_mh_forward.8} parent=131 // pred_check
          %p890 = pneg %p491
        $region154: #{transformer_nmt_mh_forward.8} parent=131 // pred_check_branch
          %892 = sbr.rel (%p890) target = $region156
        $region155: #{transformer_nmt_mh_forward.8} parent=131 // pred_region
          %893 = dma.done [#allocation11], 16
        $region156: #{transformer_nmt_mh_forward.8} parent=131 // pred_fallthru
          _
        // Predicated region
        $region157: #{transformer_nmt_mh_forward.8} parent=131 // pred_check
          %p894 = pneg %p512
        $region158: #{transformer_nmt_mh_forward.8} parent=131 // pred_check_branch
          %896 = sbr.rel (%p894) target = $region160
        $region159: #{transformer_nmt_mh_forward.8} parent=131 // pred_region
          %897 = dma.done [#allocation11], 16
        $region160: #{transformer_nmt_mh_forward.8} parent=131 // pred_fallthru
          _
        // Predicated region
        $region161: #{transformer_nmt_mh_forward.8} parent=131 // pred_check
          %p898 = pneg %p554
        $region162: #{transformer_nmt_mh_forward.8} parent=131 // pred_check_branch
          %900 = sbr.rel (%p898) target = $region164
        $region163: #{transformer_nmt_mh_forward.8} parent=131 // pred_region
          %901 = dma.done [#allocation14], 16
        $region164: #{transformer_nmt_mh_forward.8} parent=131 // pred_fallthru
          _
        // Predicated region
        $region165: #{transformer_nmt_mh_forward.8} parent=131 // pred_check
          %p902 = pneg %p596
        $region166: #{transformer_nmt_mh_forward.8} parent=131 // pred_check_branch
          %904 = sbr.rel (%p902) target = $region168
        $region167: #{transformer_nmt_mh_forward.8} parent=131 // pred_region
          %905 = dma.done [#allocation14], 16
        $region168: #{transformer_nmt_mh_forward.8} parent=131 // pred_fallthru
          _
        // Predicated region
        $region169: #{transformer_nmt_mh_forward.8} parent=131 // pred_check
          %p906 = pneg %p617
        $region170: #{transformer_nmt_mh_forward.8} parent=131 // pred_check_branch
          %908 = sbr.rel (%p906) target = $region172
        $region171: #{transformer_nmt_mh_forward.8} parent=131 // pred_region
          %909 = dma.done [#allocation17], 16
        $region172: #{transformer_nmt_mh_forward.8} parent=131 // pred_fallthru
          _
        // Predicated region
        $region173: #{transformer_nmt_mh_forward.8} parent=131 // pred_check
          %p910 = pneg %p638
        $region174: #{transformer_nmt_mh_forward.8} parent=131 // pred_check_branch
          %912 = sbr.rel (%p910) target = $region176
        $region175: #{transformer_nmt_mh_forward.8} parent=131 // pred_region
          %913 = dma.done [#allocation17], 16
        $region176: #{transformer_nmt_mh_forward.8} parent=131 // pred_fallthru
          _
        %p914 = scmp.lt.s32.totalorder %s45, 1
        %s915 = scalar_select %p914, %s45, 1
        %s916 = smul.addr %s915, 8
        %s917 = scalar_lea.vmem %s0, %s916
        %p918 = pneg %p66
        %p919 = pneg %p63
        %p920 = scmp.lt.s32.totalorder %s45, 1
        %s921 = scalar_select %p920, %s45, 1
        %s922 = smul.addr %s921, 8
        %s923 = scalar_lea.vmem %s1, %s922
        %p924 = pneg %p92
        %p925 = pneg %p89
        %p926 = pneg %p113
        %p927 = pneg %p110
        %p928 = pneg %p134
        %p929 = pneg %p131
        %p930 = pneg %p155
        %p931 = pneg %p152
        %p932 = pneg %p176
        %p933 = pneg %p173
        %p934 = pneg %p197
        %p935 = pneg %p194
        %p936 = pneg %p218
        %p937 = pneg %p215
        %p938 = pneg %p239
        %p939 = pneg %p236
        %p940 = pneg %p260
        %p941 = pneg %p257
        %p942 = pneg %p281
        %p943 = pneg %p278
        %p944 = pneg %p302
        %p945 = pneg %p299
        %p946 = pneg %p323
        %p947 = pneg %p320
        %p948 = pneg %p344
        %p949 = pneg %p341
        %p950 = pneg %p365
        %p951 = pneg %p362
        %p952 = pneg %p386
        %p953 = pneg %p383
        %p954 = pneg %p407
        %p955 = pneg %p404
        %p956 = pneg %p428
        %p957 = pneg %p425
        %p958 = pneg %p449
        %p959 = pneg %p446
        %p960 = pneg %p470
        %p961 = pneg %p467
        %p962 = pneg %p491
        %p963 = pneg %p488
        %p964 = pneg %p512
        %p965 = pneg %p509
        %p966 = pneg %p533
        %p967 = pneg %p530
        %p968 = pneg %p554
        %p969 = pneg %p551
        %p970 = pneg %p575
        %p971 = pneg %p572
        %p972 = pneg %p596
        %p973 = pneg %p593
        %p974 = pneg %p617
        %p975 = pneg %p614
        %p976 = pneg %p638
        %p977 = pneg %p635
        %p978 = pneg %p664
        %p979 = pneg %p661
        %p980 = scmp.lt.s32.totalorder %s45, 1
        %s981 = scalar_select %p980, %s45, 1
        %s982 = smul.addr %s981, 8
        %s983 = scalar_lea.vmem %s28, %s982
        %p984 = scmp.lt.s32.totalorder %s45, 1
        %s985 = scalar_select %p984, %s45, 1
        %s986 = smul.addr %s985, 8
        %s987 = scalar_lea.vmem %s0, %s986
        %p988 = scmp.lt.s32.totalorder %s45, 1
        %s989 = scalar_select %p988, %s45, 1
        %s990 = smul.addr %s989, 8
        %s991 = scalar_lea.vmem %s1, %s990
        %p992 = scmp.lt.s32.totalorder %s45, 1
        %s993 = scalar_select %p992, %s45, 1
        %s994 = smul.addr %s993, 8
        %s995 = scalar_lea.vmem %s28, %s994
        %v997 = vld [vmem:[%s987] sm:$0xff]
        %v998 = vld [vmem:[%s991] sm:$0xff]
        %v999 = vld [vmem:[%s2] sm:$0xf]
        %v1000 = vld [vmem:[%s2 + $0x4] sm:$0xf]
        %v1001 = vld [vmem:[%s2 + $0x8] sm:$0xf]
        %v1002 = vld [vmem:[%s2 + $0xc] sm:$0xf]
        %v1003 = vld [vmem:[%s3] sm:$0x1]
        %v1004 = vpack.c.bf16 %v998, %v998
        %v1006 = vlaneseq
        %v1007 = vshrl.u32 %v1006, 7
        %v1008 = vsub.s32 0, %v1007
        %v1009 = vrot.slane %v1003, %v1008
        %v1015 = vunpack.c.l.b16 %v999
        %v1016 = vunpack.c.l.b16 %v1000
        %v1017 = vunpack.c.l.b16 %v1001
        %v1018 = vunpack.c.l.b16 %v1002
        %v1019 = vpack.c.b16 %v1016, %v1015
        %v1020 = vpack.c.b16 %v1018, %v1017
        %vm1023 = vcmask 261120
        %v1025 = vsel %vm1023, %v1004, 0
        %1027 = vmatprep.subr.bf16.mxu0 0
        %1028 = vmatpush1.bf16.msra.mxu0 0
        %1029 = vmatprep.subr.bf16.mxu0 0
        %1030 = vmatpush1.bf16.msra.mxu0 0
        %1031 = vmatprep.subr.bf16.mxu0 0
        %1032 = vmatpush1.bf16.msra.mxu0 0
        %1033 = vmatprep.subr.bf16.mxu0 0
        %1034 = vmatpush1.bf16.msra.mxu0 0
        %1035 = vmatprep.subr.bf16.mxu0 0
        %1036 = vmatpush1.bf16.msra.mxu0 0
        %1037 = vmatprep.subr.bf16.mxu0 0
        %1038 = vmatpush1.bf16.msra.mxu0 0
        %1039 = vmatprep.subr.bf16.mxu0 0
        %1040 = vmatpush1.bf16.msra.mxu0 %v1020
        %1041 = vmatprep.subr.bf16.mxu0 0
        %1042 = vmatpush1.bf16.msra.mxu0 %v1019
        %1043 = vmatprep.subr.bf16.mxu0 0
        %1044 = vmatpush2.bf16.msra.mxu0 0
        %1045 = vmatprep.subr.bf16.mxu0 0
        %1046 = vmatpush2.bf16.msra.mxu0 0
        %1047 = vmatprep.subr.bf16.mxu0 0
        %1048 = vmatpush2.bf16.msra.mxu0 0
        %1049 = vmatprep.subr.bf16.mxu0 0
        %1050 = vmatpush2.bf16.msra.mxu0 0
        %1051 = vmatprep.subr.bf16.mxu0 0
        %1052 = vmatpush2.bf16.msra.mxu0 0
        %1053 = vmatprep.subr.bf16.mxu0 0
        %1054 = vmatpush2.bf16.msra.mxu0 0
        %1055 = vmatprep.subr.bf16.mxu0 0
        %1056 = vmatpush2.bf16.msra.mxu0 0
        %1057 = vmatprep.subr.bf16.mxu0 0
        %1058 = vmatpush2.bf16.msra.mxu0 0
        %1059 = vmatprep.mubr.bf16.mxu0 0
        %1060 = vmatmul.mubr.bf16.gmra.mxu0 %v1025
        %v1061 = vpop.f32.mrf.mxu0
        %v1062 = vadd.f32 %v1009, %v1061
        %v1063 = vpop.f32.mrf.mxu0
        %v1064 = vpop.f32.mrf.mxu0
        %v1065 = vpop.f32.mrf.mxu0
        %1066 = vdwg.mxu0
        %1068 = vrot.lane.b32.xlu0 %v1062, 96
        %v1069 = vpop.permute.xlu0 %1068
        %vm1070 = vcmask 64512
        %v1071 = vsel %vm1070, %v1062, 0
        %v1073 = vsel %vm1070, %v1069, 0
        %1075 = vmatprep.subr.mxu0 0.0
        %1076 = vmatpush1.xpose.msra.mxu0 0.0
        %1077 = vmatprep.subr.mxu0 0.0
        %1078 = vmatpush1.xpose.msra.mxu0 0.0
        %1079 = vmatprep.subr.mxu0 0.0
        %1080 = vmatpush1.xpose.msra.mxu0 0.0
        %1081 = vmatprep.subr.mxu0 0.0
        %1082 = vmatpush1.xpose.msra.mxu0 0.0
        %1083 = vmatprep.subr.mxu0 0.0
        %1084 = vmatpush1.xpose.msra.mxu0 0.0
        %1085 = vmatprep.subr.mxu0 0.0
        %1086 = vmatpush1.xpose.msra.mxu0 0.0
        %1087 = vmatprep.subr.mxu0 0.0
        %1088 = vmatpush1.xpose.msra.mxu0 0.0
        %1089 = vmatprep.subr.mxu0 0.0
        %1090 = vmatpush1.xpose.msra.mxu0 0.0
        %1091 = vmatprep.subr.mxu0 0.0
        %1092 = vmatpush1.xpose.msra.mxu0 0.0
        %1093 = vmatprep.subr.mxu0 0.0
        %1094 = vmatpush1.xpose.msra.mxu0 0.0
        %1095 = vmatprep.subr.mxu0 0.0
        %1096 = vmatpush1.xpose.msra.mxu0 0.0
        %1097 = vmatprep.subr.mxu0 0.0
        %1098 = vmatpush1.xpose.msra.mxu0 0.0
        %1099 = vmatprep.subr.mxu0 0.0
        %1100 = vmatpush1.xpose.msra.mxu0 0.0
        %1101 = vmatprep.subr.mxu0 0.0
        %1102 = vmatpush1.xpose.msra.mxu0 0.0
        %1103 = vmatprep.subr.mxu0 0.0
        %1104 = vmatpush1.xpose.msra.mxu0 0.0
        %1105 = vmatprep.subr.mxu0 0.0
        %1106 = vmatpush1.xpose.msra.mxu0 %v1073
        %1107 = vmatprep.subr.mxu0 0.0
        %1108 = vmatpush2.xpose.msra.mxu0 0.0
        %1109 = vmatprep.subr.mxu0 0.0
        %1110 = vmatpush2.xpose.msra.mxu0 0.0
        %1111 = vmatprep.subr.mxu0 0.0
        %1112 = vmatpush2.xpose.msra.mxu0 0.0
        %1113 = vmatprep.subr.mxu0 0.0
        %1114 = vmatpush2.xpose.msra.mxu0 0.0
        %1115 = vmatprep.subr.mxu0 0.0
        %1116 = vmatpush2.xpose.msra.mxu0 0.0
        %1117 = vmatprep.subr.mxu0 0.0
        %1118 = vmatpush2.xpose.msra.mxu0 0.0
        %1119 = vmatprep.subr.mxu0 0.0
        %1120 = vmatpush2.xpose.msra.mxu0 0.0
        %1121 = vmatprep.subr.mxu0 0.0
        %1122 = vmatpush2.xpose.msra.mxu0 0.0
        %1123 = vmatprep.subr.mxu0 0.0
        %1124 = vmatpush2.xpose.msra.mxu0 0.0
        %1125 = vmatprep.subr.mxu0 0.0
        %1126 = vmatpush2.xpose.msra.mxu0 0.0
        %1127 = vmatprep.subr.mxu0 0.0
        %1128 = vmatpush2.xpose.msra.mxu0 0.0
        %1129 = vmatprep.subr.mxu0 0.0
        %1130 = vmatpush2.xpose.msra.mxu0 0.0
        %1131 = vmatprep.subr.mxu0 0.0
        %1132 = vmatpush2.xpose.msra.mxu0 0.0
        %1133 = vmatprep.subr.mxu0 0.0
        %1134 = vmatpush2.xpose.msra.mxu0 0.0
        %1135 = vmatprep.subr.mxu0 0.0
        %1136 = vmatpush2.xpose.msra.mxu0 0.0
        %1137 = vmatprep.subr.mxu0 0.0
        %1138 = vmatpush2.xpose.msra.mxu0 0.0
        %1139 = vmatprep.mubr.f32.mxu0 0.0
        %1140 = vmatmul.mubr.f32.gmra.mxu0 %v1071
        %v1141 = vpop.f32.mrf.mxu0
        %v1142 = vadd.f32 0.0, %v1141
        %v1143 = vpop.f32.mrf.mxu0
        %1144 = vdwg.mxu0
        %v1145 = vlaneseq
        %v1146 = vshrl.u32 %v1145, 7
        %v1147 = vlaneseq
        %v1148 = vand.u32 %v1147, 127
        %vm1149 = vcmp.gt.s32.totalorder %v1148, %v1146
        %v1150 = vsel %vm1149, -inf, %v1142
        %v1151 = vsel %vm1070, %v1150, -inf
        %1152 = vmax.xlane.f32.xlu0 %v1151
        %v1153 = vpop.xlane.xlu0 %1152
        %v1154 = vsub.f32 %v1150, %v1153
        %v1155 = vmul.f32 %v1154, 1.442695
        %v1156 = vpow.pop %v1155
        %v1157 = vsel %vm1070, %v1156, 0.0
        %1158 = vadd.xlane.f32.xlu0 %v1157
        %v1159 = vpop.xlane.xlu0 %1158
        %v1160 = vrcp.pop %v1159
        %v1161 = vmul.f32 %v1156, %v1160
        %1162 = vrot.lane.b32.xlu0 %v1062, 64
        %v1163 = vpop.permute.xlu0 %1162
        %v1166 = vsel %vm1070, %v1161, 0
        %1168 = vmatprep.subr.mxu0 0.0
        %1169 = vmatpush1.msra.mxu0 0.0
        %1170 = vmatprep.subr.mxu0 0.0
        %1171 = vmatpush1.msra.mxu0 0.0
        %1172 = vmatprep.subr.mxu0 0.0
        %1173 = vmatpush1.msra.mxu0 0.0
        %1174 = vmatprep.subr.mxu0 0.0
        %1175 = vmatpush1.msra.mxu0 0.0
        %1176 = vmatprep.subr.mxu0 0.0
        %1177 = vmatpush1.msra.mxu0 0.0
        %1178 = vmatprep.subr.mxu0 0.0
        %1179 = vmatpush1.msra.mxu0 0.0
        %1180 = vmatprep.subr.mxu0 0.0
        %1181 = vmatpush1.msra.mxu0 0.0
        %1182 = vmatprep.subr.mxu0 0.0
        %1183 = vmatpush1.msra.mxu0 0.0
        %1184 = vmatprep.subr.mxu0 0.0
        %1185 = vmatpush1.msra.mxu0 0.0
        %1186 = vmatprep.subr.mxu0 0.0
        %1187 = vmatpush1.msra.mxu0 0.0
        %1188 = vmatprep.subr.mxu0 0.0
        %1189 = vmatpush1.msra.mxu0 0.0
        %1190 = vmatprep.subr.mxu0 0.0
        %1191 = vmatpush1.msra.mxu0 0.0
        %1192 = vmatprep.subr.mxu0 0.0
        %1193 = vmatpush1.msra.mxu0 0.0
        %1194 = vmatprep.subr.mxu0 0.0
        %1195 = vmatpush1.msra.mxu0 0.0
        %1196 = vmatprep.subr.mxu0 0.0
        %1197 = vmatpush1.msra.mxu0 0.0
        %1198 = vmatprep.subr.mxu0 0.0
        %1199 = vmatpush1.msra.mxu0 %v1163
        %1200 = vmatprep.subr.mxu0 0.0
        %1201 = vmatpush2.msra.mxu0 0.0
        %1202 = vmatprep.subr.mxu0 0.0
        %1203 = vmatpush2.msra.mxu0 0.0
        %1204 = vmatprep.subr.mxu0 0.0
        %1205 = vmatpush2.msra.mxu0 0.0
        %1206 = vmatprep.subr.mxu0 0.0
        %1207 = vmatpush2.msra.mxu0 0.0
        %1208 = vmatprep.subr.mxu0 0.0
        %1209 = vmatpush2.msra.mxu0 0.0
        %1210 = vmatprep.subr.mxu0 0.0
        %1211 = vmatpush2.msra.mxu0 0.0
        %1212 = vmatprep.subr.mxu0 0.0
        %1213 = vmatpush2.msra.mxu0 0.0
        %1214 = vmatprep.subr.mxu0 0.0
        %1215 = vmatpush2.msra.mxu0 0.0
        %1216 = vmatprep.subr.mxu0 0.0
        %1217 = vmatpush2.msra.mxu0 0.0
        %1218 = vmatprep.subr.mxu0 0.0
        %1219 = vmatpush2.msra.mxu0 0.0
        %1220 = vmatprep.subr.mxu0 0.0
        %1221 = vmatpush2.msra.mxu0 0.0
        %1222 = vmatprep.subr.mxu0 0.0
        %1223 = vmatpush2.msra.mxu0 0.0
        %1224 = vmatprep.subr.mxu0 0.0
        %1225 = vmatpush2.msra.mxu0 0.0
        %1226 = vmatprep.subr.mxu0 0.0
        %1227 = vmatpush2.msra.mxu0 0.0
        %1228 = vmatprep.subr.mxu0 0.0
        %1229 = vmatpush2.msra.mxu0 0.0
        %1230 = vmatprep.subr.mxu0 0.0
        %1231 = vmatpush2.msra.mxu0 0.0
        %1232 = vmatprep.mubr.f32.mxu0 0.0
        %1233 = vmatmul.mubr.f32.gmra.mxu0 %v1166
        %v1234 = vpop.f32.mrf.mxu0
        %v1235 = vadd.f32 0.0, %v1234
        %v1236 = vpop.f32.mrf.mxu0
        %1237 = vdwg.mxu0
        %1238 = vrot.lane.b32.xlu0 %v1062, 120
        %v1239 = vpop.permute.xlu0 %1238
        %1240 = vrot.lane.b32.xlu0 %v1062, 88
        %v1241 = vpop.permute.xlu0 %1240
        %v1242 = vsel %vm1070, %v1239, 0
        %v1244 = vsel %vm1070, %v1241, 0
        %1246 = vmatprep.subr.mxu0 0.0
        %1247 = vmatpush1.xpose.msra.mxu0 0.0
        %1248 = vmatprep.subr.mxu0 0.0
        %1249 = vmatpush1.xpose.msra.mxu0 0.0
        %1250 = vmatprep.subr.mxu0 0.0
        %1251 = vmatpush1.xpose.msra.mxu0 0.0
        %1252 = vmatprep.subr.mxu0 0.0
        %1253 = vmatpush1.xpose.msra.mxu0 0.0
        %1254 = vmatprep.subr.mxu0 0.0
        %1255 = vmatpush1.xpose.msra.mxu0 0.0
        %1256 = vmatprep.subr.mxu0 0.0
        %1257 = vmatpush1.xpose.msra.mxu0 0.0
        %1258 = vmatprep.subr.mxu0 0.0
        %1259 = vmatpush1.xpose.msra.mxu0 0.0
        %1260 = vmatprep.subr.mxu0 0.0
        %1261 = vmatpush1.xpose.msra.mxu0 0.0
        %1262 = vmatprep.subr.mxu0 0.0
        %1263 = vmatpush1.xpose.msra.mxu0 0.0
        %1264 = vmatprep.subr.mxu0 0.0
        %1265 = vmatpush1.xpose.msra.mxu0 0.0
        %1266 = vmatprep.subr.mxu0 0.0
        %1267 = vmatpush1.xpose.msra.mxu0 0.0
        %1268 = vmatprep.subr.mxu0 0.0
        %1269 = vmatpush1.xpose.msra.mxu0 0.0
        %1270 = vmatprep.subr.mxu0 0.0
        %1271 = vmatpush1.xpose.msra.mxu0 0.0
        %1272 = vmatprep.subr.mxu0 0.0
        %1273 = vmatpush1.xpose.msra.mxu0 0.0
        %1274 = vmatprep.subr.mxu0 0.0
        %1275 = vmatpush1.xpose.msra.mxu0 0.0
        %1276 = vmatprep.subr.mxu0 0.0
        %1277 = vmatpush1.xpose.msra.mxu0 %v1244
        %1278 = vmatprep.subr.mxu0 0.0
        %1279 = vmatpush2.xpose.msra.mxu0 0.0
        %1280 = vmatprep.subr.mxu0 0.0
        %1281 = vmatpush2.xpose.msra.mxu0 0.0
        %1282 = vmatprep.subr.mxu0 0.0
        %1283 = vmatpush2.xpose.msra.mxu0 0.0
        %1284 = vmatprep.subr.mxu0 0.0
        %1285 = vmatpush2.xpose.msra.mxu0 0.0
        %1286 = vmatprep.subr.mxu0 0.0
        %1287 = vmatpush2.xpose.msra.mxu0 0.0
        %1288 = vmatprep.subr.mxu0 0.0
        %1289 = vmatpush2.xpose.msra.mxu0 0.0
        %1290 = vmatprep.subr.mxu0 0.0
        %1291 = vmatpush2.xpose.msra.mxu0 0.0
        %1292 = vmatprep.subr.mxu0 0.0
        %1293 = vmatpush2.xpose.msra.mxu0 0.0
        %1294 = vmatprep.subr.mxu0 0.0
        %1295 = vmatpush2.xpose.msra.mxu0 0.0
        %1296 = vmatprep.subr.mxu0 0.0
        %1297 = vmatpush2.xpose.msra.mxu0 0.0
        %1298 = vmatprep.subr.mxu0 0.0
        %1299 = vmatpush2.xpose.msra.mxu0 0.0
        %1300 = vmatprep.subr.mxu0 0.0
        %1301 = vmatpush2.xpose.msra.mxu0 0.0
        %1302 = vmatprep.subr.mxu0 0.0
        %1303 = vmatpush2.xpose.msra.mxu0 0.0
        %1304 = vmatprep.subr.mxu0 0.0
        %1305 = vmatpush2.xpose.msra.mxu0 0.0
        %1306 = vmatprep.subr.mxu0 0.0
        %1307 = vmatpush2.xpose.msra.mxu0 0.0
        %1308 = vmatprep.subr.mxu0 0.0
        %1309 = vmatpush2.xpose.msra.mxu0 0.0
        %1310 = vmatprep.mubr.f32.mxu0 0.0
        %1311 = vmatmul.mubr.f32.gmra.mxu0 %v1242
        %v1312 = vpop.f32.mrf.mxu0
        %v1313 = vadd.f32 0.0, %v1312
        %v1314 = vpop.f32.mrf.mxu0
        %1315 = vdwg.mxu0
        %v1316 = vsel %vm1149, -inf, %v1313
        %v1317 = vsel %vm1070, %v1316, -inf
        %1318 = vmax.xlane.f32.xlu0 %v1317
        %v1319 = vpop.xlane.xlu0 %1318
        %v1320 = vsub.f32 %v1316, %v1319
        %v1321 = vmul.f32 %v1320, 1.442695
        %v1322 = vpow.pop %v1321
        %v1323 = vsel %vm1070, %v1322, 0.0
        %1324 = vadd.xlane.f32.xlu0 %v1323
        %v1325 = vpop.xlane.xlu0 %1324
        %v1326 = vrcp.pop %v1325
        %v1327 = vmul.f32 %v1322, %v1326
        %1328 = vrot.lane.b32.xlu0 %v1062, 56
        %v1329 = vpop.permute.xlu0 %1328
        %v1332 = vsel %vm1070, %v1327, 0
        %1334 = vmatprep.subr.mxu0 0.0
        %1335 = vmatpush1.msra.mxu0 0.0
        %1336 = vmatprep.subr.mxu0 0.0
        %1337 = vmatpush1.msra.mxu0 0.0
        %1338 = vmatprep.subr.mxu0 0.0
        %1339 = vmatpush1.msra.mxu0 0.0
        %1340 = vmatprep.subr.mxu0 0.0
        %1341 = vmatpush1.msra.mxu0 0.0
        %1342 = vmatprep.subr.mxu0 0.0
        %1343 = vmatpush1.msra.mxu0 0.0
        %1344 = vmatprep.subr.mxu0 0.0
        %1345 = vmatpush1.msra.mxu0 0.0
        %1346 = vmatprep.subr.mxu0 0.0
        %1347 = vmatpush1.msra.mxu0 0.0
        %1348 = vmatprep.subr.mxu0 0.0
        %1349 = vmatpush1.msra.mxu0 0.0
        %1350 = vmatprep.subr.mxu0 0.0
        %1351 = vmatpush1.msra.mxu0 0.0
        %1352 = vmatprep.subr.mxu0 0.0
        %1353 = vmatpush1.msra.mxu0 0.0
        %1354 = vmatprep.subr.mxu0 0.0
        %1355 = vmatpush1.msra.mxu0 0.0
        %1356 = vmatprep.subr.mxu0 0.0
        %1357 = vmatpush1.msra.mxu0 0.0
        %1358 = vmatprep.subr.mxu0 0.0
        %1359 = vmatpush1.msra.mxu0 0.0
        %1360 = vmatprep.subr.mxu0 0.0
        %1361 = vmatpush1.msra.mxu0 0.0
        %1362 = vmatprep.subr.mxu0 0.0
        %1363 = vmatpush1.msra.mxu0 0.0
        %1364 = vmatprep.subr.mxu0 0.0
        %1365 = vmatpush1.msra.mxu0 %v1329
        %1366 = vmatprep.subr.mxu0 0.0
        %1367 = vmatpush2.msra.mxu0 0.0
        %1368 = vmatprep.subr.mxu0 0.0
        %1369 = vmatpush2.msra.mxu0 0.0
        %1370 = vmatprep.subr.mxu0 0.0
        %1371 = vmatpush2.msra.mxu0 0.0
        %1372 = vmatprep.subr.mxu0 0.0
        %1373 = vmatpush2.msra.mxu0 0.0
        %1374 = vmatprep.subr.mxu0 0.0
        %1375 = vmatpush2.msra.mxu0 0.0
        %1376 = vmatprep.subr.mxu0 0.0
        %1377 = vmatpush2.msra.mxu0 0.0
        %1378 = vmatprep.subr.mxu0 0.0
        %1379 = vmatpush2.msra.mxu0 0.0
        %1380 = vmatprep.subr.mxu0 0.0
        %1381 = vmatpush2.msra.mxu0 0.0
        %1382 = vmatprep.subr.mxu0 0.0
        %1383 = vmatpush2.msra.mxu0 0.0
        %1384 = vmatprep.subr.mxu0 0.0
        %1385 = vmatpush2.msra.mxu0 0.0
        %1386 = vmatprep.subr.mxu0 0.0
        %1387 = vmatpush2.msra.mxu0 0.0
        %1388 = vmatprep.subr.mxu0 0.0
        %1389 = vmatpush2.msra.mxu0 0.0
        %1390 = vmatprep.subr.mxu0 0.0
        %1391 = vmatpush2.msra.mxu0 0.0
        %1392 = vmatprep.subr.mxu0 0.0
        %1393 = vmatpush2.msra.mxu0 0.0
        %1394 = vmatprep.subr.mxu0 0.0
        %1395 = vmatpush2.msra.mxu0 0.0
        %1396 = vmatprep.subr.mxu0 0.0
        %1397 = vmatpush2.msra.mxu0 0.0
        %1398 = vmatprep.mubr.f32.mxu0 0.0
        %1399 = vmatmul.mubr.f32.gmra.mxu0 %v1332
        %v1400 = vpop.f32.mrf.mxu0
        %v1401 = vadd.f32 0.0, %v1400
        %v1402 = vpop.f32.mrf.mxu0
        %1403 = vdwg.mxu0
        %1404 = vrot.lane.b32.xlu0 %v1062, 112
        %v1405 = vpop.permute.xlu0 %1404
        %1406 = vrot.lane.b32.xlu0 %v1062, 80
        %v1407 = vpop.permute.xlu0 %1406
        %v1408 = vsel %vm1070, %v1405, 0
        %v1410 = vsel %vm1070, %v1407, 0
        %1412 = vmatprep.subr.mxu0 0.0
        %1413 = vmatpush1.xpose.msra.mxu0 0.0
        %1414 = vmatprep.subr.mxu0 0.0
        %1415 = vmatpush1.xpose.msra.mxu0 0.0
        %1416 = vmatprep.subr.mxu0 0.0
        %1417 = vmatpush1.xpose.msra.mxu0 0.0
        %1418 = vmatprep.subr.mxu0 0.0
        %1419 = vmatpush1.xpose.msra.mxu0 0.0
        %1420 = vmatprep.subr.mxu0 0.0
        %1421 = vmatpush1.xpose.msra.mxu0 0.0
        %1422 = vmatprep.subr.mxu0 0.0
        %1423 = vmatpush1.xpose.msra.mxu0 0.0
        %1424 = vmatprep.subr.mxu0 0.0
        %1425 = vmatpush1.xpose.msra.mxu0 0.0
        %1426 = vmatprep.subr.mxu0 0.0
        %1427 = vmatpush1.xpose.msra.mxu0 0.0
        %1428 = vmatprep.subr.mxu0 0.0
        %1429 = vmatpush1.xpose.msra.mxu0 0.0
        %1430 = vmatprep.subr.mxu0 0.0
        %1431 = vmatpush1.xpose.msra.mxu0 0.0
        %1432 = vmatprep.subr.mxu0 0.0
        %1433 = vmatpush1.xpose.msra.mxu0 0.0
        %1434 = vmatprep.subr.mxu0 0.0
        %1435 = vmatpush1.xpose.msra.mxu0 0.0
        %1436 = vmatprep.subr.mxu0 0.0
        %1437 = vmatpush1.xpose.msra.mxu0 0.0
        %1438 = vmatprep.subr.mxu0 0.0
        %1439 = vmatpush1.xpose.msra.mxu0 0.0
        %1440 = vmatprep.subr.mxu0 0.0
        %1441 = vmatpush1.xpose.msra.mxu0 0.0
        %1442 = vmatprep.subr.mxu0 0.0
        %1443 = vmatpush1.xpose.msra.mxu0 %v1410
        %1444 = vmatprep.subr.mxu0 0.0
        %1445 = vmatpush2.xpose.msra.mxu0 0.0
        %1446 = vmatprep.subr.mxu0 0.0
        %1447 = vmatpush2.xpose.msra.mxu0 0.0
        %1448 = vmatprep.subr.mxu0 0.0
        %1449 = vmatpush2.xpose.msra.mxu0 0.0
        %1450 = vmatprep.subr.mxu0 0.0
        %1451 = vmatpush2.xpose.msra.mxu0 0.0
        %1452 = vmatprep.subr.mxu0 0.0
        %1453 = vmatpush2.xpose.msra.mxu0 0.0
        %1454 = vmatprep.subr.mxu0 0.0
        %1455 = vmatpush2.xpose.msra.mxu0 0.0
        %1456 = vmatprep.subr.mxu0 0.0
        %1457 = vmatpush2.xpose.msra.mxu0 0.0
        %1458 = vmatprep.subr.mxu0 0.0
        %1459 = vmatpush2.xpose.msra.mxu0 0.0
        %1460 = vmatprep.subr.mxu0 0.0
        %1461 = vmatpush2.xpose.msra.mxu0 0.0
        %1462 = vmatprep.subr.mxu0 0.0
        %1463 = vmatpush2.xpose.msra.mxu0 0.0
        %1464 = vmatprep.subr.mxu0 0.0
        %1465 = vmatpush2.xpose.msra.mxu0 0.0
        %1466 = vmatprep.subr.mxu0 0.0
        %1467 = vmatpush2.xpose.msra.mxu0 0.0
        %1468 = vmatprep.subr.mxu0 0.0
        %1469 = vmatpush2.xpose.msra.mxu0 0.0
        %1470 = vmatprep.subr.mxu0 0.0
        %1471 = vmatpush2.xpose.msra.mxu0 0.0
        %1472 = vmatprep.subr.mxu0 0.0
        %1473 = vmatpush2.xpose.msra.mxu0 0.0
        %1474 = vmatprep.subr.mxu0 0.0
        %1475 = vmatpush2.xpose.msra.mxu0 0.0
        %1476 = vmatprep.mubr.f32.mxu0 0.0
        %1477 = vmatmul.mubr.f32.gmra.mxu0 %v1408
        %v1478 = vpop.f32.mrf.mxu0
        %v1479 = vadd.f32 0.0, %v1478
        %v1480 = vpop.f32.mrf.mxu0
        %1481 = vdwg.mxu0
        %v1482 = vsel %vm1149, -inf, %v1479
        %v1483 = vsel %vm1070, %v1482, -inf
        %1484 = vmax.xlane.f32.xlu0 %v1483
        %v1485 = vpop.xlane.xlu0 %1484
        %v1486 = vsub.f32 %v1482, %v1485
        %v1487 = vmul.f32 %v1486, 1.442695
        %v1488 = vpow.pop %v1487
        %v1489 = vsel %vm1070, %v1488, 0.0
        %1490 = vadd.xlane.f32.xlu0 %v1489
        %v1491 = vpop.xlane.xlu0 %1490
        %v1492 = vrcp.pop %v1491
        %v1493 = vmul.f32 %v1488, %v1492
        %1494 = vrot.lane.b32.xlu0 %v1062, 48
        %v1495 = vpop.permute.xlu0 %1494
        %v1498 = vsel %vm1070, %v1493, 0
        %1500 = vmatprep.subr.mxu0 0.0
        %1501 = vmatpush1.msra.mxu0 0.0
        %1502 = vmatprep.subr.mxu0 0.0
        %1503 = vmatpush1.msra.mxu0 0.0
        %1504 = vmatprep.subr.mxu0 0.0
        %1505 = vmatpush1.msra.mxu0 0.0
        %1506 = vmatprep.subr.mxu0 0.0
        %1507 = vmatpush1.msra.mxu0 0.0
        %1508 = vmatprep.subr.mxu0 0.0
        %1509 = vmatpush1.msra.mxu0 0.0
        %1510 = vmatprep.subr.mxu0 0.0
        %1511 = vmatpush1.msra.mxu0 0.0
        %1512 = vmatprep.subr.mxu0 0.0
        %1513 = vmatpush1.msra.mxu0 0.0
        %1514 = vmatprep.subr.mxu0 0.0
        %1515 = vmatpush1.msra.mxu0 0.0
        %1516 = vmatprep.subr.mxu0 0.0
        %1517 = vmatpush1.msra.mxu0 0.0
        %1518 = vmatprep.subr.mxu0 0.0
        %1519 = vmatpush1.msra.mxu0 0.0
        %1520 = vmatprep.subr.mxu0 0.0
        %1521 = vmatpush1.msra.mxu0 0.0
        %1522 = vmatprep.subr.mxu0 0.0
        %1523 = vmatpush1.msra.mxu0 0.0
        %1524 = vmatprep.subr.mxu0 0.0
        %1525 = vmatpush1.msra.mxu0 0.0
        %1526 = vmatprep.subr.mxu0 0.0
        %1527 = vmatpush1.msra.mxu0 0.0
        %1528 = vmatprep.subr.mxu0 0.0
        %1529 = vmatpush1.msra.mxu0 0.0
        %1530 = vmatprep.subr.mxu0 0.0
        %1531 = vmatpush1.msra.mxu0 %v1495
        %1532 = vmatprep.subr.mxu0 0.0
        %1533 = vmatpush2.msra.mxu0 0.0
        %1534 = vmatprep.subr.mxu0 0.0
        %1535 = vmatpush2.msra.mxu0 0.0
        %1536 = vmatprep.subr.mxu0 0.0
        %1537 = vmatpush2.msra.mxu0 0.0
        %1538 = vmatprep.subr.mxu0 0.0
        %1539 = vmatpush2.msra.mxu0 0.0
        %1540 = vmatprep.subr.mxu0 0.0
        %1541 = vmatpush2.msra.mxu0 0.0
        %1542 = vmatprep.subr.mxu0 0.0
        %1543 = vmatpush2.msra.mxu0 0.0
        %1544 = vmatprep.subr.mxu0 0.0
        %1545 = vmatpush2.msra.mxu0 0.0
        %1546 = vmatprep.subr.mxu0 0.0
        %1547 = vmatpush2.msra.mxu0 0.0
        %1548 = vmatprep.subr.mxu0 0.0
        %1549 = vmatpush2.msra.mxu0 0.0
        %1550 = vmatprep.subr.mxu0 0.0
        %1551 = vmatpush2.msra.mxu0 0.0
        %1552 = vmatprep.subr.mxu0 0.0
        %1553 = vmatpush2.msra.mxu0 0.0
        %1554 = vmatprep.subr.mxu0 0.0
        %1555 = vmatpush2.msra.mxu0 0.0
        %1556 = vmatprep.subr.mxu0 0.0
        %1557 = vmatpush2.msra.mxu0 0.0
        %1558 = vmatprep.subr.mxu0 0.0
        %1559 = vmatpush2.msra.mxu0 0.0
        %1560 = vmatprep.subr.mxu0 0.0
        %1561 = vmatpush2.msra.mxu0 0.0
        %1562 = vmatprep.subr.mxu0 0.0
        %1563 = vmatpush2.msra.mxu0 0.0
        %1564 = vmatprep.mubr.f32.mxu0 0.0
        %1565 = vmatmul.mubr.f32.gmra.mxu0 %v1498
        %v1566 = vpop.f32.mrf.mxu0
        %v1567 = vadd.f32 0.0, %v1566
        %v1568 = vpop.f32.mrf.mxu0
        %1569 = vdwg.mxu0
        %1570 = vrot.lane.b32.xlu0 %v1062, 104
        %v1571 = vpop.permute.xlu0 %1570
        %1572 = vrot.lane.b32.xlu0 %v1062, 72
        %v1573 = vpop.permute.xlu0 %1572
        %v1574 = vsel %vm1070, %v1571, 0
        %v1576 = vsel %vm1070, %v1573, 0
        %1578 = vmatprep.subr.mxu0 0.0
        %1579 = vmatpush1.xpose.msra.mxu0 0.0
        %1580 = vmatprep.subr.mxu0 0.0
        %1581 = vmatpush1.xpose.msra.mxu0 0.0
        %1582 = vmatprep.subr.mxu0 0.0
        %1583 = vmatpush1.xpose.msra.mxu0 0.0
        %1584 = vmatprep.subr.mxu0 0.0
        %1585 = vmatpush1.xpose.msra.mxu0 0.0
        %1586 = vmatprep.subr.mxu0 0.0
        %1587 = vmatpush1.xpose.msra.mxu0 0.0
        %1588 = vmatprep.subr.mxu0 0.0
        %1589 = vmatpush1.xpose.msra.mxu0 0.0
        %1590 = vmatprep.subr.mxu0 0.0
        %1591 = vmatpush1.xpose.msra.mxu0 0.0
        %1592 = vmatprep.subr.mxu0 0.0
        %1593 = vmatpush1.xpose.msra.mxu0 0.0
        %1594 = vmatprep.subr.mxu0 0.0
        %1595 = vmatpush1.xpose.msra.mxu0 0.0
        %1596 = vmatprep.subr.mxu0 0.0
        %1597 = vmatpush1.xpose.msra.mxu0 0.0
        %1598 = vmatprep.subr.mxu0 0.0
        %1599 = vmatpush1.xpose.msra.mxu0 0.0
        %1600 = vmatprep.subr.mxu0 0.0
        %1601 = vmatpush1.xpose.msra.mxu0 0.0
        %1602 = vmatprep.subr.mxu0 0.0
        %1603 = vmatpush1.xpose.msra.mxu0 0.0
        %1604 = vmatprep.subr.mxu0 0.0
        %1605 = vmatpush1.xpose.msra.mxu0 0.0
        %1606 = vmatprep.subr.mxu0 0.0
        %1607 = vmatpush1.xpose.msra.mxu0 0.0
        %1608 = vmatprep.subr.mxu0 0.0
        %1609 = vmatpush1.xpose.msra.mxu0 %v1576
        %1610 = vmatprep.subr.mxu0 0.0
        %1611 = vmatpush2.xpose.msra.mxu0 0.0
        %1612 = vmatprep.subr.mxu0 0.0
        %1613 = vmatpush2.xpose.msra.mxu0 0.0
        %1614 = vmatprep.subr.mxu0 0.0
        %1615 = vmatpush2.xpose.msra.mxu0 0.0
        %1616 = vmatprep.subr.mxu0 0.0
        %1617 = vmatpush2.xpose.msra.mxu0 0.0
        %1618 = vmatprep.subr.mxu0 0.0
        %1619 = vmatpush2.xpose.msra.mxu0 0.0
        %1620 = vmatprep.subr.mxu0 0.0
        %1621 = vmatpush2.xpose.msra.mxu0 0.0
        %1622 = vmatprep.subr.mxu0 0.0
        %1623 = vmatpush2.xpose.msra.mxu0 0.0
        %1624 = vmatprep.subr.mxu0 0.0
        %1625 = vmatpush2.xpose.msra.mxu0 0.0
        %1626 = vmatprep.subr.mxu0 0.0
        %1627 = vmatpush2.xpose.msra.mxu0 0.0
        %1628 = vmatprep.subr.mxu0 0.0
        %1629 = vmatpush2.xpose.msra.mxu0 0.0
        %1630 = vmatprep.subr.mxu0 0.0
        %1631 = vmatpush2.xpose.msra.mxu0 0.0
        %1632 = vmatprep.subr.mxu0 0.0
        %1633 = vmatpush2.xpose.msra.mxu0 0.0
        %1634 = vmatprep.subr.mxu0 0.0
        %1635 = vmatpush2.xpose.msra.mxu0 0.0
        %1636 = vmatprep.subr.mxu0 0.0
        %1637 = vmatpush2.xpose.msra.mxu0 0.0
        %1638 = vmatprep.subr.mxu0 0.0
        %1639 = vmatpush2.xpose.msra.mxu0 0.0
        %1640 = vmatprep.subr.mxu0 0.0
        %1641 = vmatpush2.xpose.msra.mxu0 0.0
        %1642 = vmatprep.mubr.f32.mxu0 0.0
        %1643 = vmatmul.mubr.f32.gmra.mxu0 %v1574
        %v1644 = vpop.f32.mrf.mxu0
        %v1645 = vadd.f32 0.0, %v1644
        %v1646 = vpop.f32.mrf.mxu0
        %1647 = vdwg.mxu0
        %v1648 = vsel %vm1149, -inf, %v1645
        %v1649 = vsel %vm1070, %v1648, -inf
        %1650 = vmax.xlane.f32.xlu0 %v1649
        %v1651 = vpop.xlane.xlu0 %1650
        %v1652 = vsub.f32 %v1648, %v1651
        %v1653 = vmul.f32 %v1652, 1.442695
        %v1654 = vpow.pop %v1653
        %v1655 = vsel %vm1070, %v1654, 0.0
        %1656 = vadd.xlane.f32.xlu0 %v1655
        %v1657 = vpop.xlane.xlu0 %1656
        %v1658 = vrcp.pop %v1657
        %v1659 = vmul.f32 %v1654, %v1658
        %1660 = vrot.lane.b32.xlu0 %v1062, 40
        %v1661 = vpop.permute.xlu0 %1660
        %v1664 = vsel %vm1070, %v1659, 0
        %1666 = vmatprep.subr.mxu0 0.0
        %1667 = vmatpush1.msra.mxu0 0.0
        %1668 = vmatprep.subr.mxu0 0.0
        %1669 = vmatpush1.msra.mxu0 0.0
        %1670 = vmatprep.subr.mxu0 0.0
        %1671 = vmatpush1.msra.mxu0 0.0
        %1672 = vmatprep.subr.mxu0 0.0
        %1673 = vmatpush1.msra.mxu0 0.0
        %1674 = vmatprep.subr.mxu0 0.0
        %1675 = vmatpush1.msra.mxu0 0.0
        %1676 = vmatprep.subr.mxu0 0.0
        %1677 = vmatpush1.msra.mxu0 0.0
        %1678 = vmatprep.subr.mxu0 0.0
        %1679 = vmatpush1.msra.mxu0 0.0
        %1680 = vmatprep.subr.mxu0 0.0
        %1681 = vmatpush1.msra.mxu0 0.0
        %1682 = vmatprep.subr.mxu0 0.0
        %1683 = vmatpush1.msra.mxu0 0.0
        %1684 = vmatprep.subr.mxu0 0.0
        %1685 = vmatpush1.msra.mxu0 0.0
        %1686 = vmatprep.subr.mxu0 0.0
        %1687 = vmatpush1.msra.mxu0 0.0
        %1688 = vmatprep.subr.mxu0 0.0
        %1689 = vmatpush1.msra.mxu0 0.0
        %1690 = vmatprep.subr.mxu0 0.0
        %1691 = vmatpush1.msra.mxu0 0.0
        %1692 = vmatprep.subr.mxu0 0.0
        %1693 = vmatpush1.msra.mxu0 0.0
        %1694 = vmatprep.subr.mxu0 0.0
        %1695 = vmatpush1.msra.mxu0 0.0
        %1696 = vmatprep.subr.mxu0 0.0
        %1697 = vmatpush1.msra.mxu0 %v1661
        %1698 = vmatprep.subr.mxu0 0.0
        %1699 = vmatpush2.msra.mxu0 0.0
        %1700 = vmatprep.subr.mxu0 0.0
        %1701 = vmatpush2.msra.mxu0 0.0
        %1702 = vmatprep.subr.mxu0 0.0
        %1703 = vmatpush2.msra.mxu0 0.0
        %1704 = vmatprep.subr.mxu0 0.0
        %1705 = vmatpush2.msra.mxu0 0.0
        %1706 = vmatprep.subr.mxu0 0.0
        %1707 = vmatpush2.msra.mxu0 0.0
        %1708 = vmatprep.subr.mxu0 0.0
        %1709 = vmatpush2.msra.mxu0 0.0
        %1710 = vmatprep.subr.mxu0 0.0
        %1711 = vmatpush2.msra.mxu0 0.0
        %1712 = vmatprep.subr.mxu0 0.0
        %1713 = vmatpush2.msra.mxu0 0.0
        %1714 = vmatprep.subr.mxu0 0.0
        %1715 = vmatpush2.msra.mxu0 0.0
        %1716 = vmatprep.subr.mxu0 0.0
        %1717 = vmatpush2.msra.mxu0 0.0
        %1718 = vmatprep.subr.mxu0 0.0
        %1719 = vmatpush2.msra.mxu0 0.0
        %1720 = vmatprep.subr.mxu0 0.0
        %1721 = vmatpush2.msra.mxu0 0.0
        %1722 = vmatprep.subr.mxu0 0.0
        %1723 = vmatpush2.msra.mxu0 0.0
        %1724 = vmatprep.subr.mxu0 0.0
        %1725 = vmatpush2.msra.mxu0 0.0
        %1726 = vmatprep.subr.mxu0 0.0
        %1727 = vmatpush2.msra.mxu0 0.0
        %1728 = vmatprep.subr.mxu0 0.0
        %1729 = vmatpush2.msra.mxu0 0.0
        %1730 = vmatprep.mubr.f32.mxu0 0.0
        %1731 = vmatmul.mubr.f32.gmra.mxu0 %v1664
        %v1732 = vpop.f32.mrf.mxu0
        %v1733 = vadd.f32 0.0, %v1732
        %v1734 = vpop.f32.mrf.mxu0
        %1735 = vdwg.mxu0
        %1737 = vrot.lane.b32.xlu0 %v1401, 8
        %v1738 = vpop.permute.xlu0 %1737
        %1741 = vrot.lane.b32.xlu0 %v1567, 16
        %v1742 = vpop.permute.xlu0 %1741
        %1745 = vrot.lane.b32.xlu0 %v1733, 24
        %v1746 = vpop.permute.xlu0 %1745
        %v1748 = vsel %vm1070, %v1235, %v1738
        %vm1749 = vcmask 130048
        %v1750 = vsel %vm1749, %v1748, %v1742
        %vm1751 = vcmask 195584
        %v1752 = vsel %vm1751, %v1750, %v1746
        %v1753 = vld [vmem:[%s4] sm:$0xf]
        %v1754 = vld [vmem:[%s4 + $0x4] sm:$0xf]
        %v1755 = vld [vmem:[%s4 + $0x8] sm:$0xf]
        %v1756 = vld [vmem:[%s4 + $0xc] sm:$0xf]
        %v1757 = vld [vmem:[%s5] sm:$0x1]
        %v1758 = vpack.c.bf16 %v1752, %v1752
        %v1760 = vlaneseq
        %v1761 = vshrl.u32 %v1760, 7
        %v1762 = vsub.s32 0, %v1761
        %v1763 = vrot.slane %v1757, %v1762
        %v1769 = vunpack.c.l.b16 %v1753
        %v1770 = vunpack.c.l.b16 %v1754
        %v1771 = vunpack.c.l.b16 %v1755
        %v1772 = vunpack.c.l.b16 %v1756
        %v1773 = vpack.c.b16 %v1770, %v1769
        %v1774 = vpack.c.b16 %v1772, %v1771
        %v1778 = vsel %vm1023, %v1758, 0
        %1780 = vmatprep.subr.bf16.mxu0 0
        %1781 = vmatpush1.bf16.msra.mxu0 0
        %1782 = vmatprep.subr.bf16.mxu0 0
        %1783 = vmatpush1.bf16.msra.mxu0 0
        %1784 = vmatprep.subr.bf16.mxu0 0
        %1785 = vmatpush1.bf16.msra.mxu0 0
        %1786 = vmatprep.subr.bf16.mxu0 0
        %1787 = vmatpush1.bf16.msra.mxu0 0
        %1788 = vmatprep.subr.bf16.mxu0 0
        %1789 = vmatpush1.bf16.msra.mxu0 0
        %1790 = vmatprep.subr.bf16.mxu0 0
        %1791 = vmatpush1.bf16.msra.mxu0 0
        %1792 = vmatprep.subr.bf16.mxu0 0
        %1793 = vmatpush1.bf16.msra.mxu0 %v1774
        %1794 = vmatprep.subr.bf16.mxu0 0
        %1795 = vmatpush1.bf16.msra.mxu0 %v1773
        %1796 = vmatprep.subr.bf16.mxu0 0
        %1797 = vmatpush2.bf16.msra.mxu0 0
        %1798 = vmatprep.subr.bf16.mxu0 0
        %1799 = vmatpush2.bf16.msra.mxu0 0
        %1800 = vmatprep.subr.bf16.mxu0 0
        %1801 = vmatpush2.bf16.msra.mxu0 0
        %1802 = vmatprep.subr.bf16.mxu0 0
        %1803 = vmatpush2.bf16.msra.mxu0 0
        %1804 = vmatprep.subr.bf16.mxu0 0
        %1805 = vmatpush2.bf16.msra.mxu0 0
        %1806 = vmatprep.subr.bf16.mxu0 0
        %1807 = vmatpush2.bf16.msra.mxu0 0
        %1808 = vmatprep.subr.bf16.mxu0 0
        %1809 = vmatpush2.bf16.msra.mxu0 0
        %1810 = vmatprep.subr.bf16.mxu0 0
        %1811 = vmatpush2.bf16.msra.mxu0 0
        %1812 = vmatprep.mubr.bf16.mxu0 0
        %1813 = vmatmul.mubr.bf16.gmra.mxu0 %v1778
        %v1814 = vpop.f32.mrf.mxu0
        %v1815 = vadd.f32 %v1763, %v1814
        %v1816 = vpop.f32.mrf.mxu0
        %v1817 = vpop.f32.mrf.mxu0
        %v1818 = vpop.f32.mrf.mxu0
        %1819 = vdwg.mxu0
        %v1820 = vadd.f32 %v1815, %v998
        %v1821 = vld [vmem:[%s6] sm:$0x1]
        %v1822 = vld [vmem:[%s7] sm:$0x1]
        %v1823 = vsel %vm1023, %v1820, 0.0
        %1824 = vadd.xlane.f32.xlu0 %v1823
        %v1825 = vpop.xlane.xlu0 %1824
        %v1826 = vrcp.pop 32.0
        %v1827 = vmul.f32 %v1825, %v1826
        %v1828 = vmul.f32 %v1820, %v1820
        %v1829 = vsel %vm1023, %v1828, 0.0
        %1830 = vadd.xlane.f32.xlu0 %v1829
        %v1831 = vpop.xlane.xlu0 %1830
        %v1832 = vmul.f32 %v1831, %v1826
        %v1833 = vmul.f32 %v1827, %v1827
        %v1834 = vsub.f32 %v1832, %v1833
        %v1835 = vmax.f32 %v1834, 0.0
        %v1836 = vsub.f32 %v1820, %v1827
        %v1837 = vadd.f32 %v1835, 1e-05
        %v1838 = vrsqrt.pop %v1837
        %v1839 = vmul.f32 %v1836, %v1838
        %v1841 = vlaneseq
        %v1842 = vshrl.u32 %v1841, 7
        %v1843 = vsub.s32 0, %v1842
        %v1844 = vrot.slane %v1821, %v1843
        %v1846 = vmul.f32 %v1839, %v1844
        %v1848 = vlaneseq
        %v1849 = vshrl.u32 %v1848, 7
        %v1850 = vsub.s32 0, %v1849
        %v1851 = vrot.slane %v1822, %v1850
        %v1853 = vadd.f32 %v1846, %v1851
        %v1854 = vld [vmem:[%s8] sm:$0xf]
        %v1855 = vld [vmem:[%s8 + $0x4] sm:$0xf]
        %v1856 = vld [vmem:[%s8 + $0x8] sm:$0xf]
        %v1857 = vld [vmem:[%s8 + $0xc] sm:$0xf]
        %v1858 = vld [vmem:[%s9] sm:$0x1]
        %v1859 = vld [vmem:[%s10] sm:$0xf]
        %v1860 = vld [vmem:[%s10 + $0x4] sm:$0xf]
        %v1861 = vld [vmem:[%s10 + $0x8] sm:$0xf]
        %v1862 = vld [vmem:[%s10 + $0xc] sm:$0xf]
        %v1863 = vld [vmem:[%s10 + $0x10] sm:$0xf]
        %v1864 = vld [vmem:[%s10 + $0x14] sm:$0xf]
        %v1865 = vld [vmem:[%s10 + $0x18] sm:$0xf]
        %v1866 = vld [vmem:[%s10 + $0x1c] sm:$0xf]
        %v1867 = vld [vmem:[%s11] sm:$0x1]
        %v1868 = vpack.c.bf16 %v1853, %v1853
        %v1870 = vlaneseq
        %v1871 = vshrl.u32 %v1870, 7
        %v1872 = vsub.s32 0, %v1871
        %v1873 = vrot.slane %v1858, %v1872
        %v1879 = vunpack.c.l.b16 %v1854
        %v1880 = vunpack.c.l.b16 %v1855
        %v1881 = vunpack.c.l.b16 %v1856
        %v1882 = vunpack.c.l.b16 %v1857
        %v1883 = vpack.c.b16 %v1880, %v1879
        %v1884 = vpack.c.b16 %v1882, %v1881
        %v1888 = vsel %vm1023, %v1868, 0
        %1890 = vmatprep.subr.bf16.mxu0 0
        %1891 = vmatpush1.bf16.msra.mxu0 0
        %1892 = vmatprep.subr.bf16.mxu0 0
        %1893 = vmatpush1.bf16.msra.mxu0 0
        %1894 = vmatprep.subr.bf16.mxu0 0
        %1895 = vmatpush1.bf16.msra.mxu0 0
        %1896 = vmatprep.subr.bf16.mxu0 0
        %1897 = vmatpush1.bf16.msra.mxu0 0
        %1898 = vmatprep.subr.bf16.mxu0 0
        %1899 = vmatpush1.bf16.msra.mxu0 0
        %1900 = vmatprep.subr.bf16.mxu0 0
        %1901 = vmatpush1.bf16.msra.mxu0 0
        %1902 = vmatprep.subr.bf16.mxu0 0
        %1903 = vmatpush1.bf16.msra.mxu0 %v1884
        %1904 = vmatprep.subr.bf16.mxu0 0
        %1905 = vmatpush1.bf16.msra.mxu0 %v1883
        %1906 = vmatprep.subr.bf16.mxu0 0
        %1907 = vmatpush2.bf16.msra.mxu0 0
        %1908 = vmatprep.subr.bf16.mxu0 0
        %1909 = vmatpush2.bf16.msra.mxu0 0
        %1910 = vmatprep.subr.bf16.mxu0 0
        %1911 = vmatpush2.bf16.msra.mxu0 0
        %1912 = vmatprep.subr.bf16.mxu0 0
        %1913 = vmatpush2.bf16.msra.mxu0 0
        %1914 = vmatprep.subr.bf16.mxu0 0
        %1915 = vmatpush2.bf16.msra.mxu0 0
        %1916 = vmatprep.subr.bf16.mxu0 0
        %1917 = vmatpush2.bf16.msra.mxu0 0
        %1918 = vmatprep.subr.bf16.mxu0 0
        %1919 = vmatpush2.bf16.msra.mxu0 0
        %1920 = vmatprep.subr.bf16.mxu0 0
        %1921 = vmatpush2.bf16.msra.mxu0 0
        %1922 = vmatprep.mubr.bf16.mxu0 0
        %1923 = vmatmul.mubr.bf16.gmra.mxu0 %v1888
        %v1924 = vpop.f32.mrf.mxu0
        %v1925 = vadd.f32 %v1873, %v1924
        %v1926 = vpop.f32.mrf.mxu0
        %v1927 = vpop.f32.mrf.mxu0
        %v1928 = vpop.f32.mrf.mxu0
        %1929 = vdwg.mxu0
        %v1930 = vmax.f32 %v1925, 0.0
        %v1931 = vpack.c.bf16 %v1930, %v1930
        %v1933 = vlaneseq
        %v1934 = vshrl.u32 %v1933, 7
        %v1935 = vsub.s32 0, %v1934
        %v1936 = vrot.slane %v1867, %v1935
        %v1946 = vunpack.c.l.b16 %v1859
        %v1947 = vunpack.c.l.b16 %v1860
        %v1948 = vunpack.c.l.b16 %v1861
        %v1949 = vunpack.c.l.b16 %v1862
        %v1950 = vunpack.c.l.b16 %v1863
        %v1951 = vunpack.c.l.b16 %v1864
        %v1952 = vunpack.c.l.b16 %v1865
        %v1953 = vunpack.c.l.b16 %v1866
        %v1954 = vpack.c.b16 %v1947, %v1946
        %v1955 = vpack.c.b16 %v1949, %v1948
        %v1956 = vpack.c.b16 %v1951, %v1950
        %v1957 = vpack.c.b16 %v1953, %v1952
        %vm1962 = vcmask 523264
        %v1964 = vsel %vm1962, %v1931, 0
        %1966 = vmatprep.subr.bf16.mxu0 0
        %1967 = vmatpush1.bf16.msra.mxu0 0
        %1968 = vmatprep.subr.bf16.mxu0 0
        %1969 = vmatpush1.bf16.msra.mxu0 0
        %1970 = vmatprep.subr.bf16.mxu0 0
        %1971 = vmatpush1.bf16.msra.mxu0 0
        %1972 = vmatprep.subr.bf16.mxu0 0
        %1973 = vmatpush1.bf16.msra.mxu0 0
        %1974 = vmatprep.subr.bf16.mxu0 0
        %1975 = vmatpush1.bf16.msra.mxu0 %v1957
        %1976 = vmatprep.subr.bf16.mxu0 0
        %1977 = vmatpush1.bf16.msra.mxu0 %v1956
        %1978 = vmatprep.subr.bf16.mxu0 0
        %1979 = vmatpush1.bf16.msra.mxu0 %v1955
        %1980 = vmatprep.subr.bf16.mxu0 0
        %1981 = vmatpush1.bf16.msra.mxu0 %v1954
        %1982 = vmatprep.subr.bf16.mxu0 0
        %1983 = vmatpush2.bf16.msra.mxu0 0
        %1984 = vmatprep.subr.bf16.mxu0 0
        %1985 = vmatpush2.bf16.msra.mxu0 0
        %1986 = vmatprep.subr.bf16.mxu0 0
        %1987 = vmatpush2.bf16.msra.mxu0 0
        %1988 = vmatprep.subr.bf16.mxu0 0
        %1989 = vmatpush2.bf16.msra.mxu0 0
        %1990 = vmatprep.subr.bf16.mxu0 0
        %1991 = vmatpush2.bf16.msra.mxu0 0
        %1992 = vmatprep.subr.bf16.mxu0 0
        %1993 = vmatpush2.bf16.msra.mxu0 0
        %1994 = vmatprep.subr.bf16.mxu0 0
        %1995 = vmatpush2.bf16.msra.mxu0 0
        %1996 = vmatprep.subr.bf16.mxu0 0
        %1997 = vmatpush2.bf16.msra.mxu0 0
        %1998 = vmatprep.mubr.bf16.mxu0 0
        %1999 = vmatmul.mubr.bf16.gmra.mxu0 %v1964
        %v2000 = vpop.f32.mrf.mxu0
        %v2001 = vadd.f32 %v1936, %v2000
        %v2002 = vpop.f32.mrf.mxu0
        %v2003 = vpop.f32.mrf.mxu0
        %v2004 = vpop.f32.mrf.mxu0
        %2005 = vdwg.mxu0
        %v2006 = vadd.f32 %v1853, %v2001
        %v2007 = vld [vmem:[#allocation2] sm:$0x1]
        %v2008 = vld [vmem:[#allocation4] sm:$0x1]
        %v2009 = vsel %vm1023, %v2006, 0.0
        %2010 = vadd.xlane.f32.xlu0 %v2009
        %v2011 = vpop.xlane.xlu0 %2010
        %v2012 = vmul.f32 %v2011, %v1826
        %v2013 = vmul.f32 %v2006, %v2006
        %v2014 = vsel %vm1023, %v2013, 0.0
        %2015 = vadd.xlane.f32.xlu0 %v2014
        %v2016 = vpop.xlane.xlu0 %2015
        %v2017 = vmul.f32 %v2016, %v1826
        %v2018 = vmul.f32 %v2012, %v2012
        %v2019 = vsub.f32 %v2017, %v2018
        %v2020 = vmax.f32 %v2019, 0.0
        %v2021 = vsub.f32 %v2006, %v2012
        %v2022 = vadd.f32 %v2020, 1e-05
        %v2023 = vrsqrt.pop %v2022
        %v2024 = vmul.f32 %v2021, %v2023
        %v2026 = vlaneseq
        %v2027 = vshrl.u32 %v2026, 7
        %v2028 = vsub.s32 0, %v2027
        %v2029 = vrot.slane %v2007, %v2028
        %v2031 = vmul.f32 %v2024, %v2029
        %v2033 = vlaneseq
        %v2034 = vshrl.u32 %v2033, 7
        %v2035 = vsub.s32 0, %v2034
        %v2036 = vrot.slane %v2008, %v2035
        %v2038 = vadd.f32 %v2031, %v2036
        %v2039 = vld [vmem:[%s14] sm:$0xf]
        %v2040 = vld [vmem:[%s14 + $0x4] sm:$0xf]
        %v2041 = vld [vmem:[%s14 + $0x8] sm:$0xf]
        %v2042 = vld [vmem:[%s14 + $0xc] sm:$0xf]
        %v2043 = vld [vmem:[#allocation6] sm:$0x1]
        %v2044 = vpack.c.bf16 %v2038, %v2038
        %v2046 = vlaneseq
        %v2047 = vshrl.u32 %v2046, 7
        %v2048 = vsub.s32 0, %v2047
        %v2049 = vrot.slane %v2043, %v2048
        %v2055 = vunpack.c.l.b16 %v2039
        %v2056 = vunpack.c.l.b16 %v2040
        %v2057 = vunpack.c.l.b16 %v2041
        %v2058 = vunpack.c.l.b16 %v2042
        %v2059 = vpack.c.b16 %v2056, %v2055
        %v2060 = vpack.c.b16 %v2058, %v2057
        %v2064 = vsel %vm1023, %v2044, 0
        %2066 = vmatprep.subr.bf16.mxu0 0
        %2067 = vmatpush1.bf16.msra.mxu0 0
        %2068 = vmatprep.subr.bf16.mxu0 0
        %2069 = vmatpush1.bf16.msra.mxu0 0
        %2070 = vmatprep.subr.bf16.mxu0 0
        %2071 = vmatpush1.bf16.msra.mxu0 0
        %2072 = vmatprep.subr.bf16.mxu0 0
        %2073 = vmatpush1.bf16.msra.mxu0 0
        %2074 = vmatprep.subr.bf16.mxu0 0
        %2075 = vmatpush1.bf16.msra.mxu0 0
        %2076 = vmatprep.subr.bf16.mxu0 0
        %2077 = vmatpush1.bf16.msra.mxu0 0
        %2078 = vmatprep.subr.bf16.mxu0 0
        %2079 = vmatpush1.bf16.msra.mxu0 %v2060
        %2080 = vmatprep.subr.bf16.mxu0 0
        %2081 = vmatpush1.bf16.msra.mxu0 %v2059
        %2082 = vmatprep.subr.bf16.mxu0 0
        %2083 = vmatpush2.bf16.msra.mxu0 0
        %2084 = vmatprep.subr.bf16.mxu0 0
        %2085 = vmatpush2.bf16.msra.mxu0 0
        %2086 = vmatprep.subr.bf16.mxu0 0
        %2087 = vmatpush2.bf16.msra.mxu0 0
        %2088 = vmatprep.subr.bf16.mxu0 0
        %2089 = vmatpush2.bf16.msra.mxu0 0
        %2090 = vmatprep.subr.bf16.mxu0 0
        %2091 = vmatpush2.bf16.msra.mxu0 0
        %2092 = vmatprep.subr.bf16.mxu0 0
        %2093 = vmatpush2.bf16.msra.mxu0 0
        %2094 = vmatprep.subr.bf16.mxu0 0
        %2095 = vmatpush2.bf16.msra.mxu0 0
        %2096 = vmatprep.subr.bf16.mxu0 0
        %2097 = vmatpush2.bf16.msra.mxu0 0
        %2098 = vmatprep.mubr.bf16.mxu0 0
        %2099 = vmatmul.mubr.bf16.gmra.mxu0 %v2064
        %v2100 = vpop.f32.mrf.mxu0
        %v2101 = vadd.f32 %v2049, %v2100
        %v2102 = vpop.f32.mrf.mxu0
        %v2103 = vpop.f32.mrf.mxu0
        %v2104 = vpop.f32.mrf.mxu0
        %2105 = vdwg.mxu0
        %v2106 = vld [vmem:[%s16] sm:$0xf]
        %v2107 = vld [vmem:[%s16 + $0x4] sm:$0xf]
        %v2108 = vld [vmem:[%s16 + $0x8] sm:$0xf]
        %v2109 = vld [vmem:[%s16 + $0xc] sm:$0xf]
        %v2110 = vld [vmem:[#allocation7] sm:$0x1]
        %v2111 = vpack.c.bf16 %v997, %v997
        %v2113 = vlaneseq
        %v2114 = vshrl.u32 %v2113, 7
        %v2115 = vsub.s32 0, %v2114
        %v2116 = vrot.slane %v2110, %v2115
        %v2122 = vunpack.c.l.b16 %v2106
        %v2123 = vunpack.c.l.b16 %v2107
        %v2124 = vunpack.c.l.b16 %v2108
        %v2125 = vunpack.c.l.b16 %v2109
        %v2126 = vpack.c.b16 %v2123, %v2122
        %v2127 = vpack.c.b16 %v2125, %v2124
        %v2131 = vsel %vm1023, %v2111, 0
        %2133 = vmatprep.subr.bf16.mxu0 0
        %2134 = vmatpush1.bf16.msra.mxu0 0
        %2135 = vmatprep.subr.bf16.mxu0 0
        %2136 = vmatpush1.bf16.msra.mxu0 0
        %2137 = vmatprep.subr.bf16.mxu0 0
        %2138 = vmatpush1.bf16.msra.mxu0 0
        %2139 = vmatprep.subr.bf16.mxu0 0
        %2140 = vmatpush1.bf16.msra.mxu0 0
        %2141 = vmatprep.subr.bf16.mxu0 0
        %2142 = vmatpush1.bf16.msra.mxu0 0
        %2143 = vmatprep.subr.bf16.mxu0 0
        %2144 = vmatpush1.bf16.msra.mxu0 0
        %2145 = vmatprep.subr.bf16.mxu0 0
        %2146 = vmatpush1.bf16.msra.mxu0 %v2127
        %2147 = vmatprep.subr.bf16.mxu0 0
        %2148 = vmatpush1.bf16.msra.mxu0 %v2126
        %2149 = vmatprep.subr.bf16.mxu0 0
        %2150 = vmatpush2.bf16.msra.mxu0 0
        %2151 = vmatprep.subr.bf16.mxu0 0
        %2152 = vmatpush2.bf16.msra.mxu0 0
        %2153 = vmatprep.subr.bf16.mxu0 0
        %2154 = vmatpush2.bf16.msra.mxu0 0
        %2155 = vmatprep.subr.bf16.mxu0 0
        %2156 = vmatpush2.bf16.msra.mxu0 0
        %2157 = vmatprep.subr.bf16.mxu0 0
        %2158 = vmatpush2.bf16.msra.mxu0 0
        %2159 = vmatprep.subr.bf16.mxu0 0
        %2160 = vmatpush2.bf16.msra.mxu0 0
        %2161 = vmatprep.subr.bf16.mxu0 0
        %2162 = vmatpush2.bf16.msra.mxu0 0
        %2163 = vmatprep.subr.bf16.mxu0 0
        %2164 = vmatpush2.bf16.msra.mxu0 0
        %2165 = vmatprep.mubr.bf16.mxu0 0
        %2166 = vmatmul.mubr.bf16.gmra.mxu0 %v2131
        %v2167 = vpop.f32.mrf.mxu0
        %v2168 = vadd.f32 %v2116, %v2167
        %v2169 = vpop.f32.mrf.mxu0
        %v2170 = vpop.f32.mrf.mxu0
        %v2171 = vpop.f32.mrf.mxu0
        %2172 = vdwg.mxu0
        %v2174 = vsel %vm1070, %v2101, 0
        %v2177 = vsel %vm1070, %v2168, 0
        %2179 = vmatprep.subr.mxu0 0.0
        %2180 = vmatpush1.xpose.msra.mxu0 0.0
        %2181 = vmatprep.subr.mxu0 0.0
        %2182 = vmatpush1.xpose.msra.mxu0 0.0
        %2183 = vmatprep.subr.mxu0 0.0
        %2184 = vmatpush1.xpose.msra.mxu0 0.0
        %2185 = vmatprep.subr.mxu0 0.0
        %2186 = vmatpush1.xpose.msra.mxu0 0.0
        %2187 = vmatprep.subr.mxu0 0.0
        %2188 = vmatpush1.xpose.msra.mxu0 0.0
        %2189 = vmatprep.subr.mxu0 0.0
        %2190 = vmatpush1.xpose.msra.mxu0 0.0
        %2191 = vmatprep.subr.mxu0 0.0
        %2192 = vmatpush1.xpose.msra.mxu0 0.0
        %2193 = vmatprep.subr.mxu0 0.0
        %2194 = vmatpush1.xpose.msra.mxu0 0.0
        %2195 = vmatprep.subr.mxu0 0.0
        %2196 = vmatpush1.xpose.msra.mxu0 0.0
        %2197 = vmatprep.subr.mxu0 0.0
        %2198 = vmatpush1.xpose.msra.mxu0 0.0
        %2199 = vmatprep.subr.mxu0 0.0
        %2200 = vmatpush1.xpose.msra.mxu0 0.0
        %2201 = vmatprep.subr.mxu0 0.0
        %2202 = vmatpush1.xpose.msra.mxu0 0.0
        %2203 = vmatprep.subr.mxu0 0.0
        %2204 = vmatpush1.xpose.msra.mxu0 0.0
        %2205 = vmatprep.subr.mxu0 0.0
        %2206 = vmatpush1.xpose.msra.mxu0 0.0
        %2207 = vmatprep.subr.mxu0 0.0
        %2208 = vmatpush1.xpose.msra.mxu0 0.0
        %2209 = vmatprep.subr.mxu0 0.0
        %2210 = vmatpush1.xpose.msra.mxu0 %v2177
        %2211 = vmatprep.subr.mxu0 0.0
        %2212 = vmatpush2.xpose.msra.mxu0 0.0
        %2213 = vmatprep.subr.mxu0 0.0
        %2214 = vmatpush2.xpose.msra.mxu0 0.0
        %2215 = vmatprep.subr.mxu0 0.0
        %2216 = vmatpush2.xpose.msra.mxu0 0.0
        %2217 = vmatprep.subr.mxu0 0.0
        %2218 = vmatpush2.xpose.msra.mxu0 0.0
        %2219 = vmatprep.subr.mxu0 0.0
        %2220 = vmatpush2.xpose.msra.mxu0 0.0
        %2221 = vmatprep.subr.mxu0 0.0
        %2222 = vmatpush2.xpose.msra.mxu0 0.0
        %2223 = vmatprep.subr.mxu0 0.0
        %2224 = vmatpush2.xpose.msra.mxu0 0.0
        %2225 = vmatprep.subr.mxu0 0.0
        %2226 = vmatpush2.xpose.msra.mxu0 0.0
        %2227 = vmatprep.subr.mxu0 0.0
        %2228 = vmatpush2.xpose.msra.mxu0 0.0
        %2229 = vmatprep.subr.mxu0 0.0
        %2230 = vmatpush2.xpose.msra.mxu0 0.0
        %2231 = vmatprep.subr.mxu0 0.0
        %2232 = vmatpush2.xpose.msra.mxu0 0.0
        %2233 = vmatprep.subr.mxu0 0.0
        %2234 = vmatpush2.xpose.msra.mxu0 0.0
        %2235 = vmatprep.subr.mxu0 0.0
        %2236 = vmatpush2.xpose.msra.mxu0 0.0
        %2237 = vmatprep.subr.mxu0 0.0
        %2238 = vmatpush2.xpose.msra.mxu0 0.0
        %2239 = vmatprep.subr.mxu0 0.0
        %2240 = vmatpush2.xpose.msra.mxu0 0.0
        %2241 = vmatprep.subr.mxu0 0.0
        %2242 = vmatpush2.xpose.msra.mxu0 0.0
        %2243 = vmatprep.mubr.f32.mxu0 0.0
        %2244 = vmatmul.mubr.f32.gmra.mxu0 %v2174
        %v2245 = vpop.f32.mrf.mxu0
        %v2246 = vadd.f32 0.0, %v2245
        %v2247 = vpop.f32.mrf.mxu0
        %2248 = vdwg.mxu0
        %v2249 = vsel %vm1070, %v2246, -inf
        %2250 = vmax.xlane.f32.xlu0 %v2249
        %v2251 = vpop.xlane.xlu0 %2250
        %v2252 = vsub.f32 %v2246, %v2251
        %v2253 = vmul.f32 %v2252, 1.442695
        %v2254 = vpow.pop %v2253
        %v2255 = vsel %vm1070, %v2254, 0.0
        %2256 = vadd.xlane.f32.xlu0 %v2255
        %v2257 = vpop.xlane.xlu0 %2256
        %v2258 = vrcp.pop %v2257
        %v2259 = vmul.f32 %v2254, %v2258
        %2260 = vrot.lane.b32.xlu0 %v2168, 96
        %v2261 = vpop.permute.xlu0 %2260
        %v2264 = vsel %vm1070, %v2259, 0
        %2266 = vmatprep.subr.mxu0 0.0
        %2267 = vmatpush1.msra.mxu0 0.0
        %2268 = vmatprep.subr.mxu0 0.0
        %2269 = vmatpush1.msra.mxu0 0.0
        %2270 = vmatprep.subr.mxu0 0.0
        %2271 = vmatpush1.msra.mxu0 0.0
        %2272 = vmatprep.subr.mxu0 0.0
        %2273 = vmatpush1.msra.mxu0 0.0
        %2274 = vmatprep.subr.mxu0 0.0
        %2275 = vmatpush1.msra.mxu0 0.0
        %2276 = vmatprep.subr.mxu0 0.0
        %2277 = vmatpush1.msra.mxu0 0.0
        %2278 = vmatprep.subr.mxu0 0.0
        %2279 = vmatpush1.msra.mxu0 0.0
        %2280 = vmatprep.subr.mxu0 0.0
        %2281 = vmatpush1.msra.mxu0 0.0
        %2282 = vmatprep.subr.mxu0 0.0
        %2283 = vmatpush1.msra.mxu0 0.0
        %2284 = vmatprep.subr.mxu0 0.0
        %2285 = vmatpush1.msra.mxu0 0.0
        %2286 = vmatprep.subr.mxu0 0.0
        %2287 = vmatpush1.msra.mxu0 0.0
        %2288 = vmatprep.subr.mxu0 0.0
        %2289 = vmatpush1.msra.mxu0 0.0
        %2290 = vmatprep.subr.mxu0 0.0
        %2291 = vmatpush1.msra.mxu0 0.0
        %2292 = vmatprep.subr.mxu0 0.0
        %2293 = vmatpush1.msra.mxu0 0.0
        %2294 = vmatprep.subr.mxu0 0.0
        %2295 = vmatpush1.msra.mxu0 0.0
        %2296 = vmatprep.subr.mxu0 0.0
        %2297 = vmatpush1.msra.mxu0 %v2261
        %2298 = vmatprep.subr.mxu0 0.0
        %2299 = vmatpush2.msra.mxu0 0.0
        %2300 = vmatprep.subr.mxu0 0.0
        %2301 = vmatpush2.msra.mxu0 0.0
        %2302 = vmatprep.subr.mxu0 0.0
        %2303 = vmatpush2.msra.mxu0 0.0
        %2304 = vmatprep.subr.mxu0 0.0
        %2305 = vmatpush2.msra.mxu0 0.0
        %2306 = vmatprep.subr.mxu0 0.0
        %2307 = vmatpush2.msra.mxu0 0.0
        %2308 = vmatprep.subr.mxu0 0.0
        %2309 = vmatpush2.msra.mxu0 0.0
        %2310 = vmatprep.subr.mxu0 0.0
        %2311 = vmatpush2.msra.mxu0 0.0
        %2312 = vmatprep.subr.mxu0 0.0
        %2313 = vmatpush2.msra.mxu0 0.0
        %2314 = vmatprep.subr.mxu0 0.0
        %2315 = vmatpush2.msra.mxu0 0.0
        %2316 = vmatprep.subr.mxu0 0.0
        %2317 = vmatpush2.msra.mxu0 0.0
        %2318 = vmatprep.subr.mxu0 0.0
        %2319 = vmatpush2.msra.mxu0 0.0
        %2320 = vmatprep.subr.mxu0 0.0
        %2321 = vmatpush2.msra.mxu0 0.0
        %2322 = vmatprep.subr.mxu0 0.0
        %2323 = vmatpush2.msra.mxu0 0.0
        %2324 = vmatprep.subr.mxu0 0.0
        %2325 = vmatpush2.msra.mxu0 0.0
        %2326 = vmatprep.subr.mxu0 0.0
        %2327 = vmatpush2.msra.mxu0 0.0
        %2328 = vmatprep.subr.mxu0 0.0
        %2329 = vmatpush2.msra.mxu0 0.0
        %2330 = vmatprep.mubr.f32.mxu0 0.0
        %2331 = vmatmul.mubr.f32.gmra.mxu0 %v2264
        %v2332 = vpop.f32.mrf.mxu0
        %v2333 = vadd.f32 0.0, %v2332
        %v2334 = vpop.f32.mrf.mxu0
        %2335 = vdwg.mxu0
        %2336 = vrot.lane.b32.xlu0 %v2101, 120
        %v2337 = vpop.permute.xlu0 %2336
        %2338 = vrot.lane.b32.xlu0 %v2168, 120
        %v2339 = vpop.permute.xlu0 %2338
        %v2340 = vsel %vm1070, %v2337, 0
        %v2342 = vsel %vm1070, %v2339, 0
        %2344 = vmatprep.subr.mxu0 0.0
        %2345 = vmatpush1.xpose.msra.mxu0 0.0
        %2346 = vmatprep.subr.mxu0 0.0
        %2347 = vmatpush1.xpose.msra.mxu0 0.0
        %2348 = vmatprep.subr.mxu0 0.0
        %2349 = vmatpush1.xpose.msra.mxu0 0.0
        %2350 = vmatprep.subr.mxu0 0.0
        %2351 = vmatpush1.xpose.msra.mxu0 0.0
        %2352 = vmatprep.subr.mxu0 0.0
        %2353 = vmatpush1.xpose.msra.mxu0 0.0
        %2354 = vmatprep.subr.mxu0 0.0
        %2355 = vmatpush1.xpose.msra.mxu0 0.0
        %2356 = vmatprep.subr.mxu0 0.0
        %2357 = vmatpush1.xpose.msra.mxu0 0.0
        %2358 = vmatprep.subr.mxu0 0.0
        %2359 = vmatpush1.xpose.msra.mxu0 0.0
        %2360 = vmatprep.subr.mxu0 0.0
        %2361 = vmatpush1.xpose.msra.mxu0 0.0
        %2362 = vmatprep.subr.mxu0 0.0
        %2363 = vmatpush1.xpose.msra.mxu0 0.0
        %2364 = vmatprep.subr.mxu0 0.0
        %2365 = vmatpush1.xpose.msra.mxu0 0.0
        %2366 = vmatprep.subr.mxu0 0.0
        %2367 = vmatpush1.xpose.msra.mxu0 0.0
        %2368 = vmatprep.subr.mxu0 0.0
        %2369 = vmatpush1.xpose.msra.mxu0 0.0
        %2370 = vmatprep.subr.mxu0 0.0
        %2371 = vmatpush1.xpose.msra.mxu0 0.0
        %2372 = vmatprep.subr.mxu0 0.0
        %2373 = vmatpush1.xpose.msra.mxu0 0.0
        %2374 = vmatprep.subr.mxu0 0.0
        %2375 = vmatpush1.xpose.msra.mxu0 %v2342
        %2376 = vmatprep.subr.mxu0 0.0
        %2377 = vmatpush2.xpose.msra.mxu0 0.0
        %2378 = vmatprep.subr.mxu0 0.0
        %2379 = vmatpush2.xpose.msra.mxu0 0.0
        %2380 = vmatprep.subr.mxu0 0.0
        %2381 = vmatpush2.xpose.msra.mxu0 0.0
        %2382 = vmatprep.subr.mxu0 0.0
        %2383 = vmatpush2.xpose.msra.mxu0 0.0
        %2384 = vmatprep.subr.mxu0 0.0
        %2385 = vmatpush2.xpose.msra.mxu0 0.0
        %2386 = vmatprep.subr.mxu0 0.0
        %2387 = vmatpush2.xpose.msra.mxu0 0.0
        %2388 = vmatprep.subr.mxu0 0.0
        %2389 = vmatpush2.xpose.msra.mxu0 0.0
        %2390 = vmatprep.subr.mxu0 0.0
        %2391 = vmatpush2.xpose.msra.mxu0 0.0
        %2392 = vmatprep.subr.mxu0 0.0
        %2393 = vmatpush2.xpose.msra.mxu0 0.0
        %2394 = vmatprep.subr.mxu0 0.0
        %2395 = vmatpush2.xpose.msra.mxu0 0.0
        %2396 = vmatprep.subr.mxu0 0.0
        %2397 = vmatpush2.xpose.msra.mxu0 0.0
        %2398 = vmatprep.subr.mxu0 0.0
        %2399 = vmatpush2.xpose.msra.mxu0 0.0
        %2400 = vmatprep.subr.mxu0 0.0
        %2401 = vmatpush2.xpose.msra.mxu0 0.0
        %2402 = vmatprep.subr.mxu0 0.0
        %2403 = vmatpush2.xpose.msra.mxu0 0.0
        %2404 = vmatprep.subr.mxu0 0.0
        %2405 = vmatpush2.xpose.msra.mxu0 0.0
        %2406 = vmatprep.subr.mxu0 0.0
        %2407 = vmatpush2.xpose.msra.mxu0 0.0
        %2408 = vmatprep.mubr.f32.mxu0 0.0
        %2409 = vmatmul.mubr.f32.gmra.mxu0 %v2340
        %v2410 = vpop.f32.mrf.mxu0
        %v2411 = vadd.f32 0.0, %v2410
        %v2412 = vpop.f32.mrf.mxu0
        %2413 = vdwg.mxu0
        %v2414 = vsel %vm1070, %v2411, -inf
        %2415 = vmax.xlane.f32.xlu0 %v2414
        %v2416 = vpop.xlane.xlu0 %2415
        %v2417 = vsub.f32 %v2411, %v2416
        %v2418 = vmul.f32 %v2417, 1.442695
        %v2419 = vpow.pop %v2418
        %v2420 = vsel %vm1070, %v2419, 0.0
        %2421 = vadd.xlane.f32.xlu0 %v2420
        %v2422 = vpop.xlane.xlu0 %2421
        %v2423 = vrcp.pop %v2422
        %v2424 = vmul.f32 %v2419, %v2423
        %2425 = vrot.lane.b32.xlu0 %v2168, 88
        %v2426 = vpop.permute.xlu0 %2425
        %v2429 = vsel %vm1070, %v2424, 0
        %2431 = vmatprep.subr.mxu0 0.0
        %2432 = vmatpush1.msra.mxu0 0.0
        %2433 = vmatprep.subr.mxu0 0.0
        %2434 = vmatpush1.msra.mxu0 0.0
        %2435 = vmatprep.subr.mxu0 0.0
        %2436 = vmatpush1.msra.mxu0 0.0
        %2437 = vmatprep.subr.mxu0 0.0
        %2438 = vmatpush1.msra.mxu0 0.0
        %2439 = vmatprep.subr.mxu0 0.0
        %2440 = vmatpush1.msra.mxu0 0.0
        %2441 = vmatprep.subr.mxu0 0.0
        %2442 = vmatpush1.msra.mxu0 0.0
        %2443 = vmatprep.subr.mxu0 0.0
        %2444 = vmatpush1.msra.mxu0 0.0
        %2445 = vmatprep.subr.mxu0 0.0
        %2446 = vmatpush1.msra.mxu0 0.0
        %2447 = vmatprep.subr.mxu0 0.0
        %2448 = vmatpush1.msra.mxu0 0.0
        %2449 = vmatprep.subr.mxu0 0.0
        %2450 = vmatpush1.msra.mxu0 0.0
        %2451 = vmatprep.subr.mxu0 0.0
        %2452 = vmatpush1.msra.mxu0 0.0
        %2453 = vmatprep.subr.mxu0 0.0
        %2454 = vmatpush1.msra.mxu0 0.0
        %2455 = vmatprep.subr.mxu0 0.0
        %2456 = vmatpush1.msra.mxu0 0.0
        %2457 = vmatprep.subr.mxu0 0.0
        %2458 = vmatpush1.msra.mxu0 0.0
        %2459 = vmatprep.subr.mxu0 0.0
        %2460 = vmatpush1.msra.mxu0 0.0
        %2461 = vmatprep.subr.mxu0 0.0
        %2462 = vmatpush1.msra.mxu0 %v2426
        %2463 = vmatprep.subr.mxu0 0.0
        %2464 = vmatpush2.msra.mxu0 0.0
        %2465 = vmatprep.subr.mxu0 0.0
        %2466 = vmatpush2.msra.mxu0 0.0
        %2467 = vmatprep.subr.mxu0 0.0
        %2468 = vmatpush2.msra.mxu0 0.0
        %2469 = vmatprep.subr.mxu0 0.0
        %2470 = vmatpush2.msra.mxu0 0.0
        %2471 = vmatprep.subr.mxu0 0.0
        %2472 = vmatpush2.msra.mxu0 0.0
        %2473 = vmatprep.subr.mxu0 0.0
        %2474 = vmatpush2.msra.mxu0 0.0
        %2475 = vmatprep.subr.mxu0 0.0
        %2476 = vmatpush2.msra.mxu0 0.0
        %2477 = vmatprep.subr.mxu0 0.0
        %2478 = vmatpush2.msra.mxu0 0.0
        %2479 = vmatprep.subr.mxu0 0.0
        %2480 = vmatpush2.msra.mxu0 0.0
        %2481 = vmatprep.subr.mxu0 0.0
        %2482 = vmatpush2.msra.mxu0 0.0
        %2483 = vmatprep.subr.mxu0 0.0
        %2484 = vmatpush2.msra.mxu0 0.0
        %2485 = vmatprep.subr.mxu0 0.0
        %2486 = vmatpush2.msra.mxu0 0.0
        %2487 = vmatprep.subr.mxu0 0.0
        %2488 = vmatpush2.msra.mxu0 0.0
        %2489 = vmatprep.subr.mxu0 0.0
        %2490 = vmatpush2.msra.mxu0 0.0
        %2491 = vmatprep.subr.mxu0 0.0
        %2492 = vmatpush2.msra.mxu0 0.0
        %2493 = vmatprep.subr.mxu0 0.0
        %2494 = vmatpush2.msra.mxu0 0.0
        %2495 = vmatprep.mubr.f32.mxu0 0.0
        %2496 = vmatmul.mubr.f32.gmra.mxu0 %v2429
        %v2497 = vpop.f32.mrf.mxu0
        %v2498 = vadd.f32 0.0, %v2497
        %v2499 = vpop.f32.mrf.mxu0
        %2500 = vdwg.mxu0
        %2501 = vrot.lane.b32.xlu0 %v2101, 112
        %v2502 = vpop.permute.xlu0 %2501
        %2503 = vrot.lane.b32.xlu0 %v2168, 112
        %v2504 = vpop.permute.xlu0 %2503
        %v2505 = vsel %vm1070, %v2502, 0
        %v2507 = vsel %vm1070, %v2504, 0
        %2509 = vmatprep.subr.mxu0 0.0
        %2510 = vmatpush1.xpose.msra.mxu0 0.0
        %2511 = vmatprep.subr.mxu0 0.0
        %2512 = vmatpush1.xpose.msra.mxu0 0.0
        %2513 = vmatprep.subr.mxu0 0.0
        %2514 = vmatpush1.xpose.msra.mxu0 0.0
        %2515 = vmatprep.subr.mxu0 0.0
        %2516 = vmatpush1.xpose.msra.mxu0 0.0
        %2517 = vmatprep.subr.mxu0 0.0
        %2518 = vmatpush1.xpose.msra.mxu0 0.0
        %2519 = vmatprep.subr.mxu0 0.0
        %2520 = vmatpush1.xpose.msra.mxu0 0.0
        %2521 = vmatprep.subr.mxu0 0.0
        %2522 = vmatpush1.xpose.msra.mxu0 0.0
        %2523 = vmatprep.subr.mxu0 0.0
        %2524 = vmatpush1.xpose.msra.mxu0 0.0
        %2525 = vmatprep.subr.mxu0 0.0
        %2526 = vmatpush1.xpose.msra.mxu0 0.0
        %2527 = vmatprep.subr.mxu0 0.0
        %2528 = vmatpush1.xpose.msra.mxu0 0.0
        %2529 = vmatprep.subr.mxu0 0.0
        %2530 = vmatpush1.xpose.msra.mxu0 0.0
        %2531 = vmatprep.subr.mxu0 0.0
        %2532 = vmatpush1.xpose.msra.mxu0 0.0
        %2533 = vmatprep.subr.mxu0 0.0
        %2534 = vmatpush1.xpose.msra.mxu0 0.0
        %2535 = vmatprep.subr.mxu0 0.0
        %2536 = vmatpush1.xpose.msra.mxu0 0.0
        %2537 = vmatprep.subr.mxu0 0.0
        %2538 = vmatpush1.xpose.msra.mxu0 0.0
        %2539 = vmatprep.subr.mxu0 0.0
        %2540 = vmatpush1.xpose.msra.mxu0 %v2507
        %2541 = vmatprep.subr.mxu0 0.0
        %2542 = vmatpush2.xpose.msra.mxu0 0.0
        %2543 = vmatprep.subr.mxu0 0.0
        %2544 = vmatpush2.xpose.msra.mxu0 0.0
        %2545 = vmatprep.subr.mxu0 0.0
        %2546 = vmatpush2.xpose.msra.mxu0 0.0
        %2547 = vmatprep.subr.mxu0 0.0
        %2548 = vmatpush2.xpose.msra.mxu0 0.0
        %2549 = vmatprep.subr.mxu0 0.0
        %2550 = vmatpush2.xpose.msra.mxu0 0.0
        %2551 = vmatprep.subr.mxu0 0.0
        %2552 = vmatpush2.xpose.msra.mxu0 0.0
        %2553 = vmatprep.subr.mxu0 0.0
        %2554 = vmatpush2.xpose.msra.mxu0 0.0
        %2555 = vmatprep.subr.mxu0 0.0
        %2556 = vmatpush2.xpose.msra.mxu0 0.0
        %2557 = vmatprep.subr.mxu0 0.0
        %2558 = vmatpush2.xpose.msra.mxu0 0.0
        %2559 = vmatprep.subr.mxu0 0.0
        %2560 = vmatpush2.xpose.msra.mxu0 0.0
        %2561 = vmatprep.subr.mxu0 0.0
        %2562 = vmatpush2.xpose.msra.mxu0 0.0
        %2563 = vmatprep.subr.mxu0 0.0
        %2564 = vmatpush2.xpose.msra.mxu0 0.0
        %2565 = vmatprep.subr.mxu0 0.0
        %2566 = vmatpush2.xpose.msra.mxu0 0.0
        %2567 = vmatprep.subr.mxu0 0.0
        %2568 = vmatpush2.xpose.msra.mxu0 0.0
        %2569 = vmatprep.subr.mxu0 0.0
        %2570 = vmatpush2.xpose.msra.mxu0 0.0
        %2571 = vmatprep.subr.mxu0 0.0
        %2572 = vmatpush2.xpose.msra.mxu0 0.0
        %2573 = vmatprep.mubr.f32.mxu0 0.0
        %2574 = vmatmul.mubr.f32.gmra.mxu0 %v2505
        %v2575 = vpop.f32.mrf.mxu0
        %v2576 = vadd.f32 0.0, %v2575
        %v2577 = vpop.f32.mrf.mxu0
        %2578 = vdwg.mxu0
        %v2579 = vsel %vm1070, %v2576, -inf
        %2580 = vmax.xlane.f32.xlu0 %v2579
        %v2581 = vpop.xlane.xlu0 %2580
        %v2582 = vsub.f32 %v2576, %v2581
        %v2583 = vmul.f32 %v2582, 1.442695
        %v2584 = vpow.pop %v2583
        %v2585 = vsel %vm1070, %v2584, 0.0
        %2586 = vadd.xlane.f32.xlu0 %v2585
        %v2587 = vpop.xlane.xlu0 %2586
        %v2588 = vrcp.pop %v2587
        %v2589 = vmul.f32 %v2584, %v2588
        %2590 = vrot.lane.b32.xlu0 %v2168, 80
        %v2591 = vpop.permute.xlu0 %2590
        %v2594 = vsel %vm1070, %v2589, 0
        %2596 = vmatprep.subr.mxu0 0.0
        %2597 = vmatpush1.msra.mxu0 0.0
        %2598 = vmatprep.subr.mxu0 0.0
        %2599 = vmatpush1.msra.mxu0 0.0
        %2600 = vmatprep.subr.mxu0 0.0
        %2601 = vmatpush1.msra.mxu0 0.0
        %2602 = vmatprep.subr.mxu0 0.0
        %2603 = vmatpush1.msra.mxu0 0.0
        %2604 = vmatprep.subr.mxu0 0.0
        %2605 = vmatpush1.msra.mxu0 0.0
        %2606 = vmatprep.subr.mxu0 0.0
        %2607 = vmatpush1.msra.mxu0 0.0
        %2608 = vmatprep.subr.mxu0 0.0
        %2609 = vmatpush1.msra.mxu0 0.0
        %2610 = vmatprep.subr.mxu0 0.0
        %2611 = vmatpush1.msra.mxu0 0.0
        %2612 = vmatprep.subr.mxu0 0.0
        %2613 = vmatpush1.msra.mxu0 0.0
        %2614 = vmatprep.subr.mxu0 0.0
        %2615 = vmatpush1.msra.mxu0 0.0
        %2616 = vmatprep.subr.mxu0 0.0
        %2617 = vmatpush1.msra.mxu0 0.0
        %2618 = vmatprep.subr.mxu0 0.0
        %2619 = vmatpush1.msra.mxu0 0.0
        %2620 = vmatprep.subr.mxu0 0.0
        %2621 = vmatpush1.msra.mxu0 0.0
        %2622 = vmatprep.subr.mxu0 0.0
        %2623 = vmatpush1.msra.mxu0 0.0
        %2624 = vmatprep.subr.mxu0 0.0
        %2625 = vmatpush1.msra.mxu0 0.0
        %2626 = vmatprep.subr.mxu0 0.0
        %2627 = vmatpush1.msra.mxu0 %v2591
        %2628 = vmatprep.subr.mxu0 0.0
        %2629 = vmatpush2.msra.mxu0 0.0
        %2630 = vmatprep.subr.mxu0 0.0
        %2631 = vmatpush2.msra.mxu0 0.0
        %2632 = vmatprep.subr.mxu0 0.0
        %2633 = vmatpush2.msra.mxu0 0.0
        %2634 = vmatprep.subr.mxu0 0.0
        %2635 = vmatpush2.msra.mxu0 0.0
        %2636 = vmatprep.subr.mxu0 0.0
        %2637 = vmatpush2.msra.mxu0 0.0
        %2638 = vmatprep.subr.mxu0 0.0
        %2639 = vmatpush2.msra.mxu0 0.0
        %2640 = vmatprep.subr.mxu0 0.0
        %2641 = vmatpush2.msra.mxu0 0.0
        %2642 = vmatprep.subr.mxu0 0.0
        %2643 = vmatpush2.msra.mxu0 0.0
        %2644 = vmatprep.subr.mxu0 0.0
        %2645 = vmatpush2.msra.mxu0 0.0
        %2646 = vmatprep.subr.mxu0 0.0
        %2647 = vmatpush2.msra.mxu0 0.0
        %2648 = vmatprep.subr.mxu0 0.0
        %2649 = vmatpush2.msra.mxu0 0.0
        %2650 = vmatprep.subr.mxu0 0.0
        %2651 = vmatpush2.msra.mxu0 0.0
        %2652 = vmatprep.subr.mxu0 0.0
        %2653 = vmatpush2.msra.mxu0 0.0
        %2654 = vmatprep.subr.mxu0 0.0
        %2655 = vmatpush2.msra.mxu0 0.0
        %2656 = vmatprep.subr.mxu0 0.0
        %2657 = vmatpush2.msra.mxu0 0.0
        %2658 = vmatprep.subr.mxu0 0.0
        %2659 = vmatpush2.msra.mxu0 0.0
        %2660 = vmatprep.mubr.f32.mxu0 0.0
        %2661 = vmatmul.mubr.f32.gmra.mxu0 %v2594
        %v2662 = vpop.f32.mrf.mxu0
        %v2663 = vadd.f32 0.0, %v2662
        %v2664 = vpop.f32.mrf.mxu0
        %2665 = vdwg.mxu0
        %2666 = vrot.lane.b32.xlu0 %v2101, 104
        %v2667 = vpop.permute.xlu0 %2666
        %2668 = vrot.lane.b32.xlu0 %v2168, 104
        %v2669 = vpop.permute.xlu0 %2668
        %v2670 = vsel %vm1070, %v2667, 0
        %v2672 = vsel %vm1070, %v2669, 0
        %2674 = vmatprep.subr.mxu0 0.0
        %2675 = vmatpush1.xpose.msra.mxu0 0.0
        %2676 = vmatprep.subr.mxu0 0.0
        %2677 = vmatpush1.xpose.msra.mxu0 0.0
        %2678 = vmatprep.subr.mxu0 0.0
        %2679 = vmatpush1.xpose.msra.mxu0 0.0
        %2680 = vmatprep.subr.mxu0 0.0
        %2681 = vmatpush1.xpose.msra.mxu0 0.0
        %2682 = vmatprep.subr.mxu0 0.0
        %2683 = vmatpush1.xpose.msra.mxu0 0.0
        %2684 = vmatprep.subr.mxu0 0.0
        %2685 = vmatpush1.xpose.msra.mxu0 0.0
        %2686 = vmatprep.subr.mxu0 0.0
        %2687 = vmatpush1.xpose.msra.mxu0 0.0
        %2688 = vmatprep.subr.mxu0 0.0
        %2689 = vmatpush1.xpose.msra.mxu0 0.0
        %2690 = vmatprep.subr.mxu0 0.0
        %2691 = vmatpush1.xpose.msra.mxu0 0.0
        %2692 = vmatprep.subr.mxu0 0.0
        %2693 = vmatpush1.xpose.msra.mxu0 0.0
        %2694 = vmatprep.subr.mxu0 0.0
        %2695 = vmatpush1.xpose.msra.mxu0 0.0
        %2696 = vmatprep.subr.mxu0 0.0
        %2697 = vmatpush1.xpose.msra.mxu0 0.0
        %2698 = vmatprep.subr.mxu0 0.0
        %2699 = vmatpush1.xpose.msra.mxu0 0.0
        %2700 = vmatprep.subr.mxu0 0.0
        %2701 = vmatpush1.xpose.msra.mxu0 0.0
        %2702 = vmatprep.subr.mxu0 0.0
        %2703 = vmatpush1.xpose.msra.mxu0 0.0
        %2704 = vmatprep.subr.mxu0 0.0
        %2705 = vmatpush1.xpose.msra.mxu0 %v2672
        %2706 = vmatprep.subr.mxu0 0.0
        %2707 = vmatpush2.xpose.msra.mxu0 0.0
        %2708 = vmatprep.subr.mxu0 0.0
        %2709 = vmatpush2.xpose.msra.mxu0 0.0
        %2710 = vmatprep.subr.mxu0 0.0
        %2711 = vmatpush2.xpose.msra.mxu0 0.0
        %2712 = vmatprep.subr.mxu0 0.0
        %2713 = vmatpush2.xpose.msra.mxu0 0.0
        %2714 = vmatprep.subr.mxu0 0.0
        %2715 = vmatpush2.xpose.msra.mxu0 0.0
        %2716 = vmatprep.subr.mxu0 0.0
        %2717 = vmatpush2.xpose.msra.mxu0 0.0
        %2718 = vmatprep.subr.mxu0 0.0
        %2719 = vmatpush2.xpose.msra.mxu0 0.0
        %2720 = vmatprep.subr.mxu0 0.0
        %2721 = vmatpush2.xpose.msra.mxu0 0.0
        %2722 = vmatprep.subr.mxu0 0.0
        %2723 = vmatpush2.xpose.msra.mxu0 0.0
        %2724 = vmatprep.subr.mxu0 0.0
        %2725 = vmatpush2.xpose.msra.mxu0 0.0
        %2726 = vmatprep.subr.mxu0 0.0
        %2727 = vmatpush2.xpose.msra.mxu0 0.0
        %2728 = vmatprep.subr.mxu0 0.0
        %2729 = vmatpush2.xpose.msra.mxu0 0.0
        %2730 = vmatprep.subr.mxu0 0.0
        %2731 = vmatpush2.xpose.msra.mxu0 0.0
        %2732 = vmatprep.subr.mxu0 0.0
        %2733 = vmatpush2.xpose.msra.mxu0 0.0
        %2734 = vmatprep.subr.mxu0 0.0
        %2735 = vmatpush2.xpose.msra.mxu0 0.0
        %2736 = vmatprep.subr.mxu0 0.0
        %2737 = vmatpush2.xpose.msra.mxu0 0.0
        %2738 = vmatprep.mubr.f32.mxu0 0.0
        %2739 = vmatmul.mubr.f32.gmra.mxu0 %v2670
        %v2740 = vpop.f32.mrf.mxu0
        %v2741 = vadd.f32 0.0, %v2740
        %v2742 = vpop.f32.mrf.mxu0
        %2743 = vdwg.mxu0
        %v2744 = vsel %vm1070, %v2741, -inf
        %2745 = vmax.xlane.f32.xlu0 %v2744
        %v2746 = vpop.xlane.xlu0 %2745
        %v2747 = vsub.f32 %v2741, %v2746
        %v2748 = vmul.f32 %v2747, 1.442695
        %v2749 = vpow.pop %v2748
        %v2750 = vsel %vm1070, %v2749, 0.0
        %2751 = vadd.xlane.f32.xlu0 %v2750
        %v2752 = vpop.xlane.xlu0 %2751
        %v2753 = vrcp.pop %v2752
        %v2754 = vmul.f32 %v2749, %v2753
        %2755 = vrot.lane.b32.xlu0 %v2168, 72
        %v2756 = vpop.permute.xlu0 %2755
        %v2759 = vsel %vm1070, %v2754, 0
        %2761 = vmatprep.subr.mxu0 0.0
        %2762 = vmatpush1.msra.mxu0 0.0
        %2763 = vmatprep.subr.mxu0 0.0
        %2764 = vmatpush1.msra.mxu0 0.0
        %2765 = vmatprep.subr.mxu0 0.0
        %2766 = vmatpush1.msra.mxu0 0.0
        %2767 = vmatprep.subr.mxu0 0.0
        %2768 = vmatpush1.msra.mxu0 0.0
        %2769 = vmatprep.subr.mxu0 0.0
        %2770 = vmatpush1.msra.mxu0 0.0
        %2771 = vmatprep.subr.mxu0 0.0
        %2772 = vmatpush1.msra.mxu0 0.0
        %2773 = vmatprep.subr.mxu0 0.0
        %2774 = vmatpush1.msra.mxu0 0.0
        %2775 = vmatprep.subr.mxu0 0.0
        %2776 = vmatpush1.msra.mxu0 0.0
        %2777 = vmatprep.subr.mxu0 0.0
        %2778 = vmatpush1.msra.mxu0 0.0
        %2779 = vmatprep.subr.mxu0 0.0
        %2780 = vmatpush1.msra.mxu0 0.0
        %2781 = vmatprep.subr.mxu0 0.0
        %2782 = vmatpush1.msra.mxu0 0.0
        %2783 = vmatprep.subr.mxu0 0.0
        %2784 = vmatpush1.msra.mxu0 0.0
        %2785 = vmatprep.subr.mxu0 0.0
        %2786 = vmatpush1.msra.mxu0 0.0
        %2787 = vmatprep.subr.mxu0 0.0
        %2788 = vmatpush1.msra.mxu0 0.0
        %2789 = vmatprep.subr.mxu0 0.0
        %2790 = vmatpush1.msra.mxu0 0.0
        %2791 = vmatprep.subr.mxu0 0.0
        %2792 = vmatpush1.msra.mxu0 %v2756
        %2793 = vmatprep.subr.mxu0 0.0
        %2794 = vmatpush2.msra.mxu0 0.0
        %2795 = vmatprep.subr.mxu0 0.0
        %2796 = vmatpush2.msra.mxu0 0.0
        %2797 = vmatprep.subr.mxu0 0.0
        %2798 = vmatpush2.msra.mxu0 0.0
        %2799 = vmatprep.subr.mxu0 0.0
        %2800 = vmatpush2.msra.mxu0 0.0
        %2801 = vmatprep.subr.mxu0 0.0
        %2802 = vmatpush2.msra.mxu0 0.0
        %2803 = vmatprep.subr.mxu0 0.0
        %2804 = vmatpush2.msra.mxu0 0.0
        %2805 = vmatprep.subr.mxu0 0.0
        %2806 = vmatpush2.msra.mxu0 0.0
        %2807 = vmatprep.subr.mxu0 0.0
        %2808 = vmatpush2.msra.mxu0 0.0
        %2809 = vmatprep.subr.mxu0 0.0
        %2810 = vmatpush2.msra.mxu0 0.0
        %2811 = vmatprep.subr.mxu0 0.0
        %2812 = vmatpush2.msra.mxu0 0.0
        %2813 = vmatprep.subr.mxu0 0.0
        %2814 = vmatpush2.msra.mxu0 0.0
        %2815 = vmatprep.subr.mxu0 0.0
        %2816 = vmatpush2.msra.mxu0 0.0
        %2817 = vmatprep.subr.mxu0 0.0
        %2818 = vmatpush2.msra.mxu0 0.0
        %2819 = vmatprep.subr.mxu0 0.0
        %2820 = vmatpush2.msra.mxu0 0.0
        %2821 = vmatprep.subr.mxu0 0.0
        %2822 = vmatpush2.msra.mxu0 0.0
        %2823 = vmatprep.subr.mxu0 0.0
        %2824 = vmatpush2.msra.mxu0 0.0
        %2825 = vmatprep.mubr.f32.mxu0 0.0
        %2826 = vmatmul.mubr.f32.gmra.mxu0 %v2759
        %v2827 = vpop.f32.mrf.mxu0
        %v2828 = vadd.f32 0.0, %v2827
        %v2829 = vpop.f32.mrf.mxu0
        %2830 = vdwg.mxu0
        %2832 = vrot.lane.b32.xlu0 %v2498, 8
        %v2833 = vpop.permute.xlu0 %2832
        %2836 = vrot.lane.b32.xlu0 %v2663, 16
        %v2837 = vpop.permute.xlu0 %2836
        %2840 = vrot.lane.b32.xlu0 %v2828, 24
        %v2841 = vpop.permute.xlu0 %2840
        %v2843 = vsel %vm1070, %v2333, %v2833
        %v2844 = vsel %vm1749, %v2843, %v2837
        %v2845 = vsel %vm1751, %v2844, %v2841
        %v2846 = vld [vmem:[%s18] sm:$0xf]
        %v2847 = vld [vmem:[%s18 + $0x4] sm:$0xf]
        %v2848 = vld [vmem:[%s18 + $0x8] sm:$0xf]
        %v2849 = vld [vmem:[%s18 + $0xc] sm:$0xf]
        %v2850 = vld [vmem:[#allocation9] sm:$0x1]
        %v2851 = vpack.c.bf16 %v2845, %v2845
        %v2853 = vlaneseq
        %v2854 = vshrl.u32 %v2853, 7
        %v2855 = vsub.s32 0, %v2854
        %v2856 = vrot.slane %v2850, %v2855
        %v2862 = vunpack.c.l.b16 %v2846
        %v2863 = vunpack.c.l.b16 %v2847
        %v2864 = vunpack.c.l.b16 %v2848
        %v2865 = vunpack.c.l.b16 %v2849
        %v2866 = vpack.c.b16 %v2863, %v2862
        %v2867 = vpack.c.b16 %v2865, %v2864
        %v2871 = vsel %vm1023, %v2851, 0
        %2873 = vmatprep.subr.bf16.mxu0 0
        %2874 = vmatpush1.bf16.msra.mxu0 0
        %2875 = vmatprep.subr.bf16.mxu0 0
        %2876 = vmatpush1.bf16.msra.mxu0 0
        %2877 = vmatprep.subr.bf16.mxu0 0
        %2878 = vmatpush1.bf16.msra.mxu0 0
        %2879 = vmatprep.subr.bf16.mxu0 0
        %2880 = vmatpush1.bf16.msra.mxu0 0
        %2881 = vmatprep.subr.bf16.mxu0 0
        %2882 = vmatpush1.bf16.msra.mxu0 0
        %2883 = vmatprep.subr.bf16.mxu0 0
        %2884 = vmatpush1.bf16.msra.mxu0 0
        %2885 = vmatprep.subr.bf16.mxu0 0
        %2886 = vmatpush1.bf16.msra.mxu0 %v2867
        %2887 = vmatprep.subr.bf16.mxu0 0
        %2888 = vmatpush1.bf16.msra.mxu0 %v2866
        %2889 = vmatprep.subr.bf16.mxu0 0
        %2890 = vmatpush2.bf16.msra.mxu0 0
        %2891 = vmatprep.subr.bf16.mxu0 0
        %2892 = vmatpush2.bf16.msra.mxu0 0
        %2893 = vmatprep.subr.bf16.mxu0 0
        %2894 = vmatpush2.bf16.msra.mxu0 0
        %2895 = vmatprep.subr.bf16.mxu0 0
        %2896 = vmatpush2.bf16.msra.mxu0 0
        %2897 = vmatprep.subr.bf16.mxu0 0
        %2898 = vmatpush2.bf16.msra.mxu0 0
        %2899 = vmatprep.subr.bf16.mxu0 0
        %2900 = vmatpush2.bf16.msra.mxu0 0
        %2901 = vmatprep.subr.bf16.mxu0 0
        %2902 = vmatpush2.bf16.msra.mxu0 0
        %2903 = vmatprep.subr.bf16.mxu0 0
        %2904 = vmatpush2.bf16.msra.mxu0 0
        %2905 = vmatprep.mubr.bf16.mxu0 0
        %2906 = vmatmul.mubr.bf16.gmra.mxu0 %v2871
        %v2907 = vpop.f32.mrf.mxu0
        %v2908 = vadd.f32 %v2856, %v2907
        %v2909 = vpop.f32.mrf.mxu0
        %v2910 = vpop.f32.mrf.mxu0
        %v2911 = vpop.f32.mrf.mxu0
        %2912 = vdwg.mxu0
        %v2913 = vadd.f32 %v2908, %v2038
        %v2914 = vld [vmem:[#allocation10] sm:$0x1]
        %v2915 = vld [vmem:[#allocation12] sm:$0x1]
        %v2916 = vsel %vm1023, %v2913, 0.0
        %2917 = vadd.xlane.f32.xlu0 %v2916
        %v2918 = vpop.xlane.xlu0 %2917
        %v2919 = vmul.f32 %v2918, %v1826
        %v2920 = vmul.f32 %v2913, %v2913
        %v2921 = vsel %vm1023, %v2920, 0.0
        %2922 = vadd.xlane.f32.xlu0 %v2921
        %v2923 = vpop.xlane.xlu0 %2922
        %v2924 = vmul.f32 %v2923, %v1826
        %v2925 = vmul.f32 %v2919, %v2919
        %v2926 = vsub.f32 %v2924, %v2925
        %v2927 = vmax.f32 %v2926, 0.0
        %v2928 = vsub.f32 %v2913, %v2919
        %v2929 = vadd.f32 %v2927, 1e-05
        %v2930 = vrsqrt.pop %v2929
        %v2931 = vmul.f32 %v2928, %v2930
        %v2933 = vlaneseq
        %v2934 = vshrl.u32 %v2933, 7
        %v2935 = vsub.s32 0, %v2934
        %v2936 = vrot.slane %v2914, %v2935
        %v2938 = vmul.f32 %v2931, %v2936
        %v2940 = vlaneseq
        %v2941 = vshrl.u32 %v2940, 7
        %v2942 = vsub.s32 0, %v2941
        %v2943 = vrot.slane %v2915, %v2942
        %v2945 = vadd.f32 %v2938, %v2943
        %v2946 = vld [vmem:[%s22] sm:$0xf]
        %v2947 = vld [vmem:[%s22 + $0x4] sm:$0xf]
        %v2948 = vld [vmem:[%s22 + $0x8] sm:$0xf]
        %v2949 = vld [vmem:[%s22 + $0xc] sm:$0xf]
        %v2950 = vld [vmem:[#allocation13] sm:$0x1]
        %v2951 = vld [vmem:[%s24] sm:$0xf]
        %v2952 = vld [vmem:[%s24 + $0x4] sm:$0xf]
        %v2953 = vld [vmem:[%s24 + $0x8] sm:$0xf]
        %v2954 = vld [vmem:[%s24 + $0xc] sm:$0xf]
        %v2955 = vld [vmem:[%s24 + $0x10] sm:$0xf]
        %v2956 = vld [vmem:[%s24 + $0x14] sm:$0xf]
        %v2957 = vld [vmem:[%s24 + $0x18] sm:$0xf]
        %v2958 = vld [vmem:[%s24 + $0x1c] sm:$0xf]
        %v2959 = vld [vmem:[#allocation15] sm:$0x1]
        %v2960 = vpack.c.bf16 %v2945, %v2945
        %v2962 = vlaneseq
        %v2963 = vshrl.u32 %v2962, 7
        %v2964 = vsub.s32 0, %v2963
        %v2965 = vrot.slane %v2950, %v2964
        %v2971 = vunpack.c.l.b16 %v2946
        %v2972 = vunpack.c.l.b16 %v2947
        %v2973 = vunpack.c.l.b16 %v2948
        %v2974 = vunpack.c.l.b16 %v2949
        %v2975 = vpack.c.b16 %v2972, %v2971
        %v2976 = vpack.c.b16 %v2974, %v2973
        %v2980 = vsel %vm1023, %v2960, 0
        %2982 = vmatprep.subr.bf16.mxu0 0
        %2983 = vmatpush1.bf16.msra.mxu0 0
        %2984 = vmatprep.subr.bf16.mxu0 0
        %2985 = vmatpush1.bf16.msra.mxu0 0
        %2986 = vmatprep.subr.bf16.mxu0 0
        %2987 = vmatpush1.bf16.msra.mxu0 0
        %2988 = vmatprep.subr.bf16.mxu0 0
        %2989 = vmatpush1.bf16.msra.mxu0 0
        %2990 = vmatprep.subr.bf16.mxu0 0
        %2991 = vmatpush1.bf16.msra.mxu0 0
        %2992 = vmatprep.subr.bf16.mxu0 0
        %2993 = vmatpush1.bf16.msra.mxu0 0
        %2994 = vmatprep.subr.bf16.mxu0 0
        %2995 = vmatpush1.bf16.msra.mxu0 %v2976
        %2996 = vmatprep.subr.bf16.mxu0 0
        %2997 = vmatpush1.bf16.msra.mxu0 %v2975
        %2998 = vmatprep.subr.bf16.mxu0 0
        %2999 = vmatpush2.bf16.msra.mxu0 0
        %3000 = vmatprep.subr.bf16.mxu0 0
        %3001 = vmatpush2.bf16.msra.mxu0 0
        %3002 = vmatprep.subr.bf16.mxu0 0
        %3003 = vmatpush2.bf16.msra.mxu0 0
        %3004 = vmatprep.subr.bf16.mxu0 0
        %3005 = vmatpush2.bf16.msra.mxu0 0
        %3006 = vmatprep.subr.bf16.mxu0 0
        %3007 = vmatpush2.bf16.msra.mxu0 0
        %3008 = vmatprep.subr.bf16.mxu0 0
        %3009 = vmatpush2.bf16.msra.mxu0 0
        %3010 = vmatprep.subr.bf16.mxu0 0
        %3011 = vmatpush2.bf16.msra.mxu0 0
        %3012 = vmatprep.subr.bf16.mxu0 0
        %3013 = vmatpush2.bf16.msra.mxu0 0
        %3014 = vmatprep.mubr.bf16.mxu0 0
        %3015 = vmatmul.mubr.bf16.gmra.mxu0 %v2980
        %v3016 = vpop.f32.mrf.mxu0
        %v3017 = vadd.f32 %v2965, %v3016
        %v3018 = vpop.f32.mrf.mxu0
        %v3019 = vpop.f32.mrf.mxu0
        %v3020 = vpop.f32.mrf.mxu0
        %3021 = vdwg.mxu0
        %v3022 = vmax.f32 %v3017, 0.0
        %v3023 = vpack.c.bf16 %v3022, %v3022
        %v3025 = vlaneseq
        %v3026 = vshrl.u32 %v3025, 7
        %v3027 = vsub.s32 0, %v3026
        %v3028 = vrot.slane %v2959, %v3027
        %v3038 = vunpack.c.l.b16 %v2951
        %v3039 = vunpack.c.l.b16 %v2952
        %v3040 = vunpack.c.l.b16 %v2953
        %v3041 = vunpack.c.l.b16 %v2954
        %v3042 = vunpack.c.l.b16 %v2955
        %v3043 = vunpack.c.l.b16 %v2956
        %v3044 = vunpack.c.l.b16 %v2957
        %v3045 = vunpack.c.l.b16 %v2958
        %v3046 = vpack.c.b16 %v3039, %v3038
        %v3047 = vpack.c.b16 %v3041, %v3040
        %v3048 = vpack.c.b16 %v3043, %v3042
        %v3049 = vpack.c.b16 %v3045, %v3044
        %v3055 = vsel %vm1962, %v3023, 0
        %3057 = vmatprep.subr.bf16.mxu0 0
        %3058 = vmatpush1.bf16.msra.mxu0 0
        %3059 = vmatprep.subr.bf16.mxu0 0
        %3060 = vmatpush1.bf16.msra.mxu0 0
        %3061 = vmatprep.subr.bf16.mxu0 0
        %3062 = vmatpush1.bf16.msra.mxu0 0
        %3063 = vmatprep.subr.bf16.mxu0 0
        %3064 = vmatpush1.bf16.msra.mxu0 0
        %3065 = vmatprep.subr.bf16.mxu0 0
        %3066 = vmatpush1.bf16.msra.mxu0 %v3049
        %3067 = vmatprep.subr.bf16.mxu0 0
        %3068 = vmatpush1.bf16.msra.mxu0 %v3048
        %3069 = vmatprep.subr.bf16.mxu0 0
        %3070 = vmatpush1.bf16.msra.mxu0 %v3047
        %3071 = vmatprep.subr.bf16.mxu0 0
        %3072 = vmatpush1.bf16.msra.mxu0 %v3046
        %3073 = vmatprep.subr.bf16.mxu0 0
        %3074 = vmatpush2.bf16.msra.mxu0 0
        %3075 = vmatprep.subr.bf16.mxu0 0
        %3076 = vmatpush2.bf16.msra.mxu0 0
        %3077 = vmatprep.subr.bf16.mxu0 0
        %3078 = vmatpush2.bf16.msra.mxu0 0
        %3079 = vmatprep.subr.bf16.mxu0 0
        %3080 = vmatpush2.bf16.msra.mxu0 0
        %3081 = vmatprep.subr.bf16.mxu0 0
        %3082 = vmatpush2.bf16.msra.mxu0 0
        %3083 = vmatprep.subr.bf16.mxu0 0
        %3084 = vmatpush2.bf16.msra.mxu0 0
        %3085 = vmatprep.subr.bf16.mxu0 0
        %3086 = vmatpush2.bf16.msra.mxu0 0
        %3087 = vmatprep.subr.bf16.mxu0 0
        %3088 = vmatpush2.bf16.msra.mxu0 0
        %3089 = vmatprep.mubr.bf16.mxu0 0
        %3090 = vmatmul.mubr.bf16.gmra.mxu0 %v3055
        %v3091 = vpop.f32.mrf.mxu0
        %v3092 = vadd.f32 %v3028, %v3091
        %v3093 = vpop.f32.mrf.mxu0
        %v3094 = vpop.f32.mrf.mxu0
        %v3095 = vpop.f32.mrf.mxu0
        %3096 = vdwg.mxu0
        %v3097 = vadd.f32 %v3092, %v2945
        %v3098 = vld [vmem:[#allocation16] sm:$0x1]
        %v3099 = vld [vmem:[#allocation18] sm:$0x1]
        %v3100 = vsel %vm1023, %v3097, 0.0
        %3101 = vadd.xlane.f32.xlu0 %v3100
        %v3102 = vpop.xlane.xlu0 %3101
        %v3103 = vmul.f32 %v3102, %v1826
        %v3104 = vmul.f32 %v3097, %v3097
        %v3105 = vsel %vm1023, %v3104, 0.0
        %3106 = vadd.xlane.f32.xlu0 %v3105
        %v3107 = vpop.xlane.xlu0 %3106
        %v3108 = vmul.f32 %v3107, %v1826
        %v3109 = vmul.f32 %v3103, %v3103
        %v3110 = vsub.f32 %v3108, %v3109
        %v3111 = vmax.f32 %v3110, 0.0
        %v3112 = vsub.f32 %v3097, %v3103
        %v3113 = vadd.f32 %v3111, 1e-05
        %v3114 = vrsqrt.pop %v3113
        %v3115 = vmul.f32 %v3112, %v3114
        %v3117 = vlaneseq
        %v3118 = vshrl.u32 %v3117, 7
        %v3119 = vsub.s32 0, %v3118
        %v3120 = vrot.slane %v3098, %v3119
        %v3122 = vmul.f32 %v3115, %v3120
        %v3124 = vlaneseq
        %v3125 = vshrl.u32 %v3124, 7
        %v3126 = vsub.s32 0, %v3125
        %v3127 = vrot.slane %v3099, %v3126
        %v3129 = vadd.f32 %v3122, %v3127
        %3130 = vst.msk [vmem:[%s995] sm:$0xff] %vm1023, %v3129
        %p3131 = scmp.lt.s32.totalorder %s45, 1
        %s3132 = scalar_select %p3131, %s45, 1
        %s3133 = smul.addr %s3132, 8
        %s3134 = scalar_lea.vmem %s28, %s3133
        // Predicated region
        $region177: #{transformer_nmt_mh_forward.8} parent=131 // pred_check
          %p3135 = pneg %p661
        $region178: #{transformer_nmt_mh_forward.8} parent=131 // pred_check_branch
          %3137 = sbr.rel (%p3135) target = $region180
        $region179: #{transformer_nmt_mh_forward.8} parent=131 // pred_region
          _
        $region180: #{transformer_nmt_mh_forward.8} parent=131 // pred_fallthru
          _
      $region132: #{transformer_nmt_mh_forward.8} parent=5 // pred_fallthru
        _
      %p3138 = scmp.le.s32.totalorder 2, %s40
      // Predicated region
      $region181: #{transformer_nmt_mh_forward.8} parent=5 // pred_check
        %p3139 = pneg %p3138
      $region182: #{transformer_nmt_mh_forward.8} parent=5 // pred_check_branch
        %3141 = sbr.rel (%p3139) target = $region184
      $region183: #{transformer_nmt_mh_forward.8} parent=5 // pred_region
        %s3142 = ssub.s32 %s40, 2
        // Predicated region
        $region185: #{transformer_nmt_mh_forward.8} parent=183 // pred_check
          %p3143 = pneg %p667
        $region186: #{transformer_nmt_mh_forward.8} parent=183 // pred_check_branch
          %3145 = sbr.rel (%p3143) target = $region188
        $region187: #{transformer_nmt_mh_forward.8} parent=183 // pred_region
          %p3146 = scmp.lt.s32.totalorder %s46, 1
          %s3147 = scalar_select %p3146, %s46, 1
          %s3148 = smul.addr %s3147, 8
          %s3149 = scalar_lea.vmem %s28, %s3148
        $region188: #{transformer_nmt_mh_forward.8} parent=183 // pred_fallthru
          _
      $region184: #{transformer_nmt_mh_forward.8} parent=5 // pred_fallthru
        _
    $region6: #{transformer_nmt_mh_forward.8} parent=1 // loop_footer
      %s44 = sadd.s32 1, %s40
    $region7: #{transformer_nmt_mh_forward.8} parent=1 // loop_footer_branch
      %39 = sbr.rel target = $region3
    $region8: #{transformer_nmt_mh_forward.8} parent=1 // loop_exit
      _
    %3150 = vsyncpa [#allocation3], 1
    %s3151 = scalar_lea.sflag [#allocation3], 1
    %3152 = vsyncpa %s3151, 1
    %3153 = vsyncpa [#allocation5], 1
    %3154 = vsyncpa [#allocation8], 1
    %3155 = vsyncpa [#allocation11], 1
    %3156 = vsyncpa [#allocation14], 1
    %3157 = vsyncpa [#allocation17], 1

// kernel: transformer_nmt_mh_forward.7
$region0: #{transformer_nmt_mh_forward.7}
  #allocation0 [shape = 'u32[]', space=smem, size = 0x4, offset = 0x4, fixed_abs, tag = 'smem constant byte address 0x4 - core index']
  #allocation1 [shape = 'u32[144,128]{1,0:T(1,128)}', space=vmem, size = 0x12000, scoped, tag = 'internal scratch']
  %s0 = inlined_call_operand.vmem [shape: f32[2,8,32], index: 0, kind: input, shape index: {}]
  %s1 = inlined_call_operand.vmem [shape: f32[2,8,32], index: 1, kind: input, shape index: {}]
  %s2 = inlined_call_operand.vmem [shape: bf16[32,96], index: 2, kind: input, shape index: {}]
  %s3 = inlined_call_operand.vmem [shape: f32[1,96], index: 3, kind: input, shape index: {}]
  %s4 = inlined_call_operand.vmem [shape: bf16[32,32], index: 4, kind: input, shape index: {}]
  %s5 = inlined_call_operand.vmem [shape: f32[1,32], index: 5, kind: input, shape index: {}]
  %s6 = inlined_call_operand.vmem [shape: f32[1,32], index: 6, kind: input, shape index: {}]
  %s7 = inlined_call_operand.vmem [shape: f32[1,32], index: 7, kind: input, shape index: {}]
  %s8 = inlined_call_operand.vmem [shape: bf16[32,64], index: 8, kind: input, shape index: {}]
  %s9 = inlined_call_operand.vmem [shape: f32[1,64], index: 9, kind: input, shape index: {}]
  %s10 = inlined_call_operand.vmem [shape: bf16[64,32], index: 10, kind: input, shape index: {}]
  %s11 = inlined_call_operand.vmem [shape: f32[1,32], index: 11, kind: input, shape index: {}]
  %s12 = inlined_call_operand.vmem [shape: f32[1,32], index: 12, kind: input, shape index: {}]
  %s13 = inlined_call_operand.vmem [shape: f32[1,32], index: 13, kind: input, shape index: {}]
  %s14 = inlined_call_operand.vmem [shape: bf16[32,32], index: 14, kind: input, shape index: {}]
  %s15 = inlined_call_operand.vmem [shape: f32[1,32], index: 15, kind: input, shape index: {}]
  %s16 = inlined_call_operand.vmem [shape: bf16[32,64], index: 16, kind: input, shape index: {}]
  %s17 = inlined_call_operand.vmem [shape: f32[1,64], index: 17, kind: input, shape index: {}]
  %s18 = inlined_call_operand.vmem [shape: bf16[32,32], index: 18, kind: input, shape index: {}]
  %s19 = inlined_call_operand.vmem [shape: f32[1,32], index: 19, kind: input, shape index: {}]
  %s20 = inlined_call_operand.vmem [shape: f32[1,32], index: 20, kind: input, shape index: {}]
  %s21 = inlined_call_operand.vmem [shape: f32[1,32], index: 21, kind: input, shape index: {}]
  %s22 = inlined_call_operand.vmem [shape: bf16[32,64], index: 22, kind: input, shape index: {}]
  %s23 = inlined_call_operand.vmem [shape: f32[1,64], index: 23, kind: input, shape index: {}]
  %s24 = inlined_call_operand.vmem [shape: bf16[64,32], index: 24, kind: input, shape index: {}]
  %s25 = inlined_call_operand.vmem [shape: f32[1,32], index: 25, kind: input, shape index: {}]
  %s26 = inlined_call_operand.vmem [shape: f32[1,32], index: 26, kind: input, shape index: {}]
  %s27 = inlined_call_operand.vmem [shape: f32[1,32], index: 27, kind: input, shape index: {}]
  %s28 = inlined_call_operand.vmem [shape: f32[2,8,32], index: 28, kind: output, shape index: {}]
  %s29 = sld [smem:[#allocation0]]
  $region145: #{transformer_nmt_mh_forward.7} parent=0
    _
  %s31 = ssub.s32 1, %s29
  %s32 = scalar_select 0, %s31, %s29
  loop: start=0, step=1, limit=4
  $region2: #{transformer_nmt_mh_forward.7} parent=0 // loop_pre_header
    _
  $region3: #{transformer_nmt_mh_forward.7} parent=0 // loop_header
    %s34 = sphi 0, %s38
    %p35 = scmp.ge.s32.totalorder %s34, 4
    %s44 = sphi 0, %s46
    %s47 = sphi 0, %s44
    %s48 = sphi 0, %s47
    %s64 = sphi 0, %s48
    %s70 = sphi 0, %s72
    %s73 = sphi 0, %s70
    %s74 = sphi 0, %s73
    %s90 = sphi 0, %s74
    %s94 = sphi 0, %s94
    %s96 = sphi 0, %s94
    %s97 = sphi 0, %s96
    %s111 = sphi 0, %s97
    %s115 = sphi 0, %s115
    %s117 = sphi 0, %s115
    %s118 = sphi 0, %s117
    %s132 = sphi 0, %s118
    %s136 = sphi 0, %s136
    %s138 = sphi 0, %s136
    %s139 = sphi 0, %s138
    %s153 = sphi 0, %s139
    %s157 = sphi 0, %s157
    %s159 = sphi 0, %s157
    %s160 = sphi 0, %s159
    %s174 = sphi 0, %s160
    %s178 = sphi 0, %s178
    %s180 = sphi 0, %s178
    %s181 = sphi 0, %s180
    %s195 = sphi 0, %s181
    %s199 = sphi 0, %s199
    %s201 = sphi 0, %s199
    %s202 = sphi 0, %s201
    %s216 = sphi 0, %s202
    %s220 = sphi 0, %s220
    %s222 = sphi 0, %s220
    %s223 = sphi 0, %s222
    %s237 = sphi 0, %s223
    %s241 = sphi 0, %s241
    %s243 = sphi 0, %s241
    %s244 = sphi 0, %s243
    %s258 = sphi 0, %s244
    %s262 = sphi 0, %s262
    %s264 = sphi 0, %s262
    %s265 = sphi 0, %s264
    %s279 = sphi 0, %s265
    %s283 = sphi 0, %s283
    %s285 = sphi 0, %s283
    %s286 = sphi 0, %s285
    %s300 = sphi 0, %s286
    %s304 = sphi 0, %s304
    %s306 = sphi 0, %s304
    %s307 = sphi 0, %s306
    %s321 = sphi 0, %s307
    %s325 = sphi 0, %s325
    %s327 = sphi 0, %s325
    %s328 = sphi 0, %s327
    %s342 = sphi 0, %s328
    %s346 = sphi 0, %s346
    %s348 = sphi 0, %s346
    %s349 = sphi 0, %s348
    %s363 = sphi 0, %s349
    %s367 = sphi 0, %s367
    %s369 = sphi 0, %s367
    %s370 = sphi 0, %s369
    %s384 = sphi 0, %s370
    %s388 = sphi 0, %s388
    %s390 = sphi 0, %s388
    %s391 = sphi 0, %s390
    %s405 = sphi 0, %s391
    %s409 = sphi 0, %s409
    %s411 = sphi 0, %s409
    %s412 = sphi 0, %s411
    %s426 = sphi 0, %s412
    %s430 = sphi 0, %s430
    %s432 = sphi 0, %s430
    %s433 = sphi 0, %s432
    %s447 = sphi 0, %s433
    %s451 = sphi 0, %s451
    %s453 = sphi 0, %s451
    %s454 = sphi 0, %s453
    %s468 = sphi 0, %s454
    %s472 = sphi 0, %s472
    %s474 = sphi 0, %s472
    %s475 = sphi 0, %s474
    %s489 = sphi 0, %s475
    %s493 = sphi 0, %s493
    %s495 = sphi 0, %s493
    %s496 = sphi 0, %s495
    %s510 = sphi 0, %s496
    %s514 = sphi 0, %s514
    %s516 = sphi 0, %s514
    %s517 = sphi 0, %s516
    %s531 = sphi 0, %s517
    %s535 = sphi 0, %s535
    %s537 = sphi 0, %s535
    %s538 = sphi 0, %s537
    %s552 = sphi 0, %s538
    %s556 = sphi 0, %s556
    %s558 = sphi 0, %s556
    %s559 = sphi 0, %s558
    %s573 = sphi 0, %s559
    %s577 = sphi 0, %s577
    %s579 = sphi 0, %s577
    %s580 = sphi 0, %s579
    %s594 = sphi 0, %s580
    %s598 = sphi 0, %s598
    %s600 = sphi 0, %s598
    %s601 = sphi 0, %s600
    %s615 = sphi 0, %s601
    %s619 = sphi 0, %s619
    %s621 = sphi 0, %s619
    %s622 = sphi 0, %s621
    %s636 = sphi 0, %s622
    %s642 = sphi 0, %s644
    %s645 = sphi 0, %s642
    %s646 = sphi 0, %s645
    %s662 = sphi 0, %s646
  $region4: #{transformer_nmt_mh_forward.7} parent=0 // loop_header_branch
    %37 = sbr.rel (%p35) target = $region8
  $region5: #{transformer_nmt_mh_forward.7} parent=0 // loop_body
    %s39 = ssub.s32 %s34, 1
    %s40 = ssub.s32 %s34, 2
    %s41 = sadd.s32 %s34, 1
    %s42 = ssub.s32 %s34, %s41
    %p43 = scmp.eq.s32.totalorder %s42, 0
    %s45 = sadd.s32 %s44, 1
    %s46 = scalar_select %p43, %s44, %s45
    %p49 = pneg %p43
    %p50 = scmp.eq.s32.totalorder %s34, 1
    %p51 = por %p49, %p50
    %p52 = scmp.ne.s32.totalorder %s44, %s47
    %p53 = scmp.eq.s32.totalorder %s34, 0
    %p54 = por %p52, %p53
    %p55 = scmp.ne.s32.totalorder %s44, %s47
    %p56 = scmp.eq.s32.totalorder %s39, 1
    %p57 = por %p55, %p56
    %p58 = scmp.ne.s32.totalorder %s47, %s48
    %p59 = scmp.eq.s32.totalorder %s39, 0
    %p60 = por %p58, %p59
    %p61 = scmp.ne.s32.totalorder %s47, %s48
    %p62 = scmp.eq.s32.totalorder %s40, 1
    %p63 = por %p61, %p62
    %p65 = scmp.ne.s32.totalorder %s48, %s64
    %p66 = scmp.eq.s32.totalorder %s40, 0
    %p67 = por %p65, %p66
    %s68 = ssub.s32 %s34, %s41
    %p69 = scmp.eq.s32.totalorder %s68, 0
    %s71 = sadd.s32 %s70, 1
    %s72 = scalar_select %p69, %s70, %s71
    %p75 = pneg %p69
    %p76 = scmp.eq.s32.totalorder %s34, 1
    %p77 = por %p75, %p76
    %p78 = scmp.ne.s32.totalorder %s70, %s73
    %p79 = scmp.eq.s32.totalorder %s34, 0
    %p80 = por %p78, %p79
    %p81 = scmp.ne.s32.totalorder %s70, %s73
    %p82 = scmp.eq.s32.totalorder %s39, 1
    %p83 = por %p81, %p82
    %p84 = scmp.ne.s32.totalorder %s73, %s74
    %p85 = scmp.eq.s32.totalorder %s39, 0
    %p86 = por %p84, %p85
    %p87 = scmp.ne.s32.totalorder %s73, %s74
    %p88 = scmp.eq.s32.totalorder %s40, 1
    %p89 = por %p87, %p88
    %p91 = scmp.ne.s32.totalorder %s74, %s90
    %p92 = scmp.eq.s32.totalorder %s40, 0
    %p93 = por %p91, %p92
    %s95 = sadd.s32 %s94, 1
    %p98 = scmp.eq.s32.totalorder %s34, 1
    %p99 = scmp.ne.s32.totalorder %s94, %s96
    %p100 = scmp.eq.s32.totalorder %s34, 0
    %p101 = por %p99, %p100
    %p102 = scmp.ne.s32.totalorder %s94, %s96
    %p103 = scmp.eq.s32.totalorder %s39, 1
    %p104 = por %p102, %p103
    %p105 = scmp.ne.s32.totalorder %s96, %s97
    %p106 = scmp.eq.s32.totalorder %s39, 0
    %p107 = por %p105, %p106
    %p108 = scmp.ne.s32.totalorder %s96, %s97
    %p109 = scmp.eq.s32.totalorder %s40, 1
    %p110 = por %p108, %p109
    %p112 = scmp.ne.s32.totalorder %s97, %s111
    %p113 = scmp.eq.s32.totalorder %s40, 0
    %p114 = por %p112, %p113
    %s116 = sadd.s32 %s115, 1
    %p119 = scmp.eq.s32.totalorder %s34, 1
    %p120 = scmp.ne.s32.totalorder %s115, %s117
    %p121 = scmp.eq.s32.totalorder %s34, 0
    %p122 = por %p120, %p121
    %p123 = scmp.ne.s32.totalorder %s115, %s117
    %p124 = scmp.eq.s32.totalorder %s39, 1
    %p125 = por %p123, %p124
    %p126 = scmp.ne.s32.totalorder %s117, %s118
    %p127 = scmp.eq.s32.totalorder %s39, 0
    %p128 = por %p126, %p127
    %p129 = scmp.ne.s32.totalorder %s117, %s118
    %p130 = scmp.eq.s32.totalorder %s40, 1
    %p131 = por %p129, %p130
    %p133 = scmp.ne.s32.totalorder %s118, %s132
    %p134 = scmp.eq.s32.totalorder %s40, 0
    %p135 = por %p133, %p134
    %s137 = sadd.s32 %s136, 1
    %p140 = scmp.eq.s32.totalorder %s34, 1
    %p141 = scmp.ne.s32.totalorder %s136, %s138
    %p142 = scmp.eq.s32.totalorder %s34, 0
    %p143 = por %p141, %p142
    %p144 = scmp.ne.s32.totalorder %s136, %s138
    %p145 = scmp.eq.s32.totalorder %s39, 1
    %p146 = por %p144, %p145
    %p147 = scmp.ne.s32.totalorder %s138, %s139
    %p148 = scmp.eq.s32.totalorder %s39, 0
    %p149 = por %p147, %p148
    %p150 = scmp.ne.s32.totalorder %s138, %s139
    %p151 = scmp.eq.s32.totalorder %s40, 1
    %p152 = por %p150, %p151
    %p154 = scmp.ne.s32.totalorder %s139, %s153
    %p155 = scmp.eq.s32.totalorder %s40, 0
    %p156 = por %p154, %p155
    %s158 = sadd.s32 %s157, 1
    %p161 = scmp.eq.s32.totalorder %s34, 1
    %p162 = scmp.ne.s32.totalorder %s157, %s159
    %p163 = scmp.eq.s32.totalorder %s34, 0
    %p164 = por %p162, %p163
    %p165 = scmp.ne.s32.totalorder %s157, %s159
    %p166 = scmp.eq.s32.totalorder %s39, 1
    %p167 = por %p165, %p166
    %p168 = scmp.ne.s32.totalorder %s159, %s160
    %p169 = scmp.eq.s32.totalorder %s39, 0
    %p170 = por %p168, %p169
    %p171 = scmp.ne.s32.totalorder %s159, %s160
    %p172 = scmp.eq.s32.totalorder %s40, 1
    %p173 = por %p171, %p172
    %p175 = scmp.ne.s32.totalorder %s160, %s174
    %p176 = scmp.eq.s32.totalorder %s40, 0
    %p177 = por %p175, %p176
    %s179 = sadd.s32 %s178, 1
    %p182 = scmp.eq.s32.totalorder %s34, 1
    %p183 = scmp.ne.s32.totalorder %s178, %s180
    %p184 = scmp.eq.s32.totalorder %s34, 0
    %p185 = por %p183, %p184
    %p186 = scmp.ne.s32.totalorder %s178, %s180
    %p187 = scmp.eq.s32.totalorder %s39, 1
    %p188 = por %p186, %p187
    %p189 = scmp.ne.s32.totalorder %s180, %s181
    %p190 = scmp.eq.s32.totalorder %s39, 0
    %p191 = por %p189, %p190
    %p192 = scmp.ne.s32.totalorder %s180, %s181
    %p193 = scmp.eq.s32.totalorder %s40, 1
    %p194 = por %p192, %p193
    %p196 = scmp.ne.s32.totalorder %s181, %s195
    %p197 = scmp.eq.s32.totalorder %s40, 0
    %p198 = por %p196, %p197
    %s200 = sadd.s32 %s199, 1
    %p203 = scmp.eq.s32.totalorder %s34, 1
    %p204 = scmp.ne.s32.totalorder %s199, %s201
    %p205 = scmp.eq.s32.totalorder %s34, 0
    %p206 = por %p204, %p205
    %p207 = scmp.ne.s32.totalorder %s199, %s201
    %p208 = scmp.eq.s32.totalorder %s39, 1
    %p209 = por %p207, %p208
    %p210 = scmp.ne.s32.totalorder %s201, %s202
    %p211 = scmp.eq.s32.totalorder %s39, 0
    %p212 = por %p210, %p211
    %p213 = scmp.ne.s32.totalorder %s201, %s202
    %p214 = scmp.eq.s32.totalorder %s40, 1
    %p215 = por %p213, %p214
    %p217 = scmp.ne.s32.totalorder %s202, %s216
    %p218 = scmp.eq.s32.totalorder %s40, 0
    %p219 = por %p217, %p218
    %s221 = sadd.s32 %s220, 1
    %p224 = scmp.eq.s32.totalorder %s34, 1
    %p225 = scmp.ne.s32.totalorder %s220, %s222
    %p226 = scmp.eq.s32.totalorder %s34, 0
    %p227 = por %p225, %p226
    %p228 = scmp.ne.s32.totalorder %s220, %s222
    %p229 = scmp.eq.s32.totalorder %s39, 1
    %p230 = por %p228, %p229
    %p231 = scmp.ne.s32.totalorder %s222, %s223
    %p232 = scmp.eq.s32.totalorder %s39, 0
    %p233 = por %p231, %p232
    %p234 = scmp.ne.s32.totalorder %s222, %s223
    %p235 = scmp.eq.s32.totalorder %s40, 1
    %p236 = por %p234, %p235
    %p238 = scmp.ne.s32.totalorder %s223, %s237
    %p239 = scmp.eq.s32.totalorder %s40, 0
    %p240 = por %p238, %p239
    %s242 = sadd.s32 %s241, 1
    %p245 = scmp.eq.s32.totalorder %s34, 1
    %p246 = scmp.ne.s32.totalorder %s241, %s243
    %p247 = scmp.eq.s32.totalorder %s34, 0
    %p248 = por %p246, %p247
    %p249 = scmp.ne.s32.totalorder %s241, %s243
    %p250 = scmp.eq.s32.totalorder %s39, 1
    %p251 = por %p249, %p250
    %p252 = scmp.ne.s32.totalorder %s243, %s244
    %p253 = scmp.eq.s32.totalorder %s39, 0
    %p254 = por %p252, %p253
    %p255 = scmp.ne.s32.totalorder %s243, %s244
    %p256 = scmp.eq.s32.totalorder %s40, 1
    %p257 = por %p255, %p256
    %p259 = scmp.ne.s32.totalorder %s244, %s258
    %p260 = scmp.eq.s32.totalorder %s40, 0
    %p261 = por %p259, %p260
    %s263 = sadd.s32 %s262, 1
    %p266 = scmp.eq.s32.totalorder %s34, 1
    %p267 = scmp.ne.s32.totalorder %s262, %s264
    %p268 = scmp.eq.s32.totalorder %s34, 0
    %p269 = por %p267, %p268
    %p270 = scmp.ne.s32.totalorder %s262, %s264
    %p271 = scmp.eq.s32.totalorder %s39, 1
    %p272 = por %p270, %p271
    %p273 = scmp.ne.s32.totalorder %s264, %s265
    %p274 = scmp.eq.s32.totalorder %s39, 0
    %p275 = por %p273, %p274
    %p276 = scmp.ne.s32.totalorder %s264, %s265
    %p277 = scmp.eq.s32.totalorder %s40, 1
    %p278 = por %p276, %p277
    %p280 = scmp.ne.s32.totalorder %s265, %s279
    %p281 = scmp.eq.s32.totalorder %s40, 0
    %p282 = por %p280, %p281
    %s284 = sadd.s32 %s283, 1
    %p287 = scmp.eq.s32.totalorder %s34, 1
    %p288 = scmp.ne.s32.totalorder %s283, %s285
    %p289 = scmp.eq.s32.totalorder %s34, 0
    %p290 = por %p288, %p289
    %p291 = scmp.ne.s32.totalorder %s283, %s285
    %p292 = scmp.eq.s32.totalorder %s39, 1
    %p293 = por %p291, %p292
    %p294 = scmp.ne.s32.totalorder %s285, %s286
    %p295 = scmp.eq.s32.totalorder %s39, 0
    %p296 = por %p294, %p295
    %p297 = scmp.ne.s32.totalorder %s285, %s286
    %p298 = scmp.eq.s32.totalorder %s40, 1
    %p299 = por %p297, %p298
    %p301 = scmp.ne.s32.totalorder %s286, %s300
    %p302 = scmp.eq.s32.totalorder %s40, 0
    %p303 = por %p301, %p302
    %s305 = sadd.s32 %s304, 1
    %p308 = scmp.eq.s32.totalorder %s34, 1
    %p309 = scmp.ne.s32.totalorder %s304, %s306
    %p310 = scmp.eq.s32.totalorder %s34, 0
    %p311 = por %p309, %p310
    %p312 = scmp.ne.s32.totalorder %s304, %s306
    %p313 = scmp.eq.s32.totalorder %s39, 1
    %p314 = por %p312, %p313
    %p315 = scmp.ne.s32.totalorder %s306, %s307
    %p316 = scmp.eq.s32.totalorder %s39, 0
    %p317 = por %p315, %p316
    %p318 = scmp.ne.s32.totalorder %s306, %s307
    %p319 = scmp.eq.s32.totalorder %s40, 1
    %p320 = por %p318, %p319
    %p322 = scmp.ne.s32.totalorder %s307, %s321
    %p323 = scmp.eq.s32.totalorder %s40, 0
    %p324 = por %p322, %p323
    %s326 = sadd.s32 %s325, 1
    %p329 = scmp.eq.s32.totalorder %s34, 1
    %p330 = scmp.ne.s32.totalorder %s325, %s327
    %p331 = scmp.eq.s32.totalorder %s34, 0
    %p332 = por %p330, %p331
    %p333 = scmp.ne.s32.totalorder %s325, %s327
    %p334 = scmp.eq.s32.totalorder %s39, 1
    %p335 = por %p333, %p334
    %p336 = scmp.ne.s32.totalorder %s327, %s328
    %p337 = scmp.eq.s32.totalorder %s39, 0
    %p338 = por %p336, %p337
    %p339 = scmp.ne.s32.totalorder %s327, %s328
    %p340 = scmp.eq.s32.totalorder %s40, 1
    %p341 = por %p339, %p340
    %p343 = scmp.ne.s32.totalorder %s328, %s342
    %p344 = scmp.eq.s32.totalorder %s40, 0
    %p345 = por %p343, %p344
    %s347 = sadd.s32 %s346, 1
    %p350 = scmp.eq.s32.totalorder %s34, 1
    %p351 = scmp.ne.s32.totalorder %s346, %s348
    %p352 = scmp.eq.s32.totalorder %s34, 0
    %p353 = por %p351, %p352
    %p354 = scmp.ne.s32.totalorder %s346, %s348
    %p355 = scmp.eq.s32.totalorder %s39, 1
    %p356 = por %p354, %p355
    %p357 = scmp.ne.s32.totalorder %s348, %s349
    %p358 = scmp.eq.s32.totalorder %s39, 0
    %p359 = por %p357, %p358
    %p360 = scmp.ne.s32.totalorder %s348, %s349
    %p361 = scmp.eq.s32.totalorder %s40, 1
    %p362 = por %p360, %p361
    %p364 = scmp.ne.s32.totalorder %s349, %s363
    %p365 = scmp.eq.s32.totalorder %s40, 0
    %p366 = por %p364, %p365
    %s368 = sadd.s32 %s367, 1
    %p371 = scmp.eq.s32.totalorder %s34, 1
    %p372 = scmp.ne.s32.totalorder %s367, %s369
    %p373 = scmp.eq.s32.totalorder %s34, 0
    %p374 = por %p372, %p373
    %p375 = scmp.ne.s32.totalorder %s367, %s369
    %p376 = scmp.eq.s32.totalorder %s39, 1
    %p377 = por %p375, %p376
    %p378 = scmp.ne.s32.totalorder %s369, %s370
    %p379 = scmp.eq.s32.totalorder %s39, 0
    %p380 = por %p378, %p379
    %p381 = scmp.ne.s32.totalorder %s369, %s370
    %p382 = scmp.eq.s32.totalorder %s40, 1
    %p383 = por %p381, %p382
    %p385 = scmp.ne.s32.totalorder %s370, %s384
    %p386 = scmp.eq.s32.totalorder %s40, 0
    %p387 = por %p385, %p386
    %s389 = sadd.s32 %s388, 1
    %p392 = scmp.eq.s32.totalorder %s34, 1
    %p393 = scmp.ne.s32.totalorder %s388, %s390
    %p394 = scmp.eq.s32.totalorder %s34, 0
    %p395 = por %p393, %p394
    %p396 = scmp.ne.s32.totalorder %s388, %s390
    %p397 = scmp.eq.s32.totalorder %s39, 1
    %p398 = por %p396, %p397
    %p399 = scmp.ne.s32.totalorder %s390, %s391
    %p400 = scmp.eq.s32.totalorder %s39, 0
    %p401 = por %p399, %p400
    %p402 = scmp.ne.s32.totalorder %s390, %s391
    %p403 = scmp.eq.s32.totalorder %s40, 1
    %p404 = por %p402, %p403
    %p406 = scmp.ne.s32.totalorder %s391, %s405
    %p407 = scmp.eq.s32.totalorder %s40, 0
    %p408 = por %p406, %p407
    %s410 = sadd.s32 %s409, 1
    %p413 = scmp.eq.s32.totalorder %s34, 1
    %p414 = scmp.ne.s32.totalorder %s409, %s411
    %p415 = scmp.eq.s32.totalorder %s34, 0
    %p416 = por %p414, %p415
    %p417 = scmp.ne.s32.totalorder %s409, %s411
    %p418 = scmp.eq.s32.totalorder %s39, 1
    %p419 = por %p417, %p418
    %p420 = scmp.ne.s32.totalorder %s411, %s412
    %p421 = scmp.eq.s32.totalorder %s39, 0
    %p422 = por %p420, %p421
    %p423 = scmp.ne.s32.totalorder %s411, %s412
    %p424 = scmp.eq.s32.totalorder %s40, 1
    %p425 = por %p423, %p424
    %p427 = scmp.ne.s32.totalorder %s412, %s426
    %p428 = scmp.eq.s32.totalorder %s40, 0
    %p429 = por %p427, %p428
    %s431 = sadd.s32 %s430, 1
    %p434 = scmp.eq.s32.totalorder %s34, 1
    %p435 = scmp.ne.s32.totalorder %s430, %s432
    %p436 = scmp.eq.s32.totalorder %s34, 0
    %p437 = por %p435, %p436
    %p438 = scmp.ne.s32.totalorder %s430, %s432
    %p439 = scmp.eq.s32.totalorder %s39, 1
    %p440 = por %p438, %p439
    %p441 = scmp.ne.s32.totalorder %s432, %s433
    %p442 = scmp.eq.s32.totalorder %s39, 0
    %p443 = por %p441, %p442
    %p444 = scmp.ne.s32.totalorder %s432, %s433
    %p445 = scmp.eq.s32.totalorder %s40, 1
    %p446 = por %p444, %p445
    %p448 = scmp.ne.s32.totalorder %s433, %s447
    %p449 = scmp.eq.s32.totalorder %s40, 0
    %p450 = por %p448, %p449
    %s452 = sadd.s32 %s451, 1
    %p455 = scmp.eq.s32.totalorder %s34, 1
    %p456 = scmp.ne.s32.totalorder %s451, %s453
    %p457 = scmp.eq.s32.totalorder %s34, 0
    %p458 = por %p456, %p457
    %p459 = scmp.ne.s32.totalorder %s451, %s453
    %p460 = scmp.eq.s32.totalorder %s39, 1
    %p461 = por %p459, %p460
    %p462 = scmp.ne.s32.totalorder %s453, %s454
    %p463 = scmp.eq.s32.totalorder %s39, 0
    %p464 = por %p462, %p463
    %p465 = scmp.ne.s32.totalorder %s453, %s454
    %p466 = scmp.eq.s32.totalorder %s40, 1
    %p467 = por %p465, %p466
    %p469 = scmp.ne.s32.totalorder %s454, %s468
    %p470 = scmp.eq.s32.totalorder %s40, 0
    %p471 = por %p469, %p470
    %s473 = sadd.s32 %s472, 1
    %p476 = scmp.eq.s32.totalorder %s34, 1
    %p477 = scmp.ne.s32.totalorder %s472, %s474
    %p478 = scmp.eq.s32.totalorder %s34, 0
    %p479 = por %p477, %p478
    %p480 = scmp.ne.s32.totalorder %s472, %s474
    %p481 = scmp.eq.s32.totalorder %s39, 1
    %p482 = por %p480, %p481
    %p483 = scmp.ne.s32.totalorder %s474, %s475
    %p484 = scmp.eq.s32.totalorder %s39, 0
    %p485 = por %p483, %p484
    %p486 = scmp.ne.s32.totalorder %s474, %s475
    %p487 = scmp.eq.s32.totalorder %s40, 1
    %p488 = por %p486, %p487
    %p490 = scmp.ne.s32.totalorder %s475, %s489
    %p491 = scmp.eq.s32.totalorder %s40, 0
    %p492 = por %p490, %p491
    %s494 = sadd.s32 %s493, 1
    %p497 = scmp.eq.s32.totalorder %s34, 1
    %p498 = scmp.ne.s32.totalorder %s493, %s495
    %p499 = scmp.eq.s32.totalorder %s34, 0
    %p500 = por %p498, %p499
    %p501 = scmp.ne.s32.totalorder %s493, %s495
    %p502 = scmp.eq.s32.totalorder %s39, 1
    %p503 = por %p501, %p502
    %p504 = scmp.ne.s32.totalorder %s495, %s496
    %p505 = scmp.eq.s32.totalorder %s39, 0
    %p506 = por %p504, %p505
    %p507 = scmp.ne.s32.totalorder %s495, %s496
    %p508 = scmp.eq.s32.totalorder %s40, 1
    %p509 = por %p507, %p508
    %p511 = scmp.ne.s32.totalorder %s496, %s510
    %p512 = scmp.eq.s32.totalorder %s40, 0
    %p513 = por %p511, %p512
    %s515 = sadd.s32 %s514, 1
    %p518 = scmp.eq.s32.totalorder %s34, 1
    %p519 = scmp.ne.s32.totalorder %s514, %s516
    %p520 = scmp.eq.s32.totalorder %s34, 0
    %p521 = por %p519, %p520
    %p522 = scmp.ne.s32.totalorder %s514, %s516
    %p523 = scmp.eq.s32.totalorder %s39, 1
    %p524 = por %p522, %p523
    %p525 = scmp.ne.s32.totalorder %s516, %s517
    %p526 = scmp.eq.s32.totalorder %s39, 0
    %p527 = por %p525, %p526
    %p528 = scmp.ne.s32.totalorder %s516, %s517
    %p529 = scmp.eq.s32.totalorder %s40, 1
    %p530 = por %p528, %p529
    %p532 = scmp.ne.s32.totalorder %s517, %s531
    %p533 = scmp.eq.s32.totalorder %s40, 0
    %p534 = por %p532, %p533
    %s536 = sadd.s32 %s535, 1
    %p539 = scmp.eq.s32.totalorder %s34, 1
    %p540 = scmp.ne.s32.totalorder %s535, %s537
    %p541 = scmp.eq.s32.totalorder %s34, 0
    %p542 = por %p540, %p541
    %p543 = scmp.ne.s32.totalorder %s535, %s537
    %p544 = scmp.eq.s32.totalorder %s39, 1
    %p545 = por %p543, %p544
    %p546 = scmp.ne.s32.totalorder %s537, %s538
    %p547 = scmp.eq.s32.totalorder %s39, 0
    %p548 = por %p546, %p547
    %p549 = scmp.ne.s32.totalorder %s537, %s538
    %p550 = scmp.eq.s32.totalorder %s40, 1
    %p551 = por %p549, %p550
    %p553 = scmp.ne.s32.totalorder %s538, %s552
    %p554 = scmp.eq.s32.totalorder %s40, 0
    %p555 = por %p553, %p554
    %s557 = sadd.s32 %s556, 1
    %p560 = scmp.eq.s32.totalorder %s34, 1
    %p561 = scmp.ne.s32.totalorder %s556, %s558
    %p562 = scmp.eq.s32.totalorder %s34, 0
    %p563 = por %p561, %p562
    %p564 = scmp.ne.s32.totalorder %s556, %s558
    %p565 = scmp.eq.s32.totalorder %s39, 1
    %p566 = por %p564, %p565
    %p567 = scmp.ne.s32.totalorder %s558, %s559
    %p568 = scmp.eq.s32.totalorder %s39, 0
    %p569 = por %p567, %p568
    %p570 = scmp.ne.s32.totalorder %s558, %s559
    %p571 = scmp.eq.s32.totalorder %s40, 1
    %p572 = por %p570, %p571
    %p574 = scmp.ne.s32.totalorder %s559, %s573
    %p575 = scmp.eq.s32.totalorder %s40, 0
    %p576 = por %p574, %p575
    %s578 = sadd.s32 %s577, 1
    %p581 = scmp.eq.s32.totalorder %s34, 1
    %p582 = scmp.ne.s32.totalorder %s577, %s579
    %p583 = scmp.eq.s32.totalorder %s34, 0
    %p584 = por %p582, %p583
    %p585 = scmp.ne.s32.totalorder %s577, %s579
    %p586 = scmp.eq.s32.totalorder %s39, 1
    %p587 = por %p585, %p586
    %p588 = scmp.ne.s32.totalorder %s579, %s580
    %p589 = scmp.eq.s32.totalorder %s39, 0
    %p590 = por %p588, %p589
    %p591 = scmp.ne.s32.totalorder %s579, %s580
    %p592 = scmp.eq.s32.totalorder %s40, 1
    %p593 = por %p591, %p592
    %p595 = scmp.ne.s32.totalorder %s580, %s594
    %p596 = scmp.eq.s32.totalorder %s40, 0
    %p597 = por %p595, %p596
    %s599 = sadd.s32 %s598, 1
    %p602 = scmp.eq.s32.totalorder %s34, 1
    %p603 = scmp.ne.s32.totalorder %s598, %s600
    %p604 = scmp.eq.s32.totalorder %s34, 0
    %p605 = por %p603, %p604
    %p606 = scmp.ne.s32.totalorder %s598, %s600
    %p607 = scmp.eq.s32.totalorder %s39, 1
    %p608 = por %p606, %p607
    %p609 = scmp.ne.s32.totalorder %s600, %s601
    %p610 = scmp.eq.s32.totalorder %s39, 0
    %p611 = por %p609, %p610
    %p612 = scmp.ne.s32.totalorder %s600, %s601
    %p613 = scmp.eq.s32.totalorder %s40, 1
    %p614 = por %p612, %p613
    %p616 = scmp.ne.s32.totalorder %s601, %s615
    %p617 = scmp.eq.s32.totalorder %s40, 0
    %p618 = por %p616, %p617
    %s620 = sadd.s32 %s619, 1
    %p623 = scmp.eq.s32.totalorder %s34, 1
    %p624 = scmp.ne.s32.totalorder %s619, %s621
    %p625 = scmp.eq.s32.totalorder %s34, 0
    %p626 = por %p624, %p625
    %p627 = scmp.ne.s32.totalorder %s619, %s621
    %p628 = scmp.eq.s32.totalorder %s39, 1
    %p629 = por %p627, %p628
    %p630 = scmp.ne.s32.totalorder %s621, %s622
    %p631 = scmp.eq.s32.totalorder %s39, 0
    %p632 = por %p630, %p631
    %p633 = scmp.ne.s32.totalorder %s621, %s622
    %p634 = scmp.eq.s32.totalorder %s40, 1
    %p635 = por %p633, %p634
    %p637 = scmp.ne.s32.totalorder %s622, %s636
    %p638 = scmp.eq.s32.totalorder %s40, 0
    %p639 = por %p637, %p638
    %s640 = ssub.s32 %s34, %s41
    %p641 = scmp.eq.s32.totalorder %s640, 0
    %s643 = sadd.s32 %s642, 1
    %s644 = scalar_select %p641, %s642, %s643
    %p647 = pneg %p641
    %p648 = scmp.eq.s32.totalorder %s34, 1
    %p649 = por %p647, %p648
    %p650 = scmp.ne.s32.totalorder %s642, %s645
    %p651 = scmp.eq.s32.totalorder %s34, 0
    %p652 = por %p650, %p651
    %p653 = scmp.ne.s32.totalorder %s642, %s645
    %p654 = scmp.eq.s32.totalorder %s39, 1
    %p655 = por %p653, %p654
    %p656 = scmp.ne.s32.totalorder %s645, %s646
    %p657 = scmp.eq.s32.totalorder %s39, 0
    %p658 = por %p656, %p657
    %p659 = scmp.ne.s32.totalorder %s645, %s646
    %p660 = scmp.eq.s32.totalorder %s40, 1
    %p661 = por %p659, %p660
    %p663 = scmp.ne.s32.totalorder %s646, %s662
    %p664 = scmp.eq.s32.totalorder %s40, 0
    %p665 = por %p663, %p664
    %p666 = scmp.le.s32.totalorder 1, %s34
    %p667 = scmp.lt.s32.totalorder %s34, 3
    %p668 = pnand %p666, %p667
    %p669 = pneg %p668
    // Predicated region
    $region9: #{transformer_nmt_mh_forward.7} parent=5 // pred_check
      _
    $region10: #{transformer_nmt_mh_forward.7} parent=5 // pred_check_branch
      %671 = sbr.rel (%p668) target = $region12
    $region11: #{transformer_nmt_mh_forward.7} parent=5 // pred_region
      %s672 = ssub.s32 %s34, 1
      // Predicated region
      $region13: #{transformer_nmt_mh_forward.7} parent=11 // pred_check
        %p673 = pneg %p107
      $region14: #{transformer_nmt_mh_forward.7} parent=11 // pred_check_branch
        %675 = sbr.rel (%p673) target = $region16
      $region15: #{transformer_nmt_mh_forward.7} parent=11 // pred_region
        _
      $region16: #{transformer_nmt_mh_forward.7} parent=11 // pred_fallthru
        _
      // Predicated region
      $region17: #{transformer_nmt_mh_forward.7} parent=11 // pred_check
        %p676 = pneg %p128
      $region18: #{transformer_nmt_mh_forward.7} parent=11 // pred_check_branch
        %678 = sbr.rel (%p676) target = $region20
      $region19: #{transformer_nmt_mh_forward.7} parent=11 // pred_region
        _
      $region20: #{transformer_nmt_mh_forward.7} parent=11 // pred_fallthru
        _
      // Predicated region
      $region21: #{transformer_nmt_mh_forward.7} parent=11 // pred_check
        %p679 = pneg %p149
      $region22: #{transformer_nmt_mh_forward.7} parent=11 // pred_check_branch
        %681 = sbr.rel (%p679) target = $region24
      $region23: #{transformer_nmt_mh_forward.7} parent=11 // pred_region
        _
      $region24: #{transformer_nmt_mh_forward.7} parent=11 // pred_fallthru
        _
      // Predicated region
      $region25: #{transformer_nmt_mh_forward.7} parent=11 // pred_check
        %p682 = pneg %p170
      $region26: #{transformer_nmt_mh_forward.7} parent=11 // pred_check_branch
        %684 = sbr.rel (%p682) target = $region28
      $region27: #{transformer_nmt_mh_forward.7} parent=11 // pred_region
        _
      $region28: #{transformer_nmt_mh_forward.7} parent=11 // pred_fallthru
        _
      // Predicated region
      $region29: #{transformer_nmt_mh_forward.7} parent=11 // pred_check
        %p685 = pneg %p191
      $region30: #{transformer_nmt_mh_forward.7} parent=11 // pred_check_branch
        %687 = sbr.rel (%p685) target = $region32
      $region31: #{transformer_nmt_mh_forward.7} parent=11 // pred_region
        _
      $region32: #{transformer_nmt_mh_forward.7} parent=11 // pred_fallthru
        _
      // Predicated region
      $region33: #{transformer_nmt_mh_forward.7} parent=11 // pred_check
        %p688 = pneg %p212
      $region34: #{transformer_nmt_mh_forward.7} parent=11 // pred_check_branch
        %690 = sbr.rel (%p688) target = $region36
      $region35: #{transformer_nmt_mh_forward.7} parent=11 // pred_region
        _
      $region36: #{transformer_nmt_mh_forward.7} parent=11 // pred_fallthru
        _
      // Predicated region
      $region37: #{transformer_nmt_mh_forward.7} parent=11 // pred_check
        %p691 = pneg %p233
      $region38: #{transformer_nmt_mh_forward.7} parent=11 // pred_check_branch
        %693 = sbr.rel (%p691) target = $region40
      $region39: #{transformer_nmt_mh_forward.7} parent=11 // pred_region
        _
      $region40: #{transformer_nmt_mh_forward.7} parent=11 // pred_fallthru
        _
      // Predicated region
      $region41: #{transformer_nmt_mh_forward.7} parent=11 // pred_check
        %p694 = pneg %p254
      $region42: #{transformer_nmt_mh_forward.7} parent=11 // pred_check_branch
        %696 = sbr.rel (%p694) target = $region44
      $region43: #{transformer_nmt_mh_forward.7} parent=11 // pred_region
        _
      $region44: #{transformer_nmt_mh_forward.7} parent=11 // pred_fallthru
        _
      // Predicated region
      $region45: #{transformer_nmt_mh_forward.7} parent=11 // pred_check
        %p697 = pneg %p275
      $region46: #{transformer_nmt_mh_forward.7} parent=11 // pred_check_branch
        %699 = sbr.rel (%p697) target = $region48
      $region47: #{transformer_nmt_mh_forward.7} parent=11 // pred_region
        _
      $region48: #{transformer_nmt_mh_forward.7} parent=11 // pred_fallthru
        _
      // Predicated region
      $region49: #{transformer_nmt_mh_forward.7} parent=11 // pred_check
        %p700 = pneg %p296
      $region50: #{transformer_nmt_mh_forward.7} parent=11 // pred_check_branch
        %702 = sbr.rel (%p700) target = $region52
      $region51: #{transformer_nmt_mh_forward.7} parent=11 // pred_region
        _
      $region52: #{transformer_nmt_mh_forward.7} parent=11 // pred_fallthru
        _
      // Predicated region
      $region53: #{transformer_nmt_mh_forward.7} parent=11 // pred_check
        %p703 = pneg %p317
      $region54: #{transformer_nmt_mh_forward.7} parent=11 // pred_check_branch
        %705 = sbr.rel (%p703) target = $region56
      $region55: #{transformer_nmt_mh_forward.7} parent=11 // pred_region
        _
      $region56: #{transformer_nmt_mh_forward.7} parent=11 // pred_fallthru
        _
      // Predicated region
      $region57: #{transformer_nmt_mh_forward.7} parent=11 // pred_check
        %p706 = pneg %p338
      $region58: #{transformer_nmt_mh_forward.7} parent=11 // pred_check_branch
        %708 = sbr.rel (%p706) target = $region60
      $region59: #{transformer_nmt_mh_forward.7} parent=11 // pred_region
        _
      $region60: #{transformer_nmt_mh_forward.7} parent=11 // pred_fallthru
        _
      // Predicated region
      $region61: #{transformer_nmt_mh_forward.7} parent=11 // pred_check
        %p709 = pneg %p359
      $region62: #{transformer_nmt_mh_forward.7} parent=11 // pred_check_branch
        %711 = sbr.rel (%p709) target = $region64
      $region63: #{transformer_nmt_mh_forward.7} parent=11 // pred_region
        _
      $region64: #{transformer_nmt_mh_forward.7} parent=11 // pred_fallthru
        _
      // Predicated region
      $region65: #{transformer_nmt_mh_forward.7} parent=11 // pred_check
        %p712 = pneg %p380
      $region66: #{transformer_nmt_mh_forward.7} parent=11 // pred_check_branch
        %714 = sbr.rel (%p712) target = $region68
      $region67: #{transformer_nmt_mh_forward.7} parent=11 // pred_region
        _
      $region68: #{transformer_nmt_mh_forward.7} parent=11 // pred_fallthru
        _
      // Predicated region
      $region69: #{transformer_nmt_mh_forward.7} parent=11 // pred_check
        %p715 = pneg %p401
      $region70: #{transformer_nmt_mh_forward.7} parent=11 // pred_check_branch
        %717 = sbr.rel (%p715) target = $region72
      $region71: #{transformer_nmt_mh_forward.7} parent=11 // pred_region
        _
      $region72: #{transformer_nmt_mh_forward.7} parent=11 // pred_fallthru
        _
      // Predicated region
      $region73: #{transformer_nmt_mh_forward.7} parent=11 // pred_check
        %p718 = pneg %p422
      $region74: #{transformer_nmt_mh_forward.7} parent=11 // pred_check_branch
        %720 = sbr.rel (%p718) target = $region76
      $region75: #{transformer_nmt_mh_forward.7} parent=11 // pred_region
        _
      $region76: #{transformer_nmt_mh_forward.7} parent=11 // pred_fallthru
        _
      // Predicated region
      $region77: #{transformer_nmt_mh_forward.7} parent=11 // pred_check
        %p721 = pneg %p443
      $region78: #{transformer_nmt_mh_forward.7} parent=11 // pred_check_branch
        %723 = sbr.rel (%p721) target = $region80
      $region79: #{transformer_nmt_mh_forward.7} parent=11 // pred_region
        _
      $region80: #{transformer_nmt_mh_forward.7} parent=11 // pred_fallthru
        _
      // Predicated region
      $region81: #{transformer_nmt_mh_forward.7} parent=11 // pred_check
        %p724 = pneg %p464
      $region82: #{transformer_nmt_mh_forward.7} parent=11 // pred_check_branch
        %726 = sbr.rel (%p724) target = $region84
      $region83: #{transformer_nmt_mh_forward.7} parent=11 // pred_region
        _
      $region84: #{transformer_nmt_mh_forward.7} parent=11 // pred_fallthru
        _
      // Predicated region
      $region85: #{transformer_nmt_mh_forward.7} parent=11 // pred_check
        %p727 = pneg %p485
      $region86: #{transformer_nmt_mh_forward.7} parent=11 // pred_check_branch
        %729 = sbr.rel (%p727) target = $region88
      $region87: #{transformer_nmt_mh_forward.7} parent=11 // pred_region
        _
      $region88: #{transformer_nmt_mh_forward.7} parent=11 // pred_fallthru
        _
      // Predicated region
      $region89: #{transformer_nmt_mh_forward.7} parent=11 // pred_check
        %p730 = pneg %p506
      $region90: #{transformer_nmt_mh_forward.7} parent=11 // pred_check_branch
        %732 = sbr.rel (%p730) target = $region92
      $region91: #{transformer_nmt_mh_forward.7} parent=11 // pred_region
        _
      $region92: #{transformer_nmt_mh_forward.7} parent=11 // pred_fallthru
        _
      // Predicated region
      $region93: #{transformer_nmt_mh_forward.7} parent=11 // pred_check
        %p733 = pneg %p527
      $region94: #{transformer_nmt_mh_forward.7} parent=11 // pred_check_branch
        %735 = sbr.rel (%p733) target = $region96
      $region95: #{transformer_nmt_mh_forward.7} parent=11 // pred_region
        _
      $region96: #{transformer_nmt_mh_forward.7} parent=11 // pred_fallthru
        _
      // Predicated region
      $region97: #{transformer_nmt_mh_forward.7} parent=11 // pred_check
        %p736 = pneg %p548
      $region98: #{transformer_nmt_mh_forward.7} parent=11 // pred_check_branch
        %738 = sbr.rel (%p736) target = $region100
      $region99: #{transformer_nmt_mh_forward.7} parent=11 // pred_region
        _
      $region100: #{transformer_nmt_mh_forward.7} parent=11 // pred_fallthru
        _
      // Predicated region
      $region101: #{transformer_nmt_mh_forward.7} parent=11 // pred_check
        %p739 = pneg %p569
      $region102: #{transformer_nmt_mh_forward.7} parent=11 // pred_check_branch
        %741 = sbr.rel (%p739) target = $region104
      $region103: #{transformer_nmt_mh_forward.7} parent=11 // pred_region
        _
      $region104: #{transformer_nmt_mh_forward.7} parent=11 // pred_fallthru
        _
      // Predicated region
      $region105: #{transformer_nmt_mh_forward.7} parent=11 // pred_check
        %p742 = pneg %p590
      $region106: #{transformer_nmt_mh_forward.7} parent=11 // pred_check_branch
        %744 = sbr.rel (%p742) target = $region108
      $region107: #{transformer_nmt_mh_forward.7} parent=11 // pred_region
        _
      $region108: #{transformer_nmt_mh_forward.7} parent=11 // pred_fallthru
        _
      // Predicated region
      $region109: #{transformer_nmt_mh_forward.7} parent=11 // pred_check
        %p745 = pneg %p611
      $region110: #{transformer_nmt_mh_forward.7} parent=11 // pred_check_branch
        %747 = sbr.rel (%p745) target = $region112
      $region111: #{transformer_nmt_mh_forward.7} parent=11 // pred_region
        _
      $region112: #{transformer_nmt_mh_forward.7} parent=11 // pred_fallthru
        _
      // Predicated region
      $region113: #{transformer_nmt_mh_forward.7} parent=11 // pred_check
        %p748 = pneg %p632
      $region114: #{transformer_nmt_mh_forward.7} parent=11 // pred_check_branch
        %750 = sbr.rel (%p748) target = $region116
      $region115: #{transformer_nmt_mh_forward.7} parent=11 // pred_region
        _
      $region116: #{transformer_nmt_mh_forward.7} parent=11 // pred_fallthru
        _
    $region12: #{transformer_nmt_mh_forward.7} parent=5 // pred_fallthru
      _
    %p751 = scmp.lt.s32.totalorder %s34, 2
    // Predicated region
    $region117: #{transformer_nmt_mh_forward.7} parent=5 // pred_check
      %p752 = pneg %p751
    $region118: #{transformer_nmt_mh_forward.7} parent=5 // pred_check_branch
      %754 = sbr.rel (%p752) target = $region120
    $region119: #{transformer_nmt_mh_forward.7} parent=5 // pred_region
      // Predicated region
      $region121: #{transformer_nmt_mh_forward.7} parent=119 // pred_check
        %p755 = pneg %p54
      $region122: #{transformer_nmt_mh_forward.7} parent=119 // pred_check_branch
        %757 = sbr.rel (%p755) target = $region124
      $region123: #{transformer_nmt_mh_forward.7} parent=119 // pred_region
        %p758 = scmp.lt.s32.totalorder %s34, 1
        %s759 = scalar_select %p758, %s34, 1
        %s760 = smul.addr %s759, 8
        %s761 = scalar_lea.vmem %s0, %s760
      $region124: #{transformer_nmt_mh_forward.7} parent=119 // pred_fallthru
        _
      // Predicated region
      $region125: #{transformer_nmt_mh_forward.7} parent=119 // pred_check
        %p762 = pneg %p80
      $region126: #{transformer_nmt_mh_forward.7} parent=119 // pred_check_branch
        %764 = sbr.rel (%p762) target = $region128
      $region127: #{transformer_nmt_mh_forward.7} parent=119 // pred_region
        %p765 = scmp.lt.s32.totalorder %s34, 1
        %s766 = scalar_select %p765, %s34, 1
        %s767 = smul.addr %s766, 8
        %s768 = scalar_lea.vmem %s1, %s767
      $region128: #{transformer_nmt_mh_forward.7} parent=119 // pred_fallthru
        _
    $region120: #{transformer_nmt_mh_forward.7} parent=5 // pred_fallthru
      _
    %p769 = scmp.le.s32.totalorder 1, %s34
    %p770 = scmp.lt.s32.totalorder %s34, 3
    %p771 = pnand %p769, %p770
    %p772 = pneg %p771
    // Predicated region
    $region129: #{transformer_nmt_mh_forward.7} parent=5 // pred_check
      _
    $region130: #{transformer_nmt_mh_forward.7} parent=5 // pred_check_branch
      %774 = sbr.rel (%p771) target = $region132
    $region131: #{transformer_nmt_mh_forward.7} parent=5 // pred_region
      %s775 = ssub.s32 %s34, 1
      %p776 = scmp.lt.s32.totalorder %s39, 1
      %s777 = scalar_select %p776, %s39, 1
      %s778 = smul.addr %s777, 8
      %s779 = scalar_lea.vmem %s0, %s778
      %p780 = pneg %p60
      %p781 = pneg %p57
      %p782 = scmp.lt.s32.totalorder %s39, 1
      %s783 = scalar_select %p782, %s39, 1
      %s784 = smul.addr %s783, 8
      %s785 = scalar_lea.vmem %s1, %s784
      %p786 = pneg %p86
      %p787 = pneg %p83
      %p788 = pneg %p107
      %p789 = pneg %p104
      %p790 = pneg %p128
      %p791 = pneg %p125
      %p792 = pneg %p149
      %p793 = pneg %p146
      %p794 = pneg %p170
      %p795 = pneg %p167
      %p796 = pneg %p191
      %p797 = pneg %p188
      %p798 = pneg %p212
      %p799 = pneg %p209
      %p800 = pneg %p233
      %p801 = pneg %p230
      %p802 = pneg %p254
      %p803 = pneg %p251
      %p804 = pneg %p275
      %p805 = pneg %p272
      %p806 = pneg %p296
      %p807 = pneg %p293
      %p808 = pneg %p317
      %p809 = pneg %p314
      %p810 = pneg %p338
      %p811 = pneg %p335
      %p812 = pneg %p359
      %p813 = pneg %p356
      %p814 = pneg %p380
      %p815 = pneg %p377
      %p816 = pneg %p401
      %p817 = pneg %p398
      %p818 = pneg %p422
      %p819 = pneg %p419
      %p820 = pneg %p443
      %p821 = pneg %p440
      %p822 = pneg %p464
      %p823 = pneg %p461
      %p824 = pneg %p485
      %p825 = pneg %p482
      %p826 = pneg %p506
      %p827 = pneg %p503
      %p828 = pneg %p527
      %p829 = pneg %p524
      %p830 = pneg %p548
      %p831 = pneg %p545
      %p832 = pneg %p569
      %p833 = pneg %p566
      %p834 = pneg %p590
      %p835 = pneg %p587
      %p836 = pneg %p611
      %p837 = pneg %p608
      %p838 = pneg %p632
      %p839 = pneg %p629
      %p840 = pneg %p658
      %p841 = pneg %p655
      %p842 = scmp.lt.s32.totalorder %s39, 1
      %s843 = scalar_select %p842, %s39, 1
      %s844 = smul.addr %s843, 8
      %s845 = scalar_lea.vmem %s28, %s844
      %p846 = scmp.lt.s32.totalorder %s39, 1
      %s847 = scalar_select %p846, %s39, 1
      %s848 = smul.addr %s847, 8
      %s849 = scalar_lea.vmem %s0, %s848
      %p850 = scmp.lt.s32.totalorder %s39, 1
      %s851 = scalar_select %p850, %s39, 1
      %s852 = smul.addr %s851, 8
      %s853 = scalar_lea.vmem %s1, %s852
      %p854 = scmp.lt.s32.totalorder %s39, 1
      %s855 = scalar_select %p854, %s39, 1
      %s856 = smul.addr %s855, 8
      %s857 = scalar_lea.vmem %s28, %s856
      %v859 = vld [vmem:[%s849] sm:$0xff]
      %v860 = vld [vmem:[%s853] sm:$0xff]
      %v861 = vld [vmem:[%s2] sm:$0xf]
      %v862 = vld [vmem:[%s2 + $0x4] sm:$0xf]
      %v863 = vld [vmem:[%s2 + $0x8] sm:$0xf]
      %v864 = vld [vmem:[%s2 + $0xc] sm:$0xf]
      %v865 = vld [vmem:[%s3] sm:$0x1]
      %v866 = vpack.c.bf16 %v860, %v860
      %v868 = vlaneseq
      %v869 = vshrl.u32 %v868, 7
      %v870 = vsub.s32 0, %v869
      %v871 = vrot.slane %v865, %v870
      %v877 = vunpack.c.l.b16 %v861
      %v878 = vunpack.c.l.b16 %v862
      %v879 = vunpack.c.l.b16 %v863
      %v880 = vunpack.c.l.b16 %v864
      %v881 = vpack.c.b16 %v878, %v877
      %v882 = vpack.c.b16 %v880, %v879
      %vm885 = vcmask 261120
      %v887 = vsel %vm885, %v866, 0
      %889 = vmatprep.subr.bf16.mxu0 0
      %890 = vmatpush1.bf16.msra.mxu0 0
      %891 = vmatprep.subr.bf16.mxu0 0
      %892 = vmatpush1.bf16.msra.mxu0 0
      %893 = vmatprep.subr.bf16.mxu0 0
      %894 = vmatpush1.bf16.msra.mxu0 0
      %895 = vmatprep.subr.bf16.mxu0 0
      %896 = vmatpush1.bf16.msra.mxu0 0
      %897 = vmatprep.subr.bf16.mxu0 0
      %898 = vmatpush1.bf16.msra.mxu0 0
      %899 = vmatprep.subr.bf16.mxu0 0
      %900 = vmatpush1.bf16.msra.mxu0 0
      %901 = vmatprep.subr.bf16.mxu0 0
      %902 = vmatpush1.bf16.msra.mxu0 %v882
      %903 = vmatprep.subr.bf16.mxu0 0
      %904 = vmatpush1.bf16.msra.mxu0 %v881
      %905 = vmatprep.subr.bf16.mxu0 0
      %906 = vmatpush2.bf16.msra.mxu0 0
      %907 = vmatprep.subr.bf16.mxu0 0
      %908 = vmatpush2.bf16.msra.mxu0 0
      %909 = vmatprep.subr.bf16.mxu0 0
      %910 = vmatpush2.bf16.msra.mxu0 0
      %911 = vmatprep.subr.bf16.mxu0 0
      %912 = vmatpush2.bf16.msra.mxu0 0
      %913 = vmatprep.subr.bf16.mxu0 0
      %914 = vmatpush2.bf16.msra.mxu0 0
      %915 = vmatprep.subr.bf16.mxu0 0
      %916 = vmatpush2.bf16.msra.mxu0 0
      %917 = vmatprep.subr.bf16.mxu0 0
      %918 = vmatpush2.bf16.msra.mxu0 0
      %919 = vmatprep.subr.bf16.mxu0 0
      %920 = vmatpush2.bf16.msra.mxu0 0
      %921 = vmatprep.mubr.bf16.mxu0 0
      %922 = vmatmul.mubr.bf16.gmra.mxu0 %v887
      %v923 = vpop.f32.mrf.mxu0
      %v924 = vadd.f32 %v871, %v923
      %v925 = vpop.f32.mrf.mxu0
      %v926 = vpop.f32.mrf.mxu0
      %v927 = vpop.f32.mrf.mxu0
      %928 = vdwg.mxu0
      %930 = vrot.lane.b32.xlu0 %v924, 96
      %v931 = vpop.permute.xlu0 %930
      %vm932 = vcmask 64512
      %v933 = vsel %vm932, %v924, 0
      %v935 = vsel %vm932, %v931, 0
      %937 = vmatprep.subr.mxu0 0.0
      %938 = vmatpush1.xpose.msra.mxu0 0.0
      %939 = vmatprep.subr.mxu0 0.0
      %940 = vmatpush1.xpose.msra.mxu0 0.0
      %941 = vmatprep.subr.mxu0 0.0
      %942 = vmatpush1.xpose.msra.mxu0 0.0
      %943 = vmatprep.subr.mxu0 0.0
      %944 = vmatpush1.xpose.msra.mxu0 0.0
      %945 = vmatprep.subr.mxu0 0.0
      %946 = vmatpush1.xpose.msra.mxu0 0.0
      %947 = vmatprep.subr.mxu0 0.0
      %948 = vmatpush1.xpose.msra.mxu0 0.0
      %949 = vmatprep.subr.mxu0 0.0
      %950 = vmatpush1.xpose.msra.mxu0 0.0
      %951 = vmatprep.subr.mxu0 0.0
      %952 = vmatpush1.xpose.msra.mxu0 0.0
      %953 = vmatprep.subr.mxu0 0.0
      %954 = vmatpush1.xpose.msra.mxu0 0.0
      %955 = vmatprep.subr.mxu0 0.0
      %956 = vmatpush1.xpose.msra.mxu0 0.0
      %957 = vmatprep.subr.mxu0 0.0
      %958 = vmatpush1.xpose.msra.mxu0 0.0
      %959 = vmatprep.subr.mxu0 0.0
      %960 = vmatpush1.xpose.msra.mxu0 0.0
      %961 = vmatprep.subr.mxu0 0.0
      %962 = vmatpush1.xpose.msra.mxu0 0.0
      %963 = vmatprep.subr.mxu0 0.0
      %964 = vmatpush1.xpose.msra.mxu0 0.0
      %965 = vmatprep.subr.mxu0 0.0
      %966 = vmatpush1.xpose.msra.mxu0 0.0
      %967 = vmatprep.subr.mxu0 0.0
      %968 = vmatpush1.xpose.msra.mxu0 %v935
      %969 = vmatprep.subr.mxu0 0.0
      %970 = vmatpush2.xpose.msra.mxu0 0.0
      %971 = vmatprep.subr.mxu0 0.0
      %972 = vmatpush2.xpose.msra.mxu0 0.0
      %973 = vmatprep.subr.mxu0 0.0
      %974 = vmatpush2.xpose.msra.mxu0 0.0
      %975 = vmatprep.subr.mxu0 0.0
      %976 = vmatpush2.xpose.msra.mxu0 0.0
      %977 = vmatprep.subr.mxu0 0.0
      %978 = vmatpush2.xpose.msra.mxu0 0.0
      %979 = vmatprep.subr.mxu0 0.0
      %980 = vmatpush2.xpose.msra.mxu0 0.0
      %981 = vmatprep.subr.mxu0 0.0
      %982 = vmatpush2.xpose.msra.mxu0 0.0
      %983 = vmatprep.subr.mxu0 0.0
      %984 = vmatpush2.xpose.msra.mxu0 0.0
      %985 = vmatprep.subr.mxu0 0.0
      %986 = vmatpush2.xpose.msra.mxu0 0.0
      %987 = vmatprep.subr.mxu0 0.0
      %988 = vmatpush2.xpose.msra.mxu0 0.0
      %989 = vmatprep.subr.mxu0 0.0
      %990 = vmatpush2.xpose.msra.mxu0 0.0
      %991 = vmatprep.subr.mxu0 0.0
      %992 = vmatpush2.xpose.msra.mxu0 0.0
      %993 = vmatprep.subr.mxu0 0.0
      %994 = vmatpush2.xpose.msra.mxu0 0.0
      %995 = vmatprep.subr.mxu0 0.0
      %996 = vmatpush2.xpose.msra.mxu0 0.0
      %997 = vmatprep.subr.mxu0 0.0
      %998 = vmatpush2.xpose.msra.mxu0 0.0
      %999 = vmatprep.subr.mxu0 0.0
      %1000 = vmatpush2.xpose.msra.mxu0 0.0
      %1001 = vmatprep.mubr.f32.mxu0 0.0
      %1002 = vmatmul.mubr.f32.gmra.mxu0 %v933
      %v1003 = vpop.f32.mrf.mxu0
      %v1004 = vadd.f32 0.0, %v1003
      %v1005 = vpop.f32.mrf.mxu0
      %1006 = vdwg.mxu0
      %v1007 = vlaneseq
      %v1008 = vshrl.u32 %v1007, 7
      %v1009 = vlaneseq
      %v1010 = vand.u32 %v1009, 127
      %vm1011 = vcmp.gt.s32.totalorder %v1010, %v1008
      %v1012 = vsel %vm1011, -inf, %v1004
      %v1013 = vsel %vm932, %v1012, -inf
      %1014 = vmax.xlane.f32.xlu0 %v1013
      %v1015 = vpop.xlane.xlu0 %1014
      %v1016 = vsub.f32 %v1012, %v1015
      %v1017 = vmul.f32 %v1016, 1.442695
      %v1018 = vpow.pop %v1017
      %v1019 = vsel %vm932, %v1018, 0.0
      %1020 = vadd.xlane.f32.xlu0 %v1019
      %v1021 = vpop.xlane.xlu0 %1020
      %v1022 = vrcp.pop %v1021
      %v1023 = vmul.f32 %v1018, %v1022
      %1024 = vrot.lane.b32.xlu0 %v924, 64
      %v1025 = vpop.permute.xlu0 %1024
      %v1028 = vsel %vm932, %v1023, 0
      %1030 = vmatprep.subr.mxu0 0.0
      %1031 = vmatpush1.msra.mxu0 0.0
      %1032 = vmatprep.subr.mxu0 0.0
      %1033 = vmatpush1.msra.mxu0 0.0
      %1034 = vmatprep.subr.mxu0 0.0
      %1035 = vmatpush1.msra.mxu0 0.0
      %1036 = vmatprep.subr.mxu0 0.0
      %1037 = vmatpush1.msra.mxu0 0.0
      %1038 = vmatprep.subr.mxu0 0.0
      %1039 = vmatpush1.msra.mxu0 0.0
      %1040 = vmatprep.subr.mxu0 0.0
      %1041 = vmatpush1.msra.mxu0 0.0
      %1042 = vmatprep.subr.mxu0 0.0
      %1043 = vmatpush1.msra.mxu0 0.0
      %1044 = vmatprep.subr.mxu0 0.0
      %1045 = vmatpush1.msra.mxu0 0.0
      %1046 = vmatprep.subr.mxu0 0.0
      %1047 = vmatpush1.msra.mxu0 0.0
      %1048 = vmatprep.subr.mxu0 0.0
      %1049 = vmatpush1.msra.mxu0 0.0
      %1050 = vmatprep.subr.mxu0 0.0
      %1051 = vmatpush1.msra.mxu0 0.0
      %1052 = vmatprep.subr.mxu0 0.0
      %1053 = vmatpush1.msra.mxu0 0.0
      %1054 = vmatprep.subr.mxu0 0.0
      %1055 = vmatpush1.msra.mxu0 0.0
      %1056 = vmatprep.subr.mxu0 0.0
      %1057 = vmatpush1.msra.mxu0 0.0
      %1058 = vmatprep.subr.mxu0 0.0
      %1059 = vmatpush1.msra.mxu0 0.0
      %1060 = vmatprep.subr.mxu0 0.0
      %1061 = vmatpush1.msra.mxu0 %v1025
      %1062 = vmatprep.subr.mxu0 0.0
      %1063 = vmatpush2.msra.mxu0 0.0
      %1064 = vmatprep.subr.mxu0 0.0
      %1065 = vmatpush2.msra.mxu0 0.0
      %1066 = vmatprep.subr.mxu0 0.0
      %1067 = vmatpush2.msra.mxu0 0.0
      %1068 = vmatprep.subr.mxu0 0.0
      %1069 = vmatpush2.msra.mxu0 0.0
      %1070 = vmatprep.subr.mxu0 0.0
      %1071 = vmatpush2.msra.mxu0 0.0
      %1072 = vmatprep.subr.mxu0 0.0
      %1073 = vmatpush2.msra.mxu0 0.0
      %1074 = vmatprep.subr.mxu0 0.0
      %1075 = vmatpush2.msra.mxu0 0.0
      %1076 = vmatprep.subr.mxu0 0.0
      %1077 = vmatpush2.msra.mxu0 0.0
      %1078 = vmatprep.subr.mxu0 0.0
      %1079 = vmatpush2.msra.mxu0 0.0
      %1080 = vmatprep.subr.mxu0 0.0
      %1081 = vmatpush2.msra.mxu0 0.0
      %1082 = vmatprep.subr.mxu0 0.0
      %1083 = vmatpush2.msra.mxu0 0.0
      %1084 = vmatprep.subr.mxu0 0.0
      %1085 = vmatpush2.msra.mxu0 0.0
      %1086 = vmatprep.subr.mxu0 0.0
      %1087 = vmatpush2.msra.mxu0 0.0
      %1088 = vmatprep.subr.mxu0 0.0
      %1089 = vmatpush2.msra.mxu0 0.0
      %1090 = vmatprep.subr.mxu0 0.0
      %1091 = vmatpush2.msra.mxu0 0.0
      %1092 = vmatprep.subr.mxu0 0.0
      %1093 = vmatpush2.msra.mxu0 0.0
      %1094 = vmatprep.mubr.f32.mxu0 0.0
      %1095 = vmatmul.mubr.f32.gmra.mxu0 %v1028
      %v1096 = vpop.f32.mrf.mxu0
      %v1097 = vadd.f32 0.0, %v1096
      %v1098 = vpop.f32.mrf.mxu0
      %1099 = vdwg.mxu0
      %1100 = vrot.lane.b32.xlu0 %v924, 120
      %v1101 = vpop.permute.xlu0 %1100
      %1102 = vrot.lane.b32.xlu0 %v924, 88
      %v1103 = vpop.permute.xlu0 %1102
      %v1104 = vsel %vm932, %v1101, 0
      %v1106 = vsel %vm932, %v1103, 0
      %1108 = vmatprep.subr.mxu0 0.0
      %1109 = vmatpush1.xpose.msra.mxu0 0.0
      %1110 = vmatprep.subr.mxu0 0.0
      %1111 = vmatpush1.xpose.msra.mxu0 0.0
      %1112 = vmatprep.subr.mxu0 0.0
      %1113 = vmatpush1.xpose.msra.mxu0 0.0
      %1114 = vmatprep.subr.mxu0 0.0
      %1115 = vmatpush1.xpose.msra.mxu0 0.0
      %1116 = vmatprep.subr.mxu0 0.0
      %1117 = vmatpush1.xpose.msra.mxu0 0.0
      %1118 = vmatprep.subr.mxu0 0.0
      %1119 = vmatpush1.xpose.msra.mxu0 0.0
      %1120 = vmatprep.subr.mxu0 0.0
      %1121 = vmatpush1.xpose.msra.mxu0 0.0
      %1122 = vmatprep.subr.mxu0 0.0
      %1123 = vmatpush1.xpose.msra.mxu0 0.0
      %1124 = vmatprep.subr.mxu0 0.0
      %1125 = vmatpush1.xpose.msra.mxu0 0.0
      %1126 = vmatprep.subr.mxu0 0.0
      %1127 = vmatpush1.xpose.msra.mxu0 0.0
      %1128 = vmatprep.subr.mxu0 0.0
      %1129 = vmatpush1.xpose.msra.mxu0 0.0
      %1130 = vmatprep.subr.mxu0 0.0
      %1131 = vmatpush1.xpose.msra.mxu0 0.0
      %1132 = vmatprep.subr.mxu0 0.0
      %1133 = vmatpush1.xpose.msra.mxu0 0.0
      %1134 = vmatprep.subr.mxu0 0.0
      %1135 = vmatpush1.xpose.msra.mxu0 0.0
      %1136 = vmatprep.subr.mxu0 0.0
      %1137 = vmatpush1.xpose.msra.mxu0 0.0
      %1138 = vmatprep.subr.mxu0 0.0
      %1139 = vmatpush1.xpose.msra.mxu0 %v1106
      %1140 = vmatprep.subr.mxu0 0.0
      %1141 = vmatpush2.xpose.msra.mxu0 0.0
      %1142 = vmatprep.subr.mxu0 0.0
      %1143 = vmatpush2.xpose.msra.mxu0 0.0
      %1144 = vmatprep.subr.mxu0 0.0
      %1145 = vmatpush2.xpose.msra.mxu0 0.0
      %1146 = vmatprep.subr.mxu0 0.0
      %1147 = vmatpush2.xpose.msra.mxu0 0.0
      %1148 = vmatprep.subr.mxu0 0.0
      %1149 = vmatpush2.xpose.msra.mxu0 0.0
      %1150 = vmatprep.subr.mxu0 0.0
      %1151 = vmatpush2.xpose.msra.mxu0 0.0
      %1152 = vmatprep.subr.mxu0 0.0
      %1153 = vmatpush2.xpose.msra.mxu0 0.0
      %1154 = vmatprep.subr.mxu0 0.0
      %1155 = vmatpush2.xpose.msra.mxu0 0.0
      %1156 = vmatprep.subr.mxu0 0.0
      %1157 = vmatpush2.xpose.msra.mxu0 0.0
      %1158 = vmatprep.subr.mxu0 0.0
      %1159 = vmatpush2.xpose.msra.mxu0 0.0
      %1160 = vmatprep.subr.mxu0 0.0
      %1161 = vmatpush2.xpose.msra.mxu0 0.0
      %1162 = vmatprep.subr.mxu0 0.0
      %1163 = vmatpush2.xpose.msra.mxu0 0.0
      %1164 = vmatprep.subr.mxu0 0.0
      %1165 = vmatpush2.xpose.msra.mxu0 0.0
      %1166 = vmatprep.subr.mxu0 0.0
      %1167 = vmatpush2.xpose.msra.mxu0 0.0
      %1168 = vmatprep.subr.mxu0 0.0
      %1169 = vmatpush2.xpose.msra.mxu0 0.0
      %1170 = vmatprep.subr.mxu0 0.0
      %1171 = vmatpush2.xpose.msra.mxu0 0.0
      %1172 = vmatprep.mubr.f32.mxu0 0.0
      %1173 = vmatmul.mubr.f32.gmra.mxu0 %v1104
      %v1174 = vpop.f32.mrf.mxu0
      %v1175 = vadd.f32 0.0, %v1174
      %v1176 = vpop.f32.mrf.mxu0
      %1177 = vdwg.mxu0
      %v1178 = vsel %vm1011, -inf, %v1175
      %v1179 = vsel %vm932, %v1178, -inf
      %1180 = vmax.xlane.f32.xlu0 %v1179
      %v1181 = vpop.xlane.xlu0 %1180
      %v1182 = vsub.f32 %v1178, %v1181
      %v1183 = vmul.f32 %v1182, 1.442695
      %v1184 = vpow.pop %v1183
      %v1185 = vsel %vm932, %v1184, 0.0
      %1186 = vadd.xlane.f32.xlu0 %v1185
      %v1187 = vpop.xlane.xlu0 %1186
      %v1188 = vrcp.pop %v1187
      %v1189 = vmul.f32 %v1184, %v1188
      %1190 = vrot.lane.b32.xlu0 %v924, 56
      %v1191 = vpop.permute.xlu0 %1190
      %v1194 = vsel %vm932, %v1189, 0
      %1196 = vmatprep.subr.mxu0 0.0
      %1197 = vmatpush1.msra.mxu0 0.0
      %1198 = vmatprep.subr.mxu0 0.0
      %1199 = vmatpush1.msra.mxu0 0.0
      %1200 = vmatprep.subr.mxu0 0.0
      %1201 = vmatpush1.msra.mxu0 0.0
      %1202 = vmatprep.subr.mxu0 0.0
      %1203 = vmatpush1.msra.mxu0 0.0
      %1204 = vmatprep.subr.mxu0 0.0
      %1205 = vmatpush1.msra.mxu0 0.0
      %1206 = vmatprep.subr.mxu0 0.0
      %1207 = vmatpush1.msra.mxu0 0.0
      %1208 = vmatprep.subr.mxu0 0.0
      %1209 = vmatpush1.msra.mxu0 0.0
      %1210 = vmatprep.subr.mxu0 0.0
      %1211 = vmatpush1.msra.mxu0 0.0
      %1212 = vmatprep.subr.mxu0 0.0
      %1213 = vmatpush1.msra.mxu0 0.0
      %1214 = vmatprep.subr.mxu0 0.0
      %1215 = vmatpush1.msra.mxu0 0.0
      %1216 = vmatprep.subr.mxu0 0.0
      %1217 = vmatpush1.msra.mxu0 0.0
      %1218 = vmatprep.subr.mxu0 0.0
      %1219 = vmatpush1.msra.mxu0 0.0
      %1220 = vmatprep.subr.mxu0 0.0
      %1221 = vmatpush1.msra.mxu0 0.0
      %1222 = vmatprep.subr.mxu0 0.0
      %1223 = vmatpush1.msra.mxu0 0.0
      %1224 = vmatprep.subr.mxu0 0.0
      %1225 = vmatpush1.msra.mxu0 0.0
      %1226 = vmatprep.subr.mxu0 0.0
      %1227 = vmatpush1.msra.mxu0 %v1191
      %1228 = vmatprep.subr.mxu0 0.0
      %1229 = vmatpush2.msra.mxu0 0.0
      %1230 = vmatprep.subr.mxu0 0.0
      %1231 = vmatpush2.msra.mxu0 0.0
      %1232 = vmatprep.subr.mxu0 0.0
      %1233 = vmatpush2.msra.mxu0 0.0
      %1234 = vmatprep.subr.mxu0 0.0
      %1235 = vmatpush2.msra.mxu0 0.0
      %1236 = vmatprep.subr.mxu0 0.0
      %1237 = vmatpush2.msra.mxu0 0.0
      %1238 = vmatprep.subr.mxu0 0.0
      %1239 = vmatpush2.msra.mxu0 0.0
      %1240 = vmatprep.subr.mxu0 0.0
      %1241 = vmatpush2.msra.mxu0 0.0
      %1242 = vmatprep.subr.mxu0 0.0
      %1243 = vmatpush2.msra.mxu0 0.0
      %1244 = vmatprep.subr.mxu0 0.0
      %1245 = vmatpush2.msra.mxu0 0.0
      %1246 = vmatprep.subr.mxu0 0.0
      %1247 = vmatpush2.msra.mxu0 0.0
      %1248 = vmatprep.subr.mxu0 0.0
      %1249 = vmatpush2.msra.mxu0 0.0
      %1250 = vmatprep.subr.mxu0 0.0
      %1251 = vmatpush2.msra.mxu0 0.0
      %1252 = vmatprep.subr.mxu0 0.0
      %1253 = vmatpush2.msra.mxu0 0.0
      %1254 = vmatprep.subr.mxu0 0.0
      %1255 = vmatpush2.msra.mxu0 0.0
      %1256 = vmatprep.subr.mxu0 0.0
      %1257 = vmatpush2.msra.mxu0 0.0
      %1258 = vmatprep.subr.mxu0 0.0
      %1259 = vmatpush2.msra.mxu0 0.0
      %1260 = vmatprep.mubr.f32.mxu0 0.0
      %1261 = vmatmul.mubr.f32.gmra.mxu0 %v1194
      %v1262 = vpop.f32.mrf.mxu0
      %v1263 = vadd.f32 0.0, %v1262
      %v1264 = vpop.f32.mrf.mxu0
      %1265 = vdwg.mxu0
      %1266 = vrot.lane.b32.xlu0 %v924, 112
      %v1267 = vpop.permute.xlu0 %1266
      %1268 = vrot.lane.b32.xlu0 %v924, 80
      %v1269 = vpop.permute.xlu0 %1268
      %v1270 = vsel %vm932, %v1267, 0
      %v1272 = vsel %vm932, %v1269, 0
      %1274 = vmatprep.subr.mxu0 0.0
      %1275 = vmatpush1.xpose.msra.mxu0 0.0
      %1276 = vmatprep.subr.mxu0 0.0
      %1277 = vmatpush1.xpose.msra.mxu0 0.0
      %1278 = vmatprep.subr.mxu0 0.0
      %1279 = vmatpush1.xpose.msra.mxu0 0.0
      %1280 = vmatprep.subr.mxu0 0.0
      %1281 = vmatpush1.xpose.msra.mxu0 0.0
      %1282 = vmatprep.subr.mxu0 0.0
      %1283 = vmatpush1.xpose.msra.mxu0 0.0
      %1284 = vmatprep.subr.mxu0 0.0
      %1285 = vmatpush1.xpose.msra.mxu0 0.0
      %1286 = vmatprep.subr.mxu0 0.0
      %1287 = vmatpush1.xpose.msra.mxu0 0.0
      %1288 = vmatprep.subr.mxu0 0.0
      %1289 = vmatpush1.xpose.msra.mxu0 0.0
      %1290 = vmatprep.subr.mxu0 0.0
      %1291 = vmatpush1.xpose.msra.mxu0 0.0
      %1292 = vmatprep.subr.mxu0 0.0
      %1293 = vmatpush1.xpose.msra.mxu0 0.0
      %1294 = vmatprep.subr.mxu0 0.0
      %1295 = vmatpush1.xpose.msra.mxu0 0.0
      %1296 = vmatprep.subr.mxu0 0.0
      %1297 = vmatpush1.xpose.msra.mxu0 0.0
      %1298 = vmatprep.subr.mxu0 0.0
      %1299 = vmatpush1.xpose.msra.mxu0 0.0
      %1300 = vmatprep.subr.mxu0 0.0
      %1301 = vmatpush1.xpose.msra.mxu0 0.0
      %1302 = vmatprep.subr.mxu0 0.0
      %1303 = vmatpush1.xpose.msra.mxu0 0.0
      %1304 = vmatprep.subr.mxu0 0.0
      %1305 = vmatpush1.xpose.msra.mxu0 %v1272
      %1306 = vmatprep.subr.mxu0 0.0
      %1307 = vmatpush2.xpose.msra.mxu0 0.0
      %1308 = vmatprep.subr.mxu0 0.0
      %1309 = vmatpush2.xpose.msra.mxu0 0.0
      %1310 = vmatprep.subr.mxu0 0.0
      %1311 = vmatpush2.xpose.msra.mxu0 0.0
      %1312 = vmatprep.subr.mxu0 0.0
      %1313 = vmatpush2.xpose.msra.mxu0 0.0
      %1314 = vmatprep.subr.mxu0 0.0
      %1315 = vmatpush2.xpose.msra.mxu0 0.0
      %1316 = vmatprep.subr.mxu0 0.0
      %1317 = vmatpush2.xpose.msra.mxu0 0.0
      %1318 = vmatprep.subr.mxu0 0.0
      %1319 = vmatpush2.xpose.msra.mxu0 0.0
      %1320 = vmatprep.subr.mxu0 0.0
      %1321 = vmatpush2.xpose.msra.mxu0 0.0
      %1322 = vmatprep.subr.mxu0 0.0
      %1323 = vmatpush2.xpose.msra.mxu0 0.0
      %1324 = vmatprep.subr.mxu0 0.0
      %1325 = vmatpush2.xpose.msra.mxu0 0.0
      %1326 = vmatprep.subr.mxu0 0.0
      %1327 = vmatpush2.xpose.msra.mxu0 0.0
      %1328 = vmatprep.subr.mxu0 0.0
      %1329 = vmatpush2.xpose.msra.mxu0 0.0
      %1330 = vmatprep.subr.mxu0 0.0
      %1331 = vmatpush2.xpose.msra.mxu0 0.0
      %1332 = vmatprep.subr.mxu0 0.0
      %1333 = vmatpush2.xpose.msra.mxu0 0.0
      %1334 = vmatprep.subr.mxu0 0.0
      %1335 = vmatpush2.xpose.msra.mxu0 0.0
      %1336 = vmatprep.subr.mxu0 0.0
      %1337 = vmatpush2.xpose.msra.mxu0 0.0
      %1338 = vmatprep.mubr.f32.mxu0 0.0
      %1339 = vmatmul.mubr.f32.gmra.mxu0 %v1270
      %v1340 = vpop.f32.mrf.mxu0
      %v1341 = vadd.f32 0.0, %v1340
      %v1342 = vpop.f32.mrf.mxu0
      %1343 = vdwg.mxu0
      %v1344 = vsel %vm1011, -inf, %v1341
      %v1345 = vsel %vm932, %v1344, -inf
      %1346 = vmax.xlane.f32.xlu0 %v1345
      %v1347 = vpop.xlane.xlu0 %1346
      %v1348 = vsub.f32 %v1344, %v1347
      %v1349 = vmul.f32 %v1348, 1.442695
      %v1350 = vpow.pop %v1349
      %v1351 = vsel %vm932, %v1350, 0.0
      %1352 = vadd.xlane.f32.xlu0 %v1351
      %v1353 = vpop.xlane.xlu0 %1352
      %v1354 = vrcp.pop %v1353
      %v1355 = vmul.f32 %v1350, %v1354
      %1356 = vrot.lane.b32.xlu0 %v924, 48
      %v1357 = vpop.permute.xlu0 %1356
      %v1360 = vsel %vm932, %v1355, 0
      %1362 = vmatprep.subr.mxu0 0.0
      %1363 = vmatpush1.msra.mxu0 0.0
      %1364 = vmatprep.subr.mxu0 0.0
      %1365 = vmatpush1.msra.mxu0 0.0
      %1366 = vmatprep.subr.mxu0 0.0
      %1367 = vmatpush1.msra.mxu0 0.0
      %1368 = vmatprep.subr.mxu0 0.0
      %1369 = vmatpush1.msra.mxu0 0.0
      %1370 = vmatprep.subr.mxu0 0.0
      %1371 = vmatpush1.msra.mxu0 0.0
      %1372 = vmatprep.subr.mxu0 0.0
      %1373 = vmatpush1.msra.mxu0 0.0
      %1374 = vmatprep.subr.mxu0 0.0
      %1375 = vmatpush1.msra.mxu0 0.0
      %1376 = vmatprep.subr.mxu0 0.0
      %1377 = vmatpush1.msra.mxu0 0.0
      %1378 = vmatprep.subr.mxu0 0.0
      %1379 = vmatpush1.msra.mxu0 0.0
      %1380 = vmatprep.subr.mxu0 0.0
      %1381 = vmatpush1.msra.mxu0 0.0
      %1382 = vmatprep.subr.mxu0 0.0
      %1383 = vmatpush1.msra.mxu0 0.0
      %1384 = vmatprep.subr.mxu0 0.0
      %1385 = vmatpush1.msra.mxu0 0.0
      %1386 = vmatprep.subr.mxu0 0.0
      %1387 = vmatpush1.msra.mxu0 0.0
      %1388 = vmatprep.subr.mxu0 0.0
      %1389 = vmatpush1.msra.mxu0 0.0
      %1390 = vmatprep.subr.mxu0 0.0
      %1391 = vmatpush1.msra.mxu0 0.0
      %1392 = vmatprep.subr.mxu0 0.0
      %1393 = vmatpush1.msra.mxu0 %v1357
      %1394 = vmatprep.subr.mxu0 0.0
      %1395 = vmatpush2.msra.mxu0 0.0
      %1396 = vmatprep.subr.mxu0 0.0
      %1397 = vmatpush2.msra.mxu0 0.0
      %1398 = vmatprep.subr.mxu0 0.0
      %1399 = vmatpush2.msra.mxu0 0.0
      %1400 = vmatprep.subr.mxu0 0.0
      %1401 = vmatpush2.msra.mxu0 0.0
      %1402 = vmatprep.subr.mxu0 0.0
      %1403 = vmatpush2.msra.mxu0 0.0
      %1404 = vmatprep.subr.mxu0 0.0
      %1405 = vmatpush2.msra.mxu0 0.0
      %1406 = vmatprep.subr.mxu0 0.0
      %1407 = vmatpush2.msra.mxu0 0.0
      %1408 = vmatprep.subr.mxu0 0.0
      %1409 = vmatpush2.msra.mxu0 0.0
      %1410 = vmatprep.subr.mxu0 0.0
      %1411 = vmatpush2.msra.mxu0 0.0
      %1412 = vmatprep.subr.mxu0 0.0
      %1413 = vmatpush2.msra.mxu0 0.0
      %1414 = vmatprep.subr.mxu0 0.0
      %1415 = vmatpush2.msra.mxu0 0.0
      %1416 = vmatprep.subr.mxu0 0.0
      %1417 = vmatpush2.msra.mxu0 0.0
      %1418 = vmatprep.subr.mxu0 0.0
      %1419 = vmatpush2.msra.mxu0 0.0
      %1420 = vmatprep.subr.mxu0 0.0
      %1421 = vmatpush2.msra.mxu0 0.0
      %1422 = vmatprep.subr.mxu0 0.0
      %1423 = vmatpush2.msra.mxu0 0.0
      %1424 = vmatprep.subr.mxu0 0.0
      %1425 = vmatpush2.msra.mxu0 0.0
      %1426 = vmatprep.mubr.f32.mxu0 0.0
      %1427 = vmatmul.mubr.f32.gmra.mxu0 %v1360
      %v1428 = vpop.f32.mrf.mxu0
      %v1429 = vadd.f32 0.0, %v1428
      %v1430 = vpop.f32.mrf.mxu0
      %1431 = vdwg.mxu0
      %1432 = vrot.lane.b32.xlu0 %v924, 104
      %v1433 = vpop.permute.xlu0 %1432
      %1434 = vrot.lane.b32.xlu0 %v924, 72
      %v1435 = vpop.permute.xlu0 %1434
      %v1436 = vsel %vm932, %v1433, 0
      %v1438 = vsel %vm932, %v1435, 0
      %1440 = vmatprep.subr.mxu0 0.0
      %1441 = vmatpush1.xpose.msra.mxu0 0.0
      %1442 = vmatprep.subr.mxu0 0.0
      %1443 = vmatpush1.xpose.msra.mxu0 0.0
      %1444 = vmatprep.subr.mxu0 0.0
      %1445 = vmatpush1.xpose.msra.mxu0 0.0
      %1446 = vmatprep.subr.mxu0 0.0
      %1447 = vmatpush1.xpose.msra.mxu0 0.0
      %1448 = vmatprep.subr.mxu0 0.0
      %1449 = vmatpush1.xpose.msra.mxu0 0.0
      %1450 = vmatprep.subr.mxu0 0.0
      %1451 = vmatpush1.xpose.msra.mxu0 0.0
      %1452 = vmatprep.subr.mxu0 0.0
      %1453 = vmatpush1.xpose.msra.mxu0 0.0
      %1454 = vmatprep.subr.mxu0 0.0
      %1455 = vmatpush1.xpose.msra.mxu0 0.0
      %1456 = vmatprep.subr.mxu0 0.0
      %1457 = vmatpush1.xpose.msra.mxu0 0.0
      %1458 = vmatprep.subr.mxu0 0.0
      %1459 = vmatpush1.xpose.msra.mxu0 0.0
      %1460 = vmatprep.subr.mxu0 0.0
      %1461 = vmatpush1.xpose.msra.mxu0 0.0
      %1462 = vmatprep.subr.mxu0 0.0
      %1463 = vmatpush1.xpose.msra.mxu0 0.0
      %1464 = vmatprep.subr.mxu0 0.0
      %1465 = vmatpush1.xpose.msra.mxu0 0.0
      %1466 = vmatprep.subr.mxu0 0.0
      %1467 = vmatpush1.xpose.msra.mxu0 0.0
      %1468 = vmatprep.subr.mxu0 0.0
      %1469 = vmatpush1.xpose.msra.mxu0 0.0
      %1470 = vmatprep.subr.mxu0 0.0
      %1471 = vmatpush1.xpose.msra.mxu0 %v1438
      %1472 = vmatprep.subr.mxu0 0.0
      %1473 = vmatpush2.xpose.msra.mxu0 0.0
      %1474 = vmatprep.subr.mxu0 0.0
      %1475 = vmatpush2.xpose.msra.mxu0 0.0
      %1476 = vmatprep.subr.mxu0 0.0
      %1477 = vmatpush2.xpose.msra.mxu0 0.0
      %1478 = vmatprep.subr.mxu0 0.0
      %1479 = vmatpush2.xpose.msra.mxu0 0.0
      %1480 = vmatprep.subr.mxu0 0.0
      %1481 = vmatpush2.xpose.msra.mxu0 0.0
      %1482 = vmatprep.subr.mxu0 0.0
      %1483 = vmatpush2.xpose.msra.mxu0 0.0
      %1484 = vmatprep.subr.mxu0 0.0
      %1485 = vmatpush2.xpose.msra.mxu0 0.0
      %1486 = vmatprep.subr.mxu0 0.0
      %1487 = vmatpush2.xpose.msra.mxu0 0.0
      %1488 = vmatprep.subr.mxu0 0.0
      %1489 = vmatpush2.xpose.msra.mxu0 0.0
      %1490 = vmatprep.subr.mxu0 0.0
      %1491 = vmatpush2.xpose.msra.mxu0 0.0
      %1492 = vmatprep.subr.mxu0 0.0
      %1493 = vmatpush2.xpose.msra.mxu0 0.0
      %1494 = vmatprep.subr.mxu0 0.0
      %1495 = vmatpush2.xpose.msra.mxu0 0.0
      %1496 = vmatprep.subr.mxu0 0.0
      %1497 = vmatpush2.xpose.msra.mxu0 0.0
      %1498 = vmatprep.subr.mxu0 0.0
      %1499 = vmatpush2.xpose.msra.mxu0 0.0
      %1500 = vmatprep.subr.mxu0 0.0
      %1501 = vmatpush2.xpose.msra.mxu0 0.0
      %1502 = vmatprep.subr.mxu0 0.0
      %1503 = vmatpush2.xpose.msra.mxu0 0.0
      %1504 = vmatprep.mubr.f32.mxu0 0.0
      %1505 = vmatmul.mubr.f32.gmra.mxu0 %v1436
      %v1506 = vpop.f32.mrf.mxu0
      %v1507 = vadd.f32 0.0, %v1506
      %v1508 = vpop.f32.mrf.mxu0
      %1509 = vdwg.mxu0
      %v1510 = vsel %vm1011, -inf, %v1507
      %v1511 = vsel %vm932, %v1510, -inf
      %1512 = vmax.xlane.f32.xlu0 %v1511
      %v1513 = vpop.xlane.xlu0 %1512
      %v1514 = vsub.f32 %v1510, %v1513
      %v1515 = vmul.f32 %v1514, 1.442695
      %v1516 = vpow.pop %v1515
      %v1517 = vsel %vm932, %v1516, 0.0
      %1518 = vadd.xlane.f32.xlu0 %v1517
      %v1519 = vpop.xlane.xlu0 %1518
      %v1520 = vrcp.pop %v1519
      %v1521 = vmul.f32 %v1516, %v1520
      %1522 = vrot.lane.b32.xlu0 %v924, 40
      %v1523 = vpop.permute.xlu0 %1522
      %v1526 = vsel %vm932, %v1521, 0
      %1528 = vmatprep.subr.mxu0 0.0
      %1529 = vmatpush1.msra.mxu0 0.0
      %1530 = vmatprep.subr.mxu0 0.0
      %1531 = vmatpush1.msra.mxu0 0.0
      %1532 = vmatprep.subr.mxu0 0.0
      %1533 = vmatpush1.msra.mxu0 0.0
      %1534 = vmatprep.subr.mxu0 0.0
      %1535 = vmatpush1.msra.mxu0 0.0
      %1536 = vmatprep.subr.mxu0 0.0
      %1537 = vmatpush1.msra.mxu0 0.0
      %1538 = vmatprep.subr.mxu0 0.0
      %1539 = vmatpush1.msra.mxu0 0.0
      %1540 = vmatprep.subr.mxu0 0.0
      %1541 = vmatpush1.msra.mxu0 0.0
      %1542 = vmatprep.subr.mxu0 0.0
      %1543 = vmatpush1.msra.mxu0 0.0
      %1544 = vmatprep.subr.mxu0 0.0
      %1545 = vmatpush1.msra.mxu0 0.0
      %1546 = vmatprep.subr.mxu0 0.0
      %1547 = vmatpush1.msra.mxu0 0.0
      %1548 = vmatprep.subr.mxu0 0.0
      %1549 = vmatpush1.msra.mxu0 0.0
      %1550 = vmatprep.subr.mxu0 0.0
      %1551 = vmatpush1.msra.mxu0 0.0
      %1552 = vmatprep.subr.mxu0 0.0
      %1553 = vmatpush1.msra.mxu0 0.0
      %1554 = vmatprep.subr.mxu0 0.0
      %1555 = vmatpush1.msra.mxu0 0.0
      %1556 = vmatprep.subr.mxu0 0.0
      %1557 = vmatpush1.msra.mxu0 0.0
      %1558 = vmatprep.subr.mxu0 0.0
      %1559 = vmatpush1.msra.mxu0 %v1523
      %1560 = vmatprep.subr.mxu0 0.0
      %1561 = vmatpush2.msra.mxu0 0.0
      %1562 = vmatprep.subr.mxu0 0.0
      %1563 = vmatpush2.msra.mxu0 0.0
      %1564 = vmatprep.subr.mxu0 0.0
      %1565 = vmatpush2.msra.mxu0 0.0
      %1566 = vmatprep.subr.mxu0 0.0
      %1567 = vmatpush2.msra.mxu0 0.0
      %1568 = vmatprep.subr.mxu0 0.0
      %1569 = vmatpush2.msra.mxu0 0.0
      %1570 = vmatprep.subr.mxu0 0.0
      %1571 = vmatpush2.msra.mxu0 0.0
      %1572 = vmatprep.subr.mxu0 0.0
      %1573 = vmatpush2.msra.mxu0 0.0
      %1574 = vmatprep.subr.mxu0 0.0
      %1575 = vmatpush2.msra.mxu0 0.0
      %1576 = vmatprep.subr.mxu0 0.0
      %1577 = vmatpush2.msra.mxu0 0.0
      %1578 = vmatprep.subr.mxu0 0.0
      %1579 = vmatpush2.msra.mxu0 0.0
      %1580 = vmatprep.subr.mxu0 0.0
      %1581 = vmatpush2.msra.mxu0 0.0
      %1582 = vmatprep.subr.mxu0 0.0
      %1583 = vmatpush2.msra.mxu0 0.0
      %1584 = vmatprep.subr.mxu0 0.0
      %1585 = vmatpush2.msra.mxu0 0.0
      %1586 = vmatprep.subr.mxu0 0.0
      %1587 = vmatpush2.msra.mxu0 0.0
      %1588 = vmatprep.subr.mxu0 0.0
      %1589 = vmatpush2.msra.mxu0 0.0
      %1590 = vmatprep.subr.mxu0 0.0
      %1591 = vmatpush2.msra.mxu0 0.0
      %1592 = vmatprep.mubr.f32.mxu0 0.0
      %1593 = vmatmul.mubr.f32.gmra.mxu0 %v1526
      %v1594 = vpop.f32.mrf.mxu0
      %v1595 = vadd.f32 0.0, %v1594
      %v1596 = vpop.f32.mrf.mxu0
      %1597 = vdwg.mxu0
      %1599 = vrot.lane.b32.xlu0 %v1263, 8
      %v1600 = vpop.permute.xlu0 %1599
      %1603 = vrot.lane.b32.xlu0 %v1429, 16
      %v1604 = vpop.permute.xlu0 %1603
      %1607 = vrot.lane.b32.xlu0 %v1595, 24
      %v1608 = vpop.permute.xlu0 %1607
      %v1610 = vsel %vm932, %v1097, %v1600
      %vm1611 = vcmask 130048
      %v1612 = vsel %vm1611, %v1610, %v1604
      %vm1613 = vcmask 195584
      %v1614 = vsel %vm1613, %v1612, %v1608
      %v1615 = vld [vmem:[%s4] sm:$0xf]
      %v1616 = vld [vmem:[%s4 + $0x4] sm:$0xf]
      %v1617 = vld [vmem:[%s4 + $0x8] sm:$0xf]
      %v1618 = vld [vmem:[%s4 + $0xc] sm:$0xf]
      %v1619 = vld [vmem:[%s5] sm:$0x1]
      %v1620 = vpack.c.bf16 %v1614, %v1614
      %v1622 = vlaneseq
      %v1623 = vshrl.u32 %v1622, 7
      %v1624 = vsub.s32 0, %v1623
      %v1625 = vrot.slane %v1619, %v1624
      %v1631 = vunpack.c.l.b16 %v1615
      %v1632 = vunpack.c.l.b16 %v1616
      %v1633 = vunpack.c.l.b16 %v1617
      %v1634 = vunpack.c.l.b16 %v1618
      %v1635 = vpack.c.b16 %v1632, %v1631
      %v1636 = vpack.c.b16 %v1634, %v1633
      %v1640 = vsel %vm885, %v1620, 0
      %1642 = vmatprep.subr.bf16.mxu0 0
      %1643 = vmatpush1.bf16.msra.mxu0 0
      %1644 = vmatprep.subr.bf16.mxu0 0
      %1645 = vmatpush1.bf16.msra.mxu0 0
      %1646 = vmatprep.subr.bf16.mxu0 0
      %1647 = vmatpush1.bf16.msra.mxu0 0
      %1648 = vmatprep.subr.bf16.mxu0 0
      %1649 = vmatpush1.bf16.msra.mxu0 0
      %1650 = vmatprep.subr.bf16.mxu0 0
      %1651 = vmatpush1.bf16.msra.mxu0 0
      %1652 = vmatprep.subr.bf16.mxu0 0
      %1653 = vmatpush1.bf16.msra.mxu0 0
      %1654 = vmatprep.subr.bf16.mxu0 0
      %1655 = vmatpush1.bf16.msra.mxu0 %v1636
      %1656 = vmatprep.subr.bf16.mxu0 0
      %1657 = vmatpush1.bf16.msra.mxu0 %v1635
      %1658 = vmatprep.subr.bf16.mxu0 0
      %1659 = vmatpush2.bf16.msra.mxu0 0
      %1660 = vmatprep.subr.bf16.mxu0 0
      %1661 = vmatpush2.bf16.msra.mxu0 0
      %1662 = vmatprep.subr.bf16.mxu0 0
      %1663 = vmatpush2.bf16.msra.mxu0 0
      %1664 = vmatprep.subr.bf16.mxu0 0
      %1665 = vmatpush2.bf16.msra.mxu0 0
      %1666 = vmatprep.subr.bf16.mxu0 0
      %1667 = vmatpush2.bf16.msra.mxu0 0
      %1668 = vmatprep.subr.bf16.mxu0 0
      %1669 = vmatpush2.bf16.msra.mxu0 0
      %1670 = vmatprep.subr.bf16.mxu0 0
      %1671 = vmatpush2.bf16.msra.mxu0 0
      %1672 = vmatprep.subr.bf16.mxu0 0
      %1673 = vmatpush2.bf16.msra.mxu0 0
      %1674 = vmatprep.mubr.bf16.mxu0 0
      %1675 = vmatmul.mubr.bf16.gmra.mxu0 %v1640
      %v1676 = vpop.f32.mrf.mxu0
      %v1677 = vadd.f32 %v1625, %v1676
      %v1678 = vpop.f32.mrf.mxu0
      %v1679 = vpop.f32.mrf.mxu0
      %v1680 = vpop.f32.mrf.mxu0
      %1681 = vdwg.mxu0
      %v1682 = vadd.f32 %v1677, %v860
      %v1683 = vld [vmem:[%s6] sm:$0x1]
      %v1684 = vld [vmem:[%s7] sm:$0x1]
      %v1685 = vsel %vm885, %v1682, 0.0
      %1686 = vadd.xlane.f32.xlu0 %v1685
      %v1687 = vpop.xlane.xlu0 %1686
      %v1688 = vrcp.pop 32.0
      %v1689 = vmul.f32 %v1687, %v1688
      %v1690 = vmul.f32 %v1682, %v1682
      %v1691 = vsel %vm885, %v1690, 0.0
      %1692 = vadd.xlane.f32.xlu0 %v1691
      %v1693 = vpop.xlane.xlu0 %1692
      %v1694 = vmul.f32 %v1693, %v1688
      %v1695 = vmul.f32 %v1689, %v1689
      %v1696 = vsub.f32 %v1694, %v1695
      %v1697 = vmax.f32 %v1696, 0.0
      %v1698 = vsub.f32 %v1682, %v1689
      %v1699 = vadd.f32 %v1697, 1e-05
      %v1700 = vrsqrt.pop %v1699
      %v1701 = vmul.f32 %v1698, %v1700
      %v1703 = vlaneseq
      %v1704 = vshrl.u32 %v1703, 7
      %v1705 = vsub.s32 0, %v1704
      %v1706 = vrot.slane %v1683, %v1705
      %v1708 = vmul.f32 %v1701, %v1706
      %v1710 = vlaneseq
      %v1711 = vshrl.u32 %v1710, 7
      %v1712 = vsub.s32 0, %v1711
      %v1713 = vrot.slane %v1684, %v1712
      %v1715 = vadd.f32 %v1708, %v1713
      %v1716 = vld [vmem:[%s8] sm:$0xf]
      %v1717 = vld [vmem:[%s8 + $0x4] sm:$0xf]
      %v1718 = vld [vmem:[%s8 + $0x8] sm:$0xf]
      %v1719 = vld [vmem:[%s8 + $0xc] sm:$0xf]
      %v1720 = vld [vmem:[%s9] sm:$0x1]
      %v1721 = vld [vmem:[%s10] sm:$0xf]
      %v1722 = vld [vmem:[%s10 + $0x4] sm:$0xf]
      %v1723 = vld [vmem:[%s10 + $0x8] sm:$0xf]
      %v1724 = vld [vmem:[%s10 + $0xc] sm:$0xf]
      %v1725 = vld [vmem:[%s10 + $0x10] sm:$0xf]
      %v1726 = vld [vmem:[%s10 + $0x14] sm:$0xf]
      %v1727 = vld [vmem:[%s10 + $0x18] sm:$0xf]
      %v1728 = vld [vmem:[%s10 + $0x1c] sm:$0xf]
      %v1729 = vld [vmem:[%s11] sm:$0x1]
      %v1730 = vpack.c.bf16 %v1715, %v1715
      %v1732 = vlaneseq
      %v1733 = vshrl.u32 %v1732, 7
      %v1734 = vsub.s32 0, %v1733
      %v1735 = vrot.slane %v1720, %v1734
      %v1741 = vunpack.c.l.b16 %v1716
      %v1742 = vunpack.c.l.b16 %v1717
      %v1743 = vunpack.c.l.b16 %v1718
      %v1744 = vunpack.c.l.b16 %v1719
      %v1745 = vpack.c.b16 %v1742, %v1741
      %v1746 = vpack.c.b16 %v1744, %v1743
      %v1750 = vsel %vm885, %v1730, 0
      %1752 = vmatprep.subr.bf16.mxu0 0
      %1753 = vmatpush1.bf16.msra.mxu0 0
      %1754 = vmatprep.subr.bf16.mxu0 0
      %1755 = vmatpush1.bf16.msra.mxu0 0
      %1756 = vmatprep.subr.bf16.mxu0 0
      %1757 = vmatpush1.bf16.msra.mxu0 0
      %1758 = vmatprep.subr.bf16.mxu0 0
      %1759 = vmatpush1.bf16.msra.mxu0 0
      %1760 = vmatprep.subr.bf16.mxu0 0
      %1761 = vmatpush1.bf16.msra.mxu0 0
      %1762 = vmatprep.subr.bf16.mxu0 0
      %1763 = vmatpush1.bf16.msra.mxu0 0
      %1764 = vmatprep.subr.bf16.mxu0 0
      %1765 = vmatpush1.bf16.msra.mxu0 %v1746
      %1766 = vmatprep.subr.bf16.mxu0 0
      %1767 = vmatpush1.bf16.msra.mxu0 %v1745
      %1768 = vmatprep.subr.bf16.mxu0 0
      %1769 = vmatpush2.bf16.msra.mxu0 0
      %1770 = vmatprep.subr.bf16.mxu0 0
      %1771 = vmatpush2.bf16.msra.mxu0 0
      %1772 = vmatprep.subr.bf16.mxu0 0
      %1773 = vmatpush2.bf16.msra.mxu0 0
      %1774 = vmatprep.subr.bf16.mxu0 0
      %1775 = vmatpush2.bf16.msra.mxu0 0
      %1776 = vmatprep.subr.bf16.mxu0 0
      %1777 = vmatpush2.bf16.msra.mxu0 0
      %1778 = vmatprep.subr.bf16.mxu0 0
      %1779 = vmatpush2.bf16.msra.mxu0 0
      %1780 = vmatprep.subr.bf16.mxu0 0
      %1781 = vmatpush2.bf16.msra.mxu0 0
      %1782 = vmatprep.subr.bf16.mxu0 0
      %1783 = vmatpush2.bf16.msra.mxu0 0
      %1784 = vmatprep.mubr.bf16.mxu0 0
      %1785 = vmatmul.mubr.bf16.gmra.mxu0 %v1750
      %v1786 = vpop.f32.mrf.mxu0
      %v1787 = vadd.f32 %v1735, %v1786
      %v1788 = vpop.f32.mrf.mxu0
      %v1789 = vpop.f32.mrf.mxu0
      %v1790 = vpop.f32.mrf.mxu0
      %1791 = vdwg.mxu0
      %v1792 = vmax.f32 %v1787, 0.0
      %v1793 = vpack.c.bf16 %v1792, %v1792
      %v1795 = vlaneseq
      %v1796 = vshrl.u32 %v1795, 7
      %v1797 = vsub.s32 0, %v1796
      %v1798 = vrot.slane %v1729, %v1797
      %v1808 = vunpack.c.l.b16 %v1721
      %v1809 = vunpack.c.l.b16 %v1722
      %v1810 = vunpack.c.l.b16 %v1723
      %v1811 = vunpack.c.l.b16 %v1724
      %v1812 = vunpack.c.l.b16 %v1725
      %v1813 = vunpack.c.l.b16 %v1726
      %v1814 = vunpack.c.l.b16 %v1727
      %v1815 = vunpack.c.l.b16 %v1728
      %v1816 = vpack.c.b16 %v1809, %v1808
      %v1817 = vpack.c.b16 %v1811, %v1810
      %v1818 = vpack.c.b16 %v1813, %v1812
      %v1819 = vpack.c.b16 %v1815, %v1814
      %vm1824 = vcmask 523264
      %v1826 = vsel %vm1824, %v1793, 0
      %1828 = vmatprep.subr.bf16.mxu0 0
      %1829 = vmatpush1.bf16.msra.mxu0 0
      %1830 = vmatprep.subr.bf16.mxu0 0
      %1831 = vmatpush1.bf16.msra.mxu0 0
      %1832 = vmatprep.subr.bf16.mxu0 0
      %1833 = vmatpush1.bf16.msra.mxu0 0
      %1834 = vmatprep.subr.bf16.mxu0 0
      %1835 = vmatpush1.bf16.msra.mxu0 0
      %1836 = vmatprep.subr.bf16.mxu0 0
      %1837 = vmatpush1.bf16.msra.mxu0 %v1819
      %1838 = vmatprep.subr.bf16.mxu0 0
      %1839 = vmatpush1.bf16.msra.mxu0 %v1818
      %1840 = vmatprep.subr.bf16.mxu0 0
      %1841 = vmatpush1.bf16.msra.mxu0 %v1817
      %1842 = vmatprep.subr.bf16.mxu0 0
      %1843 = vmatpush1.bf16.msra.mxu0 %v1816
      %1844 = vmatprep.subr.bf16.mxu0 0
      %1845 = vmatpush2.bf16.msra.mxu0 0
      %1846 = vmatprep.subr.bf16.mxu0 0
      %1847 = vmatpush2.bf16.msra.mxu0 0
      %1848 = vmatprep.subr.bf16.mxu0 0
      %1849 = vmatpush2.bf16.msra.mxu0 0
      %1850 = vmatprep.subr.bf16.mxu0 0
      %1851 = vmatpush2.bf16.msra.mxu0 0
      %1852 = vmatprep.subr.bf16.mxu0 0
      %1853 = vmatpush2.bf16.msra.mxu0 0
      %1854 = vmatprep.subr.bf16.mxu0 0
      %1855 = vmatpush2.bf16.msra.mxu0 0
      %1856 = vmatprep.subr.bf16.mxu0 0
      %1857 = vmatpush2.bf16.msra.mxu0 0
      %1858 = vmatprep.subr.bf16.mxu0 0
      %1859 = vmatpush2.bf16.msra.mxu0 0
      %1860 = vmatprep.mubr.bf16.mxu0 0
      %1861 = vmatmul.mubr.bf16.gmra.mxu0 %v1826
      %v1862 = vpop.f32.mrf.mxu0
      %v1863 = vadd.f32 %v1798, %v1862
      %v1864 = vpop.f32.mrf.mxu0
      %v1865 = vpop.f32.mrf.mxu0
      %v1866 = vpop.f32.mrf.mxu0
      %1867 = vdwg.mxu0
      %v1868 = vadd.f32 %v1715, %v1863
      %v1869 = vld [vmem:[%s12] sm:$0x1]
      %v1870 = vld [vmem:[%s13] sm:$0x1]
      %v1871 = vsel %vm885, %v1868, 0.0
      %1872 = vadd.xlane.f32.xlu0 %v1871
      %v1873 = vpop.xlane.xlu0 %1872
      %v1874 = vmul.f32 %v1873, %v1688
      %v1875 = vmul.f32 %v1868, %v1868
      %v1876 = vsel %vm885, %v1875, 0.0
      %1877 = vadd.xlane.f32.xlu0 %v1876
      %v1878 = vpop.xlane.xlu0 %1877
      %v1879 = vmul.f32 %v1878, %v1688
      %v1880 = vmul.f32 %v1874, %v1874
      %v1881 = vsub.f32 %v1879, %v1880
      %v1882 = vmax.f32 %v1881, 0.0
      %v1883 = vsub.f32 %v1868, %v1874
      %v1884 = vadd.f32 %v1882, 1e-05
      %v1885 = vrsqrt.pop %v1884
      %v1886 = vmul.f32 %v1883, %v1885
      %v1888 = vlaneseq
      %v1889 = vshrl.u32 %v1888, 7
      %v1890 = vsub.s32 0, %v1889
      %v1891 = vrot.slane %v1869, %v1890
      %v1893 = vmul.f32 %v1886, %v1891
      %v1895 = vlaneseq
      %v1896 = vshrl.u32 %v1895, 7
      %v1897 = vsub.s32 0, %v1896
      %v1898 = vrot.slane %v1870, %v1897
      %v1900 = vadd.f32 %v1893, %v1898
      %v1901 = vld [vmem:[%s14] sm:$0xf]
      %v1902 = vld [vmem:[%s14 + $0x4] sm:$0xf]
      %v1903 = vld [vmem:[%s14 + $0x8] sm:$0xf]
      %v1904 = vld [vmem:[%s14 + $0xc] sm:$0xf]
      %v1905 = vld [vmem:[%s15] sm:$0x1]
      %v1906 = vpack.c.bf16 %v1900, %v1900
      %v1908 = vlaneseq
      %v1909 = vshrl.u32 %v1908, 7
      %v1910 = vsub.s32 0, %v1909
      %v1911 = vrot.slane %v1905, %v1910
      %v1917 = vunpack.c.l.b16 %v1901
      %v1918 = vunpack.c.l.b16 %v1902
      %v1919 = vunpack.c.l.b16 %v1903
      %v1920 = vunpack.c.l.b16 %v1904
      %v1921 = vpack.c.b16 %v1918, %v1917
      %v1922 = vpack.c.b16 %v1920, %v1919
      %v1926 = vsel %vm885, %v1906, 0
      %1928 = vmatprep.subr.bf16.mxu0 0
      %1929 = vmatpush1.bf16.msra.mxu0 0
      %1930 = vmatprep.subr.bf16.mxu0 0
      %1931 = vmatpush1.bf16.msra.mxu0 0
      %1932 = vmatprep.subr.bf16.mxu0 0
      %1933 = vmatpush1.bf16.msra.mxu0 0
      %1934 = vmatprep.subr.bf16.mxu0 0
      %1935 = vmatpush1.bf16.msra.mxu0 0
      %1936 = vmatprep.subr.bf16.mxu0 0
      %1937 = vmatpush1.bf16.msra.mxu0 0
      %1938 = vmatprep.subr.bf16.mxu0 0
      %1939 = vmatpush1.bf16.msra.mxu0 0
      %1940 = vmatprep.subr.bf16.mxu0 0
      %1941 = vmatpush1.bf16.msra.mxu0 %v1922
      %1942 = vmatprep.subr.bf16.mxu0 0
      %1943 = vmatpush1.bf16.msra.mxu0 %v1921
      %1944 = vmatprep.subr.bf16.mxu0 0
      %1945 = vmatpush2.bf16.msra.mxu0 0
      %1946 = vmatprep.subr.bf16.mxu0 0
      %1947 = vmatpush2.bf16.msra.mxu0 0
      %1948 = vmatprep.subr.bf16.mxu0 0
      %1949 = vmatpush2.bf16.msra.mxu0 0
      %1950 = vmatprep.subr.bf16.mxu0 0
      %1951 = vmatpush2.bf16.msra.mxu0 0
      %1952 = vmatprep.subr.bf16.mxu0 0
      %1953 = vmatpush2.bf16.msra.mxu0 0
      %1954 = vmatprep.subr.bf16.mxu0 0
      %1955 = vmatpush2.bf16.msra.mxu0 0
      %1956 = vmatprep.subr.bf16.mxu0 0
      %1957 = vmatpush2.bf16.msra.mxu0 0
      %1958 = vmatprep.subr.bf16.mxu0 0
      %1959 = vmatpush2.bf16.msra.mxu0 0
      %1960 = vmatprep.mubr.bf16.mxu0 0
      %1961 = vmatmul.mubr.bf16.gmra.mxu0 %v1926
      %v1962 = vpop.f32.mrf.mxu0
      %v1963 = vadd.f32 %v1911, %v1962
      %v1964 = vpop.f32.mrf.mxu0
      %v1965 = vpop.f32.mrf.mxu0
      %v1966 = vpop.f32.mrf.mxu0
      %1967 = vdwg.mxu0
      %v1968 = vld [vmem:[%s16] sm:$0xf]
      %v1969 = vld [vmem:[%s16 + $0x4] sm:$0xf]
      %v1970 = vld [vmem:[%s16 + $0x8] sm:$0xf]
      %v1971 = vld [vmem:[%s16 + $0xc] sm:$0xf]
      %v1972 = vld [vmem:[%s17] sm:$0x1]
      %v1973 = vpack.c.bf16 %v859, %v859
      %v1975 = vlaneseq
      %v1976 = vshrl.u32 %v1975, 7
      %v1977 = vsub.s32 0, %v1976
      %v1978 = vrot.slane %v1972, %v1977
      %v1984 = vunpack.c.l.b16 %v1968
      %v1985 = vunpack.c.l.b16 %v1969
      %v1986 = vunpack.c.l.b16 %v1970
      %v1987 = vunpack.c.l.b16 %v1971
      %v1988 = vpack.c.b16 %v1985, %v1984
      %v1989 = vpack.c.b16 %v1987, %v1986
      %v1993 = vsel %vm885, %v1973, 0
      %1995 = vmatprep.subr.bf16.mxu0 0
      %1996 = vmatpush1.bf16.msra.mxu0 0
      %1997 = vmatprep.subr.bf16.mxu0 0
      %1998 = vmatpush1.bf16.msra.mxu0 0
      %1999 = vmatprep.subr.bf16.mxu0 0
      %2000 = vmatpush1.bf16.msra.mxu0 0
      %2001 = vmatprep.subr.bf16.mxu0 0
      %2002 = vmatpush1.bf16.msra.mxu0 0
      %2003 = vmatprep.subr.bf16.mxu0 0
      %2004 = vmatpush1.bf16.msra.mxu0 0
      %2005 = vmatprep.subr.bf16.mxu0 0
      %2006 = vmatpush1.bf16.msra.mxu0 0
      %2007 = vmatprep.subr.bf16.mxu0 0
      %2008 = vmatpush1.bf16.msra.mxu0 %v1989
      %2009 = vmatprep.subr.bf16.mxu0 0
      %2010 = vmatpush1.bf16.msra.mxu0 %v1988
      %2011 = vmatprep.subr.bf16.mxu0 0
      %2012 = vmatpush2.bf16.msra.mxu0 0
      %2013 = vmatprep.subr.bf16.mxu0 0
      %2014 = vmatpush2.bf16.msra.mxu0 0
      %2015 = vmatprep.subr.bf16.mxu0 0
      %2016 = vmatpush2.bf16.msra.mxu0 0
      %2017 = vmatprep.subr.bf16.mxu0 0
      %2018 = vmatpush2.bf16.msra.mxu0 0
      %2019 = vmatprep.subr.bf16.mxu0 0
      %2020 = vmatpush2.bf16.msra.mxu0 0
      %2021 = vmatprep.subr.bf16.mxu0 0
      %2022 = vmatpush2.bf16.msra.mxu0 0
      %2023 = vmatprep.subr.bf16.mxu0 0
      %2024 = vmatpush2.bf16.msra.mxu0 0
      %2025 = vmatprep.subr.bf16.mxu0 0
      %2026 = vmatpush2.bf16.msra.mxu0 0
      %2027 = vmatprep.mubr.bf16.mxu0 0
      %2028 = vmatmul.mubr.bf16.gmra.mxu0 %v1993
      %v2029 = vpop.f32.mrf.mxu0
      %v2030 = vadd.f32 %v1978, %v2029
      %v2031 = vpop.f32.mrf.mxu0
      %v2032 = vpop.f32.mrf.mxu0
      %v2033 = vpop.f32.mrf.mxu0
      %2034 = vdwg.mxu0
      %v2036 = vsel %vm932, %v1963, 0
      %v2039 = vsel %vm932, %v2030, 0
      %2041 = vmatprep.subr.mxu0 0.0
      %2042 = vmatpush1.xpose.msra.mxu0 0.0
      %2043 = vmatprep.subr.mxu0 0.0
      %2044 = vmatpush1.xpose.msra.mxu0 0.0
      %2045 = vmatprep.subr.mxu0 0.0
      %2046 = vmatpush1.xpose.msra.mxu0 0.0
      %2047 = vmatprep.subr.mxu0 0.0
      %2048 = vmatpush1.xpose.msra.mxu0 0.0
      %2049 = vmatprep.subr.mxu0 0.0
      %2050 = vmatpush1.xpose.msra.mxu0 0.0
      %2051 = vmatprep.subr.mxu0 0.0
      %2052 = vmatpush1.xpose.msra.mxu0 0.0
      %2053 = vmatprep.subr.mxu0 0.0
      %2054 = vmatpush1.xpose.msra.mxu0 0.0
      %2055 = vmatprep.subr.mxu0 0.0
      %2056 = vmatpush1.xpose.msra.mxu0 0.0
      %2057 = vmatprep.subr.mxu0 0.0
      %2058 = vmatpush1.xpose.msra.mxu0 0.0
      %2059 = vmatprep.subr.mxu0 0.0
      %2060 = vmatpush1.xpose.msra.mxu0 0.0
      %2061 = vmatprep.subr.mxu0 0.0
      %2062 = vmatpush1.xpose.msra.mxu0 0.0
      %2063 = vmatprep.subr.mxu0 0.0
      %2064 = vmatpush1.xpose.msra.mxu0 0.0
      %2065 = vmatprep.subr.mxu0 0.0
      %2066 = vmatpush1.xpose.msra.mxu0 0.0
      %2067 = vmatprep.subr.mxu0 0.0
      %2068 = vmatpush1.xpose.msra.mxu0 0.0
      %2069 = vmatprep.subr.mxu0 0.0
      %2070 = vmatpush1.xpose.msra.mxu0 0.0
      %2071 = vmatprep.subr.mxu0 0.0
      %2072 = vmatpush1.xpose.msra.mxu0 %v2039
      %2073 = vmatprep.subr.mxu0 0.0
      %2074 = vmatpush2.xpose.msra.mxu0 0.0
      %2075 = vmatprep.subr.mxu0 0.0
      %2076 = vmatpush2.xpose.msra.mxu0 0.0
      %2077 = vmatprep.subr.mxu0 0.0
      %2078 = vmatpush2.xpose.msra.mxu0 0.0
      %2079 = vmatprep.subr.mxu0 0.0
      %2080 = vmatpush2.xpose.msra.mxu0 0.0
      %2081 = vmatprep.subr.mxu0 0.0
      %2082 = vmatpush2.xpose.msra.mxu0 0.0
      %2083 = vmatprep.subr.mxu0 0.0
      %2084 = vmatpush2.xpose.msra.mxu0 0.0
      %2085 = vmatprep.subr.mxu0 0.0
      %2086 = vmatpush2.xpose.msra.mxu0 0.0
      %2087 = vmatprep.subr.mxu0 0.0
      %2088 = vmatpush2.xpose.msra.mxu0 0.0
      %2089 = vmatprep.subr.mxu0 0.0
      %2090 = vmatpush2.xpose.msra.mxu0 0.0
      %2091 = vmatprep.subr.mxu0 0.0
      %2092 = vmatpush2.xpose.msra.mxu0 0.0
      %2093 = vmatprep.subr.mxu0 0.0
      %2094 = vmatpush2.xpose.msra.mxu0 0.0
      %2095 = vmatprep.subr.mxu0 0.0
      %2096 = vmatpush2.xpose.msra.mxu0 0.0
      %2097 = vmatprep.subr.mxu0 0.0
      %2098 = vmatpush2.xpose.msra.mxu0 0.0
      %2099 = vmatprep.subr.mxu0 0.0
      %2100 = vmatpush2.xpose.msra.mxu0 0.0
      %2101 = vmatprep.subr.mxu0 0.0
      %2102 = vmatpush2.xpose.msra.mxu0 0.0
      %2103 = vmatprep.subr.mxu0 0.0
      %2104 = vmatpush2.xpose.msra.mxu0 0.0
      %2105 = vmatprep.mubr.f32.mxu0 0.0
      %2106 = vmatmul.mubr.f32.gmra.mxu0 %v2036
      %v2107 = vpop.f32.mrf.mxu0
      %v2108 = vadd.f32 0.0, %v2107
      %v2109 = vpop.f32.mrf.mxu0
      %2110 = vdwg.mxu0
      %v2111 = vsel %vm932, %v2108, -inf
      %2112 = vmax.xlane.f32.xlu0 %v2111
      %v2113 = vpop.xlane.xlu0 %2112
      %v2114 = vsub.f32 %v2108, %v2113
      %v2115 = vmul.f32 %v2114, 1.442695
      %v2116 = vpow.pop %v2115
      %v2117 = vsel %vm932, %v2116, 0.0
      %2118 = vadd.xlane.f32.xlu0 %v2117
      %v2119 = vpop.xlane.xlu0 %2118
      %v2120 = vrcp.pop %v2119
      %v2121 = vmul.f32 %v2116, %v2120
      %2122 = vrot.lane.b32.xlu0 %v2030, 96
      %v2123 = vpop.permute.xlu0 %2122
      %v2126 = vsel %vm932, %v2121, 0
      %2128 = vmatprep.subr.mxu0 0.0
      %2129 = vmatpush1.msra.mxu0 0.0
      %2130 = vmatprep.subr.mxu0 0.0
      %2131 = vmatpush1.msra.mxu0 0.0
      %2132 = vmatprep.subr.mxu0 0.0
      %2133 = vmatpush1.msra.mxu0 0.0
      %2134 = vmatprep.subr.mxu0 0.0
      %2135 = vmatpush1.msra.mxu0 0.0
      %2136 = vmatprep.subr.mxu0 0.0
      %2137 = vmatpush1.msra.mxu0 0.0
      %2138 = vmatprep.subr.mxu0 0.0
      %2139 = vmatpush1.msra.mxu0 0.0
      %2140 = vmatprep.subr.mxu0 0.0
      %2141 = vmatpush1.msra.mxu0 0.0
      %2142 = vmatprep.subr.mxu0 0.0
      %2143 = vmatpush1.msra.mxu0 0.0
      %2144 = vmatprep.subr.mxu0 0.0
      %2145 = vmatpush1.msra.mxu0 0.0
      %2146 = vmatprep.subr.mxu0 0.0
      %2147 = vmatpush1.msra.mxu0 0.0
      %2148 = vmatprep.subr.mxu0 0.0
      %2149 = vmatpush1.msra.mxu0 0.0
      %2150 = vmatprep.subr.mxu0 0.0
      %2151 = vmatpush1.msra.mxu0 0.0
      %2152 = vmatprep.subr.mxu0 0.0
      %2153 = vmatpush1.msra.mxu0 0.0
      %2154 = vmatprep.subr.mxu0 0.0
      %2155 = vmatpush1.msra.mxu0 0.0
      %2156 = vmatprep.subr.mxu0 0.0
      %2157 = vmatpush1.msra.mxu0 0.0
      %2158 = vmatprep.subr.mxu0 0.0
      %2159 = vmatpush1.msra.mxu0 %v2123
      %2160 = vmatprep.subr.mxu0 0.0
      %2161 = vmatpush2.msra.mxu0 0.0
      %2162 = vmatprep.subr.mxu0 0.0
      %2163 = vmatpush2.msra.mxu0 0.0
      %2164 = vmatprep.subr.mxu0 0.0
      %2165 = vmatpush2.msra.mxu0 0.0
      %2166 = vmatprep.subr.mxu0 0.0
      %2167 = vmatpush2.msra.mxu0 0.0
      %2168 = vmatprep.subr.mxu0 0.0
      %2169 = vmatpush2.msra.mxu0 0.0
      %2170 = vmatprep.subr.mxu0 0.0
      %2171 = vmatpush2.msra.mxu0 0.0
      %2172 = vmatprep.subr.mxu0 0.0
      %2173 = vmatpush2.msra.mxu0 0.0
      %2174 = vmatprep.subr.mxu0 0.0
      %2175 = vmatpush2.msra.mxu0 0.0
      %2176 = vmatprep.subr.mxu0 0.0
      %2177 = vmatpush2.msra.mxu0 0.0
      %2178 = vmatprep.subr.mxu0 0.0
      %2179 = vmatpush2.msra.mxu0 0.0
      %2180 = vmatprep.subr.mxu0 0.0
      %2181 = vmatpush2.msra.mxu0 0.0
      %2182 = vmatprep.subr.mxu0 0.0
      %2183 = vmatpush2.msra.mxu0 0.0
      %2184 = vmatprep.subr.mxu0 0.0
      %2185 = vmatpush2.msra.mxu0 0.0
      %2186 = vmatprep.subr.mxu0 0.0
      %2187 = vmatpush2.msra.mxu0 0.0
      %2188 = vmatprep.subr.mxu0 0.0
      %2189 = vmatpush2.msra.mxu0 0.0
      %2190 = vmatprep.subr.mxu0 0.0
      %2191 = vmatpush2.msra.mxu0 0.0
      %2192 = vmatprep.mubr.f32.mxu0 0.0
      %2193 = vmatmul.mubr.f32.gmra.mxu0 %v2126
      %v2194 = vpop.f32.mrf.mxu0
      %v2195 = vadd.f32 0.0, %v2194
      %v2196 = vpop.f32.mrf.mxu0
      %2197 = vdwg.mxu0
      %2198 = vrot.lane.b32.xlu0 %v1963, 120
      %v2199 = vpop.permute.xlu0 %2198
      %2200 = vrot.lane.b32.xlu0 %v2030, 120
      %v2201 = vpop.permute.xlu0 %2200
      %v2202 = vsel %vm932, %v2199, 0
      %v2204 = vsel %vm932, %v2201, 0
      %2206 = vmatprep.subr.mxu0 0.0
      %2207 = vmatpush1.xpose.msra.mxu0 0.0
      %2208 = vmatprep.subr.mxu0 0.0
      %2209 = vmatpush1.xpose.msra.mxu0 0.0
      %2210 = vmatprep.subr.mxu0 0.0
      %2211 = vmatpush1.xpose.msra.mxu0 0.0
      %2212 = vmatprep.subr.mxu0 0.0
      %2213 = vmatpush1.xpose.msra.mxu0 0.0
      %2214 = vmatprep.subr.mxu0 0.0
      %2215 = vmatpush1.xpose.msra.mxu0 0.0
      %2216 = vmatprep.subr.mxu0 0.0
      %2217 = vmatpush1.xpose.msra.mxu0 0.0
      %2218 = vmatprep.subr.mxu0 0.0
      %2219 = vmatpush1.xpose.msra.mxu0 0.0
      %2220 = vmatprep.subr.mxu0 0.0
      %2221 = vmatpush1.xpose.msra.mxu0 0.0
      %2222 = vmatprep.subr.mxu0 0.0
      %2223 = vmatpush1.xpose.msra.mxu0 0.0
      %2224 = vmatprep.subr.mxu0 0.0
      %2225 = vmatpush1.xpose.msra.mxu0 0.0
      %2226 = vmatprep.subr.mxu0 0.0
      %2227 = vmatpush1.xpose.msra.mxu0 0.0
      %2228 = vmatprep.subr.mxu0 0.0
      %2229 = vmatpush1.xpose.msra.mxu0 0.0
      %2230 = vmatprep.subr.mxu0 0.0
      %2231 = vmatpush1.xpose.msra.mxu0 0.0
      %2232 = vmatprep.subr.mxu0 0.0
      %2233 = vmatpush1.xpose.msra.mxu0 0.0
      %2234 = vmatprep.subr.mxu0 0.0
      %2235 = vmatpush1.xpose.msra.mxu0 0.0
      %2236 = vmatprep.subr.mxu0 0.0
      %2237 = vmatpush1.xpose.msra.mxu0 %v2204
      %2238 = vmatprep.subr.mxu0 0.0
      %2239 = vmatpush2.xpose.msra.mxu0 0.0
      %2240 = vmatprep.subr.mxu0 0.0
      %2241 = vmatpush2.xpose.msra.mxu0 0.0
      %2242 = vmatprep.subr.mxu0 0.0
      %2243 = vmatpush2.xpose.msra.mxu0 0.0
      %2244 = vmatprep.subr.mxu0 0.0
      %2245 = vmatpush2.xpose.msra.mxu0 0.0
      %2246 = vmatprep.subr.mxu0 0.0
      %2247 = vmatpush2.xpose.msra.mxu0 0.0
      %2248 = vmatprep.subr.mxu0 0.0
      %2249 = vmatpush2.xpose.msra.mxu0 0.0
      %2250 = vmatprep.subr.mxu0 0.0
      %2251 = vmatpush2.xpose.msra.mxu0 0.0
      %2252 = vmatprep.subr.mxu0 0.0
      %2253 = vmatpush2.xpose.msra.mxu0 0.0
      %2254 = vmatprep.subr.mxu0 0.0
      %2255 = vmatpush2.xpose.msra.mxu0 0.0
      %2256 = vmatprep.subr.mxu0 0.0
      %2257 = vmatpush2.xpose.msra.mxu0 0.0
      %2258 = vmatprep.subr.mxu0 0.0
      %2259 = vmatpush2.xpose.msra.mxu0 0.0
      %2260 = vmatprep.subr.mxu0 0.0
      %2261 = vmatpush2.xpose.msra.mxu0 0.0
      %2262 = vmatprep.subr.mxu0 0.0
      %2263 = vmatpush2.xpose.msra.mxu0 0.0
      %2264 = vmatprep.subr.mxu0 0.0
      %2265 = vmatpush2.xpose.msra.mxu0 0.0
      %2266 = vmatprep.subr.mxu0 0.0
      %2267 = vmatpush2.xpose.msra.mxu0 0.0
      %2268 = vmatprep.subr.mxu0 0.0
      %2269 = vmatpush2.xpose.msra.mxu0 0.0
      %2270 = vmatprep.mubr.f32.mxu0 0.0
      %2271 = vmatmul.mubr.f32.gmra.mxu0 %v2202
      %v2272 = vpop.f32.mrf.mxu0
      %v2273 = vadd.f32 0.0, %v2272
      %v2274 = vpop.f32.mrf.mxu0
      %2275 = vdwg.mxu0
      %v2276 = vsel %vm932, %v2273, -inf
      %2277 = vmax.xlane.f32.xlu0 %v2276
      %v2278 = vpop.xlane.xlu0 %2277
      %v2279 = vsub.f32 %v2273, %v2278
      %v2280 = vmul.f32 %v2279, 1.442695
      %v2281 = vpow.pop %v2280
      %v2282 = vsel %vm932, %v2281, 0.0
      %2283 = vadd.xlane.f32.xlu0 %v2282
      %v2284 = vpop.xlane.xlu0 %2283
      %v2285 = vrcp.pop %v2284
      %v2286 = vmul.f32 %v2281, %v2285
      %2287 = vrot.lane.b32.xlu0 %v2030, 88
      %v2288 = vpop.permute.xlu0 %2287
      %v2291 = vsel %vm932, %v2286, 0
      %2293 = vmatprep.subr.mxu0 0.0
      %2294 = vmatpush1.msra.mxu0 0.0
      %2295 = vmatprep.subr.mxu0 0.0
      %2296 = vmatpush1.msra.mxu0 0.0
      %2297 = vmatprep.subr.mxu0 0.0
      %2298 = vmatpush1.msra.mxu0 0.0
      %2299 = vmatprep.subr.mxu0 0.0
      %2300 = vmatpush1.msra.mxu0 0.0
      %2301 = vmatprep.subr.mxu0 0.0
      %2302 = vmatpush1.msra.mxu0 0.0
      %2303 = vmatprep.subr.mxu0 0.0
      %2304 = vmatpush1.msra.mxu0 0.0
      %2305 = vmatprep.subr.mxu0 0.0
      %2306 = vmatpush1.msra.mxu0 0.0
      %2307 = vmatprep.subr.mxu0 0.0
      %2308 = vmatpush1.msra.mxu0 0.0
      %2309 = vmatprep.subr.mxu0 0.0
      %2310 = vmatpush1.msra.mxu0 0.0
      %2311 = vmatprep.subr.mxu0 0.0
      %2312 = vmatpush1.msra.mxu0 0.0
      %2313 = vmatprep.subr.mxu0 0.0
      %2314 = vmatpush1.msra.mxu0 0.0
      %2315 = vmatprep.subr.mxu0 0.0
      %2316 = vmatpush1.msra.mxu0 0.0
      %2317 = vmatprep.subr.mxu0 0.0
      %2318 = vmatpush1.msra.mxu0 0.0
      %2319 = vmatprep.subr.mxu0 0.0
      %2320 = vmatpush1.msra.mxu0 0.0
      %2321 = vmatprep.subr.mxu0 0.0
      %2322 = vmatpush1.msra.mxu0 0.0
      %2323 = vmatprep.subr.mxu0 0.0
      %2324 = vmatpush1.msra.mxu0 %v2288
      %2325 = vmatprep.subr.mxu0 0.0
      %2326 = vmatpush2.msra.mxu0 0.0
      %2327 = vmatprep.subr.mxu0 0.0
      %2328 = vmatpush2.msra.mxu0 0.0
      %2329 = vmatprep.subr.mxu0 0.0
      %2330 = vmatpush2.msra.mxu0 0.0
      %2331 = vmatprep.subr.mxu0 0.0
      %2332 = vmatpush2.msra.mxu0 0.0
      %2333 = vmatprep.subr.mxu0 0.0
      %2334 = vmatpush2.msra.mxu0 0.0
      %2335 = vmatprep.subr.mxu0 0.0
      %2336 = vmatpush2.msra.mxu0 0.0
      %2337 = vmatprep.subr.mxu0 0.0
      %2338 = vmatpush2.msra.mxu0 0.0
      %2339 = vmatprep.subr.mxu0 0.0
      %2340 = vmatpush2.msra.mxu0 0.0
      %2341 = vmatprep.subr.mxu0 0.0
      %2342 = vmatpush2.msra.mxu0 0.0
      %2343 = vmatprep.subr.mxu0 0.0
      %2344 = vmatpush2.msra.mxu0 0.0
      %2345 = vmatprep.subr.mxu0 0.0
      %2346 = vmatpush2.msra.mxu0 0.0
      %2347 = vmatprep.subr.mxu0 0.0
      %2348 = vmatpush2.msra.mxu0 0.0
      %2349 = vmatprep.subr.mxu0 0.0
      %2350 = vmatpush2.msra.mxu0 0.0
      %2351 = vmatprep.subr.mxu0 0.0
      %2352 = vmatpush2.msra.mxu0 0.0
      %2353 = vmatprep.subr.mxu0 0.0
      %2354 = vmatpush2.msra.mxu0 0.0
      %2355 = vmatprep.subr.mxu0 0.0
      %2356 = vmatpush2.msra.mxu0 0.0
      %2357 = vmatprep.mubr.f32.mxu0 0.0
      %2358 = vmatmul.mubr.f32.gmra.mxu0 %v2291
      %v2359 = vpop.f32.mrf.mxu0
      %v2360 = vadd.f32 0.0, %v2359
      %v2361 = vpop.f32.mrf.mxu0
      %2362 = vdwg.mxu0
      %2363 = vrot.lane.b32.xlu0 %v1963, 112
      %v2364 = vpop.permute.xlu0 %2363
      %2365 = vrot.lane.b32.xlu0 %v2030, 112
      %v2366 = vpop.permute.xlu0 %2365
      %v2367 = vsel %vm932, %v2364, 0
      %v2369 = vsel %vm932, %v2366, 0
      %2371 = vmatprep.subr.mxu0 0.0
      %2372 = vmatpush1.xpose.msra.mxu0 0.0
      %2373 = vmatprep.subr.mxu0 0.0
      %2374 = vmatpush1.xpose.msra.mxu0 0.0
      %2375 = vmatprep.subr.mxu0 0.0
      %2376 = vmatpush1.xpose.msra.mxu0 0.0
      %2377 = vmatprep.subr.mxu0 0.0
      %2378 = vmatpush1.xpose.msra.mxu0 0.0
      %2379 = vmatprep.subr.mxu0 0.0
      %2380 = vmatpush1.xpose.msra.mxu0 0.0
      %2381 = vmatprep.subr.mxu0 0.0
      %2382 = vmatpush1.xpose.msra.mxu0 0.0
      %2383 = vmatprep.subr.mxu0 0.0
      %2384 = vmatpush1.xpose.msra.mxu0 0.0
      %2385 = vmatprep.subr.mxu0 0.0
      %2386 = vmatpush1.xpose.msra.mxu0 0.0
      %2387 = vmatprep.subr.mxu0 0.0
      %2388 = vmatpush1.xpose.msra.mxu0 0.0
      %2389 = vmatprep.subr.mxu0 0.0
      %2390 = vmatpush1.xpose.msra.mxu0 0.0
      %2391 = vmatprep.subr.mxu0 0.0
      %2392 = vmatpush1.xpose.msra.mxu0 0.0
      %2393 = vmatprep.subr.mxu0 0.0
      %2394 = vmatpush1.xpose.msra.mxu0 0.0
      %2395 = vmatprep.subr.mxu0 0.0
      %2396 = vmatpush1.xpose.msra.mxu0 0.0
      %2397 = vmatprep.subr.mxu0 0.0
      %2398 = vmatpush1.xpose.msra.mxu0 0.0
      %2399 = vmatprep.subr.mxu0 0.0
      %2400 = vmatpush1.xpose.msra.mxu0 0.0
      %2401 = vmatprep.subr.mxu0 0.0
      %2402 = vmatpush1.xpose.msra.mxu0 %v2369
      %2403 = vmatprep.subr.mxu0 0.0
      %2404 = vmatpush2.xpose.msra.mxu0 0.0
      %2405 = vmatprep.subr.mxu0 0.0
      %2406 = vmatpush2.xpose.msra.mxu0 0.0
      %2407 = vmatprep.subr.mxu0 0.0
      %2408 = vmatpush2.xpose.msra.mxu0 0.0
      %2409 = vmatprep.subr.mxu0 0.0
      %2410 = vmatpush2.xpose.msra.mxu0 0.0
      %2411 = vmatprep.subr.mxu0 0.0
      %2412 = vmatpush2.xpose.msra.mxu0 0.0
      %2413 = vmatprep.subr.mxu0 0.0
      %2414 = vmatpush2.xpose.msra.mxu0 0.0
      %2415 = vmatprep.subr.mxu0 0.0
      %2416 = vmatpush2.xpose.msra.mxu0 0.0
      %2417 = vmatprep.subr.mxu0 0.0
      %2418 = vmatpush2.xpose.msra.mxu0 0.0
      %2419 = vmatprep.subr.mxu0 0.0
      %2420 = vmatpush2.xpose.msra.mxu0 0.0
      %2421 = vmatprep.subr.mxu0 0.0
      %2422 = vmatpush2.xpose.msra.mxu0 0.0
      %2423 = vmatprep.subr.mxu0 0.0
      %2424 = vmatpush2.xpose.msra.mxu0 0.0
      %2425 = vmatprep.subr.mxu0 0.0
      %2426 = vmatpush2.xpose.msra.mxu0 0.0
      %2427 = vmatprep.subr.mxu0 0.0
      %2428 = vmatpush2.xpose.msra.mxu0 0.0
      %2429 = vmatprep.subr.mxu0 0.0
      %2430 = vmatpush2.xpose.msra.mxu0 0.0
      %2431 = vmatprep.subr.mxu0 0.0
      %2432 = vmatpush2.xpose.msra.mxu0 0.0
      %2433 = vmatprep.subr.mxu0 0.0
      %2434 = vmatpush2.xpose.msra.mxu0 0.0
      %2435 = vmatprep.mubr.f32.mxu0 0.0
      %2436 = vmatmul.mubr.f32.gmra.mxu0 %v2367
      %v2437 = vpop.f32.mrf.mxu0
      %v2438 = vadd.f32 0.0, %v2437
      %v2439 = vpop.f32.mrf.mxu0
      %2440 = vdwg.mxu0
      %v2441 = vsel %vm932, %v2438, -inf
      %2442 = vmax.xlane.f32.xlu0 %v2441
      %v2443 = vpop.xlane.xlu0 %2442
      %v2444 = vsub.f32 %v2438, %v2443
      %v2445 = vmul.f32 %v2444, 1.442695
      %v2446 = vpow.pop %v2445
      %v2447 = vsel %vm932, %v2446, 0.0
      %2448 = vadd.xlane.f32.xlu0 %v2447
      %v2449 = vpop.xlane.xlu0 %2448
      %v2450 = vrcp.pop %v2449
      %v2451 = vmul.f32 %v2446, %v2450
      %2452 = vrot.lane.b32.xlu0 %v2030, 80
      %v2453 = vpop.permute.xlu0 %2452
      %v2456 = vsel %vm932, %v2451, 0
      %2458 = vmatprep.subr.mxu0 0.0
      %2459 = vmatpush1.msra.mxu0 0.0
      %2460 = vmatprep.subr.mxu0 0.0
      %2461 = vmatpush1.msra.mxu0 0.0
      %2462 = vmatprep.subr.mxu0 0.0
      %2463 = vmatpush1.msra.mxu0 0.0
      %2464 = vmatprep.subr.mxu0 0.0
      %2465 = vmatpush1.msra.mxu0 0.0
      %2466 = vmatprep.subr.mxu0 0.0
      %2467 = vmatpush1.msra.mxu0 0.0
      %2468 = vmatprep.subr.mxu0 0.0
      %2469 = vmatpush1.msra.mxu0 0.0
      %2470 = vmatprep.subr.mxu0 0.0
      %2471 = vmatpush1.msra.mxu0 0.0
      %2472 = vmatprep.subr.mxu0 0.0
      %2473 = vmatpush1.msra.mxu0 0.0
      %2474 = vmatprep.subr.mxu0 0.0
      %2475 = vmatpush1.msra.mxu0 0.0
      %2476 = vmatprep.subr.mxu0 0.0
      %2477 = vmatpush1.msra.mxu0 0.0
      %2478 = vmatprep.subr.mxu0 0.0
      %2479 = vmatpush1.msra.mxu0 0.0
      %2480 = vmatprep.subr.mxu0 0.0
      %2481 = vmatpush1.msra.mxu0 0.0
      %2482 = vmatprep.subr.mxu0 0.0
      %2483 = vmatpush1.msra.mxu0 0.0
      %2484 = vmatprep.subr.mxu0 0.0
      %2485 = vmatpush1.msra.mxu0 0.0
      %2486 = vmatprep.subr.mxu0 0.0
      %2487 = vmatpush1.msra.mxu0 0.0
      %2488 = vmatprep.subr.mxu0 0.0
      %2489 = vmatpush1.msra.mxu0 %v2453
      %2490 = vmatprep.subr.mxu0 0.0
      %2491 = vmatpush2.msra.mxu0 0.0
      %2492 = vmatprep.subr.mxu0 0.0
      %2493 = vmatpush2.msra.mxu0 0.0
      %2494 = vmatprep.subr.mxu0 0.0
      %2495 = vmatpush2.msra.mxu0 0.0
      %2496 = vmatprep.subr.mxu0 0.0
      %2497 = vmatpush2.msra.mxu0 0.0
      %2498 = vmatprep.subr.mxu0 0.0
      %2499 = vmatpush2.msra.mxu0 0.0
      %2500 = vmatprep.subr.mxu0 0.0
      %2501 = vmatpush2.msra.mxu0 0.0
      %2502 = vmatprep.subr.mxu0 0.0
      %2503 = vmatpush2.msra.mxu0 0.0
      %2504 = vmatprep.subr.mxu0 0.0
      %2505 = vmatpush2.msra.mxu0 0.0
      %2506 = vmatprep.subr.mxu0 0.0
      %2507 = vmatpush2.msra.mxu0 0.0
      %2508 = vmatprep.subr.mxu0 0.0
      %2509 = vmatpush2.msra.mxu0 0.0
      %2510 = vmatprep.subr.mxu0 0.0
      %2511 = vmatpush2.msra.mxu0 0.0
      %2512 = vmatprep.subr.mxu0 0.0
      %2513 = vmatpush2.msra.mxu0 0.0
      %2514 = vmatprep.subr.mxu0 0.0
      %2515 = vmatpush2.msra.mxu0 0.0
      %2516 = vmatprep.subr.mxu0 0.0
      %2517 = vmatpush2.msra.mxu0 0.0
      %2518 = vmatprep.subr.mxu0 0.0
      %2519 = vmatpush2.msra.mxu0 0.0
      %2520 = vmatprep.subr.mxu0 0.0
      %2521 = vmatpush2.msra.mxu0 0.0
      %2522 = vmatprep.mubr.f32.mxu0 0.0
      %2523 = vmatmul.mubr.f32.gmra.mxu0 %v2456
      %v2524 = vpop.f32.mrf.mxu0
      %v2525 = vadd.f32 0.0, %v2524
      %v2526 = vpop.f32.mrf.mxu0
      %2527 = vdwg.mxu0
      %2528 = vrot.lane.b32.xlu0 %v1963, 104
      %v2529 = vpop.permute.xlu0 %2528
      %2530 = vrot.lane.b32.xlu0 %v2030, 104
      %v2531 = vpop.permute.xlu0 %2530
      %v2532 = vsel %vm932, %v2529, 0
      %v2534 = vsel %vm932, %v2531, 0
      %2536 = vmatprep.subr.mxu0 0.0
      %2537 = vmatpush1.xpose.msra.mxu0 0.0
      %2538 = vmatprep.subr.mxu0 0.0
      %2539 = vmatpush1.xpose.msra.mxu0 0.0
      %2540 = vmatprep.subr.mxu0 0.0
      %2541 = vmatpush1.xpose.msra.mxu0 0.0
      %2542 = vmatprep.subr.mxu0 0.0
      %2543 = vmatpush1.xpose.msra.mxu0 0.0
      %2544 = vmatprep.subr.mxu0 0.0
      %2545 = vmatpush1.xpose.msra.mxu0 0.0
      %2546 = vmatprep.subr.mxu0 0.0
      %2547 = vmatpush1.xpose.msra.mxu0 0.0
      %2548 = vmatprep.subr.mxu0 0.0
      %2549 = vmatpush1.xpose.msra.mxu0 0.0
      %2550 = vmatprep.subr.mxu0 0.0
      %2551 = vmatpush1.xpose.msra.mxu0 0.0
      %2552 = vmatprep.subr.mxu0 0.0
      %2553 = vmatpush1.xpose.msra.mxu0 0.0
      %2554 = vmatprep.subr.mxu0 0.0
      %2555 = vmatpush1.xpose.msra.mxu0 0.0
      %2556 = vmatprep.subr.mxu0 0.0
      %2557 = vmatpush1.xpose.msra.mxu0 0.0
      %2558 = vmatprep.subr.mxu0 0.0
      %2559 = vmatpush1.xpose.msra.mxu0 0.0
      %2560 = vmatprep.subr.mxu0 0.0
      %2561 = vmatpush1.xpose.msra.mxu0 0.0
      %2562 = vmatprep.subr.mxu0 0.0
      %2563 = vmatpush1.xpose.msra.mxu0 0.0
      %2564 = vmatprep.subr.mxu0 0.0
      %2565 = vmatpush1.xpose.msra.mxu0 0.0
      %2566 = vmatprep.subr.mxu0 0.0
      %2567 = vmatpush1.xpose.msra.mxu0 %v2534
      %2568 = vmatprep.subr.mxu0 0.0
      %2569 = vmatpush2.xpose.msra.mxu0 0.0
      %2570 = vmatprep.subr.mxu0 0.0
      %2571 = vmatpush2.xpose.msra.mxu0 0.0
      %2572 = vmatprep.subr.mxu0 0.0
      %2573 = vmatpush2.xpose.msra.mxu0 0.0
      %2574 = vmatprep.subr.mxu0 0.0
      %2575 = vmatpush2.xpose.msra.mxu0 0.0
      %2576 = vmatprep.subr.mxu0 0.0
      %2577 = vmatpush2.xpose.msra.mxu0 0.0
      %2578 = vmatprep.subr.mxu0 0.0
      %2579 = vmatpush2.xpose.msra.mxu0 0.0
      %2580 = vmatprep.subr.mxu0 0.0
      %2581 = vmatpush2.xpose.msra.mxu0 0.0
      %2582 = vmatprep.subr.mxu0 0.0
      %2583 = vmatpush2.xpose.msra.mxu0 0.0
      %2584 = vmatprep.subr.mxu0 0.0
      %2585 = vmatpush2.xpose.msra.mxu0 0.0
      %2586 = vmatprep.subr.mxu0 0.0
      %2587 = vmatpush2.xpose.msra.mxu0 0.0
      %2588 = vmatprep.subr.mxu0 0.0
      %2589 = vmatpush2.xpose.msra.mxu0 0.0
      %2590 = vmatprep.subr.mxu0 0.0
      %2591 = vmatpush2.xpose.msra.mxu0 0.0
      %2592 = vmatprep.subr.mxu0 0.0
      %2593 = vmatpush2.xpose.msra.mxu0 0.0
      %2594 = vmatprep.subr.mxu0 0.0
      %2595 = vmatpush2.xpose.msra.mxu0 0.0
      %2596 = vmatprep.subr.mxu0 0.0
      %2597 = vmatpush2.xpose.msra.mxu0 0.0
      %2598 = vmatprep.subr.mxu0 0.0
      %2599 = vmatpush2.xpose.msra.mxu0 0.0
      %2600 = vmatprep.mubr.f32.mxu0 0.0
      %2601 = vmatmul.mubr.f32.gmra.mxu0 %v2532
      %v2602 = vpop.f32.mrf.mxu0
      %v2603 = vadd.f32 0.0, %v2602
      %v2604 = vpop.f32.mrf.mxu0
      %2605 = vdwg.mxu0
      %v2606 = vsel %vm932, %v2603, -inf
      %2607 = vmax.xlane.f32.xlu0 %v2606
      %v2608 = vpop.xlane.xlu0 %2607
      %v2609 = vsub.f32 %v2603, %v2608
      %v2610 = vmul.f32 %v2609, 1.442695
      %v2611 = vpow.pop %v2610
      %v2612 = vsel %vm932, %v2611, 0.0
      %2613 = vadd.xlane.f32.xlu0 %v2612
      %v2614 = vpop.xlane.xlu0 %2613
      %v2615 = vrcp.pop %v2614
      %v2616 = vmul.f32 %v2611, %v2615
      %2617 = vrot.lane.b32.xlu0 %v2030, 72
      %v2618 = vpop.permute.xlu0 %2617
      %v2621 = vsel %vm932, %v2616, 0
      %2623 = vmatprep.subr.mxu0 0.0
      %2624 = vmatpush1.msra.mxu0 0.0
      %2625 = vmatprep.subr.mxu0 0.0
      %2626 = vmatpush1.msra.mxu0 0.0
      %2627 = vmatprep.subr.mxu0 0.0
      %2628 = vmatpush1.msra.mxu0 0.0
      %2629 = vmatprep.subr.mxu0 0.0
      %2630 = vmatpush1.msra.mxu0 0.0
      %2631 = vmatprep.subr.mxu0 0.0
      %2632 = vmatpush1.msra.mxu0 0.0
      %2633 = vmatprep.subr.mxu0 0.0
      %2634 = vmatpush1.msra.mxu0 0.0
      %2635 = vmatprep.subr.mxu0 0.0
      %2636 = vmatpush1.msra.mxu0 0.0
      %2637 = vmatprep.subr.mxu0 0.0
      %2638 = vmatpush1.msra.mxu0 0.0
      %2639 = vmatprep.subr.mxu0 0.0
      %2640 = vmatpush1.msra.mxu0 0.0
      %2641 = vmatprep.subr.mxu0 0.0
      %2642 = vmatpush1.msra.mxu0 0.0
      %2643 = vmatprep.subr.mxu0 0.0
      %2644 = vmatpush1.msra.mxu0 0.0
      %2645 = vmatprep.subr.mxu0 0.0
      %2646 = vmatpush1.msra.mxu0 0.0
      %2647 = vmatprep.subr.mxu0 0.0
      %2648 = vmatpush1.msra.mxu0 0.0
      %2649 = vmatprep.subr.mxu0 0.0
      %2650 = vmatpush1.msra.mxu0 0.0
      %2651 = vmatprep.subr.mxu0 0.0
      %2652 = vmatpush1.msra.mxu0 0.0
      %2653 = vmatprep.subr.mxu0 0.0
      %2654 = vmatpush1.msra.mxu0 %v2618
      %2655 = vmatprep.subr.mxu0 0.0
      %2656 = vmatpush2.msra.mxu0 0.0
      %2657 = vmatprep.subr.mxu0 0.0
      %2658 = vmatpush2.msra.mxu0 0.0
      %2659 = vmatprep.subr.mxu0 0.0
      %2660 = vmatpush2.msra.mxu0 0.0
      %2661 = vmatprep.subr.mxu0 0.0
      %2662 = vmatpush2.msra.mxu0 0.0
      %2663 = vmatprep.subr.mxu0 0.0
      %2664 = vmatpush2.msra.mxu0 0.0
      %2665 = vmatprep.subr.mxu0 0.0
      %2666 = vmatpush2.msra.mxu0 0.0
      %2667 = vmatprep.subr.mxu0 0.0
      %2668 = vmatpush2.msra.mxu0 0.0
      %2669 = vmatprep.subr.mxu0 0.0
      %2670 = vmatpush2.msra.mxu0 0.0
      %2671 = vmatprep.subr.mxu0 0.0
      %2672 = vmatpush2.msra.mxu0 0.0
      %2673 = vmatprep.subr.mxu0 0.0
      %2674 = vmatpush2.msra.mxu0 0.0
      %2675 = vmatprep.subr.mxu0 0.0
      %2676 = vmatpush2.msra.mxu0 0.0
      %2677 = vmatprep.subr.mxu0 0.0
      %2678 = vmatpush2.msra.mxu0 0.0
      %2679 = vmatprep.subr.mxu0 0.0
      %2680 = vmatpush2.msra.mxu0 0.0
      %2681 = vmatprep.subr.mxu0 0.0
      %2682 = vmatpush2.msra.mxu0 0.0
      %2683 = vmatprep.subr.mxu0 0.0
      %2684 = vmatpush2.msra.mxu0 0.0
      %2685 = vmatprep.subr.mxu0 0.0
      %2686 = vmatpush2.msra.mxu0 0.0
      %2687 = vmatprep.mubr.f32.mxu0 0.0
      %2688 = vmatmul.mubr.f32.gmra.mxu0 %v2621
      %v2689 = vpop.f32.mrf.mxu0
      %v2690 = vadd.f32 0.0, %v2689
      %v2691 = vpop.f32.mrf.mxu0
      %2692 = vdwg.mxu0
      %2694 = vrot.lane.b32.xlu0 %v2360, 8
      %v2695 = vpop.permute.xlu0 %2694
      %2698 = vrot.lane.b32.xlu0 %v2525, 16
      %v2699 = vpop.permute.xlu0 %2698
      %2702 = vrot.lane.b32.xlu0 %v2690, 24
      %v2703 = vpop.permute.xlu0 %2702
      %v2705 = vsel %vm932, %v2195, %v2695
      %v2706 = vsel %vm1611, %v2705, %v2699
      %v2707 = vsel %vm1613, %v2706, %v2703
      %v2708 = vld [vmem:[%s18] sm:$0xf]
      %v2709 = vld [vmem:[%s18 + $0x4] sm:$0xf]
      %v2710 = vld [vmem:[%s18 + $0x8] sm:$0xf]
      %v2711 = vld [vmem:[%s18 + $0xc] sm:$0xf]
      %v2712 = vld [vmem:[%s19] sm:$0x1]
      %v2713 = vpack.c.bf16 %v2707, %v2707
      %v2715 = vlaneseq
      %v2716 = vshrl.u32 %v2715, 7
      %v2717 = vsub.s32 0, %v2716
      %v2718 = vrot.slane %v2712, %v2717
      %v2724 = vunpack.c.l.b16 %v2708
      %v2725 = vunpack.c.l.b16 %v2709
      %v2726 = vunpack.c.l.b16 %v2710
      %v2727 = vunpack.c.l.b16 %v2711
      %v2728 = vpack.c.b16 %v2725, %v2724
      %v2729 = vpack.c.b16 %v2727, %v2726
      %v2733 = vsel %vm885, %v2713, 0
      %2735 = vmatprep.subr.bf16.mxu0 0
      %2736 = vmatpush1.bf16.msra.mxu0 0
      %2737 = vmatprep.subr.bf16.mxu0 0
      %2738 = vmatpush1.bf16.msra.mxu0 0
      %2739 = vmatprep.subr.bf16.mxu0 0
      %2740 = vmatpush1.bf16.msra.mxu0 0
      %2741 = vmatprep.subr.bf16.mxu0 0
      %2742 = vmatpush1.bf16.msra.mxu0 0
      %2743 = vmatprep.subr.bf16.mxu0 0
      %2744 = vmatpush1.bf16.msra.mxu0 0
      %2745 = vmatprep.subr.bf16.mxu0 0
      %2746 = vmatpush1.bf16.msra.mxu0 0
      %2747 = vmatprep.subr.bf16.mxu0 0
      %2748 = vmatpush1.bf16.msra.mxu0 %v2729
      %2749 = vmatprep.subr.bf16.mxu0 0
      %2750 = vmatpush1.bf16.msra.mxu0 %v2728
      %2751 = vmatprep.subr.bf16.mxu0 0
      %2752 = vmatpush2.bf16.msra.mxu0 0
      %2753 = vmatprep.subr.bf16.mxu0 0
      %2754 = vmatpush2.bf16.msra.mxu0 0
      %2755 = vmatprep.subr.bf16.mxu0 0
      %2756 = vmatpush2.bf16.msra.mxu0 0
      %2757 = vmatprep.subr.bf16.mxu0 0
      %2758 = vmatpush2.bf16.msra.mxu0 0
      %2759 = vmatprep.subr.bf16.mxu0 0
      %2760 = vmatpush2.bf16.msra.mxu0 0
      %2761 = vmatprep.subr.bf16.mxu0 0
      %2762 = vmatpush2.bf16.msra.mxu0 0
      %2763 = vmatprep.subr.bf16.mxu0 0
      %2764 = vmatpush2.bf16.msra.mxu0 0
      %2765 = vmatprep.subr.bf16.mxu0 0
      %2766 = vmatpush2.bf16.msra.mxu0 0
      %2767 = vmatprep.mubr.bf16.mxu0 0
      %2768 = vmatmul.mubr.bf16.gmra.mxu0 %v2733
      %v2769 = vpop.f32.mrf.mxu0
      %v2770 = vadd.f32 %v2718, %v2769
      %v2771 = vpop.f32.mrf.mxu0
      %v2772 = vpop.f32.mrf.mxu0
      %v2773 = vpop.f32.mrf.mxu0
      %2774 = vdwg.mxu0
      %v2775 = vadd.f32 %v2770, %v1900
      %v2776 = vld [vmem:[%s20] sm:$0x1]
      %v2777 = vld [vmem:[%s21] sm:$0x1]
      %v2778 = vsel %vm885, %v2775, 0.0
      %2779 = vadd.xlane.f32.xlu0 %v2778
      %v2780 = vpop.xlane.xlu0 %2779
      %v2781 = vmul.f32 %v2780, %v1688
      %v2782 = vmul.f32 %v2775, %v2775
      %v2783 = vsel %vm885, %v2782, 0.0
      %2784 = vadd.xlane.f32.xlu0 %v2783
      %v2785 = vpop.xlane.xlu0 %2784
      %v2786 = vmul.f32 %v2785, %v1688
      %v2787 = vmul.f32 %v2781, %v2781
      %v2788 = vsub.f32 %v2786, %v2787
      %v2789 = vmax.f32 %v2788, 0.0
      %v2790 = vsub.f32 %v2775, %v2781
      %v2791 = vadd.f32 %v2789, 1e-05
      %v2792 = vrsqrt.pop %v2791
      %v2793 = vmul.f32 %v2790, %v2792
      %v2795 = vlaneseq
      %v2796 = vshrl.u32 %v2795, 7
      %v2797 = vsub.s32 0, %v2796
      %v2798 = vrot.slane %v2776, %v2797
      %v2800 = vmul.f32 %v2793, %v2798
      %v2802 = vlaneseq
      %v2803 = vshrl.u32 %v2802, 7
      %v2804 = vsub.s32 0, %v2803
      %v2805 = vrot.slane %v2777, %v2804
      %v2807 = vadd.f32 %v2800, %v2805
      %v2808 = vld [vmem:[%s22] sm:$0xf]
      %v2809 = vld [vmem:[%s22 + $0x4] sm:$0xf]
      %v2810 = vld [vmem:[%s22 + $0x8] sm:$0xf]
      %v2811 = vld [vmem:[%s22 + $0xc] sm:$0xf]
      %v2812 = vld [vmem:[%s23] sm:$0x1]
      %v2813 = vld [vmem:[%s24] sm:$0xf]
      %v2814 = vld [vmem:[%s24 + $0x4] sm:$0xf]
      %v2815 = vld [vmem:[%s24 + $0x8] sm:$0xf]
      %v2816 = vld [vmem:[%s24 + $0xc] sm:$0xf]
      %v2817 = vld [vmem:[%s24 + $0x10] sm:$0xf]
      %v2818 = vld [vmem:[%s24 + $0x14] sm:$0xf]
      %v2819 = vld [vmem:[%s24 + $0x18] sm:$0xf]
      %v2820 = vld [vmem:[%s24 + $0x1c] sm:$0xf]
      %v2821 = vld [vmem:[%s25] sm:$0x1]
      %v2822 = vpack.c.bf16 %v2807, %v2807
      %v2824 = vlaneseq
      %v2825 = vshrl.u32 %v2824, 7
      %v2826 = vsub.s32 0, %v2825
      %v2827 = vrot.slane %v2812, %v2826
      %v2833 = vunpack.c.l.b16 %v2808
      %v2834 = vunpack.c.l.b16 %v2809
      %v2835 = vunpack.c.l.b16 %v2810
      %v2836 = vunpack.c.l.b16 %v2811
      %v2837 = vpack.c.b16 %v2834, %v2833
      %v2838 = vpack.c.b16 %v2836, %v2835
      %v2842 = vsel %vm885, %v2822, 0
      %2844 = vmatprep.subr.bf16.mxu0 0
      %2845 = vmatpush1.bf16.msra.mxu0 0
      %2846 = vmatprep.subr.bf16.mxu0 0
      %2847 = vmatpush1.bf16.msra.mxu0 0
      %2848 = vmatprep.subr.bf16.mxu0 0
      %2849 = vmatpush1.bf16.msra.mxu0 0
      %2850 = vmatprep.subr.bf16.mxu0 0
      %2851 = vmatpush1.bf16.msra.mxu0 0
      %2852 = vmatprep.subr.bf16.mxu0 0
      %2853 = vmatpush1.bf16.msra.mxu0 0
      %2854 = vmatprep.subr.bf16.mxu0 0
      %2855 = vmatpush1.bf16.msra.mxu0 0
      %2856 = vmatprep.subr.bf16.mxu0 0
      %2857 = vmatpush1.bf16.msra.mxu0 %v2838
      %2858 = vmatprep.subr.bf16.mxu0 0
      %2859 = vmatpush1.bf16.msra.mxu0 %v2837
      %2860 = vmatprep.subr.bf16.mxu0 0
      %2861 = vmatpush2.bf16.msra.mxu0 0
      %2862 = vmatprep.subr.bf16.mxu0 0
      %2863 = vmatpush2.bf16.msra.mxu0 0
      %2864 = vmatprep.subr.bf16.mxu0 0
      %2865 = vmatpush2.bf16.msra.mxu0 0
      %2866 = vmatprep.subr.bf16.mxu0 0
      %2867 = vmatpush2.bf16.msra.mxu0 0
      %2868 = vmatprep.subr.bf16.mxu0 0
      %2869 = vmatpush2.bf16.msra.mxu0 0
      %2870 = vmatprep.subr.bf16.mxu0 0
      %2871 = vmatpush2.bf16.msra.mxu0 0
      %2872 = vmatprep.subr.bf16.mxu0 0
      %2873 = vmatpush2.bf16.msra.mxu0 0
      %2874 = vmatprep.subr.bf16.mxu0 0
      %2875 = vmatpush2.bf16.msra.mxu0 0
      %2876 = vmatprep.mubr.bf16.mxu0 0
      %2877 = vmatmul.mubr.bf16.gmra.mxu0 %v2842
      %v2878 = vpop.f32.mrf.mxu0
      %v2879 = vadd.f32 %v2827, %v2878
      %v2880 = vpop.f32.mrf.mxu0
      %v2881 = vpop.f32.mrf.mxu0
      %v2882 = vpop.f32.mrf.mxu0
      %2883 = vdwg.mxu0
      %v2884 = vmax.f32 %v2879, 0.0
      %v2885 = vpack.c.bf16 %v2884, %v2884
      %v2887 = vlaneseq
      %v2888 = vshrl.u32 %v2887, 7
      %v2889 = vsub.s32 0, %v2888
      %v2890 = vrot.slane %v2821, %v2889
      %v2900 = vunpack.c.l.b16 %v2813
      %v2901 = vunpack.c.l.b16 %v2814
      %v2902 = vunpack.c.l.b16 %v2815
      %v2903 = vunpack.c.l.b16 %v2816
      %v2904 = vunpack.c.l.b16 %v2817
      %v2905 = vunpack.c.l.b16 %v2818
      %v2906 = vunpack.c.l.b16 %v2819
      %v2907 = vunpack.c.l.b16 %v2820
      %v2908 = vpack.c.b16 %v2901, %v2900
      %v2909 = vpack.c.b16 %v2903, %v2902
      %v2910 = vpack.c.b16 %v2905, %v2904
      %v2911 = vpack.c.b16 %v2907, %v2906
      %v2917 = vsel %vm1824, %v2885, 0
      %2919 = vmatprep.subr.bf16.mxu0 0
      %2920 = vmatpush1.bf16.msra.mxu0 0
      %2921 = vmatprep.subr.bf16.mxu0 0
      %2922 = vmatpush1.bf16.msra.mxu0 0
      %2923 = vmatprep.subr.bf16.mxu0 0
      %2924 = vmatpush1.bf16.msra.mxu0 0
      %2925 = vmatprep.subr.bf16.mxu0 0
      %2926 = vmatpush1.bf16.msra.mxu0 0
      %2927 = vmatprep.subr.bf16.mxu0 0
      %2928 = vmatpush1.bf16.msra.mxu0 %v2911
      %2929 = vmatprep.subr.bf16.mxu0 0
      %2930 = vmatpush1.bf16.msra.mxu0 %v2910
      %2931 = vmatprep.subr.bf16.mxu0 0
      %2932 = vmatpush1.bf16.msra.mxu0 %v2909
      %2933 = vmatprep.subr.bf16.mxu0 0
      %2934 = vmatpush1.bf16.msra.mxu0 %v2908
      %2935 = vmatprep.subr.bf16.mxu0 0
      %2936 = vmatpush2.bf16.msra.mxu0 0
      %2937 = vmatprep.subr.bf16.mxu0 0
      %2938 = vmatpush2.bf16.msra.mxu0 0
      %2939 = vmatprep.subr.bf16.mxu0 0
      %2940 = vmatpush2.bf16.msra.mxu0 0
      %2941 = vmatprep.subr.bf16.mxu0 0
      %2942 = vmatpush2.bf16.msra.mxu0 0
      %2943 = vmatprep.subr.bf16.mxu0 0
      %2944 = vmatpush2.bf16.msra.mxu0 0
      %2945 = vmatprep.subr.bf16.mxu0 0
      %2946 = vmatpush2.bf16.msra.mxu0 0
      %2947 = vmatprep.subr.bf16.mxu0 0
      %2948 = vmatpush2.bf16.msra.mxu0 0
      %2949 = vmatprep.subr.bf16.mxu0 0
      %2950 = vmatpush2.bf16.msra.mxu0 0
      %2951 = vmatprep.mubr.bf16.mxu0 0
      %2952 = vmatmul.mubr.bf16.gmra.mxu0 %v2917
      %v2953 = vpop.f32.mrf.mxu0
      %v2954 = vadd.f32 %v2890, %v2953
      %v2955 = vpop.f32.mrf.mxu0
      %v2956 = vpop.f32.mrf.mxu0
      %v2957 = vpop.f32.mrf.mxu0
      %2958 = vdwg.mxu0
      %v2959 = vadd.f32 %v2954, %v2807
      %v2960 = vld [vmem:[%s26] sm:$0x1]
      %v2961 = vld [vmem:[%s27] sm:$0x1]
      %v2962 = vsel %vm885, %v2959, 0.0
      %2963 = vadd.xlane.f32.xlu0 %v2962
      %v2964 = vpop.xlane.xlu0 %2963
      %v2965 = vmul.f32 %v2964, %v1688
      %v2966 = vmul.f32 %v2959, %v2959
      %v2967 = vsel %vm885, %v2966, 0.0
      %2968 = vadd.xlane.f32.xlu0 %v2967
      %v2969 = vpop.xlane.xlu0 %2968
      %v2970 = vmul.f32 %v2969, %v1688
      %v2971 = vmul.f32 %v2965, %v2965
      %v2972 = vsub.f32 %v2970, %v2971
      %v2973 = vmax.f32 %v2972, 0.0
      %v2974 = vsub.f32 %v2959, %v2965
      %v2975 = vadd.f32 %v2973, 1e-05
      %v2976 = vrsqrt.pop %v2975
      %v2977 = vmul.f32 %v2974, %v2976
      %v2979 = vlaneseq
      %v2980 = vshrl.u32 %v2979, 7
      %v2981 = vsub.s32 0, %v2980
      %v2982 = vrot.slane %v2960, %v2981
      %v2984 = vmul.f32 %v2977, %v2982
      %v2986 = vlaneseq
      %v2987 = vshrl.u32 %v2986, 7
      %v2988 = vsub.s32 0, %v2987
      %v2989 = vrot.slane %v2961, %v2988
      %v2991 = vadd.f32 %v2984, %v2989
      %2992 = vst.msk [vmem:[%s857] sm:$0xff] %vm885, %v2991
      %p2993 = scmp.lt.s32.totalorder %s39, 1
      %s2994 = scalar_select %p2993, %s39, 1
      %s2995 = smul.addr %s2994, 8
      %s2996 = scalar_lea.vmem %s28, %s2995
      // Predicated region
      $region133: #{transformer_nmt_mh_forward.7} parent=131 // pred_check
        %p2997 = pneg %p655
      $region134: #{transformer_nmt_mh_forward.7} parent=131 // pred_check_branch
        %2999 = sbr.rel (%p2997) target = $region136
      $region135: #{transformer_nmt_mh_forward.7} parent=131 // pred_region
        _
      $region136: #{transformer_nmt_mh_forward.7} parent=131 // pred_fallthru
        _
    $region132: #{transformer_nmt_mh_forward.7} parent=5 // pred_fallthru
      _
    %p3000 = scmp.le.s32.totalorder 2, %s34
    // Predicated region
    $region137: #{transformer_nmt_mh_forward.7} parent=5 // pred_check
      %p3001 = pneg %p3000
    $region138: #{transformer_nmt_mh_forward.7} parent=5 // pred_check_branch
      %3003 = sbr.rel (%p3001) target = $region140
    $region139: #{transformer_nmt_mh_forward.7} parent=5 // pred_region
      %s3004 = ssub.s32 %s34, 2
      // Predicated region
      $region141: #{transformer_nmt_mh_forward.7} parent=139 // pred_check
        %p3005 = pneg %p661
      $region142: #{transformer_nmt_mh_forward.7} parent=139 // pred_check_branch
        %3007 = sbr.rel (%p3005) target = $region144
      $region143: #{transformer_nmt_mh_forward.7} parent=139 // pred_region
        %p3008 = scmp.lt.s32.totalorder %s40, 1
        %s3009 = scalar_select %p3008, %s40, 1
        %s3010 = smul.addr %s3009, 8
        %s3011 = scalar_lea.vmem %s28, %s3010
      $region144: #{transformer_nmt_mh_forward.7} parent=139 // pred_fallthru
        _
    $region140: #{transformer_nmt_mh_forward.7} parent=5 // pred_fallthru
      _
  $region6: #{transformer_nmt_mh_forward.7} parent=0 // loop_footer
    %s38 = sadd.s32 1, %s34
  $region7: #{transformer_nmt_mh_forward.7} parent=0 // loop_footer_branch
    %33 = sbr.rel target = $region3
  $region8: #{transformer_nmt_mh_forward.7} parent=0 // loop_exit
    _

</llo_original>
